<compile_context>
chip_gen: v6e
topology: v6e:2x2x1
jax: 0.10.0
libtpu: 0.0.40
codegen_flags: <defaults>
</compile_context>

<pallas_src>
import functools
import math

import jax
import jax.numpy as jnp
from jax.experimental import pallas as pl
from jax.experimental.pallas import tpu as pltpu

# ---------------------------------------------------------------------------
# Scaled-down wav2vec2-large-robust config (structure preserved, sizes shrunk)
# ---------------------------------------------------------------------------
CONV_DIM    = (32, 32, 32, 32, 32, 32, 32)
CONV_KERNEL = (10, 3, 3, 3, 3, 2, 2)
CONV_STRIDE = (5, 2, 2, 2, 2, 2, 2)
HIDDEN      = 32
NUM_HEADS   = 4
HEAD_DIM    = HIDDEN // NUM_HEADS
FFN_DIM     = 64
NUM_LAYERS  = 4
POS_KERNEL  = 4
POS_GROUPS  = 2
NUM_LABELS  = 2
LAYER       = 2          # module default is 14; scaled down with NUM_LAYERS=4
LN_EPS      = 1e-5

BATCH       = 2
NUM_SAMPLES = 3200

MXU_DTYPE   = jnp.bfloat16       # MXU operand dtype; accumulation is always f32
CLS_PAD     = 128                # classifier output padded to a full 128-lane tile
POS_PAD_L   = POS_KERNEL // 2
POS_PAD_R   = POS_KERNEL - 1 - POS_PAD_L
CONV_C      = CONV_DIM[0]

# Encoder per-layer bf16 weight slab layout (rows x cols = WS_ROWS x WS_COLS):
#   rows [0:D)      cols [0:3D)       -> fused W_qkv  (q pre-scaled)
#   rows [0:D)      cols [3D:4D)      -> W_o
#   rows [0:D)      cols [4D:4D+FFN)  -> W_ff1
#   rows [D:D+FFN)  cols [0:D)        -> W_ff2
WS_WO_OFF  = 3 * HIDDEN
WS_FF1_OFF = 4 * HIDDEN
WS_ROWS    = HIDDEN + FFN_DIM
WS_COLS    = 4 * HIDDEN + FFN_DIM
# Encoder per-layer f32 bias/LN slab (8, PS_COLS):
#   row 0 ln1_g, 1 ln1_b, 2 ln2_g, 3 ln2_b, 4 b_qkv, 5 b_o, 6 b_ff1, 7 b_ff2
PS_COLS    = 3 * HIDDEN


# ---------------------------------------------------------------------------
# In-kernel helpers (pure value math, used inside Pallas kernel bodies)
# ---------------------------------------------------------------------------
def _ln(x, g, b, eps=LN_EPS):
    mean = jnp.mean(x, axis=-1, keepdims=True)
    var = jnp.mean(jnp.square(x - mean), axis=-1, keepdims=True)
    return (x - mean) * jax.lax.rsqrt(var + eps) * g + b


def _gelu(x):
    # TODO(synk): PyTorch uses exact erf-GELU; tanh approximation used for
    # Mosaic-safe lowering (EUP tanh).
    return jax.nn.gelu(x, approximate=True)


# ---------------------------------------------------------------------------
# Kernel A: whole feature extractor tail (convs 2..7 + channel LN + GELU) +
#           feature projection + grouped positional conv + residual, fully in
#           VMEM.  grid = (B,), "parallel".
# ---------------------------------------------------------------------------
def _featurizer_kernel(x1_ref, cw_ref, cp_ref, pw_ref, pp_ref, out_ref,
                       buf_a, buf_b, *, lens):
    c = CONV_C
    bufs = (buf_a, buf_b)

    # conv layer 0: the matmul ran outside (XLA, on the 5-folded waveform);
    # add bias, channel LayerNorm, GELU here.
    p0 = cp_ref[0]
    a = x1_ref[0] + p0[0:1, :]
    buf_a[0:lens[0], :] = _gelu(_ln(a, p0[1:2, :], p0[2:3, :]))

    # conv layers 1..6: one matmul each.  Stride-2 taps are gathered with
    # strided reads from the ping-pong scratch and fused on lanes into a
    # (lout, K*C) operand (K*C = 96 / 64) -> a single MXU contraction per layer.
    dst = buf_a
    for i in range(1, len(CONV_KERNEL)):
        k, lout = CONV_KERNEL[i], lens[i]
        src = bufs[(i + 1) % 2]
        dst = bufs[i % 2]
        x_even = src[pl.ds(0, lout + (1 if k == 3 else 0), stride=2), :]
        x_odd = src[pl.ds(1, lout, stride=2), :]
        if k == 3:
            operand = jnp.concatenate(
                [x_even[0:lout], x_odd, x_even[1:lout + 1]], axis=-1)
        else:  # k == 2 (non-overlapping): just the even/odd pair
            operand = jnp.concatenate([x_even, x_odd], axis=-1)
        acc = jnp.dot(operand.astype(MXU_DTYPE), cw_ref[i - 1, 0:k * c, :],
                      preferred_element_type=jnp.float32)
        pi = cp_ref[i]
        dst[0:lout, :] = _gelu(_ln(acc + pi[0:1, :], pi[1:2, :], pi[2:3, :]))

    # feature projection (LN -> Linear) + grouped positional conv (densified,
    # all POS_KERNEL taps fused into one K = POS_KERNEL*D matmul; SamePad trim
    # folded into the (left 2, right 1) zero padding) + GELU + residual.
    t = lens[-1]
    x7 = dst[0:t, :]
    pp = pp_ref[...]
    h = _ln(x7, pp[0:1, :], pp[1:2, :])
    fp = jnp.dot(h.astype(MXU_DTYPE), pw_ref[0:c, :],
                 preferred_element_type=jnp.float32) + pp[2:3, :]
    fp_pad = jnp.concatenate(
        [jnp.zeros((POS_PAD_L, HIDDEN), jnp.float32), fp,
         jnp.zeros((POS_PAD_R, HIDDEN), jnp.float32)], axis=0)
    operand = jnp.concatenate([fp_pad[j:j + t, :] for j in range(POS_KERNEL)],
                              axis=-1)                                   # (t, K*D)
    pc = jnp.dot(operand.astype(MXU_DTYPE), pw_ref[c:c + POS_KERNEL * HIDDEN, :],
                 preferred_element_type=jnp.float32) + pp[3:4, :]
    out_ref[0] = fp + _gelu(pc)


def featurizer(conv1_pre, prep):
    bsz, l1, c = conv1_pre.shape
    lens = [l1]
    for i in range(1, len(CONV_KERNEL)):
        lens.append((lens[-1] - CONV_KERNEL[i]) // CONV_STRIDE[i] + 1)
    lens = tuple(lens)
    lmax = ((l1 + 7) // 8) * 8
    t_out = lens[-1]
    kern = functools.partial(_featurizer_kernel, lens=lens)
    return pl.pallas_call(
        kern,
        grid=(bsz,),
        in_specs=[
            pl.BlockSpec((1, l1, c), lambda b: (b, 0, 0)),
            pl.BlockSpec(prep["conv_w_slab"].shape, lambda b: (0, 0, 0)),
            pl.BlockSpec(prep["conv_p_slab"].shape, lambda b: (0, 0, 0)),
            pl.BlockSpec(prep["proj_w_slab"].shape, lambda b: (0, 0)),
            pl.BlockSpec(prep["proj_p_slab"].shape, lambda b: (0, 0)),
        ],
        out_specs=pl.BlockSpec((1, t_out, HIDDEN), lambda b: (b, 0, 0)),
        out_shape=jax.ShapeDtypeStruct((bsz, t_out, HIDDEN), jnp.float32),
        scratch_shapes=[pltpu.VMEM((lmax, c), jnp.float32),
                        pltpu.VMEM((lmax, c), jnp.float32)],
        compiler_params=pltpu.CompilerParams(dimension_semantics=("parallel",)),
    )(conv1_pre, prep["conv_w_slab"], prep["conv_p_slab"],
      prep["proj_w_slab"], prep["proj_p_slab"])


# ---------------------------------------------------------------------------
# Kernel B: stable-layer-norm transformer encoder (layers 0..tap) + tapped,
#           lane-padded classifier.
#   grid = (B, tap+1): batch "parallel" (megacore), layers "arbitrary";
#   one batch row (T, D) per block -> no attention mask needed.
# ---------------------------------------------------------------------------
def _encoder_kernel(hs_ref, w_ref, p_ref, clsw_ref, clsb_ref, out_ref, hid_ref, *, tap):
    layer_idx = pl.program_id(1)

    @pl.when(layer_idx == 0)
    def _init():
        hid_ref[...] = hs_ref[0]

    x = hid_ref[...]                                     # (T, D) f32
    w = w_ref[0]                                         # (WS_ROWS, WS_COLS) bf16
    p = p_ref[0]                                         # (8, PS_COLS) f32

    ln1_g, ln1_b = p[0:1, 0:HIDDEN], p[1:2, 0:HIDDEN]
    ln2_g, ln2_b = p[2:3, 0:HIDDEN], p[3:4, 0:HIDDEN]
    bqkv = p[4:5, 0:3 * HIDDEN]
    bo = p[5:6, 0:HIDDEN]
    bff1 = p[6:7, 0:FFN_DIM]
    bff2 = p[7:8, 0:HIDDEN]

    wqkv = w[0:HIDDEN, 0:3 * HIDDEN]
    wo = w[0:HIDDEN, WS_WO_OFF:WS_WO_OFF + HIDDEN]
    wff1 = w[0:HIDDEN, WS_FF1_OFF:WS_FF1_OFF + FFN_DIM]
    wff2 = w[HIDDEN:HIDDEN + FFN_DIM, 0:HIDDEN]

    # ---- self-attention block: LN1 + fused QKV matmul (q-scaling folded) -----
    h1 = _ln(x, ln1_g, ln1_b)
    qkv = jnp.dot(h1.astype(MXU_DTYPE), wqkv,
                  preferred_element_type=jnp.float32) + bqkv              # (T, 3D)

    ctx = []
    for h in range(NUM_HEADS):
        c0 = h * HEAD_DIM
        q = qkv[:, c0:c0 + HEAD_DIM]
        k = qkv[:, HIDDEN + c0:HIDDEN + c0 + HEAD_DIM]
        v = qkv[:, 2 * HIDDEN + c0:2 * HIDDEN + c0 + HEAD_DIM]
        s = jnp.einsum("td,sd->ts", q, k, preferred_element_type=jnp.float32)
        s = s - jnp.max(s, axis=-1, keepdims=True)
        e = jnp.exp(s)
        prob = e * pl.reciprocal(jnp.sum(e, axis=-1, keepdims=True), approx=True)
        ctx.append(jnp.dot(prob, v, preferred_element_type=jnp.float32))
    ctx = jnp.concatenate(ctx, axis=-1)                                   # (T, D)
    attn = jnp.dot(ctx.astype(MXU_DTYPE), wo,
                   preferred_element_type=jnp.float32) + bo
    x = x + attn

    # ---- feed-forward block ---------------------------------------------------
    h2 = _ln(x, ln2_g, ln2_b)
    f = _gelu(jnp.dot(h2.astype(MXU_DTYPE), wff1,
                      preferred_element_type=jnp.float32) + bff1)
    f = jnp.dot(f.astype(MXU_DTYPE), wff2,
                preferred_element_type=jnp.float32) + bff2
    x = x + f
    hid_ref[...] = x

    # ---- tap hidden_states[tap + 1] and fuse the (lane-padded) classifier ------
    # The encoder's trailing layer_norm never touches hidden_states[tap + 1]
    # for tap < num_layers - 1 (asserted in forward()).
    @pl.when(layer_idx == tap)
    def _tap():
        out_ref[0] = jnp.dot(x.astype(MXU_DTYPE), clsw_ref[...],
                             preferred_element_type=jnp.float32) + clsb_ref[...]


def encoder_classifier_logits(hs, prep, tap):
    bsz, t_len, d = hs.shape
    n_run = tap + 1            # layers after the tap cannot affect the logits
    kern = functools.partial(_encoder_kernel, tap=tap)
    return pl.pallas_call(
        kern,
        grid=(bsz, n_run),
        in_specs=[
            pl.BlockSpec((1, t_len, d), lambda b, l: (b, 0, 0)),            # hs
            pl.BlockSpec((1, WS_ROWS, WS_COLS), lambda b, l: (l, 0, 0)),    # weight slab
            pl.BlockSpec((1, 8, PS_COLS), lambda b, l: (l, 0, 0)),          # bias/LN slab
            pl.BlockSpec((d, CLS_PAD), lambda b, l: (0, 0)),                # classifier W
            pl.BlockSpec((1, CLS_PAD), lambda b, l: (0, 0)),                # classifier b
        ],
        out_specs=pl.BlockSpec((1, t_len, CLS_PAD), lambda b, l: (b, 0, 0)),
        out_shape=jax.ShapeDtypeStruct((bsz, t_len, CLS_PAD), jnp.float32),
        scratch_shapes=[pltpu.VMEM((t_len, d), jnp.float32)],
        compiler_params=pltpu.CompilerParams(
            dimension_semantics=("parallel", "arbitrary")),
    )(hs, prep["enc_w_slab"], prep["enc_p_slab"], prep["cls_w"], prep["cls_b"])


# ---------------------------------------------------------------------------
# Parameters (deterministic, synthetic — no checkpoint loading)
# ---------------------------------------------------------------------------
def init_params(key):
    keys = iter(jax.random.split(key, 128))

    def nxt():
        return next(keys)

    def xavier(in_d, out_d):
        a = math.sqrt(6.0 / (in_d + out_d))
        return jax.random.uniform(nxt(), (in_d, out_d), jnp.float32, -a, a)

    params = {}
    feat_convs = []
    in_c = 1
    for out_c, k in zip(CONV_DIM, CONV_KERNEL):
        cw = 0.02 * jax.random.normal(nxt(), (out_c, in_c, k), jnp.float32)
        cb = jnp.zeros((out_c,), jnp.float32)
        lg = jnp.ones((out_c,), jnp.float32)
        lb = jnp.zeros((out_c,), jnp.float32)
        feat_convs.append((cw, cb, lg, lb))
        in_c = out_c
    params["feat_convs"] = feat_convs

    params["fp_ln_g"] = jnp.ones((in_c,), jnp.float32)
    params["fp_ln_b"] = jnp.zeros((in_c,), jnp.float32)
    params["fp_w"] = xavier(in_c, HIDDEN)
    params["fp_b"] = jnp.zeros((HIDDEN,), jnp.float32)

    # grouped positional conv (weight-norm folded into a plain weight)
    params["pos_w"] = 0.02 * jax.random.normal(
        nxt(), (HIDDEN, HIDDEN // POS_GROUPS, POS_KERNEL), jnp.float32)
    params["pos_b"] = jnp.zeros((HIDDEN,), jnp.float32)

    layers = []
    for _ in range(NUM_LAYERS):
        lp = dict(
            ln1_g=jnp.ones((HIDDEN,), jnp.float32), ln1_b=jnp.zeros((HIDDEN,), jnp.float32),
            wq=xavier(HIDDEN, HIDDEN), bq=jnp.zeros((HIDDEN,), jnp.float32),
            wk=xavier(HIDDEN, HIDDEN), bk=jnp.zeros((HIDDEN,), jnp.float32),
            wv=xavier(HIDDEN, HIDDEN), bv=jnp.zeros((HIDDEN,), jnp.float32),
            wo=xavier(HIDDEN, HIDDEN), bo=jnp.zeros((HIDDEN,), jnp.float32),
            ln2_g=jnp.ones((HIDDEN,), jnp.float32), ln2_b=jnp.zeros((HIDDEN,), jnp.float32),
            w_ff1=xavier(HIDDEN, FFN_DIM), b_ff1=jnp.zeros((FFN_DIM,), jnp.float32),
            w_ff2=xavier(FFN_DIM, HIDDEN), b_ff2=jnp.zeros((HIDDEN,), jnp.float32),
        )
        layers.append(lp)
    params["layers"] = layers

    # classifier: xavier_uniform weight, zero bias (matches _init_weights)
    params["cls_w"] = xavier(HIDDEN, NUM_LABELS)
    params["cls_b"] = jnp.zeros((NUM_LABELS,), jnp.float32)
    return params


# ---------------------------------------------------------------------------
# One-time weight re-packing for the fused kernels
# ---------------------------------------------------------------------------
def _densify_grouped_conv(w, groups):
    """(Cout, Cin_g, K) grouped conv weight -> (K, Cin, Cout) block-diagonal dense taps."""
    cout, cin_g, k = w.shape
    cog = cout // groups
    dense = jnp.zeros((k, groups * cin_g, cout), w.dtype)
    for g in range(groups):
        blk = jnp.transpose(w[g * cog:(g + 1) * cog], (2, 1, 0))   # (K, ci_local, co_local)
        dense = dense.at[:, g * cin_g:(g + 1) * cin_g, g * cog:(g + 1) * cog].set(blk)
    return dense


def prepare_params(params):
    """Fold q-scaling, concat QKV, pack per-layer weights into slabs, densify the
    grouped pos-conv, pad the classifier to 128 lanes, pre-cast MXU operands to bf16."""
    prep = {}

    # conv1 (Cin=1): (Cout, 1, K) -> (K, Cout); applied outside Pallas.
    w1 = params["feat_convs"][0][0]
    prep["conv1_w"] = jnp.transpose(w1[:, 0, :], (1, 0)).astype(MXU_DTYPE)

    # convs 2..7: one bf16 weight slab (6, 3*C, C); rows [j*C, (j+1)*C) = kernel tap j.
    kmax = max(CONV_KERNEL[1:])
    w_rows = []
    for i in range(1, len(CONV_KERNEL)):
        cw = params["feat_convs"][i][0]                   # (Cout, Cin, K)
        cout, cin, k = cw.shape
        wk = jnp.concatenate([cw[:, :, j].T for j in range(k)], axis=0)   # (K*Cin, Cout)
        wk = jnp.pad(wk, ((0, (kmax - k) * cin), (0, 0)))
        w_rows.append(wk)
    prep["conv_w_slab"] = jnp.stack(w_rows).astype(MXU_DTYPE)

    # per conv layer bias / LN gamma / LN beta slab (7, 8, C) f32.
    p_rows = []
    for cw, cb, lg, lb in params["feat_convs"]:
        blk = jnp.zeros((8, CONV_C), jnp.float32)
        blk = blk.at[0].set(cb).at[1].set(lg).at[2].set(lb)
        p_rows.append(blk)
    prep["conv_p_slab"] = jnp.stack(p_rows)

    # feature projection + positional conv: one bf16 weight slab (C + K*D, D),
    # one f32 vector slab (8, D): rows 0 fp_ln_g, 1 fp_ln_b, 2 fp_b, 3 pos_b.
    pos_flat = _densify_grouped_conv(params["pos_w"], POS_GROUPS).reshape(
        POS_KERNEL * HIDDEN, HIDDEN)
    prep["proj_w_slab"] = jnp.concatenate(
        [params["fp_w"], pos_flat], axis=0).astype(MXU_DTYPE)
    pp = jnp.zeros((8, HIDDEN), jnp.float32)
    pp = pp.at[0].set(params["fp_ln_g"]).at[1].set(params["fp_ln_b"])
    pp = pp.at[2].set(params["fp_b"]).at[3].set(params["pos_b"])
    prep["proj_p_slab"] = pp

    # encoder: one bf16 weight slab + one f32 bias/LN slab per layer.
    scaling = HEAD_DIM ** -0.5
    n = NUM_LAYERS
    ws = jnp.zeros((n, WS_ROWS, WS_COLS), jnp.float32)
    ps = jnp.zeros((n, 8, PS_COLS), jnp.float32)
    for li, lp in enumerate(params["layers"]):
        wqkv = jnp.concatenate([lp["wq"] * scaling, lp["wk"], lp["wv"]], axis=-1)
        ws = ws.at[li, 0:HIDDEN, 0:3 * HIDDEN].set(wqkv)
        ws = ws.at[li, 0:HIDDEN, WS_WO_OFF:WS_WO_OFF + HIDDEN].set(lp["wo"])
        ws = ws.at[li, 0:HIDDEN, WS_FF1_OFF:WS_FF1_OFF + FFN_DIM].set(lp["w_ff1"])
        ws = ws.at[li, HIDDEN:HIDDEN + FFN_DIM, 0:HIDDEN].set(lp["w_ff2"])
        bqkv = jnp.concatenate([lp["bq"] * scaling, lp["bk"], lp["bv"]])
        ps = ps.at[li, 0, 0:HIDDEN].set(lp["ln1_g"])
        ps = ps.at[li, 1, 0:HIDDEN].set(lp["ln1_b"])
        ps = ps.at[li, 2, 0:HIDDEN].set(lp["ln2_g"])
        ps = ps.at[li, 3, 0:HIDDEN].set(lp["ln2_b"])
        ps = ps.at[li, 4, 0:3 * HIDDEN].set(bqkv)
        ps = ps.at[li, 5, 0:HIDDEN].set(lp["bo"])
        ps = ps.at[li, 6, 0:FFN_DIM].set(lp["b_ff1"])
        ps = ps.at[li, 7, 0:HIDDEN].set(lp["b_ff2"])
    prep["enc_w_slab"] = ws.astype(MXU_DTYPE)
    prep["enc_p_slab"] = ps

    prep["cls_w"] = jnp.pad(params["cls_w"],
                            ((0, 0), (0, CLS_PAD - NUM_LABELS))).astype(MXU_DTYPE)
    prep["cls_b"] = jnp.pad(params["cls_b"], (0, CLS_PAD - NUM_LABELS)).reshape(1, CLS_PAD)
    return prep


# ---------------------------------------------------------------------------
# Forward pass (eval mode: dropout / spec-augment / layerdrop are identity)
# ---------------------------------------------------------------------------
def forward(prep, input_values, layer=LAYER):
    # hidden_states[layer + 1] is the output of encoder layer `layer` *before*
    # the encoder's trailing LayerNorm (stable-LN encoder); skipping that LN
    # (and all later layers) is only valid while layer < NUM_LAYERS - 1.
    # TODO(synk): apply the final encoder LayerNorm if tapping the last layer.
    assert 0 <= layer < NUM_LAYERS - 1

    bsz, n_samples = input_values.shape
    s0, k0 = CONV_STRIDE[0], CONV_KERNEL[0]
    assert k0 == 2 * s0
    # TODO(synk): conv 1 (Cin=1, stride*Cin=5) stays outside Pallas as a plain XLA
    # matmul on the 5-folded waveform; its in-kernel layout would waste 123/128 lanes.
    lout1 = (n_samples - k0) // s0 + 1
    nf = n_samples // s0
    x5 = input_values.astype(jnp.float32)[:, :nf * s0].reshape(bsz, nf, s0)
    patches = jnp.concatenate([x5[:, :-1, :], x5[:, 1:, :]], axis=-1)[:, :lout1]
    conv1_pre = jnp.einsum("blk,kc->blc", patches.astype(MXU_DTYPE),
                           prep["conv1_w"], preferred_element_type=jnp.float32)

    # fused: convs 2..7 + channel LN + GELU + feature projection + pos-conv + residual
    hs = featurizer(conv1_pre, prep)                            # (B, T, D)

    # fused: encoder layers 0..layer + lane-padded classifier at the tap
    logits_pad = encoder_classifier_logits(hs, prep, layer)     # (B, T, 128)
    return {"logits": logits_pad[:, :, :NUM_LABELS]}


# ---------------------------------------------------------------------------
if __name__ == "__main__":
    key = jax.random.PRNGKey(0)
    pkey, xkey = jax.random.split(key)
    params = init_params(pkey)
    prep = prepare_params(params)
    input_values = jax.random.normal(xkey, (BATCH, NUM_SAMPLES), jnp.float32)

    fwd = jax.jit(forward)
    out = fwd(prep, input_values)
    logits = jax.block_until_ready(out["logits"])

    # expected number of frames after the conv feature extractor
    L = NUM_SAMPLES
    for k, s in zip(CONV_KERNEL, CONV_STRIDE):
        L = (L - k) // s + 1
    assert logits.shape == (BATCH, L, NUM_LABELS), logits.shape
    assert bool(jnp.all(jnp.isfinite(logits)))
    print("KERNEL_OK")
</pallas_src>

<mosaic_0001>
module attributes {stable_mosaic.version = 11 : i64} {
  func.func @_featurizer_kernel(%arg0: i32, %arg1: memref<1x639x32xf32, #tpu.memory_space<vmem>>, %arg2: memref<6x96x32xbf16, #tpu.memory_space<vmem>>, %arg3: memref<7x8x32xf32, #tpu.memory_space<vmem>>, %arg4: memref<160x32xbf16, #tpu.memory_space<vmem>>, %arg5: memref<8x32xf32, #tpu.memory_space<vmem>>, %arg6: memref<1x9x32xf32, #tpu.memory_space<vmem>>, %arg7: memref<640x32xf32, #tpu.memory_space<vmem>>, %arg8: memref<640x32xf32, #tpu.memory_space<vmem>>) attributes {dimension_semantics = [#tpu.dimension_semantics<parallel>], iteration_bounds = array<i64: 2>, scalar_prefetch = 0 : i64, scratch_operands = 2 : i64, tpu.core_type = #tpu.core_type<tc>, window_params = [{transform_indices = @transform_0, window_bounds = array<i64: 1, 639, 32>}, {pipeline_mode = #tpu.pipeline_mode<synchronous>, transform_indices = @transform_1, window_bounds = array<i64: 6, 96, 32>}, {pipeline_mode = #tpu.pipeline_mode<synchronous>, transform_indices = @transform_2, window_bounds = array<i64: 7, 8, 32>}, {pipeline_mode = #tpu.pipeline_mode<synchronous>, transform_indices = @transform_3, window_bounds = array<i64: 160, 32>}, {pipeline_mode = #tpu.pipeline_mode<synchronous>, transform_indices = @transform_4, window_bounds = array<i64: 8, 32>}, {transform_indices = @transform_5, window_bounds = array<i64: 1, 9, 32>}]} {
    %c0 = arith.constant 0 : index
    %c0_0 = arith.constant 0 : index
    %c0_1 = arith.constant 0 : index
    %0 = vector.load %arg3[%c0, %c0_0, %c0_1] : memref<7x8x32xf32, #tpu.memory_space<vmem>>, vector<1x8x32xf32>
    %1 = vector.shape_cast %0 : vector<1x8x32xf32> to vector<8x32xf32>
    %c0_2 = arith.constant 0 : index
    %c0_3 = arith.constant 0 : index
    %c0_4 = arith.constant 0 : index
    %2 = vector.load %arg1[%c0_2, %c0_3, %c0_4] : memref<1x639x32xf32, #tpu.memory_space<vmem>>, vector<1x639x32xf32>
    %3 = vector.shape_cast %2 : vector<1x639x32xf32> to vector<639x32xf32>
    %4 = vector.extract_strided_slice %1 {offsets = [0, 0], sizes = [1, 32], strides = [1, 1]} : vector<8x32xf32> to vector<1x32xf32>
    %5 = vector.broadcast %4 : vector<1x32xf32> to vector<639x32xf32>
    %6 = arith.addf %3, %5 : vector<639x32xf32>
    %7 = vector.extract_strided_slice %1 {offsets = [1, 0], sizes = [1, 32], strides = [1, 1]} : vector<8x32xf32> to vector<1x32xf32>
    %8 = vector.extract_strided_slice %1 {offsets = [2, 0], sizes = [1, 32], strides = [1, 1]} : vector<8x32xf32> to vector<1x32xf32>
    %cst = arith.constant dense<0.000000e+00> : vector<639xf32>
    %9 = vector.multi_reduction <add>, %6, %cst [1] : vector<639x32xf32> to vector<639xf32>
    %10 = vector.shape_cast %9 : vector<639xf32> to vector<639x1xf32>
    %cst_5 = arith.constant 3.200000e+01 : f32
    %11 = vector.broadcast %cst_5 : f32 to vector<639x1xf32>
    %12 = arith.divf %10, %11 : vector<639x1xf32>
    %13 = vector.broadcast %12 : vector<639x1xf32> to vector<639x32xf32>
    %14 = arith.subf %6, %13 : vector<639x32xf32>
    %15 = arith.mulf %14, %14 : vector<639x32xf32>
    %cst_6 = arith.constant dense<0.000000e+00> : vector<639xf32>
    %16 = vector.multi_reduction <add>, %15, %cst_6 [1] : vector<639x32xf32> to vector<639xf32>
    %17 = vector.shape_cast %16 : vector<639xf32> to vector<639x1xf32>
    %cst_7 = arith.constant 3.200000e+01 : f32
    %18 = vector.broadcast %cst_7 : f32 to vector<639x1xf32>
    %19 = arith.divf %17, %18 : vector<639x1xf32>
    %20 = vector.broadcast %12 : vector<639x1xf32> to vector<639x32xf32>
    %21 = arith.subf %6, %20 : vector<639x32xf32>
    %cst_8 = arith.constant 9.99999974E-6 : f32
    %22 = vector.broadcast %cst_8 : f32 to vector<639x1xf32>
    %23 = arith.addf %19, %22 : vector<639x1xf32>
    %24 = math.rsqrt %23 : vector<639x1xf32>
    %25 = vector.broadcast %24 : vector<639x1xf32> to vector<639x32xf32>
    %26 = arith.mulf %21, %25 : vector<639x32xf32>
    %27 = vector.broadcast %7 : vector<1x32xf32> to vector<639x32xf32>
    %28 = arith.mulf %26, %27 : vector<639x32xf32>
    %29 = vector.broadcast %8 : vector<1x32xf32> to vector<639x32xf32>
    %30 = arith.addf %28, %29 : vector<639x32xf32>
    %31 = arith.mulf %30, %30 : vector<639x32xf32>
    %32 = arith.mulf %30, %31 : vector<639x32xf32>
    %cst_9 = arith.constant 4.471500e-02 : f32
    %33 = vector.broadcast %cst_9 : f32 to vector<639x32xf32>
    %34 = arith.mulf %33, %32 : vector<639x32xf32>
    %35 = arith.addf %30, %34 : vector<639x32xf32>
    %cst_10 = arith.constant 0.797884583 : f32
    %36 = vector.broadcast %cst_10 : f32 to vector<639x32xf32>
    %37 = arith.mulf %36, %35 : vector<639x32xf32>
    %38 = math.tanh %37 : vector<639x32xf32>
    %cst_11 = arith.constant 1.000000e+00 : f32
    %39 = vector.broadcast %cst_11 : f32 to vector<639x32xf32>
    %40 = arith.addf %39, %38 : vector<639x32xf32>
    %cst_12 = arith.constant 5.000000e-01 : f32
    %41 = vector.broadcast %cst_12 : f32 to vector<639x32xf32>
    %42 = arith.mulf %41, %40 : vector<639x32xf32>
    %43 = arith.mulf %30, %42 : vector<639x32xf32>
    %c0_13 = arith.constant 0 : index
    %c0_14 = arith.constant 0 : index
    %44 = vector.load %arg7[%c0_13, %c0_14] : memref<640x32xf32, #tpu.memory_space<vmem>>, vector<639x32xf32>
    tpu.vector_store %arg7[%c0_13, %c0_14], %43 {strides = array<i32>} : memref<640x32xf32, #tpu.memory_space<vmem>>, vector<639x32xf32>,
    %c0_15 = arith.constant 0 : index
    %c0_16 = arith.constant 0 : index
    %45 = tpu.strided_load %arg7[%c0_15, %c0_16] {strides = array<i32: 2, 1>} : memref<640x32xf32, #tpu.memory_space<vmem>>, vector<320x32xf32>
    %c1 = arith.constant 1 : index
    %c0_17 = arith.constant 0 : index
    %46 = tpu.strided_load %arg7[%c1, %c0_17] {strides = array<i32: 2, 1>} : memref<640x32xf32, #tpu.memory_space<vmem>>, vector<319x32xf32>
    %47 = vector.extract_strided_slice %45 {offsets = [0, 0], sizes = [319, 32], strides = [1, 1]} : vector<320x32xf32> to vector<319x32xf32>
    %48 = vector.extract_strided_slice %45 {offsets = [1, 0], sizes = [319, 32], strides = [1, 1]} : vector<320x32xf32> to vector<319x32xf32>
    %49 = tpu.concatenate %47, %46, %48 in 1 : vector<319x32xf32>, vector<319x32xf32>, vector<319x32xf32> -> vector<319x96xf32>
    %50 = arith.truncf %49 : vector<319x96xf32> to vector<319x96xbf16>
    %c0_18 = arith.constant 0 : index
    %c0_19 = arith.constant 0 : index
    %c0_20 = arith.constant 0 : index
    %51 = vector.load %arg2[%c0_18, %c0_19, %c0_20] : memref<6x96x32xbf16, #tpu.memory_space<vmem>>, vector<1x96x32xbf16>
    %52 = vector.shape_cast %51 : vector<1x96x32xbf16> to vector<96x32xbf16>
    %cst_21 = arith.constant dense<0.000000e+00> : vector<319x32xf32>
    %53 = tpu.matmul %50, %52, %cst_21 {dimension_numbers = #tpu.dot_dimension_numbers<[1], [0], [0], [1], [0, 0, 1, 1], [], []>} : vector<319x96xbf16>, vector<96x32xbf16>, vector<319x32xf32> -> vector<319x32xf32>
    %c1_22 = arith.constant 1 : index
    %c0_23 = arith.constant 0 : index
    %c0_24 = arith.constant 0 : index
    %54 = vector.load %arg3[%c1_22, %c0_23, %c0_24] : memref<7x8x32xf32, #tpu.memory_space<vmem>>, vector<1x8x32xf32>
    %55 = vector.shape_cast %54 : vector<1x8x32xf32> to vector<8x32xf32>
    %56 = vector.extract_strided_slice %55 {offsets = [0, 0], sizes = [1, 32], strides = [1, 1]} : vector<8x32xf32> to vector<1x32xf32>
    %57 = vector.broadcast %56 : vector<1x32xf32> to vector<319x32xf32>
    %58 = arith.addf %53, %57 : vector<319x32xf32>
    %59 = vector.extract_strided_slice %55 {offsets = [1, 0], sizes = [1, 32], strides = [1, 1]} : vector<8x32xf32> to vector<1x32xf32>
    %60 = vector.extract_strided_slice %55 {offsets = [2, 0], sizes = [1, 32], strides = [1, 1]} : vector<8x32xf32> to vector<1x32xf32>
    %cst_25 = arith.constant dense<0.000000e+00> : vector<319xf32>
    %61 = vector.multi_reduction <add>, %58, %cst_25 [1] : vector<319x32xf32> to vector<319xf32>
    %62 = vector.shape_cast %61 : vector<319xf32> to vector<319x1xf32>
    %cst_26 = arith.constant 3.200000e+01 : f32
    %63 = vector.broadcast %cst_26 : f32 to vector<319x1xf32>
    %64 = arith.divf %62, %63 : vector<319x1xf32>
    %65 = vector.broadcast %64 : vector<319x1xf32> to vector<319x32xf32>
    %66 = arith.subf %58, %65 : vector<319x32xf32>
    %67 = arith.mulf %66, %66 : vector<319x32xf32>
    %cst_27 = arith.constant dense<0.000000e+00> : vector<319xf32>
    %68 = vector.multi_reduction <add>, %67, %cst_27 [1] : vector<319x32xf32> to vector<319xf32>
    %69 = vector.shape_cast %68 : vector<319xf32> to vector<319x1xf32>
    %cst_28 = arith.constant 3.200000e+01 : f32
    %70 = vector.broadcast %cst_28 : f32 to vector<319x1xf32>
    %71 = arith.divf %69, %70 : vector<319x1xf32>
    %72 = vector.broadcast %64 : vector<319x1xf32> to vector<319x32xf32>
    %73 = arith.subf %58, %72 : vector<319x32xf32>
    %cst_29 = arith.constant 9.99999974E-6 : f32
    %74 = vector.broadcast %cst_29 : f32 to vector<319x1xf32>
    %75 = arith.addf %71, %74 : vector<319x1xf32>
    %76 = math.rsqrt %75 : vector<319x1xf32>
    %77 = vector.broadcast %76 : vector<319x1xf32> to vector<319x32xf32>
    %78 = arith.mulf %73, %77 : vector<319x32xf32>
    %79 = vector.broadcast %59 : vector<1x32xf32> to vector<319x32xf32>
    %80 = arith.mulf %78, %79 : vector<319x32xf32>
    %81 = vector.broadcast %60 : vector<1x32xf32> to vector<319x32xf32>
    %82 = arith.addf %80, %81 : vector<319x32xf32>
    %83 = arith.mulf %82, %82 : vector<319x32xf32>
    %84 = arith.mulf %82, %83 : vector<319x32xf32>
    %cst_30 = arith.constant 4.471500e-02 : f32
    %85 = vector.broadcast %cst_30 : f32 to vector<319x32xf32>
    %86 = arith.mulf %85, %84 : vector<319x32xf32>
    %87 = arith.addf %82, %86 : vector<319x32xf32>
    %cst_31 = arith.constant 0.797884583 : f32
    %88 = vector.broadcast %cst_31 : f32 to vector<319x32xf32>
    %89 = arith.mulf %88, %87 : vector<319x32xf32>
    %90 = math.tanh %89 : vector<319x32xf32>
    %cst_32 = arith.constant 1.000000e+00 : f32
    %91 = vector.broadcast %cst_32 : f32 to vector<319x32xf32>
    %92 = arith.addf %91, %90 : vector<319x32xf32>
    %cst_33 = arith.constant 5.000000e-01 : f32
    %93 = vector.broadcast %cst_33 : f32 to vector<319x32xf32>
    %94 = arith.mulf %93, %92 : vector<319x32xf32>
    %95 = arith.mulf %82, %94 : vector<319x32xf32>
    %c0_34 = arith.constant 0 : index
    %c0_35 = arith.constant 0 : index
    %96 = vector.load %arg8[%c0_34, %c0_35] : memref<640x32xf32, #tpu.memory_space<vmem>>, vector<319x32xf32>
    tpu.vector_store %arg8[%c0_34, %c0_35], %95 {strides = array<i32>} : memref<640x32xf32, #tpu.memory_space<vmem>>, vector<319x32xf32>,
    %c0_36 = arith.constant 0 : index
    %c0_37 = arith.constant 0 : index
    %97 = tpu.strided_load %arg8[%c0_36, %c0_37] {strides = array<i32: 2, 1>} : memref<640x32xf32, #tpu.memory_space<vmem>>, vector<160x32xf32>
    %c1_38 = arith.constant 1 : index
    %c0_39 = arith.constant 0 : index
    %98 = tpu.strided_load %arg8[%c1_38, %c0_39] {strides = array<i32: 2, 1>} : memref<640x32xf32, #tpu.memory_space<vmem>>, vector<159x32xf32>
    %99 = vector.extract_strided_slice %97 {offsets = [0, 0], sizes = [159, 32], strides = [1, 1]} : vector<160x32xf32> to vector<159x32xf32>
    %100 = vector.extract_strided_slice %97 {offsets = [1, 0], sizes = [159, 32], strides = [1, 1]} : vector<160x32xf32> to vector<159x32xf32>
    %101 = tpu.concatenate %99, %98, %100 in 1 : vector<159x32xf32>, vector<159x32xf32>, vector<159x32xf32> -> vector<159x96xf32>
    %102 = arith.truncf %101 : vector<159x96xf32> to vector<159x96xbf16>
    %c1_40 = arith.constant 1 : index
    %c0_41 = arith.constant 0 : index
    %c0_42 = arith.constant 0 : index
    %103 = vector.load %arg2[%c1_40, %c0_41, %c0_42] : memref<6x96x32xbf16, #tpu.memory_space<vmem>>, vector<1x96x32xbf16>
    %104 = vector.shape_cast %103 : vector<1x96x32xbf16> to vector<96x32xbf16>
    %cst_43 = arith.constant dense<0.000000e+00> : vector<159x32xf32>
    %105 = tpu.matmul %102, %104, %cst_43 {dimension_numbers = #tpu.dot_dimension_numbers<[1], [0], [0], [1], [0, 0, 1, 1], [], []>} : vector<159x96xbf16>, vector<96x32xbf16>, vector<159x32xf32> -> vector<159x32xf32>
    %c2 = arith.constant 2 : index
    %c0_44 = arith.constant 0 : index
    %c0_45 = arith.constant 0 : index
    %106 = vector.load %arg3[%c2, %c0_44, %c0_45] : memref<7x8x32xf32, #tpu.memory_space<vmem>>, vector<1x8x32xf32>
    %107 = vector.shape_cast %106 : vector<1x8x32xf32> to vector<8x32xf32>
    %108 = vector.extract_strided_slice %107 {offsets = [0, 0], sizes = [1, 32], strides = [1, 1]} : vector<8x32xf32> to vector<1x32xf32>
    %109 = vector.broadcast %108 : vector<1x32xf32> to vector<159x32xf32>
    %110 = arith.addf %105, %109 : vector<159x32xf32>
    %111 = vector.extract_strided_slice %107 {offsets = [1, 0], sizes = [1, 32], strides = [1, 1]} : vector<8x32xf32> to vector<1x32xf32>
    %112 = vector.extract_strided_slice %107 {offsets = [2, 0], sizes = [1, 32], strides = [1, 1]} : vector<8x32xf32> to vector<1x32xf32>
    %cst_46 = arith.constant dense<0.000000e+00> : vector<159xf32>
    %113 = vector.multi_reduction <add>, %110, %cst_46 [1] : vector<159x32xf32> to vector<159xf32>
    %114 = vector.shape_cast %113 : vector<159xf32> to vector<159x1xf32>
    %cst_47 = arith.constant 3.200000e+01 : f32
    %115 = vector.broadcast %cst_47 : f32 to vector<159x1xf32>
    %116 = arith.divf %114, %115 : vector<159x1xf32>
    %117 = vector.broadcast %116 : vector<159x1xf32> to vector<159x32xf32>
    %118 = arith.subf %110, %117 : vector<159x32xf32>
    %119 = arith.mulf %118, %118 : vector<159x32xf32>
    %cst_48 = arith.constant dense<0.000000e+00> : vector<159xf32>
    %120 = vector.multi_reduction <add>, %119, %cst_48 [1] : vector<159x32xf32> to vector<159xf32>
    %121 = vector.shape_cast %120 : vector<159xf32> to vector<159x1xf32>
    %cst_49 = arith.constant 3.200000e+01 : f32
    %122 = vector.broadcast %cst_49 : f32 to vector<159x1xf32>
    %123 = arith.divf %121, %122 : vector<159x1xf32>
    %124 = vector.broadcast %116 : vector<159x1xf32> to vector<159x32xf32>
    %125 = arith.subf %110, %124 : vector<159x32xf32>
    %cst_50 = arith.constant 9.99999974E-6 : f32
    %126 = vector.broadcast %cst_50 : f32 to vector<159x1xf32>
    %127 = arith.addf %123, %126 : vector<159x1xf32>
    %128 = math.rsqrt %127 : vector<159x1xf32>
    %129 = vector.broadcast %128 : vector<159x1xf32> to vector<159x32xf32>
    %130 = arith.mulf %125, %129 : vector<159x32xf32>
    %131 = vector.broadcast %111 : vector<1x32xf32> to vector<159x32xf32>
    %132 = arith.mulf %130, %131 : vector<159x32xf32>
    %133 = vector.broadcast %112 : vector<1x32xf32> to vector<159x32xf32>
    %134 = arith.addf %132, %133 : vector<159x32xf32>
    %135 = arith.mulf %134, %134 : vector<159x32xf32>
    %136 = arith.mulf %134, %135 : vector<159x32xf32>
    %cst_51 = arith.constant 4.471500e-02 : f32
    %137 = vector.broadcast %cst_51 : f32 to vector<159x32xf32>
    %138 = arith.mulf %137, %136 : vector<159x32xf32>
    %139 = arith.addf %134, %138 : vector<159x32xf32>
    %cst_52 = arith.constant 0.797884583 : f32
    %140 = vector.broadcast %cst_52 : f32 to vector<159x32xf32>
    %141 = arith.mulf %140, %139 : vector<159x32xf32>
    %142 = math.tanh %141 : vector<159x32xf32>
    %cst_53 = arith.constant 1.000000e+00 : f32
    %143 = vector.broadcast %cst_53 : f32 to vector<159x32xf32>
    %144 = arith.addf %143, %142 : vector<159x32xf32>
    %cst_54 = arith.constant 5.000000e-01 : f32
    %145 = vector.broadcast %cst_54 : f32 to vector<159x32xf32>
    %146 = arith.mulf %145, %144 : vector<159x32xf32>
    %147 = arith.mulf %134, %146 : vector<159x32xf32>
    %c0_55 = arith.constant 0 : index
    %c0_56 = arith.constant 0 : index
    %148 = vector.load %arg7[%c0_55, %c0_56] : memref<640x32xf32, #tpu.memory_space<vmem>>, vector<159x32xf32>
    tpu.vector_store %arg7[%c0_55, %c0_56], %147 {strides = array<i32>} : memref<640x32xf32, #tpu.memory_space<vmem>>, vector<159x32xf32>,
    %c0_57 = arith.constant 0 : index
    %c0_58 = arith.constant 0 : index
    %149 = tpu.strided_load %arg7[%c0_57, %c0_58] {strides = array<i32: 2, 1>} : memref<640x32xf32, #tpu.memory_space<vmem>>, vector<80x32xf32>
    %c1_59 = arith.constant 1 : index
    %c0_60 = arith.constant 0 : index
    %150 = tpu.strided_load %arg7[%c1_59, %c0_60] {strides = array<i32: 2, 1>} : memref<640x32xf32, #tpu.memory_space<vmem>>, vector<79x32xf32>
    %151 = vector.extract_strided_slice %149 {offsets = [0, 0], sizes = [79, 32], strides = [1, 1]} : vector<80x32xf32> to vector<79x32xf32>
    %152 = vector.extract_strided_slice %149 {offsets = [1, 0], sizes = [79, 32], strides = [1, 1]} : vector<80x32xf32> to vector<79x32xf32>
    %153 = tpu.concatenate %151, %150, %152 in 1 : vector<79x32xf32>, vector<79x32xf32>, vector<79x32xf32> -> vector<79x96xf32>
    %154 = arith.truncf %153 : vector<79x96xf32> to vector<79x96xbf16>
    %c2_61 = arith.constant 2 : index
    %c0_62 = arith.constant 0 : index
    %c0_63 = arith.constant 0 : index
    %155 = vector.load %arg2[%c2_61, %c0_62, %c0_63] : memref<6x96x32xbf16, #tpu.memory_space<vmem>>, vector<1x96x32xbf16>
    %156 = vector.shape_cast %155 : vector<1x96x32xbf16> to vector<96x32xbf16>
    %cst_64 = arith.constant dense<0.000000e+00> : vector<79x32xf32>
    %157 = tpu.matmul %154, %156, %cst_64 {dimension_numbers = #tpu.dot_dimension_numbers<[1], [0], [0], [1], [0, 0, 1, 1], [], []>} : vector<79x96xbf16>, vector<96x32xbf16>, vector<79x32xf32> -> vector<79x32xf32>
    %c3 = arith.constant 3 : index
    %c0_65 = arith.constant 0 : index
    %c0_66 = arith.constant 0 : index
    %158 = vector.load %arg3[%c3, %c0_65, %c0_66] : memref<7x8x32xf32, #tpu.memory_space<vmem>>, vector<1x8x32xf32>
    %159 = vector.shape_cast %158 : vector<1x8x32xf32> to vector<8x32xf32>
    %160 = vector.extract_strided_slice %159 {offsets = [0, 0], sizes = [1, 32], strides = [1, 1]} : vector<8x32xf32> to vector<1x32xf32>
    %161 = vector.broadcast %160 : vector<1x32xf32> to vector<79x32xf32>
    %162 = arith.addf %157, %161 : vector<79x32xf32>
    %163 = vector.extract_strided_slice %159 {offsets = [1, 0], sizes = [1, 32], strides = [1, 1]} : vector<8x32xf32> to vector<1x32xf32>
    %164 = vector.extract_strided_slice %159 {offsets = [2, 0], sizes = [1, 32], strides = [1, 1]} : vector<8x32xf32> to vector<1x32xf32>
    %cst_67 = arith.constant dense<0.000000e+00> : vector<79xf32>
    %165 = vector.multi_reduction <add>, %162, %cst_67 [1] : vector<79x32xf32> to vector<79xf32>
    %166 = vector.shape_cast %165 : vector<79xf32> to vector<79x1xf32>
    %cst_68 = arith.constant 3.200000e+01 : f32
    %167 = vector.broadcast %cst_68 : f32 to vector<79x1xf32>
    %168 = arith.divf %166, %167 : vector<79x1xf32>
    %169 = vector.broadcast %168 : vector<79x1xf32> to vector<79x32xf32>
    %170 = arith.subf %162, %169 : vector<79x32xf32>
    %171 = arith.mulf %170, %170 : vector<79x32xf32>
    %cst_69 = arith.constant dense<0.000000e+00> : vector<79xf32>
    %172 = vector.multi_reduction <add>, %171, %cst_69 [1] : vector<79x32xf32> to vector<79xf32>
    %173 = vector.shape_cast %172 : vector<79xf32> to vector<79x1xf32>
    %cst_70 = arith.constant 3.200000e+01 : f32
    %174 = vector.broadcast %cst_70 : f32 to vector<79x1xf32>
    %175 = arith.divf %173, %174 : vector<79x1xf32>
    %176 = vector.broadcast %168 : vector<79x1xf32> to vector<79x32xf32>
    %177 = arith.subf %162, %176 : vector<79x32xf32>
    %cst_71 = arith.constant 9.99999974E-6 : f32
    %178 = vector.broadcast %cst_71 : f32 to vector<79x1xf32>
    %179 = arith.addf %175, %178 : vector<79x1xf32>
    %180 = math.rsqrt %179 : vector<79x1xf32>
    %181 = vector.broadcast %180 : vector<79x1xf32> to vector<79x32xf32>
    %182 = arith.mulf %177, %181 : vector<79x32xf32>
    %183 = vector.broadcast %163 : vector<1x32xf32> to vector<79x32xf32>
    %184 = arith.mulf %182, %183 : vector<79x32xf32>
    %185 = vector.broadcast %164 : vector<1x32xf32> to vector<79x32xf32>
    %186 = arith.addf %184, %185 : vector<79x32xf32>
    %187 = arith.mulf %186, %186 : vector<79x32xf32>
    %188 = arith.mulf %186, %187 : vector<79x32xf32>
    %cst_72 = arith.constant 4.471500e-02 : f32
    %189 = vector.broadcast %cst_72 : f32 to vector<79x32xf32>
    %190 = arith.mulf %189, %188 : vector<79x32xf32>
    %191 = arith.addf %186, %190 : vector<79x32xf32>
    %cst_73 = arith.constant 0.797884583 : f32
    %192 = vector.broadcast %cst_73 : f32 to vector<79x32xf32>
    %193 = arith.mulf %192, %191 : vector<79x32xf32>
    %194 = math.tanh %193 : vector<79x32xf32>
    %cst_74 = arith.constant 1.000000e+00 : f32
    %195 = vector.broadcast %cst_74 : f32 to vector<79x32xf32>
    %196 = arith.addf %195, %194 : vector<79x32xf32>
    %cst_75 = arith.constant 5.000000e-01 : f32
    %197 = vector.broadcast %cst_75 : f32 to vector<79x32xf32>
    %198 = arith.mulf %197, %196 : vector<79x32xf32>
    %199 = arith.mulf %186, %198 : vector<79x32xf32>
    %c0_76 = arith.constant 0 : index
    %c0_77 = arith.constant 0 : index
    %200 = vector.load %arg8[%c0_76, %c0_77] : memref<640x32xf32, #tpu.memory_space<vmem>>, vector<79x32xf32>
    tpu.vector_store %arg8[%c0_76, %c0_77], %199 {strides = array<i32>} : memref<640x32xf32, #tpu.memory_space<vmem>>, vector<79x32xf32>,
    %c0_78 = arith.constant 0 : index
    %c0_79 = arith.constant 0 : index
    %201 = tpu.strided_load %arg8[%c0_78, %c0_79] {strides = array<i32: 2, 1>} : memref<640x32xf32, #tpu.memory_space<vmem>>, vector<40x32xf32>
    %c1_80 = arith.constant 1 : index
    %c0_81 = arith.constant 0 : index
    %202 = tpu.strided_load %arg8[%c1_80, %c0_81] {strides = array<i32: 2, 1>} : memref<640x32xf32, #tpu.memory_space<vmem>>, vector<39x32xf32>
    %203 = vector.extract_strided_slice %201 {offsets = [0, 0], sizes = [39, 32], strides = [1, 1]} : vector<40x32xf32> to vector<39x32xf32>
    %204 = vector.extract_strided_slice %201 {offsets = [1, 0], sizes = [39, 32], strides = [1, 1]} : vector<40x32xf32> to vector<39x32xf32>
    %205 = tpu.concatenate %203, %202, %204 in 1 : vector<39x32xf32>, vector<39x32xf32>, vector<39x32xf32> -> vector<39x96xf32>
    %206 = arith.truncf %205 : vector<39x96xf32> to vector<39x96xbf16>
    %c3_82 = arith.constant 3 : index
    %c0_83 = arith.constant 0 : index
    %c0_84 = arith.constant 0 : index
    %207 = vector.load %arg2[%c3_82, %c0_83, %c0_84] : memref<6x96x32xbf16, #tpu.memory_space<vmem>>, vector<1x96x32xbf16>
    %208 = vector.shape_cast %207 : vector<1x96x32xbf16> to vector<96x32xbf16>
    %cst_85 = arith.constant dense<0.000000e+00> : vector<39x32xf32>
    %209 = tpu.matmul %206, %208, %cst_85 {dimension_numbers = #tpu.dot_dimension_numbers<[1], [0], [0], [1], [0, 0, 1, 1], [], []>} : vector<39x96xbf16>, vector<96x32xbf16>, vector<39x32xf32> -> vector<39x32xf32>
    %c4 = arith.constant 4 : index
    %c0_86 = arith.constant 0 : index
    %c0_87 = arith.constant 0 : index
    %210 = vector.load %arg3[%c4, %c0_86, %c0_87] : memref<7x8x32xf32, #tpu.memory_space<vmem>>, vector<1x8x32xf32>
    %211 = vector.shape_cast %210 : vector<1x8x32xf32> to vector<8x32xf32>
    %212 = vector.extract_strided_slice %211 {offsets = [0, 0], sizes = [1, 32], strides = [1, 1]} : vector<8x32xf32> to vector<1x32xf32>
    %213 = vector.broadcast %212 : vector<1x32xf32> to vector<39x32xf32>
    %214 = arith.addf %209, %213 : vector<39x32xf32>
    %215 = vector.extract_strided_slice %211 {offsets = [1, 0], sizes = [1, 32], strides = [1, 1]} : vector<8x32xf32> to vector<1x32xf32>
    %216 = vector.extract_strided_slice %211 {offsets = [2, 0], sizes = [1, 32], strides = [1, 1]} : vector<8x32xf32> to vector<1x32xf32>
    %cst_88 = arith.constant dense<0.000000e+00> : vector<39xf32>
    %217 = vector.multi_reduction <add>, %214, %cst_88 [1] : vector<39x32xf32> to vector<39xf32>
    %218 = vector.shape_cast %217 : vector<39xf32> to vector<39x1xf32>
    %cst_89 = arith.constant 3.200000e+01 : f32
    %219 = vector.broadcast %cst_89 : f32 to vector<39x1xf32>
    %220 = arith.divf %218, %219 : vector<39x1xf32>
    %221 = vector.broadcast %220 : vector<39x1xf32> to vector<39x32xf32>
    %222 = arith.subf %214, %221 : vector<39x32xf32>
    %223 = arith.mulf %222, %222 : vector<39x32xf32>
    %cst_90 = arith.constant dense<0.000000e+00> : vector<39xf32>
    %224 = vector.multi_reduction <add>, %223, %cst_90 [1] : vector<39x32xf32> to vector<39xf32>
    %225 = vector.shape_cast %224 : vector<39xf32> to vector<39x1xf32>
    %cst_91 = arith.constant 3.200000e+01 : f32
    %226 = vector.broadcast %cst_91 : f32 to vector<39x1xf32>
    %227 = arith.divf %225, %226 : vector<39x1xf32>
    %228 = vector.broadcast %220 : vector<39x1xf32> to vector<39x32xf32>
    %229 = arith.subf %214, %228 : vector<39x32xf32>
    %cst_92 = arith.constant 9.99999974E-6 : f32
    %230 = vector.broadcast %cst_92 : f32 to vector<39x1xf32>
    %231 = arith.addf %227, %230 : vector<39x1xf32>
    %232 = math.rsqrt %231 : vector<39x1xf32>
    %233 = vector.broadcast %232 : vector<39x1xf32> to vector<39x32xf32>
    %234 = arith.mulf %229, %233 : vector<39x32xf32>
    %235 = vector.broadcast %215 : vector<1x32xf32> to vector<39x32xf32>
    %236 = arith.mulf %234, %235 : vector<39x32xf32>
    %237 = vector.broadcast %216 : vector<1x32xf32> to vector<39x32xf32>
    %238 = arith.addf %236, %237 : vector<39x32xf32>
    %239 = arith.mulf %238, %238 : vector<39x32xf32>
    %240 = arith.mulf %238, %239 : vector<39x32xf32>
    %cst_93 = arith.constant 4.471500e-02 : f32
    %241 = vector.broadcast %cst_93 : f32 to vector<39x32xf32>
    %242 = arith.mulf %241, %240 : vector<39x32xf32>
    %243 = arith.addf %238, %242 : vector<39x32xf32>
    %cst_94 = arith.constant 0.797884583 : f32
    %244 = vector.broadcast %cst_94 : f32 to vector<39x32xf32>
    %245 = arith.mulf %244, %243 : vector<39x32xf32>
    %246 = math.tanh %245 : vector<39x32xf32>
    %cst_95 = arith.constant 1.000000e+00 : f32
    %247 = vector.broadcast %cst_95 : f32 to vector<39x32xf32>
    %248 = arith.addf %247, %246 : vector<39x32xf32>
    %cst_96 = arith.constant 5.000000e-01 : f32
    %249 = vector.broadcast %cst_96 : f32 to vector<39x32xf32>
    %250 = arith.mulf %249, %248 : vector<39x32xf32>
    %251 = arith.mulf %238, %250 : vector<39x32xf32>
    %c0_97 = arith.constant 0 : index
    %c0_98 = arith.constant 0 : index
    %252 = vector.load %arg7[%c0_97, %c0_98] : memref<640x32xf32, #tpu.memory_space<vmem>>, vector<39x32xf32>
    tpu.vector_store %arg7[%c0_97, %c0_98], %251 {strides = array<i32>} : memref<640x32xf32, #tpu.memory_space<vmem>>, vector<39x32xf32>,
    %c0_99 = arith.constant 0 : index
    %c0_100 = arith.constant 0 : index
    %253 = tpu.strided_load %arg7[%c0_99, %c0_100] {strides = array<i32: 2, 1>} : memref<640x32xf32, #tpu.memory_space<vmem>>, vector<19x32xf32>
    %c1_101 = arith.constant 1 : index
    %c0_102 = arith.constant 0 : index
    %254 = tpu.strided_load %arg7[%c1_101, %c0_102] {strides = array<i32: 2, 1>} : memref<640x32xf32, #tpu.memory_space<vmem>>, vector<19x32xf32>
    %255 = tpu.concatenate %253, %254 in 1 : vector<19x32xf32>, vector<19x32xf32> -> vector<19x64xf32>
    %256 = arith.truncf %255 : vector<19x64xf32> to vector<19x64xbf16>
    %c4_103 = arith.constant 4 : index
    %c0_104 = arith.constant 0 : index
    %c0_105 = arith.constant 0 : index
    %257 = vector.load %arg2[%c4_103, %c0_104, %c0_105] : memref<6x96x32xbf16, #tpu.memory_space<vmem>>, vector<1x64x32xbf16>
    %258 = vector.shape_cast %257 : vector<1x64x32xbf16> to vector<64x32xbf16>
    %cst_106 = arith.constant dense<0.000000e+00> : vector<19x32xf32>
    %259 = tpu.matmul %256, %258, %cst_106 {dimension_numbers = #tpu.dot_dimension_numbers<[1], [0], [0], [1], [0, 0, 1, 1], [], []>} : vector<19x64xbf16>, vector<64x32xbf16>, vector<19x32xf32> -> vector<19x32xf32>
    %c5 = arith.constant 5 : index
    %c0_107 = arith.constant 0 : index
    %c0_108 = arith.constant 0 : index
    %260 = vector.load %arg3[%c5, %c0_107, %c0_108] : memref<7x8x32xf32, #tpu.memory_space<vmem>>, vector<1x8x32xf32>
    %261 = vector.shape_cast %260 : vector<1x8x32xf32> to vector<8x32xf32>
    %262 = vector.extract_strided_slice %261 {offsets = [0, 0], sizes = [1, 32], strides = [1, 1]} : vector<8x32xf32> to vector<1x32xf32>
    %263 = vector.broadcast %262 : vector<1x32xf32> to vector<19x32xf32>
    %264 = arith.addf %259, %263 : vector<19x32xf32>
    %265 = vector.extract_strided_slice %261 {offsets = [1, 0], sizes = [1, 32], strides = [1, 1]} : vector<8x32xf32> to vector<1x32xf32>
    %266 = vector.extract_strided_slice %261 {offsets = [2, 0], sizes = [1, 32], strides = [1, 1]} : vector<8x32xf32> to vector<1x32xf32>
    %cst_109 = arith.constant dense<0.000000e+00> : vector<19xf32>
    %267 = vector.multi_reduction <add>, %264, %cst_109 [1] : vector<19x32xf32> to vector<19xf32>
    %268 = vector.shape_cast %267 : vector<19xf32> to vector<19x1xf32>
    %cst_110 = arith.constant 3.200000e+01 : f32
    %269 = vector.broadcast %cst_110 : f32 to vector<19x1xf32>
    %270 = arith.divf %268, %269 : vector<19x1xf32>
    %271 = vector.broadcast %270 : vector<19x1xf32> to vector<19x32xf32>
    %272 = arith.subf %264, %271 : vector<19x32xf32>
    %273 = arith.mulf %272, %272 : vector<19x32xf32>
    %cst_111 = arith.constant dense<0.000000e+00> : vector<19xf32>
    %274 = vector.multi_reduction <add>, %273, %cst_111 [1] : vector<19x32xf32> to vector<19xf32>
    %275 = vector.shape_cast %274 : vector<19xf32> to vector<19x1xf32>
    %cst_112 = arith.constant 3.200000e+01 : f32
    %276 = vector.broadcast %cst_112 : f32 to vector<19x1xf32>
    %277 = arith.divf %275, %276 : vector<19x1xf32>
    %278 = vector.broadcast %270 : vector<19x1xf32> to vector<19x32xf32>
    %279 = arith.subf %264, %278 : vector<19x32xf32>
    %cst_113 = arith.constant 9.99999974E-6 : f32
    %280 = vector.broadcast %cst_113 : f32 to vector<19x1xf32>
    %281 = arith.addf %277, %280 : vector<19x1xf32>
    %282 = math.rsqrt %281 : vector<19x1xf32>
    %283 = vector.broadcast %282 : vector<19x1xf32> to vector<19x32xf32>
    %284 = arith.mulf %279, %283 : vector<19x32xf32>
    %285 = vector.broadcast %265 : vector<1x32xf32> to vector<19x32xf32>
    %286 = arith.mulf %284, %285 : vector<19x32xf32>
    %287 = vector.broadcast %266 : vector<1x32xf32> to vector<19x32xf32>
    %288 = arith.addf %286, %287 : vector<19x32xf32>
    %289 = arith.mulf %288, %288 : vector<19x32xf32>
    %290 = arith.mulf %288, %289 : vector<19x32xf32>
    %cst_114 = arith.constant 4.471500e-02 : f32
    %291 = vector.broadcast %cst_114 : f32 to vector<19x32xf32>
    %292 = arith.mulf %291, %290 : vector<19x32xf32>
    %293 = arith.addf %288, %292 : vector<19x32xf32>
    %cst_115 = arith.constant 0.797884583 : f32
    %294 = vector.broadcast %cst_115 : f32 to vector<19x32xf32>
    %295 = arith.mulf %294, %293 : vector<19x32xf32>
    %296 = math.tanh %295 : vector<19x32xf32>
    %cst_116 = arith.constant 1.000000e+00 : f32
    %297 = vector.broadcast %cst_116 : f32 to vector<19x32xf32>
    %298 = arith.addf %297, %296 : vector<19x32xf32>
    %cst_117 = arith.constant 5.000000e-01 : f32
    %299 = vector.broadcast %cst_117 : f32 to vector<19x32xf32>
    %300 = arith.mulf %299, %298 : vector<19x32xf32>
    %301 = arith.mulf %288, %300 : vector<19x32xf32>
    %c0_118 = arith.constant 0 : index
    %c0_119 = arith.constant 0 : index
    %302 = vector.load %arg8[%c0_118, %c0_119] : memref<640x32xf32, #tpu.memory_space<vmem>>, vector<19x32xf32>
    tpu.vector_store %arg8[%c0_118, %c0_119], %301 {strides = array<i32>} : memref<640x32xf32, #tpu.memory_space<vmem>>, vector<19x32xf32>,
    %c0_120 = arith.constant 0 : index
    %c0_121 = arith.constant 0 : index
    %303 = tpu.strided_load %arg8[%c0_120, %c0_121] {strides = array<i32: 2, 1>} : memref<640x32xf32, #tpu.memory_space<vmem>>, vector<9x32xf32>
    %c1_122 = arith.constant 1 : index
    %c0_123 = arith.constant 0 : index
    %304 = tpu.strided_load %arg8[%c1_122, %c0_123] {strides = array<i32: 2, 1>} : memref<640x32xf32, #tpu.memory_space<vmem>>, vector<9x32xf32>
    %305 = tpu.concatenate %303, %304 in 1 : vector<9x32xf32>, vector<9x32xf32> -> vector<9x64xf32>
    %306 = arith.truncf %305 : vector<9x64xf32> to vector<9x64xbf16>
    %c5_124 = arith.constant 5 : index
    %c0_125 = arith.constant 0 : index
    %c0_126 = arith.constant 0 : index
    %307 = vector.load %arg2[%c5_124, %c0_125, %c0_126] : memref<6x96x32xbf16, #tpu.memory_space<vmem>>, vector<1x64x32xbf16>
    %308 = vector.shape_cast %307 : vector<1x64x32xbf16> to vector<64x32xbf16>
    %cst_127 = arith.constant dense<0.000000e+00> : vector<9x32xf32>
    %309 = tpu.matmul %306, %308, %cst_127 {dimension_numbers = #tpu.dot_dimension_numbers<[1], [0], [0], [1], [0, 0, 1, 1], [], []>} : vector<9x64xbf16>, vector<64x32xbf16>, vector<9x32xf32> -> vector<9x32xf32>
    %c6 = arith.constant 6 : index
    %c0_128 = arith.constant 0 : index
    %c0_129 = arith.constant 0 : index
    %310 = vector.load %arg3[%c6, %c0_128, %c0_129] : memref<7x8x32xf32, #tpu.memory_space<vmem>>, vector<1x8x32xf32>
    %311 = vector.shape_cast %310 : vector<1x8x32xf32> to vector<8x32xf32>
    %312 = vector.extract_strided_slice %311 {offsets = [0, 0], sizes = [1, 32], strides = [1, 1]} : vector<8x32xf32> to vector<1x32xf32>
    %313 = vector.broadcast %312 : vector<1x32xf32> to vector<9x32xf32>
    %314 = arith.addf %309, %313 : vector<9x32xf32>
    %315 = vector.extract_strided_slice %311 {offsets = [1, 0], sizes = [1, 32], strides = [1, 1]} : vector<8x32xf32> to vector<1x32xf32>
    %316 = vector.extract_strided_slice %311 {offsets = [2, 0], sizes = [1, 32], strides = [1, 1]} : vector<8x32xf32> to vector<1x32xf32>
    %cst_130 = arith.constant dense<0.000000e+00> : vector<9xf32>
    %317 = vector.multi_reduction <add>, %314, %cst_130 [1] : vector<9x32xf32> to vector<9xf32>
    %318 = vector.shape_cast %317 : vector<9xf32> to vector<9x1xf32>
    %cst_131 = arith.constant 3.200000e+01 : f32
    %319 = vector.broadcast %cst_131 : f32 to vector<9x1xf32>
    %320 = arith.divf %318, %319 : vector<9x1xf32>
    %321 = vector.broadcast %320 : vector<9x1xf32> to vector<9x32xf32>
    %322 = arith.subf %314, %321 : vector<9x32xf32>
    %323 = arith.mulf %322, %322 : vector<9x32xf32>
    %cst_132 = arith.constant dense<0.000000e+00> : vector<9xf32>
    %324 = vector.multi_reduction <add>, %323, %cst_132 [1] : vector<9x32xf32> to vector<9xf32>
    %325 = vector.shape_cast %324 : vector<9xf32> to vector<9x1xf32>
    %cst_133 = arith.constant 3.200000e+01 : f32
    %326 = vector.broadcast %cst_133 : f32 to vector<9x1xf32>
    %327 = arith.divf %325, %326 : vector<9x1xf32>
    %328 = vector.broadcast %320 : vector<9x1xf32> to vector<9x32xf32>
    %329 = arith.subf %314, %328 : vector<9x32xf32>
    %cst_134 = arith.constant 9.99999974E-6 : f32
    %330 = vector.broadcast %cst_134 : f32 to vector<9x1xf32>
    %331 = arith.addf %327, %330 : vector<9x1xf32>
    %332 = math.rsqrt %331 : vector<9x1xf32>
    %333 = vector.broadcast %332 : vector<9x1xf32> to vector<9x32xf32>
    %334 = arith.mulf %329, %333 : vector<9x32xf32>
    %335 = vector.broadcast %315 : vector<1x32xf32> to vector<9x32xf32>
    %336 = arith.mulf %334, %335 : vector<9x32xf32>
    %337 = vector.broadcast %316 : vector<1x32xf32> to vector<9x32xf32>
    %338 = arith.addf %336, %337 : vector<9x32xf32>
    %339 = arith.mulf %338, %338 : vector<9x32xf32>
    %340 = arith.mulf %338, %339 : vector<9x32xf32>
    %cst_135 = arith.constant 4.471500e-02 : f32
    %341 = vector.broadcast %cst_135 : f32 to vector<9x32xf32>
    %342 = arith.mulf %341, %340 : vector<9x32xf32>
    %343 = arith.addf %338, %342 : vector<9x32xf32>
    %cst_136 = arith.constant 0.797884583 : f32
    %344 = vector.broadcast %cst_136 : f32 to vector<9x32xf32>
    %345 = arith.mulf %344, %343 : vector<9x32xf32>
    %346 = math.tanh %345 : vector<9x32xf32>
    %cst_137 = arith.constant 1.000000e+00 : f32
    %347 = vector.broadcast %cst_137 : f32 to vector<9x32xf32>
    %348 = arith.addf %347, %346 : vector<9x32xf32>
    %cst_138 = arith.constant 5.000000e-01 : f32
    %349 = vector.broadcast %cst_138 : f32 to vector<9x32xf32>
    %350 = arith.mulf %349, %348 : vector<9x32xf32>
    %351 = arith.mulf %338, %350 : vector<9x32xf32>
    %c0_139 = arith.constant 0 : index
    %c0_140 = arith.constant 0 : index
    %352 = vector.load %arg7[%c0_139, %c0_140] : memref<640x32xf32, #tpu.memory_space<vmem>>, vector<9x32xf32>
    tpu.vector_store %arg7[%c0_139, %c0_140], %351 {strides = array<i32>} : memref<640x32xf32, #tpu.memory_space<vmem>>, vector<9x32xf32>,
    %c0_141 = arith.constant 0 : index
    %c0_142 = arith.constant 0 : index
    %353 = vector.load %arg7[%c0_141, %c0_142] : memref<640x32xf32, #tpu.memory_space<vmem>>, vector<9x32xf32>
    %c0_143 = arith.constant 0 : index
    %c0_144 = arith.constant 0 : index
    %354 = vector.load %arg5[%c0_143, %c0_144] : memref<8x32xf32, #tpu.memory_space<vmem>>, vector<8x32xf32>
    %355 = vector.extract_strided_slice %354 {offsets = [0, 0], sizes = [1, 32], strides = [1, 1]} : vector<8x32xf32> to vector<1x32xf32>
    %356 = vector.extract_strided_slice %354 {offsets = [1, 0], sizes = [1, 32], strides = [1, 1]} : vector<8x32xf32> to vector<1x32xf32>
    %cst_145 = arith.constant dense<0.000000e+00> : vector<9xf32>
    %357 = vector.multi_reduction <add>, %353, %cst_145 [1] : vector<9x32xf32> to vector<9xf32>
    %358 = vector.shape_cast %357 : vector<9xf32> to vector<9x1xf32>
    %cst_146 = arith.constant 3.200000e+01 : f32
    %359 = vector.broadcast %cst_146 : f32 to vector<9x1xf32>
    %360 = arith.divf %358, %359 : vector<9x1xf32>
    %361 = vector.broadcast %360 : vector<9x1xf32> to vector<9x32xf32>
    %362 = arith.subf %353, %361 : vector<9x32xf32>
    %363 = arith.mulf %362, %362 : vector<9x32xf32>
    %cst_147 = arith.constant dense<0.000000e+00> : vector<9xf32>
    %364 = vector.multi_reduction <add>, %363, %cst_147 [1] : vector<9x32xf32> to vector<9xf32>
    %365 = vector.shape_cast %364 : vector<9xf32> to vector<9x1xf32>
    %cst_148 = arith.constant 3.200000e+01 : f32
    %366 = vector.broadcast %cst_148 : f32 to vector<9x1xf32>
    %367 = arith.divf %365, %366 : vector<9x1xf32>
    %368 = vector.broadcast %360 : vector<9x1xf32> to vector<9x32xf32>
    %369 = arith.subf %353, %368 : vector<9x32xf32>
    %cst_149 = arith.constant 9.99999974E-6 : f32
    %370 = vector.broadcast %cst_149 : f32 to vector<9x1xf32>
    %371 = arith.addf %367, %370 : vector<9x1xf32>
    %372 = math.rsqrt %371 : vector<9x1xf32>
    %373 = vector.broadcast %372 : vector<9x1xf32> to vector<9x32xf32>
    %374 = arith.mulf %369, %373 : vector<9x32xf32>
    %375 = vector.broadcast %355 : vector<1x32xf32> to vector<9x32xf32>
    %376 = arith.mulf %374, %375 : vector<9x32xf32>
    %377 = vector.broadcast %356 : vector<1x32xf32> to vector<9x32xf32>
    %378 = arith.addf %376, %377 : vector<9x32xf32>
    %379 = arith.truncf %378 : vector<9x32xf32> to vector<9x32xbf16>
    %c0_150 = arith.constant 0 : index
    %c0_151 = arith.constant 0 : index
    %380 = vector.load %arg4[%c0_150, %c0_151] : memref<160x32xbf16, #tpu.memory_space<vmem>>, vector<32x32xbf16>
    %cst_152 = arith.constant dense<0.000000e+00> : vector<9x32xf32>
    %381 = tpu.matmul %379, %380, %cst_152 {dimension_numbers = #tpu.dot_dimension_numbers<[1], [0], [0], [1], [0, 0, 1, 1], [], []>} : vector<9x32xbf16>, vector<32x32xbf16>, vector<9x32xf32> -> vector<9x32xf32>
    %382 = vector.extract_strided_slice %354 {offsets = [2, 0], sizes = [1, 32], strides = [1, 1]} : vector<8x32xf32> to vector<1x32xf32>
    %383 = vector.broadcast %382 : vector<1x32xf32> to vector<9x32xf32>
    %384 = arith.addf %381, %383 : vector<9x32xf32>
    %cst_153 = arith.constant 0.000000e+00 : f32
    %385 = vector.broadcast %cst_153 : f32 to vector<2x32xf32>
    %cst_154 = arith.constant 0.000000e+00 : f32
    %386 = vector.broadcast %cst_154 : f32 to vector<1x32xf32>
    %387 = tpu.concatenate %385, %384, %386 in 0 : vector<2x32xf32>, vector<9x32xf32>, vector<1x32xf32> -> vector<12x32xf32>
    %388 = vector.extract_strided_slice %387 {offsets = [0, 0], sizes = [9, 32], strides = [1, 1]} : vector<12x32xf32> to vector<9x32xf32>
    %389 = vector.extract_strided_slice %387 {offsets = [1, 0], sizes = [9, 32], strides = [1, 1]} : vector<12x32xf32> to vector<9x32xf32>
    %390 = vector.extract_strided_slice %387 {offsets = [2, 0], sizes = [9, 32], strides = [1, 1]} : vector<12x32xf32> to vector<9x32xf32>
    %391 = vector.extract_strided_slice %387 {offsets = [3, 0], sizes = [9, 32], strides = [1, 1]} : vector<12x32xf32> to vector<9x32xf32>
    %392 = tpu.concatenate %388, %389, %390, %391 in 1 : vector<9x32xf32>, vector<9x32xf32>, vector<9x32xf32>, vector<9x32xf32> -> vector<9x128xf32>
    %393 = arith.truncf %392 : vector<9x128xf32> to vector<9x128xbf16>
    %c32 = arith.constant 32 : index
    %c0_155 = arith.constant 0 : index
    %394 = vector.load %arg4[%c32, %c0_155] : memref<160x32xbf16, #tpu.memory_space<vmem>>, vector<128x32xbf16>
    %cst_156 = arith.constant dense<0.000000e+00> : vector<9x32xf32>
    %395 = tpu.matmul %393, %394, %cst_156 {dimension_numbers = #tpu.dot_dimension_numbers<[1], [0], [0], [1], [0, 0, 1, 1], [], []>} : vector<9x128xbf16>, vector<128x32xbf16>, vector<9x32xf32> -> vector<9x32xf32>
    %396 = vector.extract_strided_slice %354 {offsets = [3, 0], sizes = [1, 32], strides = [1, 1]} : vector<8x32xf32> to vector<1x32xf32>
    %397 = vector.broadcast %396 : vector<1x32xf32> to vector<9x32xf32>
    %398 = arith.addf %395, %397 : vector<9x32xf32>
    %399 = arith.mulf %398, %398 : vector<9x32xf32>
    %400 = arith.mulf %398, %399 : vector<9x32xf32>
    %cst_157 = arith.constant 4.471500e-02 : f32
    %401 = vector.broadcast %cst_157 : f32 to vector<9x32xf32>
    %402 = arith.mulf %401, %400 : vector<9x32xf32>
    %403 = arith.addf %398, %402 : vector<9x32xf32>
    %cst_158 = arith.constant 0.797884583 : f32
    %404 = vector.broadcast %cst_158 : f32 to vector<9x32xf32>
    %405 = arith.mulf %404, %403 : vector<9x32xf32>
    %406 = math.tanh %405 : vector<9x32xf32>
    %cst_159 = arith.constant 1.000000e+00 : f32
    %407 = vector.broadcast %cst_159 : f32 to vector<9x32xf32>
    %408 = arith.addf %407, %406 : vector<9x32xf32>
    %cst_160 = arith.constant 5.000000e-01 : f32
    %409 = vector.broadcast %cst_160 : f32 to vector<9x32xf32>
    %410 = arith.mulf %409, %408 : vector<9x32xf32>
    %411 = arith.mulf %398, %410 : vector<9x32xf32>
    %412 = arith.addf %384, %411 : vector<9x32xf32>
    %c0_161 = arith.constant 0 : index
    %c0_162 = arith.constant 0 : index
    %c0_163 = arith.constant 0 : index
    %413 = vector.load %arg6[%c0_161, %c0_162, %c0_163] : memref<1x9x32xf32, #tpu.memory_space<vmem>>, vector<1x9x32xf32>
    %414 = vector.shape_cast %413 : vector<1x9x32xf32> to vector<9x32xf32>
    %415 = vector.shape_cast %412 : vector<9x32xf32> to vector<1x9x32xf32>
    tpu.vector_store %arg6[%c0_161, %c0_162, %c0_163], %415 {strides = array<i32>} : memref<1x9x32xf32, #tpu.memory_space<vmem>>, vector<1x9x32xf32>,
    return
  }
  func.func @transform_0(%arg0: i32) -> (i32, i32, i32) {
    %c0_i32 = arith.constant 0 : i32
    %c0_i32_0 = arith.constant 0 : i32
    %c0_i32_1 = arith.constant 0 : i32
    return %arg0, %c0_i32, %c0_i32_0 : i32, i32, i32
  }
  func.func @transform_1(%arg0: i32) -> (i32, i32, i32) {
    %c0_i32 = arith.constant 0 : i32
    %c0_i32_0 = arith.constant 0 : i32
    %c0_i32_1 = arith.constant 0 : i32
    %c0_i32_2 = arith.constant 0 : i32
    return %c0_i32, %c0_i32_0, %c0_i32_1 : i32, i32, i32
  }
  func.func @transform_2(%arg0: i32) -> (i32, i32, i32) {
    %c0_i32 = arith.constant 0 : i32
    %c0_i32_0 = arith.constant 0 : i32
    %c0_i32_1 = arith.constant 0 : i32
    %c0_i32_2 = arith.constant 0 : i32
    return %c0_i32, %c0_i32_0, %c0_i32_1 : i32, i32, i32
  }
  func.func @transform_3(%arg0: i32) -> (i32, i32) {
    %c0_i32 = arith.constant 0 : i32
    %c0_i32_0 = arith.constant 0 : i32
    %c0_i32_1 = arith.constant 0 : i32
    return %c0_i32, %c0_i32_0 : i32, i32
  }
  func.func @transform_4(%arg0: i32) -> (i32, i32) {
    %c0_i32 = arith.constant 0 : i32
    %c0_i32_0 = arith.constant 0 : i32
    %c0_i32_1 = arith.constant 0 : i32
    return %c0_i32, %c0_i32_0 : i32, i32
  }
  func.func @transform_5(%arg0: i32) -> (i32, i32, i32) {
    %c0_i32 = arith.constant 0 : i32
    %c0_i32_0 = arith.constant 0 : i32
    %c0_i32_1 = arith.constant 0 : i32
    return %arg0, %c0_i32, %c0_i32_0 : i32, i32, i32
  }
}

module attributes {stable_mosaic.version = 11 : i64} {
  func.func @_encoder_kernel(%arg0: i32, %arg1: i32, %arg2: memref<1x9x32xf32, #tpu.memory_space<vmem>>, %arg3: memref<1x96x192xbf16, #tpu.memory_space<vmem>>, %arg4: memref<1x8x96xf32, #tpu.memory_space<vmem>>, %arg5: memref<32x128xbf16, #tpu.memory_space<vmem>>, %arg6: memref<1x128xf32, #tpu.memory_space<vmem>>, %arg7: memref<1x9x128xf32, #tpu.memory_space<vmem>>, %arg8: memref<9x32xf32, #tpu.memory_space<vmem>>) attributes {dimension_semantics = [#tpu.dimension_semantics<parallel>, #tpu.dimension_semantics<arbitrary>], iteration_bounds = array<i64: 2, 3>, scalar_prefetch = 0 : i64, scratch_operands = 1 : i64, tpu.core_type = #tpu.core_type<tc>, window_params = [{transform_indices = @transform_0, window_bounds = array<i64: 1, 9, 32>}, {transform_indices = @transform_1, window_bounds = array<i64: 1, 96, 192>}, {transform_indices = @transform_2, window_bounds = array<i64: 1, 8, 96>}, {pipeline_mode = #tpu.pipeline_mode<synchronous>, transform_indices = @transform_3, window_bounds = array<i64: 32, 128>}, {pipeline_mode = #tpu.pipeline_mode<synchronous>, transform_indices = @transform_4, window_bounds = array<i64: 1, 128>}, {transform_indices = @transform_5, window_bounds = array<i64: 1, 9, 128>}]} {
    %c0_i32 = arith.constant 0 : i32
    %0 = arith.cmpi eq, %arg1, %c0_i32 : i32
    %1 = arith.extui %0 : i1 to i32
    %c0_i32_0 = arith.constant 0 : i32
    %2 = arith.cmpi ne, %1, %c0_i32_0 : i32
    scf.if %2 {
      %c0_44 = arith.constant 0 : index
      %c0_45 = arith.constant 0 : index
      %c0_46 = arith.constant 0 : index
      %160 = vector.load %arg2[%c0_44, %c0_45, %c0_46] : memref<1x9x32xf32, #tpu.memory_space<vmem>>, vector<1x9x32xf32>
      %161 = vector.shape_cast %160 : vector<1x9x32xf32> to vector<9x32xf32>
      %c0_47 = arith.constant 0 : index
      %c0_48 = arith.constant 0 : index
      %162 = vector.load %arg8[%c0_47, %c0_48] : memref<9x32xf32, #tpu.memory_space<vmem>>, vector<9x32xf32>
      tpu.vector_store %arg8[%c0_47, %c0_48], %161 {strides = array<i32>} : memref<9x32xf32, #tpu.memory_space<vmem>>, vector<9x32xf32>,
    } else {
    }
    %c0 = arith.constant 0 : index
    %c0_1 = arith.constant 0 : index
    %3 = vector.load %arg8[%c0, %c0_1] : memref<9x32xf32, #tpu.memory_space<vmem>>, vector<9x32xf32>
    %c0_2 = arith.constant 0 : index
    %c0_3 = arith.constant 0 : index
    %c0_4 = arith.constant 0 : index
    %4 = vector.load %arg3[%c0_2, %c0_3, %c0_4] : memref<1x96x192xbf16, #tpu.memory_space<vmem>>, vector<1x96x192xbf16>
    %5 = vector.shape_cast %4 : vector<1x96x192xbf16> to vector<96x192xbf16>
    %c0_5 = arith.constant 0 : index
    %c0_6 = arith.constant 0 : index
    %c0_7 = arith.constant 0 : index
    %6 = vector.load %arg4[%c0_5, %c0_6, %c0_7] : memref<1x8x96xf32, #tpu.memory_space<vmem>>, vector<1x8x96xf32>
    %7 = vector.shape_cast %6 : vector<1x8x96xf32> to vector<8x96xf32>
    %8 = vector.extract_strided_slice %7 {offsets = [0, 0], sizes = [1, 32], strides = [1, 1]} : vector<8x96xf32> to vector<1x32xf32>
    %9 = vector.extract_strided_slice %7 {offsets = [1, 0], sizes = [1, 32], strides = [1, 1]} : vector<8x96xf32> to vector<1x32xf32>
    %10 = vector.extract_strided_slice %7 {offsets = [2, 0], sizes = [1, 32], strides = [1, 1]} : vector<8x96xf32> to vector<1x32xf32>
    %11 = vector.extract_strided_slice %7 {offsets = [3, 0], sizes = [1, 32], strides = [1, 1]} : vector<8x96xf32> to vector<1x32xf32>
    %12 = vector.extract_strided_slice %7 {offsets = [4, 0], sizes = [1, 96], strides = [1, 1]} : vector<8x96xf32> to vector<1x96xf32>
    %13 = vector.extract_strided_slice %7 {offsets = [5, 0], sizes = [1, 32], strides = [1, 1]} : vector<8x96xf32> to vector<1x32xf32>
    %14 = vector.extract_strided_slice %7 {offsets = [6, 0], sizes = [1, 64], strides = [1, 1]} : vector<8x96xf32> to vector<1x64xf32>
    %15 = vector.extract_strided_slice %7 {offsets = [7, 0], sizes = [1, 32], strides = [1, 1]} : vector<8x96xf32> to vector<1x32xf32>
    %16 = vector.extract_strided_slice %5 {offsets = [0, 0], sizes = [32, 96], strides = [1, 1]} : vector<96x192xbf16> to vector<32x96xbf16>
    %17 = vector.extract_strided_slice %5 {offsets = [0, 96], sizes = [32, 32], strides = [1, 1]} : vector<96x192xbf16> to vector<32x32xbf16>
    %18 = vector.extract_strided_slice %5 {offsets = [0, 128], sizes = [32, 64], strides = [1, 1]} : vector<96x192xbf16> to vector<32x64xbf16>
    %19 = vector.extract_strided_slice %5 {offsets = [32, 0], sizes = [64, 32], strides = [1, 1]} : vector<96x192xbf16> to vector<64x32xbf16>
    %cst = arith.constant dense<0.000000e+00> : vector<9xf32>
    %20 = vector.multi_reduction <add>, %3, %cst [1] : vector<9x32xf32> to vector<9xf32>
    %21 = vector.shape_cast %20 : vector<9xf32> to vector<9x1xf32>
    %cst_8 = arith.constant 3.200000e+01 : f32
    %22 = vector.broadcast %cst_8 : f32 to vector<9x1xf32>
    %23 = arith.divf %21, %22 : vector<9x1xf32>
    %24 = vector.broadcast %23 : vector<9x1xf32> to vector<9x32xf32>
    %25 = arith.subf %3, %24 : vector<9x32xf32>
    %26 = arith.mulf %25, %25 : vector<9x32xf32>
    %cst_9 = arith.constant dense<0.000000e+00> : vector<9xf32>
    %27 = vector.multi_reduction <add>, %26, %cst_9 [1] : vector<9x32xf32> to vector<9xf32>
    %28 = vector.shape_cast %27 : vector<9xf32> to vector<9x1xf32>
    %cst_10 = arith.constant 3.200000e+01 : f32
    %29 = vector.broadcast %cst_10 : f32 to vector<9x1xf32>
    %30 = arith.divf %28, %29 : vector<9x1xf32>
    %31 = vector.broadcast %23 : vector<9x1xf32> to vector<9x32xf32>
    %32 = arith.subf %3, %31 : vector<9x32xf32>
    %cst_11 = arith.constant 9.99999974E-6 : f32
    %33 = vector.broadcast %cst_11 : f32 to vector<9x1xf32>
    %34 = arith.addf %30, %33 : vector<9x1xf32>
    %35 = math.rsqrt %34 : vector<9x1xf32>
    %36 = vector.broadcast %35 : vector<9x1xf32> to vector<9x32xf32>
    %37 = arith.mulf %32, %36 : vector<9x32xf32>
    %38 = vector.broadcast %8 : vector<1x32xf32> to vector<9x32xf32>
    %39 = arith.mulf %37, %38 : vector<9x32xf32>
    %40 = vector.broadcast %9 : vector<1x32xf32> to vector<9x32xf32>
    %41 = arith.addf %39, %40 : vector<9x32xf32>
    %42 = arith.truncf %41 : vector<9x32xf32> to vector<9x32xbf16>
    %cst_12 = arith.constant dense<0.000000e+00> : vector<9x96xf32>
    %43 = tpu.matmul %42, %16, %cst_12 {dimension_numbers = #tpu.dot_dimension_numbers<[1], [0], [0], [1], [0, 0, 1, 1], [], []>} : vector<9x32xbf16>, vector<32x96xbf16>, vector<9x96xf32> -> vector<9x96xf32>
    %44 = vector.broadcast %12 : vector<1x96xf32> to vector<9x96xf32>
    %45 = arith.addf %43, %44 : vector<9x96xf32>
    %46 = vector.extract_strided_slice %45 {offsets = [0, 0], sizes = [9, 8], strides = [1, 1]} : vector<9x96xf32> to vector<9x8xf32>
    %47 = vector.extract_strided_slice %45 {offsets = [0, 32], sizes = [9, 8], strides = [1, 1]} : vector<9x96xf32> to vector<9x8xf32>
    %48 = vector.extract_strided_slice %45 {offsets = [0, 64], sizes = [9, 8], strides = [1, 1]} : vector<9x96xf32> to vector<9x8xf32>
    "tpu.trace_start"() <{level = 10 : i32, message = "td,sd->ts"}> : () -> ()
    %cst_13 = arith.constant dense<0.000000e+00> : vector<9x9xf32>
    %49 = tpu.matmul %46, %47, %cst_13 {dimension_numbers = #tpu.dot_dimension_numbers<[1], [1], [0], [0], [0, 0, 1, 0], [], []>} : vector<9x8xf32>, vector<9x8xf32>, vector<9x9xf32> -> vector<9x9xf32>
    "tpu.trace_stop"() : () -> ()
    %cst_14 = arith.constant dense<0xFF800000> : vector<9xf32>
    %50 = vector.multi_reduction <maximumf>, %49, %cst_14 [1] : vector<9x9xf32> to vector<9xf32>
    %51 = vector.shape_cast %50 : vector<9xf32> to vector<9x1xf32>
    %52 = vector.broadcast %51 : vector<9x1xf32> to vector<9x9xf32>
    %53 = arith.subf %49, %52 : vector<9x9xf32>
    %54 = math.exp %53 : vector<9x9xf32>
    %cst_15 = arith.constant dense<0.000000e+00> : vector<9xf32>
    %55 = vector.multi_reduction <add>, %54, %cst_15 [1] : vector<9x9xf32> to vector<9xf32>
    %56 = vector.shape_cast %55 : vector<9xf32> to vector<9x1xf32>
    %57 = tpu.reciprocal %56 {approx = true} : vector<9x1xf32> -> vector<9x1xf32>
    %58 = vector.broadcast %57 : vector<9x1xf32> to vector<9x9xf32>
    %59 = arith.mulf %54, %58 : vector<9x9xf32>
    %cst_16 = arith.constant dense<0.000000e+00> : vector<9x8xf32>
    %60 = tpu.matmul %59, %48, %cst_16 {dimension_numbers = #tpu.dot_dimension_numbers<[1], [0], [0], [1], [0, 0, 1, 1], [], []>} : vector<9x9xf32>, vector<9x8xf32>, vector<9x8xf32> -> vector<9x8xf32>
    %61 = vector.extract_strided_slice %45 {offsets = [0, 8], sizes = [9, 8], strides = [1, 1]} : vector<9x96xf32> to vector<9x8xf32>
    %62 = vector.extract_strided_slice %45 {offsets = [0, 40], sizes = [9, 8], strides = [1, 1]} : vector<9x96xf32> to vector<9x8xf32>
    %63 = vector.extract_strided_slice %45 {offsets = [0, 72], sizes = [9, 8], strides = [1, 1]} : vector<9x96xf32> to vector<9x8xf32>
    "tpu.trace_start"() <{level = 10 : i32, message = "td,sd->ts"}> : () -> ()
    %cst_17 = arith.constant dense<0.000000e+00> : vector<9x9xf32>
    %64 = tpu.matmul %61, %62, %cst_17 {dimension_numbers = #tpu.dot_dimension_numbers<[1], [1], [0], [0], [0, 0, 1, 0], [], []>} : vector<9x8xf32>, vector<9x8xf32>, vector<9x9xf32> -> vector<9x9xf32>
    "tpu.trace_stop"() : () -> ()
    %cst_18 = arith.constant dense<0xFF800000> : vector<9xf32>
    %65 = vector.multi_reduction <maximumf>, %64, %cst_18 [1] : vector<9x9xf32> to vector<9xf32>
    %66 = vector.shape_cast %65 : vector<9xf32> to vector<9x1xf32>
    %67 = vector.broadcast %66 : vector<9x1xf32> to vector<9x9xf32>
    %68 = arith.subf %64, %67 : vector<9x9xf32>
    %69 = math.exp %68 : vector<9x9xf32>
    %cst_19 = arith.constant dense<0.000000e+00> : vector<9xf32>
    %70 = vector.multi_reduction <add>, %69, %cst_19 [1] : vector<9x9xf32> to vector<9xf32>
    %71 = vector.shape_cast %70 : vector<9xf32> to vector<9x1xf32>
    %72 = tpu.reciprocal %71 {approx = true} : vector<9x1xf32> -> vector<9x1xf32>
    %73 = vector.broadcast %72 : vector<9x1xf32> to vector<9x9xf32>
    %74 = arith.mulf %69, %73 : vector<9x9xf32>
    %cst_20 = arith.constant dense<0.000000e+00> : vector<9x8xf32>
    %75 = tpu.matmul %74, %63, %cst_20 {dimension_numbers = #tpu.dot_dimension_numbers<[1], [0], [0], [1], [0, 0, 1, 1], [], []>} : vector<9x9xf32>, vector<9x8xf32>, vector<9x8xf32> -> vector<9x8xf32>
    %76 = vector.extract_strided_slice %45 {offsets = [0, 16], sizes = [9, 8], strides = [1, 1]} : vector<9x96xf32> to vector<9x8xf32>
    %77 = vector.extract_strided_slice %45 {offsets = [0, 48], sizes = [9, 8], strides = [1, 1]} : vector<9x96xf32> to vector<9x8xf32>
    %78 = vector.extract_strided_slice %45 {offsets = [0, 80], sizes = [9, 8], strides = [1, 1]} : vector<9x96xf32> to vector<9x8xf32>
    "tpu.trace_start"() <{level = 10 : i32, message = "td,sd->ts"}> : () -> ()
    %cst_21 = arith.constant dense<0.000000e+00> : vector<9x9xf32>
    %79 = tpu.matmul %76, %77, %cst_21 {dimension_numbers = #tpu.dot_dimension_numbers<[1], [1], [0], [0], [0, 0, 1, 0], [], []>} : vector<9x8xf32>, vector<9x8xf32>, vector<9x9xf32> -> vector<9x9xf32>
    "tpu.trace_stop"() : () -> ()
    %cst_22 = arith.constant dense<0xFF800000> : vector<9xf32>
    %80 = vector.multi_reduction <maximumf>, %79, %cst_22 [1] : vector<9x9xf32> to vector<9xf32>
    %81 = vector.shape_cast %80 : vector<9xf32> to vector<9x1xf32>
    %82 = vector.broadcast %81 : vector<9x1xf32> to vector<9x9xf32>
    %83 = arith.subf %79, %82 : vector<9x9xf32>
    %84 = math.exp %83 : vector<9x9xf32>
    %cst_23 = arith.constant dense<0.000000e+00> : vector<9xf32>
    %85 = vector.multi_reduction <add>, %84, %cst_23 [1] : vector<9x9xf32> to vector<9xf32>
    %86 = vector.shape_cast %85 : vector<9xf32> to vector<9x1xf32>
    %87 = tpu.reciprocal %86 {approx = true} : vector<9x1xf32> -> vector<9x1xf32>
    %88 = vector.broadcast %87 : vector<9x1xf32> to vector<9x9xf32>
    %89 = arith.mulf %84, %88 : vector<9x9xf32>
    %cst_24 = arith.constant dense<0.000000e+00> : vector<9x8xf32>
    %90 = tpu.matmul %89, %78, %cst_24 {dimension_numbers = #tpu.dot_dimension_numbers<[1], [0], [0], [1], [0, 0, 1, 1], [], []>} : vector<9x9xf32>, vector<9x8xf32>, vector<9x8xf32> -> vector<9x8xf32>
    %91 = vector.extract_strided_slice %45 {offsets = [0, 24], sizes = [9, 8], strides = [1, 1]} : vector<9x96xf32> to vector<9x8xf32>
    %92 = vector.extract_strided_slice %45 {offsets = [0, 56], sizes = [9, 8], strides = [1, 1]} : vector<9x96xf32> to vector<9x8xf32>
    %93 = vector.extract_strided_slice %45 {offsets = [0, 88], sizes = [9, 8], strides = [1, 1]} : vector<9x96xf32> to vector<9x8xf32>
    "tpu.trace_start"() <{level = 10 : i32, message = "td,sd->ts"}> : () -> ()
    %cst_25 = arith.constant dense<0.000000e+00> : vector<9x9xf32>
    %94 = tpu.matmul %91, %92, %cst_25 {dimension_numbers = #tpu.dot_dimension_numbers<[1], [1], [0], [0], [0, 0, 1, 0], [], []>} : vector<9x8xf32>, vector<9x8xf32>, vector<9x9xf32> -> vector<9x9xf32>
    "tpu.trace_stop"() : () -> ()
    %cst_26 = arith.constant dense<0xFF800000> : vector<9xf32>
    %95 = vector.multi_reduction <maximumf>, %94, %cst_26 [1] : vector<9x9xf32> to vector<9xf32>
    %96 = vector.shape_cast %95 : vector<9xf32> to vector<9x1xf32>
    %97 = vector.broadcast %96 : vector<9x1xf32> to vector<9x9xf32>
    %98 = arith.subf %94, %97 : vector<9x9xf32>
    %99 = math.exp %98 : vector<9x9xf32>
    %cst_27 = arith.constant dense<0.000000e+00> : vector<9xf32>
    %100 = vector.multi_reduction <add>, %99, %cst_27 [1] : vector<9x9xf32> to vector<9xf32>
    %101 = vector.shape_cast %100 : vector<9xf32> to vector<9x1xf32>
    %102 = tpu.reciprocal %101 {approx = true} : vector<9x1xf32> -> vector<9x1xf32>
    %103 = vector.broadcast %102 : vector<9x1xf32> to vector<9x9xf32>
    %104 = arith.mulf %99, %103 : vector<9x9xf32>
    %cst_28 = arith.constant dense<0.000000e+00> : vector<9x8xf32>
    %105 = tpu.matmul %104, %93, %cst_28 {dimension_numbers = #tpu.dot_dimension_numbers<[1], [0], [0], [1], [0, 0, 1, 1], [], []>} : vector<9x9xf32>, vector<9x8xf32>, vector<9x8xf32> -> vector<9x8xf32>
    %106 = tpu.concatenate %60, %75, %90, %105 in 1 : vector<9x8xf32>, vector<9x8xf32>, vector<9x8xf32>, vector<9x8xf32> -> vector<9x32xf32>
    %107 = arith.truncf %106 : vector<9x32xf32> to vector<9x32xbf16>
    %cst_29 = arith.constant dense<0.000000e+00> : vector<9x32xf32>
    %108 = tpu.matmul %107, %17, %cst_29 {dimension_numbers = #tpu.dot_dimension_numbers<[1], [0], [0], [1], [0, 0, 1, 1], [], []>} : vector<9x32xbf16>, vector<32x32xbf16>, vector<9x32xf32> -> vector<9x32xf32>
    %109 = vector.broadcast %13 : vector<1x32xf32> to vector<9x32xf32>
    %110 = arith.addf %108, %109 : vector<9x32xf32>
    %111 = arith.addf %3, %110 : vector<9x32xf32>
    %cst_30 = arith.constant dense<0.000000e+00> : vector<9xf32>
    %112 = vector.multi_reduction <add>, %111, %cst_30 [1] : vector<9x32xf32> to vector<9xf32>
    %113 = vector.shape_cast %112 : vector<9xf32> to vector<9x1xf32>
    %cst_31 = arith.constant 3.200000e+01 : f32
    %114 = vector.broadcast %cst_31 : f32 to vector<9x1xf32>
    %115 = arith.divf %113, %114 : vector<9x1xf32>
    %116 = vector.broadcast %115 : vector<9x1xf32> to vector<9x32xf32>
    %117 = arith.subf %111, %116 : vector<9x32xf32>
    %118 = arith.mulf %117, %117 : vector<9x32xf32>
    %cst_32 = arith.constant dense<0.000000e+00> : vector<9xf32>
    %119 = vector.multi_reduction <add>, %118, %cst_32 [1] : vector<9x32xf32> to vector<9xf32>
    %120 = vector.shape_cast %119 : vector<9xf32> to vector<9x1xf32>
    %cst_33 = arith.constant 3.200000e+01 : f32
    %121 = vector.broadcast %cst_33 : f32 to vector<9x1xf32>
    %122 = arith.divf %120, %121 : vector<9x1xf32>
    %123 = vector.broadcast %115 : vector<9x1xf32> to vector<9x32xf32>
    %124 = arith.subf %111, %123 : vector<9x32xf32>
    %cst_34 = arith.constant 9.99999974E-6 : f32
    %125 = vector.broadcast %cst_34 : f32 to vector<9x1xf32>
    %126 = arith.addf %122, %125 : vector<9x1xf32>
    %127 = math.rsqrt %126 : vector<9x1xf32>
    %128 = vector.broadcast %127 : vector<9x1xf32> to vector<9x32xf32>
    %129 = arith.mulf %124, %128 : vector<9x32xf32>
    %130 = vector.broadcast %10 : vector<1x32xf32> to vector<9x32xf32>
    %131 = arith.mulf %129, %130 : vector<9x32xf32>
    %132 = vector.broadcast %11 : vector<1x32xf32> to vector<9x32xf32>
    %133 = arith.addf %131, %132 : vector<9x32xf32>
    %134 = arith.truncf %133 : vector<9x32xf32> to vector<9x32xbf16>
    %cst_35 = arith.constant dense<0.000000e+00> : vector<9x64xf32>
    %135 = tpu.matmul %134, %18, %cst_35 {dimension_numbers = #tpu.dot_dimension_numbers<[1], [0], [0], [1], [0, 0, 1, 1], [], []>} : vector<9x32xbf16>, vector<32x64xbf16>, vector<9x64xf32> -> vector<9x64xf32>
    %136 = vector.broadcast %14 : vector<1x64xf32> to vector<9x64xf32>
    %137 = arith.addf %135, %136 : vector<9x64xf32>
    %138 = arith.mulf %137, %137 : vector<9x64xf32>
    %139 = arith.mulf %137, %138 : vector<9x64xf32>
    %cst_36 = arith.constant 4.471500e-02 : f32
    %140 = vector.broadcast %cst_36 : f32 to vector<9x64xf32>
    %141 = arith.mulf %140, %139 : vector<9x64xf32>
    %142 = arith.addf %137, %141 : vector<9x64xf32>
    %cst_37 = arith.constant 0.797884583 : f32
    %143 = vector.broadcast %cst_37 : f32 to vector<9x64xf32>
    %144 = arith.mulf %143, %142 : vector<9x64xf32>
    %145 = math.tanh %144 : vector<9x64xf32>
    %cst_38 = arith.constant 1.000000e+00 : f32
    %146 = vector.broadcast %cst_38 : f32 to vector<9x64xf32>
    %147 = arith.addf %146, %145 : vector<9x64xf32>
    %cst_39 = arith.constant 5.000000e-01 : f32
    %148 = vector.broadcast %cst_39 : f32 to vector<9x64xf32>
    %149 = arith.mulf %148, %147 : vector<9x64xf32>
    %150 = arith.mulf %137, %149 : vector<9x64xf32>
    %151 = arith.truncf %150 : vector<9x64xf32> to vector<9x64xbf16>
    %cst_40 = arith.constant dense<0.000000e+00> : vector<9x32xf32>
    %152 = tpu.matmul %151, %19, %cst_40 {dimension_numbers = #tpu.dot_dimension_numbers<[1], [0], [0], [1], [0, 0, 1, 1], [], []>} : vector<9x64xbf16>, vector<64x32xbf16>, vector<9x32xf32> -> vector<9x32xf32>
    %153 = vector.broadcast %15 : vector<1x32xf32> to vector<9x32xf32>
    %154 = arith.addf %152, %153 : vector<9x32xf32>
    %155 = arith.addf %111, %154 : vector<9x32xf32>
    %c0_41 = arith.constant 0 : index
    %c0_42 = arith.constant 0 : index
    %156 = vector.load %arg8[%c0_41, %c0_42] : memref<9x32xf32, #tpu.memory_space<vmem>>, vector<9x32xf32>
    tpu.vector_store %arg8[%c0_41, %c0_42], %155 {strides = array<i32>} : memref<9x32xf32, #tpu.memory_space<vmem>>, vector<9x32xf32>,
    %c2_i32 = arith.constant 2 : i32
    %157 = arith.cmpi eq, %arg1, %c2_i32 : i32
    %158 = arith.extui %157 : i1 to i32
    %c0_i32_43 = arith.constant 0 : i32
    %159 = arith.cmpi ne, %158, %c0_i32_43 : i32
    scf.if %159 {
      %160 = arith.truncf %155 : vector<9x32xf32> to vector<9x32xbf16>
      %c0_44 = arith.constant 0 : index
      %c0_45 = arith.constant 0 : index
      %161 = vector.load %arg5[%c0_44, %c0_45] : memref<32x128xbf16, #tpu.memory_space<vmem>>, vector<32x128xbf16>
      %cst_46 = arith.constant dense<0.000000e+00> : vector<9x128xf32>
      %162 = tpu.matmul %160, %161, %cst_46 {dimension_numbers = #tpu.dot_dimension_numbers<[1], [0], [0], [1], [0, 0, 1, 1], [], []>} : vector<9x32xbf16>, vector<32x128xbf16>, vector<9x128xf32> -> vector<9x128xf32>
      %c0_47 = arith.constant 0 : index
      %c0_48 = arith.constant 0 : index
      %163 = vector.load %arg6[%c0_47, %c0_48] : memref<1x128xf32, #tpu.memory_space<vmem>>, vector<1x128xf32>
      %164 = vector.broadcast %163 : vector<1x128xf32> to vector<9x128xf32>
      %165 = arith.addf %162, %164 : vector<9x128xf32>
      %c0_49 = arith.constant 0 : index
      %c0_50 = arith.constant 0 : index
      %c0_51 = arith.constant 0 : index
      %166 = vector.load %arg7[%c0_49, %c0_50, %c0_51] : memref<1x9x128xf32, #tpu.memory_space<vmem>>, vector<1x9x128xf32>
      %167 = vector.shape_cast %166 : vector<1x9x128xf32> to vector<9x128xf32>
      %168 = vector.shape_cast %165 : vector<9x128xf32> to vector<1x9x128xf32>
      tpu.vector_store %arg7[%c0_49, %c0_50, %c0_51], %168 {strides = array<i32>} : memref<1x9x128xf32, #tpu.memory_space<vmem>>, vector<1x9x128xf32>,
    } else {
    }
    return
  }
  func.func @transform_0(%arg0: i32, %arg1: i32) -> (i32, i32, i32) {
    %c0_i32 = arith.constant 0 : i32
    %c0_i32_0 = arith.constant 0 : i32
    %c0_i32_1 = arith.constant 0 : i32
    return %arg0, %c0_i32, %c0_i32_0 : i32, i32, i32
  }
  func.func @transform_1(%arg0: i32, %arg1: i32) -> (i32, i32, i32) {
    %c0_i32 = arith.constant 0 : i32
    %c0_i32_0 = arith.constant 0 : i32
    %c0_i32_1 = arith.constant 0 : i32
    return %arg1, %c0_i32, %c0_i32_0 : i32, i32, i32
  }
  func.func @transform_2(%arg0: i32, %arg1: i32) -> (i32, i32, i32) {
    %c0_i32 = arith.constant 0 : i32
    %c0_i32_0 = arith.constant 0 : i32
    %c0_i32_1 = arith.constant 0 : i32
    return %arg1, %c0_i32, %c0_i32_0 : i32, i32, i32
  }
  func.func @transform_3(%arg0: i32, %arg1: i32) -> (i32, i32) {
    %c0_i32 = arith.constant 0 : i32
    %c0_i32_0 = arith.constant 0 : i32
    %c0_i32_1 = arith.constant 0 : i32
    return %c0_i32, %c0_i32_0 : i32, i32
  }
  func.func @transform_4(%arg0: i32, %arg1: i32) -> (i32, i32) {
    %c0_i32 = arith.constant 0 : i32
    %c0_i32_0 = arith.constant 0 : i32
    %c0_i32_1 = arith.constant 0 : i32
    return %c0_i32, %c0_i32_0 : i32, i32
  }
  func.func @transform_5(%arg0: i32, %arg1: i32) -> (i32, i32, i32) {
    %c0_i32 = arith.constant 0 : i32
    %c0_i32_0 = arith.constant 0 : i32
    %c0_i32_1 = arith.constant 0 : i32
    return %arg0, %c0_i32, %c0_i32_0 : i32, i32, i32
  }
}

</mosaic_0001>

<llo_original>
// kernel: forward.3
$region0: #{forward.3}
  #allocation0 [shape = 'u32[]', space=smem, size = 0x4, offset = 0x4, fixed_abs, tag = 'smem constant byte address 0x4 - core index']
  #allocation1 [shape = 'u32[144,128]{1,0:T(1,128)}', space=vmem, size = 0x12000, scoped, tag = 'internal scratch']
  #allocation2 [shape = 'f32[9,32]{1,0:T(8,128)}', space=vmem, size = 0x2000, scoped, tag = 'scratch operand']
  %s0 = inlined_call_operand.vmem [shape: f32[2,9,32], index: 0, kind: input, shape index: {}]
  %s1 = inlined_call_operand.vmem [shape: bf16[4,96,192], index: 1, kind: input, shape index: {}]
  %s2 = inlined_call_operand.vmem [shape: f32[4,8,96], index: 2, kind: input, shape index: {}]
  %s3 = inlined_call_operand.vmem [shape: bf16[32,128], index: 3, kind: input, shape index: {}]
  %s4 = inlined_call_operand.vmem [shape: f32[1,128], index: 4, kind: input, shape index: {}]
  %s5 = inlined_call_operand.vmem [shape: f32[2,9,128], index: 5, kind: output, shape index: {}]
  %s6 = sld [smem:[#allocation0]]
  $region61: #{forward.3} parent=0
    _
  %s8 = ssub.s32 1, %s6
  %s9 = scalar_select 0, %s8, %s6
  loop: start=0, step=1, limit=8
  $region2: #{forward.3} parent=0 // loop_pre_header
    _
  $region3: #{forward.3} parent=0 // loop_header
    %s11 = sphi 0, %s15
    %p12 = scmp.ge.s32.totalorder %s11, 8
    %s18 = sphi 0, %s30
    %s19 = sphi 0, %s26
    %s20 = sphi 0, %s18
    %s21 = sphi 0, %s19
    %s22 = sphi 0, %s20
    %s23 = sphi 0, %s21
    %s33 = sphi 0, %s35
    %s36 = sphi 0, %s33
    %s37 = sphi 0, %s36
    %s53 = sphi 0, %s37
    %s59 = sphi 0, %s61
    %s62 = sphi 0, %s59
    %s63 = sphi 0, %s62
    %s79 = sphi 0, %s63
    %s85 = sphi 0, %s87
    %s88 = sphi 0, %s85
    %s89 = sphi 0, %s88
    %s105 = sphi 0, %s89
    %s109 = sphi 0, %s109
    %s111 = sphi 0, %s109
    %s112 = sphi 0, %s111
    %s126 = sphi 0, %s112
    %s130 = sphi 0, %s130
    %s132 = sphi 0, %s130
    %s133 = sphi 0, %s132
    %s147 = sphi 0, %s133
    %s153 = sphi 0, %s155
    %s156 = sphi 0, %s153
    %s157 = sphi 0, %s156
    %s173 = sphi 0, %s157
  $region4: #{forward.3} parent=0 // loop_header_branch
    %14 = sbr.rel (%p12) target = $region8
  $region5: #{forward.3} parent=0 // loop_body
    %s16 = ssub.s32 %s11, 1
    %s17 = ssub.s32 %s11, 2
    %s24 = sadd.s32 1, %s19
    %p25 = scmp.ge.s32.totalorder %s24, 3
    %s26 = scalar_select %p25, 0, %s24
    %s27 = sadd.s32 1, %s18
    %s28 = scalar_select %p25, %s27, %s18
    %p29 = scmp.ge.s32.totalorder %s28, 2
    %s30 = scalar_select %p29, 0, %s28
    %s31 = ssub.s32 %s18, %s30
    %p32 = scmp.eq.s32.totalorder %s31, 0
    %s34 = sadd.s32 %s33, 1
    %s35 = scalar_select %p32, %s33, %s34
    %p38 = pneg %p32
    %p39 = scmp.eq.s32.totalorder %s11, 5
    %p40 = por %p38, %p39
    %p41 = scmp.ne.s32.totalorder %s33, %s36
    %p42 = scmp.eq.s32.totalorder %s11, 0
    %p43 = por %p41, %p42
    %p44 = scmp.ne.s32.totalorder %s33, %s36
    %p45 = scmp.eq.s32.totalorder %s16, 5
    %p46 = por %p44, %p45
    %p47 = scmp.ne.s32.totalorder %s36, %s37
    %p48 = scmp.eq.s32.totalorder %s16, 0
    %p49 = por %p47, %p48
    %p50 = scmp.ne.s32.totalorder %s36, %s37
    %p51 = scmp.eq.s32.totalorder %s17, 5
    %p52 = por %p50, %p51
    %p54 = scmp.ne.s32.totalorder %s37, %s53
    %p55 = scmp.eq.s32.totalorder %s17, 0
    %p56 = por %p54, %p55
    %s57 = ssub.s32 %s19, %s26
    %p58 = scmp.eq.s32.totalorder %s57, 0
    %s60 = sadd.s32 %s59, 1
    %s61 = scalar_select %p58, %s59, %s60
    %p64 = pneg %p58
    %p65 = scmp.eq.s32.totalorder %s11, 5
    %p66 = por %p64, %p65
    %p67 = scmp.ne.s32.totalorder %s59, %s62
    %p68 = scmp.eq.s32.totalorder %s11, 0
    %p69 = por %p67, %p68
    %p70 = scmp.ne.s32.totalorder %s59, %s62
    %p71 = scmp.eq.s32.totalorder %s16, 5
    %p72 = por %p70, %p71
    %p73 = scmp.ne.s32.totalorder %s62, %s63
    %p74 = scmp.eq.s32.totalorder %s16, 0
    %p75 = por %p73, %p74
    %p76 = scmp.ne.s32.totalorder %s62, %s63
    %p77 = scmp.eq.s32.totalorder %s17, 5
    %p78 = por %p76, %p77
    %p80 = scmp.ne.s32.totalorder %s63, %s79
    %p81 = scmp.eq.s32.totalorder %s17, 0
    %p82 = por %p80, %p81
    %s83 = ssub.s32 %s19, %s26
    %p84 = scmp.eq.s32.totalorder %s83, 0
    %s86 = sadd.s32 %s85, 1
    %s87 = scalar_select %p84, %s85, %s86
    %p90 = pneg %p84
    %p91 = scmp.eq.s32.totalorder %s11, 5
    %p92 = por %p90, %p91
    %p93 = scmp.ne.s32.totalorder %s85, %s88
    %p94 = scmp.eq.s32.totalorder %s11, 0
    %p95 = por %p93, %p94
    %p96 = scmp.ne.s32.totalorder %s85, %s88
    %p97 = scmp.eq.s32.totalorder %s16, 5
    %p98 = por %p96, %p97
    %p99 = scmp.ne.s32.totalorder %s88, %s89
    %p100 = scmp.eq.s32.totalorder %s16, 0
    %p101 = por %p99, %p100
    %p102 = scmp.ne.s32.totalorder %s88, %s89
    %p103 = scmp.eq.s32.totalorder %s17, 5
    %p104 = por %p102, %p103
    %p106 = scmp.ne.s32.totalorder %s89, %s105
    %p107 = scmp.eq.s32.totalorder %s17, 0
    %p108 = por %p106, %p107
    %s110 = sadd.s32 %s109, 1
    %p113 = scmp.eq.s32.totalorder %s11, 5
    %p114 = scmp.ne.s32.totalorder %s109, %s111
    %p115 = scmp.eq.s32.totalorder %s11, 0
    %p116 = por %p114, %p115
    %p117 = scmp.ne.s32.totalorder %s109, %s111
    %p118 = scmp.eq.s32.totalorder %s16, 5
    %p119 = por %p117, %p118
    %p120 = scmp.ne.s32.totalorder %s111, %s112
    %p121 = scmp.eq.s32.totalorder %s16, 0
    %p122 = por %p120, %p121
    %p123 = scmp.ne.s32.totalorder %s111, %s112
    %p124 = scmp.eq.s32.totalorder %s17, 5
    %p125 = por %p123, %p124
    %p127 = scmp.ne.s32.totalorder %s112, %s126
    %p128 = scmp.eq.s32.totalorder %s17, 0
    %p129 = por %p127, %p128
    %s131 = sadd.s32 %s130, 1
    %p134 = scmp.eq.s32.totalorder %s11, 5
    %p135 = scmp.ne.s32.totalorder %s130, %s132
    %p136 = scmp.eq.s32.totalorder %s11, 0
    %p137 = por %p135, %p136
    %p138 = scmp.ne.s32.totalorder %s130, %s132
    %p139 = scmp.eq.s32.totalorder %s16, 5
    %p140 = por %p138, %p139
    %p141 = scmp.ne.s32.totalorder %s132, %s133
    %p142 = scmp.eq.s32.totalorder %s16, 0
    %p143 = por %p141, %p142
    %p144 = scmp.ne.s32.totalorder %s132, %s133
    %p145 = scmp.eq.s32.totalorder %s17, 5
    %p146 = por %p144, %p145
    %p148 = scmp.ne.s32.totalorder %s133, %s147
    %p149 = scmp.eq.s32.totalorder %s17, 0
    %p150 = por %p148, %p149
    %s151 = ssub.s32 %s18, %s30
    %p152 = scmp.eq.s32.totalorder %s151, 0
    %s154 = sadd.s32 %s153, 1
    %s155 = scalar_select %p152, %s153, %s154
    %p158 = pneg %p152
    %p159 = scmp.eq.s32.totalorder %s11, 5
    %p160 = por %p158, %p159
    %p161 = scmp.ne.s32.totalorder %s153, %s156
    %p162 = scmp.eq.s32.totalorder %s11, 0
    %p163 = por %p161, %p162
    %p164 = scmp.ne.s32.totalorder %s153, %s156
    %p165 = scmp.eq.s32.totalorder %s16, 5
    %p166 = por %p164, %p165
    %p167 = scmp.ne.s32.totalorder %s156, %s157
    %p168 = scmp.eq.s32.totalorder %s16, 0
    %p169 = por %p167, %p168
    %p170 = scmp.ne.s32.totalorder %s156, %s157
    %p171 = scmp.eq.s32.totalorder %s17, 5
    %p172 = por %p170, %p171
    %p174 = scmp.ne.s32.totalorder %s157, %s173
    %p175 = scmp.eq.s32.totalorder %s17, 0
    %p176 = por %p174, %p175
    %p177 = scmp.le.s32.totalorder 1, %s11
    %p178 = scmp.lt.s32.totalorder %s11, 7
    %p179 = pnand %p177, %p178
    %p180 = pneg %p179
    // Predicated region
    $region9: #{forward.3} parent=5 // pred_check
      _
    $region10: #{forward.3} parent=5 // pred_check_branch
      %182 = sbr.rel (%p179) target = $region12
    $region11: #{forward.3} parent=5 // pred_region
      %s183 = ssub.s32 %s11, 1
      // Predicated region
      $region13: #{forward.3} parent=11 // pred_check
        %p184 = pneg %p122
      $region14: #{forward.3} parent=11 // pred_check_branch
        %186 = sbr.rel (%p184) target = $region16
      $region15: #{forward.3} parent=11 // pred_region
        _
      $region16: #{forward.3} parent=11 // pred_fallthru
        _
      // Predicated region
      $region17: #{forward.3} parent=11 // pred_check
        %p187 = pneg %p143
      $region18: #{forward.3} parent=11 // pred_check_branch
        %189 = sbr.rel (%p187) target = $region20
      $region19: #{forward.3} parent=11 // pred_region
        _
      $region20: #{forward.3} parent=11 // pred_fallthru
        _
    $region12: #{forward.3} parent=5 // pred_fallthru
      _
    %p190 = scmp.lt.s32.totalorder %s11, 6
    // Predicated region
    $region21: #{forward.3} parent=5 // pred_check
      %p191 = pneg %p190
    $region22: #{forward.3} parent=5 // pred_check_branch
      %193 = sbr.rel (%p191) target = $region24
    $region23: #{forward.3} parent=5 // pred_region
      // Predicated region
      $region25: #{forward.3} parent=23 // pred_check
        %p194 = pneg %p43
      $region26: #{forward.3} parent=23 // pred_check_branch
        %196 = sbr.rel (%p194) target = $region28
      $region27: #{forward.3} parent=23 // pred_region
        %p197 = scmp.lt.s32.totalorder %s18, 1
        %s198 = scalar_select %p197, %s18, 1
        %s199 = smul.addr %s198, 2
        %s200 = smul.addr %s199, 8
        %s201 = scalar_lea.vmem %s0, %s200
      $region28: #{forward.3} parent=23 // pred_fallthru
        _
      // Predicated region
      $region29: #{forward.3} parent=23 // pred_check
        %p202 = pneg %p69
      $region30: #{forward.3} parent=23 // pred_check_branch
        %204 = sbr.rel (%p202) target = $region32
      $region31: #{forward.3} parent=23 // pred_region
        %p205 = scmp.lt.s32.totalorder %s19, 3
        %s206 = scalar_select %p205, %s19, 3
        %s207 = smul.addr %s206, 24
        %s208 = smul.addr %s207, 4
        %s209 = scalar_lea.vmem %s1, %s208
      $region32: #{forward.3} parent=23 // pred_fallthru
        _
      // Predicated region
      $region33: #{forward.3} parent=23 // pred_check
        %p210 = pneg %p95
      $region34: #{forward.3} parent=23 // pred_check_branch
        %212 = sbr.rel (%p210) target = $region36
      $region35: #{forward.3} parent=23 // pred_region
        %p213 = scmp.lt.s32.totalorder %s19, 3
        %s214 = scalar_select %p213, %s19, 3
        %s215 = smul.addr %s214, 8
        %s216 = scalar_lea.vmem %s2, %s215
      $region36: #{forward.3} parent=23 // pred_fallthru
        _
    $region24: #{forward.3} parent=5 // pred_fallthru
      _
    %p217 = scmp.le.s32.totalorder 1, %s11
    %p218 = scmp.lt.s32.totalorder %s11, 7
    %p219 = pnand %p217, %p218
    %p220 = pneg %p219
    // Predicated region
    $region37: #{forward.3} parent=5 // pred_check
      _
    $region38: #{forward.3} parent=5 // pred_check_branch
      %222 = sbr.rel (%p219) target = $region40
    $region39: #{forward.3} parent=5 // pred_region
      %s223 = ssub.s32 %s11, 1
      %p224 = scmp.lt.s32.totalorder %s20, 1
      %s225 = scalar_select %p224, %s20, 1
      %s226 = smul.addr %s225, 2
      %s227 = smul.addr %s226, 8
      %s228 = scalar_lea.vmem %s0, %s227
      %p229 = pneg %p49
      %p230 = pneg %p46
      %p231 = scmp.lt.s32.totalorder %s21, 3
      %s232 = scalar_select %p231, %s21, 3
      %s233 = smul.addr %s232, 24
      %s234 = smul.addr %s233, 4
      %s235 = scalar_lea.vmem %s1, %s234
      %p236 = pneg %p75
      %p237 = pneg %p72
      %p238 = scmp.lt.s32.totalorder %s21, 3
      %s239 = scalar_select %p238, %s21, 3
      %s240 = smul.addr %s239, 8
      %s241 = scalar_lea.vmem %s2, %s240
      %p242 = pneg %p101
      %p243 = pneg %p98
      %p244 = pneg %p122
      %p245 = pneg %p119
      %p246 = pneg %p143
      %p247 = pneg %p140
      %p248 = pneg %p169
      %p249 = pneg %p166
      %p250 = scmp.lt.s32.totalorder %s20, 1
      %s251 = scalar_select %p250, %s20, 1
      %s252 = smul.addr %s251, 2
      %s253 = smul.addr %s252, 8
      %s254 = scalar_lea.vmem %s5, %s253
      %p255 = scmp.lt.s32.totalorder %s20, 1
      %s256 = scalar_select %p255, %s20, 1
      %s257 = smul.addr %s256, 2
      %s258 = smul.addr %s257, 8
      %s259 = scalar_lea.vmem %s0, %s258
      %p260 = scmp.lt.s32.totalorder %s21, 3
      %s261 = scalar_select %p260, %s21, 3
      %s262 = smul.addr %s261, 24
      %s263 = smul.addr %s262, 4
      %s264 = scalar_lea.vmem %s1, %s263
      %p265 = scmp.lt.s32.totalorder %s21, 3
      %s266 = scalar_select %p265, %s21, 3
      %s267 = smul.addr %s266, 8
      %s268 = scalar_lea.vmem %s2, %s267
      %p269 = scmp.lt.s32.totalorder %s20, 1
      %s270 = scalar_select %p269, %s20, 1
      %s271 = smul.addr %s270, 2
      %s272 = smul.addr %s271, 8
      %s273 = scalar_lea.vmem %s5, %s272
      %p275 = scmp.eq.s32.totalorder %s21, 0
      // Predicated region
      $region41: #{forward.3} parent=39 // pred_check
        %p276 = pneg %p275
      $region42: #{forward.3} parent=39 // pred_check_branch
        %278 = sbr.rel (%p276) target = $region44
      $region43: #{forward.3} parent=39 // pred_region
        %v279 = vld [vmem:[%s259] sm:$0xff]
        %v280 = vld [vmem:[%s259 + $0x8] sm:$0x1]
        %vm281 = vcmask 261120
        %282 = vst.msk [vmem:[#allocation2] sm:$0xff] %vm281, %v279
        %vm283 = vcmask 253952
        %284 = vst.msk [vmem:[#allocation2 + $0x8] sm:$0x1] %vm283, %v280
      $region44: #{forward.3} parent=39 // pred_fallthru
        _
      %v285 = vld [vmem:[#allocation2] sm:$0xff]
      %v286 = vld [vmem:[#allocation2 + $0x8] sm:$0x1]
      %v287 = vld [vmem:[%s264] sm:$0xff]
      %v288 = vld [vmem:[%s264 + $0x8] sm:$0xff]
      %v289 = vld [vmem:[%s264 + $0x10] sm:$0xff]
      %v290 = vld [vmem:[%s264 + $0x18] sm:$0xff]
      %v291 = vld [vmem:[%s264 + $0x20] sm:$0xff]
      %v292 = vld [vmem:[%s264 + $0x28] sm:$0xff]
      %v293 = vld [vmem:[%s264 + $0x30] sm:$0xff]
      %v294 = vld [vmem:[%s264 + $0x38] sm:$0xff]
      %v295 = vld [vmem:[%s264 + $0x40] sm:$0xff]
      %v296 = vld [vmem:[%s264 + $0x48] sm:$0xff]
      %v297 = vld [vmem:[%s264 + $0x50] sm:$0xff]
      %v298 = vld [vmem:[%s264 + $0x58] sm:$0xff]
      %v299 = vld [vmem:[%s268] sm:$0xff]
      %vm300 = vcmask 261120
      %v301 = vsel %vm300, %v285, 0.0
      %302 = vadd.xlane.f32.xlu0 %v301
      %v303 = vpop.xlane.xlu0 %302
      %vm304 = vcmask 253952
      %v305 = vsel %vm304, %v286, 0.0
      %306 = vadd.xlane.f32.xlu0 %v305
      %v307 = vpop.xlane.xlu0 %306
      %v308 = vrcp.pop 32.0
      %v309 = vmul.f32 %v303, %v308
      %v310 = vmul.f32 %v307, %v308
      %v311 = vsub.f32 %v285, %v309
      %v312 = vsub.f32 %v286, %v310
      %v313 = vmul.f32 %v311, %v311
      %v314 = vmul.f32 %v312, %v312
      %v315 = vsel %vm300, %v313, 0.0
      %316 = vadd.xlane.f32.xlu0 %v315
      %v317 = vpop.xlane.xlu0 %316
      %v318 = vsel %vm304, %v314, 0.0
      %319 = vadd.xlane.f32.xlu0 %v318
      %v320 = vpop.xlane.xlu0 %319
      %v321 = vmul.f32 %v317, %v308
      %v322 = vmul.f32 %v320, %v308
      %v323 = vadd.f32 %v321, 1e-05
      %v324 = vadd.f32 %v322, 1e-05
      %v325 = vrsqrt.pop %v323
      %v326 = vrsqrt.pop %v324
      %v327 = vmul.f32 %v311, %v325
      %v328 = vmul.f32 %v312, %v326
      %v329 = vlaneseq
      %v330 = vshrl.u32 %v329, 7
      %v331 = vsub.s32 0, %v330
      %v332 = vrot.slane %v299, %v331
      %v333 = vmul.f32 %v327, %v332
      %v334 = vmul.f32 %v328, %v332
      %v335 = vlaneseq
      %v336 = vshrl.u32 %v335, 7
      %v337 = vsub.s32 1, %v336
      %v338 = vrot.slane %v299, %v337
      %v339 = vadd.f32 %v333, %v338
      %v340 = vadd.f32 %v334, %v338
      %v341 = vpack.c.bf16 %v340, %v339
      %v342 = vlaneseq
      %v343 = vshrl.u32 %v342, 7
      %v344 = vsub.s32 4, %v343
      %v345 = vrot.slane %v299, %v344
      %v350 = vunpack.c.l.b16 %v287
      %v351 = vunpack.c.l.b16 %v288
      %v352 = vunpack.c.l.b16 %v289
      %v353 = vunpack.c.l.b16 %v290
      %v354 = vpack.c.b16 %v351, %v350
      %v355 = vpack.c.b16 %v353, %v352
      %v359 = vsel %vm300, %v341, 0
      %361 = vmatprep.subr.bf16.mxu0 0
      %362 = vmatpush1.bf16.msra.mxu0 0
      %363 = vmatprep.subr.bf16.mxu0 0
      %364 = vmatpush1.bf16.msra.mxu0 0
      %365 = vmatprep.subr.bf16.mxu0 0
      %366 = vmatpush1.bf16.msra.mxu0 0
      %367 = vmatprep.subr.bf16.mxu0 0
      %368 = vmatpush1.bf16.msra.mxu0 0
      %369 = vmatprep.subr.bf16.mxu0 0
      %370 = vmatpush1.bf16.msra.mxu0 0
      %371 = vmatprep.subr.bf16.mxu0 0
      %372 = vmatpush1.bf16.msra.mxu0 0
      %373 = vmatprep.subr.bf16.mxu0 0
      %374 = vmatpush1.bf16.msra.mxu0 %v355
      %375 = vmatprep.subr.bf16.mxu0 0
      %376 = vmatpush1.bf16.msra.mxu0 %v354
      %377 = vmatprep.subr.bf16.mxu0 0
      %378 = vmatpush2.bf16.msra.mxu0 0
      %379 = vmatprep.subr.bf16.mxu0 0
      %380 = vmatpush2.bf16.msra.mxu0 0
      %381 = vmatprep.subr.bf16.mxu0 0
      %382 = vmatpush2.bf16.msra.mxu0 0
      %383 = vmatprep.subr.bf16.mxu0 0
      %384 = vmatpush2.bf16.msra.mxu0 0
      %385 = vmatprep.subr.bf16.mxu0 0
      %386 = vmatpush2.bf16.msra.mxu0 0
      %387 = vmatprep.subr.bf16.mxu0 0
      %388 = vmatpush2.bf16.msra.mxu0 0
      %389 = vmatprep.subr.bf16.mxu0 0
      %390 = vmatpush2.bf16.msra.mxu0 0
      %391 = vmatprep.subr.bf16.mxu0 0
      %392 = vmatpush2.bf16.msra.mxu0 0
      %393 = vmatprep.mubr.bf16.mxu0 0
      %394 = vmatmul.mubr.bf16.gmra.mxu0 %v359
      %v395 = vpop.f32.mrf.mxu0
      %v396 = vadd.f32 %v345, %v395
      %v397 = vpop.f32.mrf.mxu0
      %v398 = vpop.f32.mrf.mxu0
      %v399 = vadd.f32 %v345, %v398
      %v400 = vpop.f32.mrf.mxu0
      %401 = vdwg.mxu0
      %404 = vrot.lane.b32.xlu0 %v396, 96
      %v405 = vpop.permute.xlu0 %404
      %406 = vrot.lane.b32.xlu0 %v399, 96
      %v407 = vpop.permute.xlu0 %406
      %vm408 = vcmask 64512
      %v409 = vsel %vm408, %v396, 0
      %v411 = vsel %vm408, %v399, 0
      %v413 = vsel %vm408, %v405, 0
      %v415 = vsel %vm408, %v407, 0
      %417 = vmatprep.subr.mxu0 0.0
      %418 = vmatpush1.xpose.msra.mxu0 0.0
      %419 = vmatprep.subr.mxu0 0.0
      %420 = vmatpush1.xpose.msra.mxu0 0.0
      %421 = vmatprep.subr.mxu0 0.0
      %422 = vmatpush1.xpose.msra.mxu0 0.0
      %423 = vmatprep.subr.mxu0 0.0
      %424 = vmatpush1.xpose.msra.mxu0 0.0
      %425 = vmatprep.subr.mxu0 0.0
      %426 = vmatpush1.xpose.msra.mxu0 0.0
      %427 = vmatprep.subr.mxu0 0.0
      %428 = vmatpush1.xpose.msra.mxu0 0.0
      %429 = vmatprep.subr.mxu0 0.0
      %430 = vmatpush1.xpose.msra.mxu0 0.0
      %431 = vmatprep.subr.mxu0 0.0
      %432 = vmatpush1.xpose.msra.mxu0 0.0
      %433 = vmatprep.subr.mxu0 0.0
      %434 = vmatpush1.xpose.msra.mxu0 0.0
      %435 = vmatprep.subr.mxu0 0.0
      %436 = vmatpush1.xpose.msra.mxu0 0.0
      %437 = vmatprep.subr.mxu0 0.0
      %438 = vmatpush1.xpose.msra.mxu0 0.0
      %439 = vmatprep.subr.mxu0 0.0
      %440 = vmatpush1.xpose.msra.mxu0 0.0
      %441 = vmatprep.subr.mxu0 0.0
      %442 = vmatpush1.xpose.msra.mxu0 0.0
      %443 = vmatprep.subr.mxu0 0.0
      %444 = vmatpush1.xpose.msra.mxu0 0.0
      %445 = vmatprep.subr.mxu0 0.0
      %446 = vmatpush1.xpose.msra.mxu0 %v415
      %447 = vmatprep.subr.mxu0 0.0
      %448 = vmatpush1.xpose.msra.mxu0 %v413
      %449 = vmatprep.subr.mxu0 0.0
      %450 = vmatpush2.xpose.msra.mxu0 0.0
      %451 = vmatprep.subr.mxu0 0.0
      %452 = vmatpush2.xpose.msra.mxu0 0.0
      %453 = vmatprep.subr.mxu0 0.0
      %454 = vmatpush2.xpose.msra.mxu0 0.0
      %455 = vmatprep.subr.mxu0 0.0
      %456 = vmatpush2.xpose.msra.mxu0 0.0
      %457 = vmatprep.subr.mxu0 0.0
      %458 = vmatpush2.xpose.msra.mxu0 0.0
      %459 = vmatprep.subr.mxu0 0.0
      %460 = vmatpush2.xpose.msra.mxu0 0.0
      %461 = vmatprep.subr.mxu0 0.0
      %462 = vmatpush2.xpose.msra.mxu0 0.0
      %463 = vmatprep.subr.mxu0 0.0
      %464 = vmatpush2.xpose.msra.mxu0 0.0
      %465 = vmatprep.subr.mxu0 0.0
      %466 = vmatpush2.xpose.msra.mxu0 0.0
      %467 = vmatprep.subr.mxu0 0.0
      %468 = vmatpush2.xpose.msra.mxu0 0.0
      %469 = vmatprep.subr.mxu0 0.0
      %470 = vmatpush2.xpose.msra.mxu0 0.0
      %471 = vmatprep.subr.mxu0 0.0
      %472 = vmatpush2.xpose.msra.mxu0 0.0
      %473 = vmatprep.subr.mxu0 0.0
      %474 = vmatpush2.xpose.msra.mxu0 0.0
      %475 = vmatprep.subr.mxu0 0.0
      %476 = vmatpush2.xpose.msra.mxu0 0.0
      %477 = vmatprep.subr.mxu0 0.0
      %478 = vmatpush2.xpose.msra.mxu0 0.0
      %479 = vmatprep.subr.mxu0 0.0
      %480 = vmatpush2.xpose.msra.mxu0 0.0
      %481 = vmatprep.mubr.f32.mxu0 0.0
      %482 = vmatmul.mubr.f32.gmra.mxu0 %v409
      %v483 = vpop.f32.mrf.mxu0
      %v484 = vadd.f32 0.0, %v483
      %v485 = vpop.f32.mrf.mxu0
      %486 = vmatprep.mubr.f32.mxu0 0.0
      %487 = vmatmul.mubr.f32.gmra.mxu0 %v411
      %v488 = vpop.f32.mrf.mxu0
      %v489 = vadd.f32 0.0, %v488
      %v490 = vpop.f32.mrf.mxu0
      %491 = vdwg.mxu0
      %vm492 = vcmask 72704
      %v493 = vsel %vm492, %v484, -inf
      %494 = vmax.xlane.f32.xlu0 %v493
      %v495 = vpop.xlane.xlu0 %494
      %vm496 = vcmask 65536
      %v497 = vsel %vm496, %v489, -inf
      %498 = vmax.xlane.f32.xlu0 %v497
      %v499 = vpop.xlane.xlu0 %498
      %v500 = vsub.f32 %v484, %v495
      %v501 = vsub.f32 %v489, %v499
      %v502 = vmul.f32 %v500, 1.442695
      %v503 = vpow.pop %v502
      %v504 = vmul.f32 %v501, 1.442695
      %v505 = vpow.pop %v504
      %v506 = vsel %vm492, %v503, 0.0
      %507 = vadd.xlane.f32.xlu0 %v506
      %v508 = vpop.xlane.xlu0 %507
      %v509 = vsel %vm496, %v505, 0.0
      %510 = vadd.xlane.f32.xlu0 %v509
      %v511 = vpop.xlane.xlu0 %510
      %v512 = vrcp.pop %v508
      %v513 = vrcp.pop %v511
      %v514 = vmul.f32 %v503, %v512
      %v515 = vmul.f32 %v505, %v513
      %516 = vrot.lane.b32.xlu0 %v396, 64
      %v517 = vpop.permute.xlu0 %516
      %518 = vrot.lane.b32.xlu0 %v399, 64
      %v519 = vpop.permute.xlu0 %518
      %v522 = vsel %vm492, %v514, 0
      %v525 = vsel %vm492, %v515, 0
      %vm527 = vcmask 1040384
      %v528 = vsel %vm527, %v519, 0
      %530 = vmatprep.subr.mxu0 0.0
      %531 = vmatpush1.msra.mxu0 0.0
      %532 = vmatprep.subr.mxu0 0.0
      %533 = vmatpush1.msra.mxu0 0.0
      %534 = vmatprep.subr.mxu0 0.0
      %535 = vmatpush1.msra.mxu0 0.0
      %536 = vmatprep.subr.mxu0 0.0
      %537 = vmatpush1.msra.mxu0 0.0
      %538 = vmatprep.subr.mxu0 0.0
      %539 = vmatpush1.msra.mxu0 0.0
      %540 = vmatprep.subr.mxu0 0.0
      %541 = vmatpush1.msra.mxu0 0.0
      %542 = vmatprep.subr.mxu0 0.0
      %543 = vmatpush1.msra.mxu0 0.0
      %544 = vmatprep.subr.mxu0 0.0
      %545 = vmatpush1.msra.mxu0 0.0
      %546 = vmatprep.subr.mxu0 0.0
      %547 = vmatpush1.msra.mxu0 0.0
      %548 = vmatprep.subr.mxu0 0.0
      %549 = vmatpush1.msra.mxu0 0.0
      %550 = vmatprep.subr.mxu0 0.0
      %551 = vmatpush1.msra.mxu0 0.0
      %552 = vmatprep.subr.mxu0 0.0
      %553 = vmatpush1.msra.mxu0 0.0
      %554 = vmatprep.subr.mxu0 0.0
      %555 = vmatpush1.msra.mxu0 0.0
      %556 = vmatprep.subr.mxu0 0.0
      %557 = vmatpush1.msra.mxu0 0.0
      %558 = vmatprep.subr.mxu0 0.0
      %559 = vmatpush1.msra.mxu0 %v528
      %560 = vmatprep.subr.mxu0 0.0
      %561 = vmatpush1.msra.mxu0 %v517
      %562 = vmatprep.subr.mxu0 0.0
      %563 = vmatpush2.msra.mxu0 0.0
      %564 = vmatprep.subr.mxu0 0.0
      %565 = vmatpush2.msra.mxu0 0.0
      %566 = vmatprep.subr.mxu0 0.0
      %567 = vmatpush2.msra.mxu0 0.0
      %568 = vmatprep.subr.mxu0 0.0
      %569 = vmatpush2.msra.mxu0 0.0
      %570 = vmatprep.subr.mxu0 0.0
      %571 = vmatpush2.msra.mxu0 0.0
      %572 = vmatprep.subr.mxu0 0.0
      %573 = vmatpush2.msra.mxu0 0.0
      %574 = vmatprep.subr.mxu0 0.0
      %575 = vmatpush2.msra.mxu0 0.0
      %576 = vmatprep.subr.mxu0 0.0
      %577 = vmatpush2.msra.mxu0 0.0
      %578 = vmatprep.subr.mxu0 0.0
      %579 = vmatpush2.msra.mxu0 0.0
      %580 = vmatprep.subr.mxu0 0.0
      %581 = vmatpush2.msra.mxu0 0.0
      %582 = vmatprep.subr.mxu0 0.0
      %583 = vmatpush2.msra.mxu0 0.0
      %584 = vmatprep.subr.mxu0 0.0
      %585 = vmatpush2.msra.mxu0 0.0
      %586 = vmatprep.subr.mxu0 0.0
      %587 = vmatpush2.msra.mxu0 0.0
      %588 = vmatprep.subr.mxu0 0.0
      %589 = vmatpush2.msra.mxu0 0.0
      %590 = vmatprep.subr.mxu0 0.0
      %591 = vmatpush2.msra.mxu0 0.0
      %592 = vmatprep.subr.mxu0 0.0
      %593 = vmatpush2.msra.mxu0 0.0
      %594 = vmatprep.mubr.f32.mxu0 0.0
      %595 = vmatmul.mubr.f32.gmra.mxu0 %v522
      %v596 = vpop.f32.mrf.mxu0
      %v597 = vadd.f32 0.0, %v596
      %v598 = vpop.f32.mrf.mxu0
      %599 = vmatprep.mubr.f32.mxu0 0.0
      %600 = vmatmul.mubr.f32.gmra.mxu0 %v525
      %v601 = vpop.f32.mrf.mxu0
      %v602 = vadd.f32 0.0, %v601
      %v603 = vpop.f32.mrf.mxu0
      %604 = vdwg.mxu0
      %605 = vrot.lane.b32.xlu0 %v396, 120
      %v606 = vpop.permute.xlu0 %605
      %607 = vrot.lane.b32.xlu0 %v399, 120
      %v608 = vpop.permute.xlu0 %607
      %609 = vrot.lane.b32.xlu0 %v396, 88
      %v610 = vpop.permute.xlu0 %609
      %611 = vrot.lane.b32.xlu0 %v399, 88
      %v612 = vpop.permute.xlu0 %611
      %v613 = vsel %vm408, %v606, 0
      %v615 = vsel %vm408, %v608, 0
      %v617 = vsel %vm408, %v610, 0
      %v619 = vsel %vm408, %v612, 0
      %621 = vmatprep.subr.mxu0 0.0
      %622 = vmatpush1.xpose.msra.mxu0 0.0
      %623 = vmatprep.subr.mxu0 0.0
      %624 = vmatpush1.xpose.msra.mxu0 0.0
      %625 = vmatprep.subr.mxu0 0.0
      %626 = vmatpush1.xpose.msra.mxu0 0.0
      %627 = vmatprep.subr.mxu0 0.0
      %628 = vmatpush1.xpose.msra.mxu0 0.0
      %629 = vmatprep.subr.mxu0 0.0
      %630 = vmatpush1.xpose.msra.mxu0 0.0
      %631 = vmatprep.subr.mxu0 0.0
      %632 = vmatpush1.xpose.msra.mxu0 0.0
      %633 = vmatprep.subr.mxu0 0.0
      %634 = vmatpush1.xpose.msra.mxu0 0.0
      %635 = vmatprep.subr.mxu0 0.0
      %636 = vmatpush1.xpose.msra.mxu0 0.0
      %637 = vmatprep.subr.mxu0 0.0
      %638 = vmatpush1.xpose.msra.mxu0 0.0
      %639 = vmatprep.subr.mxu0 0.0
      %640 = vmatpush1.xpose.msra.mxu0 0.0
      %641 = vmatprep.subr.mxu0 0.0
      %642 = vmatpush1.xpose.msra.mxu0 0.0
      %643 = vmatprep.subr.mxu0 0.0
      %644 = vmatpush1.xpose.msra.mxu0 0.0
      %645 = vmatprep.subr.mxu0 0.0
      %646 = vmatpush1.xpose.msra.mxu0 0.0
      %647 = vmatprep.subr.mxu0 0.0
      %648 = vmatpush1.xpose.msra.mxu0 0.0
      %649 = vmatprep.subr.mxu0 0.0
      %650 = vmatpush1.xpose.msra.mxu0 %v619
      %651 = vmatprep.subr.mxu0 0.0
      %652 = vmatpush1.xpose.msra.mxu0 %v617
      %653 = vmatprep.subr.mxu0 0.0
      %654 = vmatpush2.xpose.msra.mxu0 0.0
      %655 = vmatprep.subr.mxu0 0.0
      %656 = vmatpush2.xpose.msra.mxu0 0.0
      %657 = vmatprep.subr.mxu0 0.0
      %658 = vmatpush2.xpose.msra.mxu0 0.0
      %659 = vmatprep.subr.mxu0 0.0
      %660 = vmatpush2.xpose.msra.mxu0 0.0
      %661 = vmatprep.subr.mxu0 0.0
      %662 = vmatpush2.xpose.msra.mxu0 0.0
      %663 = vmatprep.subr.mxu0 0.0
      %664 = vmatpush2.xpose.msra.mxu0 0.0
      %665 = vmatprep.subr.mxu0 0.0
      %666 = vmatpush2.xpose.msra.mxu0 0.0
      %667 = vmatprep.subr.mxu0 0.0
      %668 = vmatpush2.xpose.msra.mxu0 0.0
      %669 = vmatprep.subr.mxu0 0.0
      %670 = vmatpush2.xpose.msra.mxu0 0.0
      %671 = vmatprep.subr.mxu0 0.0
      %672 = vmatpush2.xpose.msra.mxu0 0.0
      %673 = vmatprep.subr.mxu0 0.0
      %674 = vmatpush2.xpose.msra.mxu0 0.0
      %675 = vmatprep.subr.mxu0 0.0
      %676 = vmatpush2.xpose.msra.mxu0 0.0
      %677 = vmatprep.subr.mxu0 0.0
      %678 = vmatpush2.xpose.msra.mxu0 0.0
      %679 = vmatprep.subr.mxu0 0.0
      %680 = vmatpush2.xpose.msra.mxu0 0.0
      %681 = vmatprep.subr.mxu0 0.0
      %682 = vmatpush2.xpose.msra.mxu0 0.0
      %683 = vmatprep.subr.mxu0 0.0
      %684 = vmatpush2.xpose.msra.mxu0 0.0
      %685 = vmatprep.mubr.f32.mxu0 0.0
      %686 = vmatmul.mubr.f32.gmra.mxu0 %v613
      %v687 = vpop.f32.mrf.mxu0
      %v688 = vadd.f32 0.0, %v687
      %v689 = vpop.f32.mrf.mxu0
      %690 = vmatprep.mubr.f32.mxu0 0.0
      %691 = vmatmul.mubr.f32.gmra.mxu0 %v615
      %v692 = vpop.f32.mrf.mxu0
      %v693 = vadd.f32 0.0, %v692
      %v694 = vpop.f32.mrf.mxu0
      %695 = vdwg.mxu0
      %v696 = vsel %vm492, %v688, -inf
      %697 = vmax.xlane.f32.xlu0 %v696
      %v698 = vpop.xlane.xlu0 %697
      %v699 = vsel %vm496, %v693, -inf
      %700 = vmax.xlane.f32.xlu0 %v699
      %v701 = vpop.xlane.xlu0 %700
      %v702 = vsub.f32 %v688, %v698
      %v703 = vsub.f32 %v693, %v701
      %v704 = vmul.f32 %v702, 1.442695
      %v705 = vpow.pop %v704
      %v706 = vmul.f32 %v703, 1.442695
      %v707 = vpow.pop %v706
      %v708 = vsel %vm492, %v705, 0.0
      %709 = vadd.xlane.f32.xlu0 %v708
      %v710 = vpop.xlane.xlu0 %709
      %v711 = vsel %vm496, %v707, 0.0
      %712 = vadd.xlane.f32.xlu0 %v711
      %v713 = vpop.xlane.xlu0 %712
      %v714 = vrcp.pop %v710
      %v715 = vrcp.pop %v713
      %v716 = vmul.f32 %v705, %v714
      %v717 = vmul.f32 %v707, %v715
      %718 = vrot.lane.b32.xlu0 %v396, 56
      %v719 = vpop.permute.xlu0 %718
      %720 = vrot.lane.b32.xlu0 %v399, 56
      %v721 = vpop.permute.xlu0 %720
      %v724 = vsel %vm492, %v716, 0
      %v727 = vsel %vm492, %v717, 0
      %v729 = vsel %vm527, %v721, 0
      %731 = vmatprep.subr.mxu0 0.0
      %732 = vmatpush1.msra.mxu0 0.0
      %733 = vmatprep.subr.mxu0 0.0
      %734 = vmatpush1.msra.mxu0 0.0
      %735 = vmatprep.subr.mxu0 0.0
      %736 = vmatpush1.msra.mxu0 0.0
      %737 = vmatprep.subr.mxu0 0.0
      %738 = vmatpush1.msra.mxu0 0.0
      %739 = vmatprep.subr.mxu0 0.0
      %740 = vmatpush1.msra.mxu0 0.0
      %741 = vmatprep.subr.mxu0 0.0
      %742 = vmatpush1.msra.mxu0 0.0
      %743 = vmatprep.subr.mxu0 0.0
      %744 = vmatpush1.msra.mxu0 0.0
      %745 = vmatprep.subr.mxu0 0.0
      %746 = vmatpush1.msra.mxu0 0.0
      %747 = vmatprep.subr.mxu0 0.0
      %748 = vmatpush1.msra.mxu0 0.0
      %749 = vmatprep.subr.mxu0 0.0
      %750 = vmatpush1.msra.mxu0 0.0
      %751 = vmatprep.subr.mxu0 0.0
      %752 = vmatpush1.msra.mxu0 0.0
      %753 = vmatprep.subr.mxu0 0.0
      %754 = vmatpush1.msra.mxu0 0.0
      %755 = vmatprep.subr.mxu0 0.0
      %756 = vmatpush1.msra.mxu0 0.0
      %757 = vmatprep.subr.mxu0 0.0
      %758 = vmatpush1.msra.mxu0 0.0
      %759 = vmatprep.subr.mxu0 0.0
      %760 = vmatpush1.msra.mxu0 %v729
      %761 = vmatprep.subr.mxu0 0.0
      %762 = vmatpush1.msra.mxu0 %v719
      %763 = vmatprep.subr.mxu0 0.0
      %764 = vmatpush2.msra.mxu0 0.0
      %765 = vmatprep.subr.mxu0 0.0
      %766 = vmatpush2.msra.mxu0 0.0
      %767 = vmatprep.subr.mxu0 0.0
      %768 = vmatpush2.msra.mxu0 0.0
      %769 = vmatprep.subr.mxu0 0.0
      %770 = vmatpush2.msra.mxu0 0.0
      %771 = vmatprep.subr.mxu0 0.0
      %772 = vmatpush2.msra.mxu0 0.0
      %773 = vmatprep.subr.mxu0 0.0
      %774 = vmatpush2.msra.mxu0 0.0
      %775 = vmatprep.subr.mxu0 0.0
      %776 = vmatpush2.msra.mxu0 0.0
      %777 = vmatprep.subr.mxu0 0.0
      %778 = vmatpush2.msra.mxu0 0.0
      %779 = vmatprep.subr.mxu0 0.0
      %780 = vmatpush2.msra.mxu0 0.0
      %781 = vmatprep.subr.mxu0 0.0
      %782 = vmatpush2.msra.mxu0 0.0
      %783 = vmatprep.subr.mxu0 0.0
      %784 = vmatpush2.msra.mxu0 0.0
      %785 = vmatprep.subr.mxu0 0.0
      %786 = vmatpush2.msra.mxu0 0.0
      %787 = vmatprep.subr.mxu0 0.0
      %788 = vmatpush2.msra.mxu0 0.0
      %789 = vmatprep.subr.mxu0 0.0
      %790 = vmatpush2.msra.mxu0 0.0
      %791 = vmatprep.subr.mxu0 0.0
      %792 = vmatpush2.msra.mxu0 0.0
      %793 = vmatprep.subr.mxu0 0.0
      %794 = vmatpush2.msra.mxu0 0.0
      %795 = vmatprep.mubr.f32.mxu0 0.0
      %796 = vmatmul.mubr.f32.gmra.mxu0 %v724
      %v797 = vpop.f32.mrf.mxu0
      %v798 = vadd.f32 0.0, %v797
      %v799 = vpop.f32.mrf.mxu0
      %800 = vmatprep.mubr.f32.mxu0 0.0
      %801 = vmatmul.mubr.f32.gmra.mxu0 %v727
      %v802 = vpop.f32.mrf.mxu0
      %v803 = vadd.f32 0.0, %v802
      %v804 = vpop.f32.mrf.mxu0
      %805 = vdwg.mxu0
      %806 = vrot.lane.b32.xlu0 %v396, 112
      %v807 = vpop.permute.xlu0 %806
      %808 = vrot.lane.b32.xlu0 %v399, 112
      %v809 = vpop.permute.xlu0 %808
      %810 = vrot.lane.b32.xlu0 %v396, 80
      %v811 = vpop.permute.xlu0 %810
      %812 = vrot.lane.b32.xlu0 %v399, 80
      %v813 = vpop.permute.xlu0 %812
      %v814 = vsel %vm408, %v807, 0
      %v816 = vsel %vm408, %v809, 0
      %v818 = vsel %vm408, %v811, 0
      %v820 = vsel %vm408, %v813, 0
      %822 = vmatprep.subr.mxu0 0.0
      %823 = vmatpush1.xpose.msra.mxu0 0.0
      %824 = vmatprep.subr.mxu0 0.0
      %825 = vmatpush1.xpose.msra.mxu0 0.0
      %826 = vmatprep.subr.mxu0 0.0
      %827 = vmatpush1.xpose.msra.mxu0 0.0
      %828 = vmatprep.subr.mxu0 0.0
      %829 = vmatpush1.xpose.msra.mxu0 0.0
      %830 = vmatprep.subr.mxu0 0.0
      %831 = vmatpush1.xpose.msra.mxu0 0.0
      %832 = vmatprep.subr.mxu0 0.0
      %833 = vmatpush1.xpose.msra.mxu0 0.0
      %834 = vmatprep.subr.mxu0 0.0
      %835 = vmatpush1.xpose.msra.mxu0 0.0
      %836 = vmatprep.subr.mxu0 0.0
      %837 = vmatpush1.xpose.msra.mxu0 0.0
      %838 = vmatprep.subr.mxu0 0.0
      %839 = vmatpush1.xpose.msra.mxu0 0.0
      %840 = vmatprep.subr.mxu0 0.0
      %841 = vmatpush1.xpose.msra.mxu0 0.0
      %842 = vmatprep.subr.mxu0 0.0
      %843 = vmatpush1.xpose.msra.mxu0 0.0
      %844 = vmatprep.subr.mxu0 0.0
      %845 = vmatpush1.xpose.msra.mxu0 0.0
      %846 = vmatprep.subr.mxu0 0.0
      %847 = vmatpush1.xpose.msra.mxu0 0.0
      %848 = vmatprep.subr.mxu0 0.0
      %849 = vmatpush1.xpose.msra.mxu0 0.0
      %850 = vmatprep.subr.mxu0 0.0
      %851 = vmatpush1.xpose.msra.mxu0 %v820
      %852 = vmatprep.subr.mxu0 0.0
      %853 = vmatpush1.xpose.msra.mxu0 %v818
      %854 = vmatprep.subr.mxu0 0.0
      %855 = vmatpush2.xpose.msra.mxu0 0.0
      %856 = vmatprep.subr.mxu0 0.0
      %857 = vmatpush2.xpose.msra.mxu0 0.0
      %858 = vmatprep.subr.mxu0 0.0
      %859 = vmatpush2.xpose.msra.mxu0 0.0
      %860 = vmatprep.subr.mxu0 0.0
      %861 = vmatpush2.xpose.msra.mxu0 0.0
      %862 = vmatprep.subr.mxu0 0.0
      %863 = vmatpush2.xpose.msra.mxu0 0.0
      %864 = vmatprep.subr.mxu0 0.0
      %865 = vmatpush2.xpose.msra.mxu0 0.0
      %866 = vmatprep.subr.mxu0 0.0
      %867 = vmatpush2.xpose.msra.mxu0 0.0
      %868 = vmatprep.subr.mxu0 0.0
      %869 = vmatpush2.xpose.msra.mxu0 0.0
      %870 = vmatprep.subr.mxu0 0.0
      %871 = vmatpush2.xpose.msra.mxu0 0.0
      %872 = vmatprep.subr.mxu0 0.0
      %873 = vmatpush2.xpose.msra.mxu0 0.0
      %874 = vmatprep.subr.mxu0 0.0
      %875 = vmatpush2.xpose.msra.mxu0 0.0
      %876 = vmatprep.subr.mxu0 0.0
      %877 = vmatpush2.xpose.msra.mxu0 0.0
      %878 = vmatprep.subr.mxu0 0.0
      %879 = vmatpush2.xpose.msra.mxu0 0.0
      %880 = vmatprep.subr.mxu0 0.0
      %881 = vmatpush2.xpose.msra.mxu0 0.0
      %882 = vmatprep.subr.mxu0 0.0
      %883 = vmatpush2.xpose.msra.mxu0 0.0
      %884 = vmatprep.subr.mxu0 0.0
      %885 = vmatpush2.xpose.msra.mxu0 0.0
      %886 = vmatprep.mubr.f32.mxu0 0.0
      %887 = vmatmul.mubr.f32.gmra.mxu0 %v814
      %v888 = vpop.f32.mrf.mxu0
      %v889 = vadd.f32 0.0, %v888
      %v890 = vpop.f32.mrf.mxu0
      %891 = vmatprep.mubr.f32.mxu0 0.0
      %892 = vmatmul.mubr.f32.gmra.mxu0 %v816
      %v893 = vpop.f32.mrf.mxu0
      %v894 = vadd.f32 0.0, %v893
      %v895 = vpop.f32.mrf.mxu0
      %896 = vdwg.mxu0
      %v897 = vsel %vm492, %v889, -inf
      %898 = vmax.xlane.f32.xlu0 %v897
      %v899 = vpop.xlane.xlu0 %898
      %v900 = vsel %vm496, %v894, -inf
      %901 = vmax.xlane.f32.xlu0 %v900
      %v902 = vpop.xlane.xlu0 %901
      %v903 = vsub.f32 %v889, %v899
      %v904 = vsub.f32 %v894, %v902
      %v905 = vmul.f32 %v903, 1.442695
      %v906 = vpow.pop %v905
      %v907 = vmul.f32 %v904, 1.442695
      %v908 = vpow.pop %v907
      %v909 = vsel %vm492, %v906, 0.0
      %910 = vadd.xlane.f32.xlu0 %v909
      %v911 = vpop.xlane.xlu0 %910
      %v912 = vsel %vm496, %v908, 0.0
      %913 = vadd.xlane.f32.xlu0 %v912
      %v914 = vpop.xlane.xlu0 %913
      %v915 = vrcp.pop %v911
      %v916 = vrcp.pop %v914
      %v917 = vmul.f32 %v906, %v915
      %v918 = vmul.f32 %v908, %v916
      %919 = vrot.lane.b32.xlu0 %v396, 48
      %v920 = vpop.permute.xlu0 %919
      %921 = vrot.lane.b32.xlu0 %v399, 48
      %v922 = vpop.permute.xlu0 %921
      %v925 = vsel %vm492, %v917, 0
      %v928 = vsel %vm492, %v918, 0
      %v930 = vsel %vm527, %v922, 0
      %932 = vmatprep.subr.mxu0 0.0
      %933 = vmatpush1.msra.mxu0 0.0
      %934 = vmatprep.subr.mxu0 0.0
      %935 = vmatpush1.msra.mxu0 0.0
      %936 = vmatprep.subr.mxu0 0.0
      %937 = vmatpush1.msra.mxu0 0.0
      %938 = vmatprep.subr.mxu0 0.0
      %939 = vmatpush1.msra.mxu0 0.0
      %940 = vmatprep.subr.mxu0 0.0
      %941 = vmatpush1.msra.mxu0 0.0
      %942 = vmatprep.subr.mxu0 0.0
      %943 = vmatpush1.msra.mxu0 0.0
      %944 = vmatprep.subr.mxu0 0.0
      %945 = vmatpush1.msra.mxu0 0.0
      %946 = vmatprep.subr.mxu0 0.0
      %947 = vmatpush1.msra.mxu0 0.0
      %948 = vmatprep.subr.mxu0 0.0
      %949 = vmatpush1.msra.mxu0 0.0
      %950 = vmatprep.subr.mxu0 0.0
      %951 = vmatpush1.msra.mxu0 0.0
      %952 = vmatprep.subr.mxu0 0.0
      %953 = vmatpush1.msra.mxu0 0.0
      %954 = vmatprep.subr.mxu0 0.0
      %955 = vmatpush1.msra.mxu0 0.0
      %956 = vmatprep.subr.mxu0 0.0
      %957 = vmatpush1.msra.mxu0 0.0
      %958 = vmatprep.subr.mxu0 0.0
      %959 = vmatpush1.msra.mxu0 0.0
      %960 = vmatprep.subr.mxu0 0.0
      %961 = vmatpush1.msra.mxu0 %v930
      %962 = vmatprep.subr.mxu0 0.0
      %963 = vmatpush1.msra.mxu0 %v920
      %964 = vmatprep.subr.mxu0 0.0
      %965 = vmatpush2.msra.mxu0 0.0
      %966 = vmatprep.subr.mxu0 0.0
      %967 = vmatpush2.msra.mxu0 0.0
      %968 = vmatprep.subr.mxu0 0.0
      %969 = vmatpush2.msra.mxu0 0.0
      %970 = vmatprep.subr.mxu0 0.0
      %971 = vmatpush2.msra.mxu0 0.0
      %972 = vmatprep.subr.mxu0 0.0
      %973 = vmatpush2.msra.mxu0 0.0
      %974 = vmatprep.subr.mxu0 0.0
      %975 = vmatpush2.msra.mxu0 0.0
      %976 = vmatprep.subr.mxu0 0.0
      %977 = vmatpush2.msra.mxu0 0.0
      %978 = vmatprep.subr.mxu0 0.0
      %979 = vmatpush2.msra.mxu0 0.0
      %980 = vmatprep.subr.mxu0 0.0
      %981 = vmatpush2.msra.mxu0 0.0
      %982 = vmatprep.subr.mxu0 0.0
      %983 = vmatpush2.msra.mxu0 0.0
      %984 = vmatprep.subr.mxu0 0.0
      %985 = vmatpush2.msra.mxu0 0.0
      %986 = vmatprep.subr.mxu0 0.0
      %987 = vmatpush2.msra.mxu0 0.0
      %988 = vmatprep.subr.mxu0 0.0
      %989 = vmatpush2.msra.mxu0 0.0
      %990 = vmatprep.subr.mxu0 0.0
      %991 = vmatpush2.msra.mxu0 0.0
      %992 = vmatprep.subr.mxu0 0.0
      %993 = vmatpush2.msra.mxu0 0.0
      %994 = vmatprep.subr.mxu0 0.0
      %995 = vmatpush2.msra.mxu0 0.0
      %996 = vmatprep.mubr.f32.mxu0 0.0
      %997 = vmatmul.mubr.f32.gmra.mxu0 %v925
      %v998 = vpop.f32.mrf.mxu0
      %v999 = vadd.f32 0.0, %v998
      %v1000 = vpop.f32.mrf.mxu0
      %1001 = vmatprep.mubr.f32.mxu0 0.0
      %1002 = vmatmul.mubr.f32.gmra.mxu0 %v928
      %v1003 = vpop.f32.mrf.mxu0
      %v1004 = vadd.f32 0.0, %v1003
      %v1005 = vpop.f32.mrf.mxu0
      %1006 = vdwg.mxu0
      %1007 = vrot.lane.b32.xlu0 %v396, 104
      %v1008 = vpop.permute.xlu0 %1007
      %1009 = vrot.lane.b32.xlu0 %v399, 104
      %v1010 = vpop.permute.xlu0 %1009
      %1011 = vrot.lane.b32.xlu0 %v396, 72
      %v1012 = vpop.permute.xlu0 %1011
      %1013 = vrot.lane.b32.xlu0 %v399, 72
      %v1014 = vpop.permute.xlu0 %1013
      %v1015 = vsel %vm408, %v1008, 0
      %v1017 = vsel %vm408, %v1010, 0
      %v1019 = vsel %vm408, %v1012, 0
      %v1021 = vsel %vm408, %v1014, 0
      %1023 = vmatprep.subr.mxu0 0.0
      %1024 = vmatpush1.xpose.msra.mxu0 0.0
      %1025 = vmatprep.subr.mxu0 0.0
      %1026 = vmatpush1.xpose.msra.mxu0 0.0
      %1027 = vmatprep.subr.mxu0 0.0
      %1028 = vmatpush1.xpose.msra.mxu0 0.0
      %1029 = vmatprep.subr.mxu0 0.0
      %1030 = vmatpush1.xpose.msra.mxu0 0.0
      %1031 = vmatprep.subr.mxu0 0.0
      %1032 = vmatpush1.xpose.msra.mxu0 0.0
      %1033 = vmatprep.subr.mxu0 0.0
      %1034 = vmatpush1.xpose.msra.mxu0 0.0
      %1035 = vmatprep.subr.mxu0 0.0
      %1036 = vmatpush1.xpose.msra.mxu0 0.0
      %1037 = vmatprep.subr.mxu0 0.0
      %1038 = vmatpush1.xpose.msra.mxu0 0.0
      %1039 = vmatprep.subr.mxu0 0.0
      %1040 = vmatpush1.xpose.msra.mxu0 0.0
      %1041 = vmatprep.subr.mxu0 0.0
      %1042 = vmatpush1.xpose.msra.mxu0 0.0
      %1043 = vmatprep.subr.mxu0 0.0
      %1044 = vmatpush1.xpose.msra.mxu0 0.0
      %1045 = vmatprep.subr.mxu0 0.0
      %1046 = vmatpush1.xpose.msra.mxu0 0.0
      %1047 = vmatprep.subr.mxu0 0.0
      %1048 = vmatpush1.xpose.msra.mxu0 0.0
      %1049 = vmatprep.subr.mxu0 0.0
      %1050 = vmatpush1.xpose.msra.mxu0 0.0
      %1051 = vmatprep.subr.mxu0 0.0
      %1052 = vmatpush1.xpose.msra.mxu0 %v1021
      %1053 = vmatprep.subr.mxu0 0.0
      %1054 = vmatpush1.xpose.msra.mxu0 %v1019
      %1055 = vmatprep.subr.mxu0 0.0
      %1056 = vmatpush2.xpose.msra.mxu0 0.0
      %1057 = vmatprep.subr.mxu0 0.0
      %1058 = vmatpush2.xpose.msra.mxu0 0.0
      %1059 = vmatprep.subr.mxu0 0.0
      %1060 = vmatpush2.xpose.msra.mxu0 0.0
      %1061 = vmatprep.subr.mxu0 0.0
      %1062 = vmatpush2.xpose.msra.mxu0 0.0
      %1063 = vmatprep.subr.mxu0 0.0
      %1064 = vmatpush2.xpose.msra.mxu0 0.0
      %1065 = vmatprep.subr.mxu0 0.0
      %1066 = vmatpush2.xpose.msra.mxu0 0.0
      %1067 = vmatprep.subr.mxu0 0.0
      %1068 = vmatpush2.xpose.msra.mxu0 0.0
      %1069 = vmatprep.subr.mxu0 0.0
      %1070 = vmatpush2.xpose.msra.mxu0 0.0
      %1071 = vmatprep.subr.mxu0 0.0
      %1072 = vmatpush2.xpose.msra.mxu0 0.0
      %1073 = vmatprep.subr.mxu0 0.0
      %1074 = vmatpush2.xpose.msra.mxu0 0.0
      %1075 = vmatprep.subr.mxu0 0.0
      %1076 = vmatpush2.xpose.msra.mxu0 0.0
      %1077 = vmatprep.subr.mxu0 0.0
      %1078 = vmatpush2.xpose.msra.mxu0 0.0
      %1079 = vmatprep.subr.mxu0 0.0
      %1080 = vmatpush2.xpose.msra.mxu0 0.0
      %1081 = vmatprep.subr.mxu0 0.0
      %1082 = vmatpush2.xpose.msra.mxu0 0.0
      %1083 = vmatprep.subr.mxu0 0.0
      %1084 = vmatpush2.xpose.msra.mxu0 0.0
      %1085 = vmatprep.subr.mxu0 0.0
      %1086 = vmatpush2.xpose.msra.mxu0 0.0
      %1087 = vmatprep.mubr.f32.mxu0 0.0
      %1088 = vmatmul.mubr.f32.gmra.mxu0 %v1015
      %v1089 = vpop.f32.mrf.mxu0
      %v1090 = vadd.f32 0.0, %v1089
      %v1091 = vpop.f32.mrf.mxu0
      %1092 = vmatprep.mubr.f32.mxu0 0.0
      %1093 = vmatmul.mubr.f32.gmra.mxu0 %v1017
      %v1094 = vpop.f32.mrf.mxu0
      %v1095 = vadd.f32 0.0, %v1094
      %v1096 = vpop.f32.mrf.mxu0
      %1097 = vdwg.mxu0
      %v1098 = vsel %vm492, %v1090, -inf
      %1099 = vmax.xlane.f32.xlu0 %v1098
      %v1100 = vpop.xlane.xlu0 %1099
      %v1101 = vsel %vm496, %v1095, -inf
      %1102 = vmax.xlane.f32.xlu0 %v1101
      %v1103 = vpop.xlane.xlu0 %1102
      %v1104 = vsub.f32 %v1090, %v1100
      %v1105 = vsub.f32 %v1095, %v1103
      %v1106 = vmul.f32 %v1104, 1.442695
      %v1107 = vpow.pop %v1106
      %v1108 = vmul.f32 %v1105, 1.442695
      %v1109 = vpow.pop %v1108
      %v1110 = vsel %vm492, %v1107, 0.0
      %1111 = vadd.xlane.f32.xlu0 %v1110
      %v1112 = vpop.xlane.xlu0 %1111
      %v1113 = vsel %vm496, %v1109, 0.0
      %1114 = vadd.xlane.f32.xlu0 %v1113
      %v1115 = vpop.xlane.xlu0 %1114
      %v1116 = vrcp.pop %v1112
      %v1117 = vrcp.pop %v1115
      %v1118 = vmul.f32 %v1107, %v1116
      %v1119 = vmul.f32 %v1109, %v1117
      %1120 = vrot.lane.b32.xlu0 %v396, 40
      %v1121 = vpop.permute.xlu0 %1120
      %1122 = vrot.lane.b32.xlu0 %v399, 40
      %v1123 = vpop.permute.xlu0 %1122
      %v1126 = vsel %vm492, %v1118, 0
      %v1129 = vsel %vm492, %v1119, 0
      %v1131 = vsel %vm527, %v1123, 0
      %1133 = vmatprep.subr.mxu0 0.0
      %1134 = vmatpush1.msra.mxu0 0.0
      %1135 = vmatprep.subr.mxu0 0.0
      %1136 = vmatpush1.msra.mxu0 0.0
      %1137 = vmatprep.subr.mxu0 0.0
      %1138 = vmatpush1.msra.mxu0 0.0
      %1139 = vmatprep.subr.mxu0 0.0
      %1140 = vmatpush1.msra.mxu0 0.0
      %1141 = vmatprep.subr.mxu0 0.0
      %1142 = vmatpush1.msra.mxu0 0.0
      %1143 = vmatprep.subr.mxu0 0.0
      %1144 = vmatpush1.msra.mxu0 0.0
      %1145 = vmatprep.subr.mxu0 0.0
      %1146 = vmatpush1.msra.mxu0 0.0
      %1147 = vmatprep.subr.mxu0 0.0
      %1148 = vmatpush1.msra.mxu0 0.0
      %1149 = vmatprep.subr.mxu0 0.0
      %1150 = vmatpush1.msra.mxu0 0.0
      %1151 = vmatprep.subr.mxu0 0.0
      %1152 = vmatpush1.msra.mxu0 0.0
      %1153 = vmatprep.subr.mxu0 0.0
      %1154 = vmatpush1.msra.mxu0 0.0
      %1155 = vmatprep.subr.mxu0 0.0
      %1156 = vmatpush1.msra.mxu0 0.0
      %1157 = vmatprep.subr.mxu0 0.0
      %1158 = vmatpush1.msra.mxu0 0.0
      %1159 = vmatprep.subr.mxu0 0.0
      %1160 = vmatpush1.msra.mxu0 0.0
      %1161 = vmatprep.subr.mxu0 0.0
      %1162 = vmatpush1.msra.mxu0 %v1131
      %1163 = vmatprep.subr.mxu0 0.0
      %1164 = vmatpush1.msra.mxu0 %v1121
      %1165 = vmatprep.subr.mxu0 0.0
      %1166 = vmatpush2.msra.mxu0 0.0
      %1167 = vmatprep.subr.mxu0 0.0
      %1168 = vmatpush2.msra.mxu0 0.0
      %1169 = vmatprep.subr.mxu0 0.0
      %1170 = vmatpush2.msra.mxu0 0.0
      %1171 = vmatprep.subr.mxu0 0.0
      %1172 = vmatpush2.msra.mxu0 0.0
      %1173 = vmatprep.subr.mxu0 0.0
      %1174 = vmatpush2.msra.mxu0 0.0
      %1175 = vmatprep.subr.mxu0 0.0
      %1176 = vmatpush2.msra.mxu0 0.0
      %1177 = vmatprep.subr.mxu0 0.0
      %1178 = vmatpush2.msra.mxu0 0.0
      %1179 = vmatprep.subr.mxu0 0.0
      %1180 = vmatpush2.msra.mxu0 0.0
      %1181 = vmatprep.subr.mxu0 0.0
      %1182 = vmatpush2.msra.mxu0 0.0
      %1183 = vmatprep.subr.mxu0 0.0
      %1184 = vmatpush2.msra.mxu0 0.0
      %1185 = vmatprep.subr.mxu0 0.0
      %1186 = vmatpush2.msra.mxu0 0.0
      %1187 = vmatprep.subr.mxu0 0.0
      %1188 = vmatpush2.msra.mxu0 0.0
      %1189 = vmatprep.subr.mxu0 0.0
      %1190 = vmatpush2.msra.mxu0 0.0
      %1191 = vmatprep.subr.mxu0 0.0
      %1192 = vmatpush2.msra.mxu0 0.0
      %1193 = vmatprep.subr.mxu0 0.0
      %1194 = vmatpush2.msra.mxu0 0.0
      %1195 = vmatprep.subr.mxu0 0.0
      %1196 = vmatpush2.msra.mxu0 0.0
      %1197 = vmatprep.mubr.f32.mxu0 0.0
      %1198 = vmatmul.mubr.f32.gmra.mxu0 %v1126
      %v1199 = vpop.f32.mrf.mxu0
      %v1200 = vadd.f32 0.0, %v1199
      %v1201 = vpop.f32.mrf.mxu0
      %1202 = vmatprep.mubr.f32.mxu0 0.0
      %1203 = vmatmul.mubr.f32.gmra.mxu0 %v1129
      %v1204 = vpop.f32.mrf.mxu0
      %v1205 = vadd.f32 0.0, %v1204
      %v1206 = vpop.f32.mrf.mxu0
      %1207 = vdwg.mxu0
      %1210 = vrot.lane.b32.xlu0 %v798, 8
      %v1211 = vpop.permute.xlu0 %1210
      %1212 = vrot.lane.b32.xlu0 %v803, 8
      %v1213 = vpop.permute.xlu0 %1212
      %1218 = vrot.lane.b32.xlu0 %v999, 16
      %v1219 = vpop.permute.xlu0 %1218
      %1220 = vrot.lane.b32.xlu0 %v1004, 16
      %v1221 = vpop.permute.xlu0 %1220
      %1226 = vrot.lane.b32.xlu0 %v1200, 24
      %v1227 = vpop.permute.xlu0 %1226
      %1228 = vrot.lane.b32.xlu0 %v1205, 24
      %v1229 = vpop.permute.xlu0 %1228
      %v1232 = vsel %vm408, %v597, %v1211
      %v1233 = vsel %vm408, %v602, %v1213
      %vm1234 = vcmask 130048
      %v1235 = vsel %vm1234, %v1232, %v1219
      %v1236 = vsel %vm1234, %v1233, %v1221
      %vm1237 = vcmask 195584
      %v1238 = vsel %vm1237, %v1235, %v1227
      %v1239 = vsel %vm1237, %v1236, %v1229
      %v1240 = vpack.c.bf16 %v1239, %v1238
      %v1241 = vlaneseq
      %v1242 = vshrl.u32 %v1241, 7
      %v1243 = vsub.s32 5, %v1242
      %v1244 = vrot.slane %v299, %v1243
      %1245 = vrot.lane.b32.xlu0 %v354, 32
      %v1246 = vpop.permute.xlu0 %1245
      %1247 = vrot.lane.b32.xlu0 %v355, 32
      %v1248 = vpop.permute.xlu0 %1247
      %v1252 = vsel %vm300, %v1240, 0
      %1254 = vmatprep.subr.bf16.mxu0 0
      %1255 = vmatpush1.bf16.msra.mxu0 0
      %1256 = vmatprep.subr.bf16.mxu0 0
      %1257 = vmatpush1.bf16.msra.mxu0 0
      %1258 = vmatprep.subr.bf16.mxu0 0
      %1259 = vmatpush1.bf16.msra.mxu0 0
      %1260 = vmatprep.subr.bf16.mxu0 0
      %1261 = vmatpush1.bf16.msra.mxu0 0
      %1262 = vmatprep.subr.bf16.mxu0 0
      %1263 = vmatpush1.bf16.msra.mxu0 0
      %1264 = vmatprep.subr.bf16.mxu0 0
      %1265 = vmatpush1.bf16.msra.mxu0 0
      %1266 = vmatprep.subr.bf16.mxu0 0
      %1267 = vmatpush1.bf16.msra.mxu0 %v1248
      %1268 = vmatprep.subr.bf16.mxu0 0
      %1269 = vmatpush1.bf16.msra.mxu0 %v1246
      %1270 = vmatprep.subr.bf16.mxu0 0
      %1271 = vmatpush2.bf16.msra.mxu0 0
      %1272 = vmatprep.subr.bf16.mxu0 0
      %1273 = vmatpush2.bf16.msra.mxu0 0
      %1274 = vmatprep.subr.bf16.mxu0 0
      %1275 = vmatpush2.bf16.msra.mxu0 0
      %1276 = vmatprep.subr.bf16.mxu0 0
      %1277 = vmatpush2.bf16.msra.mxu0 0
      %1278 = vmatprep.subr.bf16.mxu0 0
      %1279 = vmatpush2.bf16.msra.mxu0 0
      %1280 = vmatprep.subr.bf16.mxu0 0
      %1281 = vmatpush2.bf16.msra.mxu0 0
      %1282 = vmatprep.subr.bf16.mxu0 0
      %1283 = vmatpush2.bf16.msra.mxu0 0
      %1284 = vmatprep.subr.bf16.mxu0 0
      %1285 = vmatpush2.bf16.msra.mxu0 0
      %1286 = vmatprep.mubr.bf16.mxu0 0
      %1287 = vmatmul.mubr.bf16.gmra.mxu0 %v1252
      %v1288 = vpop.f32.mrf.mxu0
      %v1289 = vadd.f32 %v1244, %v1288
      %v1290 = vpop.f32.mrf.mxu0
      %v1291 = vpop.f32.mrf.mxu0
      %v1292 = vadd.f32 %v1244, %v1291
      %v1293 = vpop.f32.mrf.mxu0
      %1294 = vdwg.mxu0
      %v1295 = vadd.f32 %v285, %v1289
      %v1296 = vadd.f32 %v286, %v1292
      %v1297 = vsel %vm300, %v1295, 0.0
      %1298 = vadd.xlane.f32.xlu0 %v1297
      %v1299 = vpop.xlane.xlu0 %1298
      %v1300 = vsel %vm304, %v1296, 0.0
      %1301 = vadd.xlane.f32.xlu0 %v1300
      %v1302 = vpop.xlane.xlu0 %1301
      %v1303 = vmul.f32 %v1299, %v308
      %v1304 = vmul.f32 %v1302, %v308
      %v1305 = vsub.f32 %v1295, %v1303
      %v1306 = vsub.f32 %v1296, %v1304
      %v1307 = vmul.f32 %v1305, %v1305
      %v1308 = vmul.f32 %v1306, %v1306
      %v1309 = vsel %vm300, %v1307, 0.0
      %1310 = vadd.xlane.f32.xlu0 %v1309
      %v1311 = vpop.xlane.xlu0 %1310
      %v1312 = vsel %vm304, %v1308, 0.0
      %1313 = vadd.xlane.f32.xlu0 %v1312
      %v1314 = vpop.xlane.xlu0 %1313
      %v1315 = vmul.f32 %v1311, %v308
      %v1316 = vmul.f32 %v1314, %v308
      %v1317 = vadd.f32 %v1315, 1e-05
      %v1318 = vadd.f32 %v1316, 1e-05
      %v1319 = vrsqrt.pop %v1317
      %v1320 = vrsqrt.pop %v1318
      %v1321 = vmul.f32 %v1305, %v1319
      %v1322 = vmul.f32 %v1306, %v1320
      %v1323 = vlaneseq
      %v1324 = vshrl.u32 %v1323, 7
      %v1325 = vsub.s32 2, %v1324
      %v1326 = vrot.slane %v299, %v1325
      %v1327 = vmul.f32 %v1321, %v1326
      %v1328 = vmul.f32 %v1322, %v1326
      %v1329 = vlaneseq
      %v1330 = vshrl.u32 %v1329, 7
      %v1331 = vsub.s32 3, %v1330
      %v1332 = vrot.slane %v299, %v1331
      %v1333 = vadd.f32 %v1327, %v1332
      %v1334 = vadd.f32 %v1328, %v1332
      %v1335 = vpack.c.bf16 %v1334, %v1333
      %v1336 = vlaneseq
      %v1337 = vshrl.u32 %v1336, 7
      %v1338 = vsub.s32 6, %v1337
      %v1339 = vrot.slane %v299, %v1338
      %v1340 = vunpack.c.h.b16 %v287
      %v1341 = vunpack.c.h.b16 %v288
      %v1342 = vunpack.c.h.b16 %v289
      %v1343 = vunpack.c.h.b16 %v290
      %v1344 = vpack.c.b16 %v1341, %v1340
      %v1345 = vpack.c.b16 %v1343, %v1342
      %v1349 = vsel %vm300, %v1335, 0
      %1351 = vmatprep.subr.bf16.mxu0 0
      %1352 = vmatpush1.bf16.msra.mxu0 0
      %1353 = vmatprep.subr.bf16.mxu0 0
      %1354 = vmatpush1.bf16.msra.mxu0 0
      %1355 = vmatprep.subr.bf16.mxu0 0
      %1356 = vmatpush1.bf16.msra.mxu0 0
      %1357 = vmatprep.subr.bf16.mxu0 0
      %1358 = vmatpush1.bf16.msra.mxu0 0
      %1359 = vmatprep.subr.bf16.mxu0 0
      %1360 = vmatpush1.bf16.msra.mxu0 0
      %1361 = vmatprep.subr.bf16.mxu0 0
      %1362 = vmatpush1.bf16.msra.mxu0 0
      %1363 = vmatprep.subr.bf16.mxu0 0
      %1364 = vmatpush1.bf16.msra.mxu0 %v1345
      %1365 = vmatprep.subr.bf16.mxu0 0
      %1366 = vmatpush1.bf16.msra.mxu0 %v1344
      %1367 = vmatprep.subr.bf16.mxu0 0
      %1368 = vmatpush2.bf16.msra.mxu0 0
      %1369 = vmatprep.subr.bf16.mxu0 0
      %1370 = vmatpush2.bf16.msra.mxu0 0
      %1371 = vmatprep.subr.bf16.mxu0 0
      %1372 = vmatpush2.bf16.msra.mxu0 0
      %1373 = vmatprep.subr.bf16.mxu0 0
      %1374 = vmatpush2.bf16.msra.mxu0 0
      %1375 = vmatprep.subr.bf16.mxu0 0
      %1376 = vmatpush2.bf16.msra.mxu0 0
      %1377 = vmatprep.subr.bf16.mxu0 0
      %1378 = vmatpush2.bf16.msra.mxu0 0
      %1379 = vmatprep.subr.bf16.mxu0 0
      %1380 = vmatpush2.bf16.msra.mxu0 0
      %1381 = vmatprep.subr.bf16.mxu0 0
      %1382 = vmatpush2.bf16.msra.mxu0 0
      %1383 = vmatprep.mubr.bf16.mxu0 0
      %1384 = vmatmul.mubr.bf16.gmra.mxu0 %v1349
      %v1385 = vpop.f32.mrf.mxu0
      %v1386 = vadd.f32 %v1339, %v1385
      %v1387 = vpop.f32.mrf.mxu0
      %v1388 = vpop.f32.mrf.mxu0
      %v1389 = vadd.f32 %v1339, %v1388
      %v1390 = vpop.f32.mrf.mxu0
      %1391 = vdwg.mxu0
      %v1392 = vmul.f32 %v1386, %v1386
      %v1393 = vmul.f32 %v1389, %v1389
      %v1394 = vmul.f32 %v1386, %v1392
      %v1395 = vmul.f32 %v1389, %v1393
      %v1396 = vmul.f32 %v1394, 0.044715
      %v1397 = vmul.f32 %v1395, 0.044715
      %v1398 = vadd.f32 %v1386, %v1396
      %v1399 = vadd.f32 %v1389, %v1397
      %v1400 = vmul.f32 %v1398, 0.7978846
      %v1401 = vmul.f32 %v1399, 0.7978846
      %v1402 = vtanh.pop %v1400
      %v1403 = vtanh.pop %v1401
      %v1404 = vadd.f32 %v1402, 1.0
      %v1405 = vadd.f32 %v1403, 1.0
      %v1406 = vmul.f32 %v1404, 0.5
      %v1407 = vmul.f32 %v1405, 0.5
      %v1408 = vmul.f32 %v1386, %v1406
      %v1409 = vmul.f32 %v1389, %v1407
      %v1410 = vpack.c.bf16 %v1409, %v1408
      %v1411 = vlaneseq
      %v1412 = vshrl.u32 %v1411, 7
      %v1413 = vsub.s32 7, %v1412
      %v1414 = vrot.slane %v299, %v1413
      %v1423 = vunpack.c.l.b16 %v291
      %v1424 = vunpack.c.l.b16 %v292
      %v1425 = vunpack.c.l.b16 %v293
      %v1426 = vunpack.c.l.b16 %v294
      %v1427 = vunpack.c.l.b16 %v295
      %v1428 = vunpack.c.l.b16 %v296
      %v1429 = vunpack.c.l.b16 %v297
      %v1430 = vunpack.c.l.b16 %v298
      %v1431 = vpack.c.b16 %v1424, %v1423
      %v1432 = vpack.c.b16 %v1426, %v1425
      %v1433 = vpack.c.b16 %v1428, %v1427
      %v1434 = vpack.c.b16 %v1430, %v1429
      %vm1439 = vcmask 523264
      %v1441 = vsel %vm1439, %v1410, 0
      %1443 = vmatprep.subr.bf16.mxu0 0
      %1444 = vmatpush1.bf16.msra.mxu0 0
      %1445 = vmatprep.subr.bf16.mxu0 0
      %1446 = vmatpush1.bf16.msra.mxu0 0
      %1447 = vmatprep.subr.bf16.mxu0 0
      %1448 = vmatpush1.bf16.msra.mxu0 0
      %1449 = vmatprep.subr.bf16.mxu0 0
      %1450 = vmatpush1.bf16.msra.mxu0 0
      %1451 = vmatprep.subr.bf16.mxu0 0
      %1452 = vmatpush1.bf16.msra.mxu0 %v1434
      %1453 = vmatprep.subr.bf16.mxu0 0
      %1454 = vmatpush1.bf16.msra.mxu0 %v1433
      %1455 = vmatprep.subr.bf16.mxu0 0
      %1456 = vmatpush1.bf16.msra.mxu0 %v1432
      %1457 = vmatprep.subr.bf16.mxu0 0
      %1458 = vmatpush1.bf16.msra.mxu0 %v1431
      %1459 = vmatprep.subr.bf16.mxu0 0
      %1460 = vmatpush2.bf16.msra.mxu0 0
      %1461 = vmatprep.subr.bf16.mxu0 0
      %1462 = vmatpush2.bf16.msra.mxu0 0
      %1463 = vmatprep.subr.bf16.mxu0 0
      %1464 = vmatpush2.bf16.msra.mxu0 0
      %1465 = vmatprep.subr.bf16.mxu0 0
      %1466 = vmatpush2.bf16.msra.mxu0 0
      %1467 = vmatprep.subr.bf16.mxu0 0
      %1468 = vmatpush2.bf16.msra.mxu0 0
      %1469 = vmatprep.subr.bf16.mxu0 0
      %1470 = vmatpush2.bf16.msra.mxu0 0
      %1471 = vmatprep.subr.bf16.mxu0 0
      %1472 = vmatpush2.bf16.msra.mxu0 0
      %1473 = vmatprep.subr.bf16.mxu0 0
      %1474 = vmatpush2.bf16.msra.mxu0 0
      %1475 = vmatprep.mubr.bf16.mxu0 0
      %1476 = vmatmul.mubr.bf16.gmra.mxu0 %v1441
      %v1477 = vpop.f32.mrf.mxu0
      %v1478 = vadd.f32 %v1414, %v1477
      %v1479 = vpop.f32.mrf.mxu0
      %v1480 = vpop.f32.mrf.mxu0
      %v1481 = vadd.f32 %v1414, %v1480
      %v1482 = vpop.f32.mrf.mxu0
      %1483 = vdwg.mxu0
      %v1484 = vadd.f32 %v1295, %v1478
      %v1485 = vadd.f32 %v1296, %v1481
      %1486 = vst.msk [vmem:[#allocation2] sm:$0xff] %vm300, %v1484
      %1487 = vst.msk [vmem:[#allocation2 + $0x8] sm:$0x1] %vm304, %v1485
      %p1488 = scmp.eq.s32.totalorder %s21, 2
      // Predicated region
      $region45: #{forward.3} parent=39 // pred_check
        %p1489 = pneg %p1488
      $region46: #{forward.3} parent=39 // pred_check_branch
        %1491 = sbr.rel (%p1489) target = $region48
      $region47: #{forward.3} parent=39 // pred_region
        %v1492 = vpack.c.bf16 %v1485, %v1484
        %v1493 = vld [vmem:[%s3] sm:$0xf]
        %v1494 = vld [vmem:[%s3 + $0x4] sm:$0xf]
        %v1495 = vld [vmem:[%s3 + $0x8] sm:$0xf]
        %v1496 = vld [vmem:[%s3 + $0xc] sm:$0xf]
        %v1497 = vld [vmem:[%s4] sm:$0x1]
        %v1499 = vlaneseq
        %v1500 = vshrl.u32 %v1499, 7
        %v1501 = vsub.s32 0, %v1500
        %v1502 = vrot.slane %v1497, %v1501
        %v1508 = vunpack.c.l.b16 %v1493
        %v1509 = vunpack.c.l.b16 %v1494
        %v1510 = vunpack.c.l.b16 %v1495
        %v1511 = vunpack.c.l.b16 %v1496
        %v1512 = vpack.c.b16 %v1509, %v1508
        %v1513 = vpack.c.b16 %v1511, %v1510
        %v1517 = vsel %vm300, %v1492, 0
        %1519 = vmatprep.subr.bf16.mxu0 0
        %1520 = vmatpush1.bf16.msra.mxu0 0
        %1521 = vmatprep.subr.bf16.mxu0 0
        %1522 = vmatpush1.bf16.msra.mxu0 0
        %1523 = vmatprep.subr.bf16.mxu0 0
        %1524 = vmatpush1.bf16.msra.mxu0 0
        %1525 = vmatprep.subr.bf16.mxu0 0
        %1526 = vmatpush1.bf16.msra.mxu0 0
        %1527 = vmatprep.subr.bf16.mxu0 0
        %1528 = vmatpush1.bf16.msra.mxu0 0
        %1529 = vmatprep.subr.bf16.mxu0 0
        %1530 = vmatpush1.bf16.msra.mxu0 0
        %1531 = vmatprep.subr.bf16.mxu0 0
        %1532 = vmatpush1.bf16.msra.mxu0 %v1513
        %1533 = vmatprep.subr.bf16.mxu0 0
        %1534 = vmatpush1.bf16.msra.mxu0 %v1512
        %1535 = vmatprep.subr.bf16.mxu0 0
        %1536 = vmatpush2.bf16.msra.mxu0 0
        %1537 = vmatprep.subr.bf16.mxu0 0
        %1538 = vmatpush2.bf16.msra.mxu0 0
        %1539 = vmatprep.subr.bf16.mxu0 0
        %1540 = vmatpush2.bf16.msra.mxu0 0
        %1541 = vmatprep.subr.bf16.mxu0 0
        %1542 = vmatpush2.bf16.msra.mxu0 0
        %1543 = vmatprep.subr.bf16.mxu0 0
        %1544 = vmatpush2.bf16.msra.mxu0 0
        %1545 = vmatprep.subr.bf16.mxu0 0
        %1546 = vmatpush2.bf16.msra.mxu0 0
        %1547 = vmatprep.subr.bf16.mxu0 0
        %1548 = vmatpush2.bf16.msra.mxu0 0
        %1549 = vmatprep.subr.bf16.mxu0 0
        %1550 = vmatpush2.bf16.msra.mxu0 0
        %1551 = vmatprep.mubr.bf16.mxu0 0
        %1552 = vmatmul.mubr.bf16.gmra.mxu0 %v1517
        %v1553 = vpop.f32.mrf.mxu0
        %v1554 = vadd.f32 %v1502, %v1553
        %v1555 = vpop.f32.mrf.mxu0
        %v1556 = vpop.f32.mrf.mxu0
        %v1557 = vadd.f32 %v1502, %v1556
        %v1558 = vpop.f32.mrf.mxu0
        %1559 = vdwg.mxu0
        %1560 = vst [vmem:[%s273] sm:$0xff] %v1554
        %1561 = vst [vmem:[%s273 + $0x8] sm:$0x1] %v1557
      $region48: #{forward.3} parent=39 // pred_fallthru
        _
      %p1562 = scmp.lt.s32.totalorder %s20, 1
      %s1563 = scalar_select %p1562, %s20, 1
      %s1564 = smul.addr %s1563, 2
      %s1565 = smul.addr %s1564, 8
      %s1566 = scalar_lea.vmem %s5, %s1565
      // Predicated region
      $region49: #{forward.3} parent=39 // pred_check
        %p1567 = pneg %p166
      $region50: #{forward.3} parent=39 // pred_check_branch
        %1569 = sbr.rel (%p1567) target = $region52
      $region51: #{forward.3} parent=39 // pred_region
        _
      $region52: #{forward.3} parent=39 // pred_fallthru
        _
    $region40: #{forward.3} parent=5 // pred_fallthru
      _
    %p1570 = scmp.le.s32.totalorder 2, %s11
    // Predicated region
    $region53: #{forward.3} parent=5 // pred_check
      %p1571 = pneg %p1570
    $region54: #{forward.3} parent=5 // pred_check_branch
      %1573 = sbr.rel (%p1571) target = $region56
    $region55: #{forward.3} parent=5 // pred_region
      %s1574 = ssub.s32 %s11, 2
      // Predicated region
      $region57: #{forward.3} parent=55 // pred_check
        %p1575 = pneg %p172
      $region58: #{forward.3} parent=55 // pred_check_branch
        %1577 = sbr.rel (%p1575) target = $region60
      $region59: #{forward.3} parent=55 // pred_region
        %p1578 = scmp.lt.s32.totalorder %s22, 1
        %s1579 = scalar_select %p1578, %s22, 1
        %s1580 = smul.addr %s1579, 2
        %s1581 = smul.addr %s1580, 8
        %s1582 = scalar_lea.vmem %s5, %s1581
      $region60: #{forward.3} parent=55 // pred_fallthru
        _
    $region56: #{forward.3} parent=5 // pred_fallthru
      _
  $region6: #{forward.3} parent=0 // loop_footer
    %s15 = sadd.s32 1, %s11
  $region7: #{forward.3} parent=0 // loop_footer_branch
    %10 = sbr.rel target = $region3
  $region8: #{forward.3} parent=0 // loop_exit
    _

// kernel: forward.2
$region0: #{forward.2}
  #allocation0 [shape = 'u32[]', space=smem, size = 0x4, offset = 0x4, fixed_abs, tag = 'smem constant byte address 0x4 - core index']
  #allocation1 [shape = 'u32[144,128]{1,0:T(1,128)}', space=vmem, size = 0x12000, scoped, tag = 'internal scratch']
  #allocation2 [shape = 'f32[640,32]{1,0:T(8,128)}', space=vmem, size = 0x50000, scoped, tag = 'scratch operand']
  #allocation3 [shape = 'f32[640,32]{1,0:T(8,128)}', space=vmem, size = 0x50000, scoped, tag = 'scratch operand']
  %s0 = inlined_call_operand.vmem [shape: f32[2,639,32], index: 0, kind: input, shape index: {}]
  %s1 = inlined_call_operand.vmem [shape: bf16[6,96,32], index: 1, kind: input, shape index: {}]
  %s2 = inlined_call_operand.vmem [shape: f32[7,8,32], index: 2, kind: input, shape index: {}]
  %s3 = inlined_call_operand.vmem [shape: bf16[160,32], index: 3, kind: input, shape index: {}]
  %s4 = inlined_call_operand.vmem [shape: f32[8,32], index: 4, kind: input, shape index: {}]
  %s5 = inlined_call_operand.vmem [shape: f32[2,9,32], index: 5, kind: output, shape index: {}]
  %s6 = sld [smem:[#allocation0]]
  $region53: #{forward.2} parent=0
    _
  %s8 = ssub.s32 1, %s6
  %s9 = scalar_select 0, %s8, %s6
  loop: start=0, step=1, limit=4
  $region2: #{forward.2} parent=0 // loop_pre_header
    _
  $region3: #{forward.2} parent=0 // loop_header
    %s11 = sphi 0, %s15
    %p12 = scmp.ge.s32.totalorder %s11, 4
    %s21 = sphi 0, %s23
    %s24 = sphi 0, %s21
    %s25 = sphi 0, %s24
    %s41 = sphi 0, %s25
    %s45 = sphi 0, %s45
    %s47 = sphi 0, %s45
    %s48 = sphi 0, %s47
    %s62 = sphi 0, %s48
    %s66 = sphi 0, %s66
    %s68 = sphi 0, %s66
    %s69 = sphi 0, %s68
    %s83 = sphi 0, %s69
    %s87 = sphi 0, %s87
    %s89 = sphi 0, %s87
    %s90 = sphi 0, %s89
    %s104 = sphi 0, %s90
    %s108 = sphi 0, %s108
    %s110 = sphi 0, %s108
    %s111 = sphi 0, %s110
    %s125 = sphi 0, %s111
    %s131 = sphi 0, %s133
    %s134 = sphi 0, %s131
    %s135 = sphi 0, %s134
    %s151 = sphi 0, %s135
  $region4: #{forward.2} parent=0 // loop_header_branch
    %14 = sbr.rel (%p12) target = $region8
  $region5: #{forward.2} parent=0 // loop_body
    %s16 = ssub.s32 %s11, 1
    %s17 = ssub.s32 %s11, 2
    %s18 = sadd.s32 %s11, 1
    %s19 = ssub.s32 %s11, %s18
    %p20 = scmp.eq.s32.totalorder %s19, 0
    %s22 = sadd.s32 %s21, 1
    %s23 = scalar_select %p20, %s21, %s22
    %p26 = pneg %p20
    %p27 = scmp.eq.s32.totalorder %s11, 1
    %p28 = por %p26, %p27
    %p29 = scmp.ne.s32.totalorder %s21, %s24
    %p30 = scmp.eq.s32.totalorder %s11, 0
    %p31 = por %p29, %p30
    %p32 = scmp.ne.s32.totalorder %s21, %s24
    %p33 = scmp.eq.s32.totalorder %s16, 1
    %p34 = por %p32, %p33
    %p35 = scmp.ne.s32.totalorder %s24, %s25
    %p36 = scmp.eq.s32.totalorder %s16, 0
    %p37 = por %p35, %p36
    %p38 = scmp.ne.s32.totalorder %s24, %s25
    %p39 = scmp.eq.s32.totalorder %s17, 1
    %p40 = por %p38, %p39
    %p42 = scmp.ne.s32.totalorder %s25, %s41
    %p43 = scmp.eq.s32.totalorder %s17, 0
    %p44 = por %p42, %p43
    %s46 = sadd.s32 %s45, 1
    %p49 = scmp.eq.s32.totalorder %s11, 1
    %p50 = scmp.ne.s32.totalorder %s45, %s47
    %p51 = scmp.eq.s32.totalorder %s11, 0
    %p52 = por %p50, %p51
    %p53 = scmp.ne.s32.totalorder %s45, %s47
    %p54 = scmp.eq.s32.totalorder %s16, 1
    %p55 = por %p53, %p54
    %p56 = scmp.ne.s32.totalorder %s47, %s48
    %p57 = scmp.eq.s32.totalorder %s16, 0
    %p58 = por %p56, %p57
    %p59 = scmp.ne.s32.totalorder %s47, %s48
    %p60 = scmp.eq.s32.totalorder %s17, 1
    %p61 = por %p59, %p60
    %p63 = scmp.ne.s32.totalorder %s48, %s62
    %p64 = scmp.eq.s32.totalorder %s17, 0
    %p65 = por %p63, %p64
    %s67 = sadd.s32 %s66, 1
    %p70 = scmp.eq.s32.totalorder %s11, 1
    %p71 = scmp.ne.s32.totalorder %s66, %s68
    %p72 = scmp.eq.s32.totalorder %s11, 0
    %p73 = por %p71, %p72
    %p74 = scmp.ne.s32.totalorder %s66, %s68
    %p75 = scmp.eq.s32.totalorder %s16, 1
    %p76 = por %p74, %p75
    %p77 = scmp.ne.s32.totalorder %s68, %s69
    %p78 = scmp.eq.s32.totalorder %s16, 0
    %p79 = por %p77, %p78
    %p80 = scmp.ne.s32.totalorder %s68, %s69
    %p81 = scmp.eq.s32.totalorder %s17, 1
    %p82 = por %p80, %p81
    %p84 = scmp.ne.s32.totalorder %s69, %s83
    %p85 = scmp.eq.s32.totalorder %s17, 0
    %p86 = por %p84, %p85
    %s88 = sadd.s32 %s87, 1
    %p91 = scmp.eq.s32.totalorder %s11, 1
    %p92 = scmp.ne.s32.totalorder %s87, %s89
    %p93 = scmp.eq.s32.totalorder %s11, 0
    %p94 = por %p92, %p93
    %p95 = scmp.ne.s32.totalorder %s87, %s89
    %p96 = scmp.eq.s32.totalorder %s16, 1
    %p97 = por %p95, %p96
    %p98 = scmp.ne.s32.totalorder %s89, %s90
    %p99 = scmp.eq.s32.totalorder %s16, 0
    %p100 = por %p98, %p99
    %p101 = scmp.ne.s32.totalorder %s89, %s90
    %p102 = scmp.eq.s32.totalorder %s17, 1
    %p103 = por %p101, %p102
    %p105 = scmp.ne.s32.totalorder %s90, %s104
    %p106 = scmp.eq.s32.totalorder %s17, 0
    %p107 = por %p105, %p106
    %s109 = sadd.s32 %s108, 1
    %p112 = scmp.eq.s32.totalorder %s11, 1
    %p113 = scmp.ne.s32.totalorder %s108, %s110
    %p114 = scmp.eq.s32.totalorder %s11, 0
    %p115 = por %p113, %p114
    %p116 = scmp.ne.s32.totalorder %s108, %s110
    %p117 = scmp.eq.s32.totalorder %s16, 1
    %p118 = por %p116, %p117
    %p119 = scmp.ne.s32.totalorder %s110, %s111
    %p120 = scmp.eq.s32.totalorder %s16, 0
    %p121 = por %p119, %p120
    %p122 = scmp.ne.s32.totalorder %s110, %s111
    %p123 = scmp.eq.s32.totalorder %s17, 1
    %p124 = por %p122, %p123
    %p126 = scmp.ne.s32.totalorder %s111, %s125
    %p127 = scmp.eq.s32.totalorder %s17, 0
    %p128 = por %p126, %p127
    %s129 = ssub.s32 %s11, %s18
    %p130 = scmp.eq.s32.totalorder %s129, 0
    %s132 = sadd.s32 %s131, 1
    %s133 = scalar_select %p130, %s131, %s132
    %p136 = pneg %p130
    %p137 = scmp.eq.s32.totalorder %s11, 1
    %p138 = por %p136, %p137
    %p139 = scmp.ne.s32.totalorder %s131, %s134
    %p140 = scmp.eq.s32.totalorder %s11, 0
    %p141 = por %p139, %p140
    %p142 = scmp.ne.s32.totalorder %s131, %s134
    %p143 = scmp.eq.s32.totalorder %s16, 1
    %p144 = por %p142, %p143
    %p145 = scmp.ne.s32.totalorder %s134, %s135
    %p146 = scmp.eq.s32.totalorder %s16, 0
    %p147 = por %p145, %p146
    %p148 = scmp.ne.s32.totalorder %s134, %s135
    %p149 = scmp.eq.s32.totalorder %s17, 1
    %p150 = por %p148, %p149
    %p152 = scmp.ne.s32.totalorder %s135, %s151
    %p153 = scmp.eq.s32.totalorder %s17, 0
    %p154 = por %p152, %p153
    %p155 = scmp.le.s32.totalorder 1, %s11
    %p156 = scmp.lt.s32.totalorder %s11, 3
    %p157 = pnand %p155, %p156
    %p158 = pneg %p157
    // Predicated region
    $region9: #{forward.2} parent=5 // pred_check
      _
    $region10: #{forward.2} parent=5 // pred_check_branch
      %160 = sbr.rel (%p157) target = $region12
    $region11: #{forward.2} parent=5 // pred_region
      %s161 = ssub.s32 %s11, 1
      // Predicated region
      $region13: #{forward.2} parent=11 // pred_check
        %p162 = pneg %p58
      $region14: #{forward.2} parent=11 // pred_check_branch
        %164 = sbr.rel (%p162) target = $region16
      $region15: #{forward.2} parent=11 // pred_region
        _
      $region16: #{forward.2} parent=11 // pred_fallthru
        _
      // Predicated region
      $region17: #{forward.2} parent=11 // pred_check
        %p165 = pneg %p79
      $region18: #{forward.2} parent=11 // pred_check_branch
        %167 = sbr.rel (%p165) target = $region20
      $region19: #{forward.2} parent=11 // pred_region
        _
      $region20: #{forward.2} parent=11 // pred_fallthru
        _
      // Predicated region
      $region21: #{forward.2} parent=11 // pred_check
        %p168 = pneg %p100
      $region22: #{forward.2} parent=11 // pred_check_branch
        %170 = sbr.rel (%p168) target = $region24
      $region23: #{forward.2} parent=11 // pred_region
        _
      $region24: #{forward.2} parent=11 // pred_fallthru
        _
      // Predicated region
      $region25: #{forward.2} parent=11 // pred_check
        %p171 = pneg %p121
      $region26: #{forward.2} parent=11 // pred_check_branch
        %173 = sbr.rel (%p171) target = $region28
      $region27: #{forward.2} parent=11 // pred_region
        _
      $region28: #{forward.2} parent=11 // pred_fallthru
        _
    $region12: #{forward.2} parent=5 // pred_fallthru
      _
    %p174 = scmp.lt.s32.totalorder %s11, 2
    // Predicated region
    $region29: #{forward.2} parent=5 // pred_check
      %p175 = pneg %p174
    $region30: #{forward.2} parent=5 // pred_check_branch
      %177 = sbr.rel (%p175) target = $region32
    $region31: #{forward.2} parent=5 // pred_region
      // Predicated region
      $region33: #{forward.2} parent=31 // pred_check
        %p178 = pneg %p31
      $region34: #{forward.2} parent=31 // pred_check_branch
        %180 = sbr.rel (%p178) target = $region36
      $region35: #{forward.2} parent=31 // pred_region
        %p181 = scmp.lt.s32.totalorder %s11, 1
        %s182 = scalar_select %p181, %s11, 1
        %s183 = smul.addr %s182, 80
        %s184 = smul.addr %s183, 8
        %s185 = scalar_lea.vmem %s0, %s184
      $region36: #{forward.2} parent=31 // pred_fallthru
        _
    $region32: #{forward.2} parent=5 // pred_fallthru
      _
    %p186 = scmp.le.s32.totalorder 1, %s11
    %p187 = scmp.lt.s32.totalorder %s11, 3
    %p188 = pnand %p186, %p187
    %p189 = pneg %p188
    // Predicated region
    $region37: #{forward.2} parent=5 // pred_check
      _
    $region38: #{forward.2} parent=5 // pred_check_branch
      %191 = sbr.rel (%p188) target = $region40
    $region39: #{forward.2} parent=5 // pred_region
      %s192 = ssub.s32 %s11, 1
      %p193 = scmp.lt.s32.totalorder %s16, 1
      %s194 = scalar_select %p193, %s16, 1
      %s195 = smul.addr %s194, 80
      %s196 = smul.addr %s195, 8
      %s197 = scalar_lea.vmem %s0, %s196
      %p198 = pneg %p37
      %p199 = pneg %p34
      %p200 = pneg %p58
      %p201 = pneg %p55
      %p202 = pneg %p79
      %p203 = pneg %p76
      %p204 = pneg %p100
      %p205 = pneg %p97
      %p206 = pneg %p121
      %p207 = pneg %p118
      %p208 = pneg %p147
      %p209 = pneg %p144
      %p210 = scmp.lt.s32.totalorder %s16, 1
      %s211 = scalar_select %p210, %s16, 1
      %s212 = smul.addr %s211, 2
      %s213 = smul.addr %s212, 8
      %s214 = scalar_lea.vmem %s5, %s213
      %p215 = scmp.lt.s32.totalorder %s16, 1
      %s216 = scalar_select %p215, %s16, 1
      %s217 = smul.addr %s216, 80
      %s218 = smul.addr %s217, 8
      %s219 = scalar_lea.vmem %s0, %s218
      %p220 = scmp.lt.s32.totalorder %s16, 1
      %s221 = scalar_select %p220, %s16, 1
      %s222 = smul.addr %s221, 2
      %s223 = smul.addr %s222, 8
      %s224 = scalar_lea.vmem %s5, %s223
      %v226 = vld [vmem:[%s2] sm:$0xff]
      %v227 = vld [vmem:[%s219] sm:$0xff]
      %v228 = vld [vmem:[%s219 + $0x8] sm:$0xff]
      %v229 = vld [vmem:[%s219 + $0x10] sm:$0xff]
      %v230 = vld [vmem:[%s219 + $0x18] sm:$0xff]
      %v231 = vld [vmem:[%s219 + $0x20] sm:$0xff]
      %v232 = vld [vmem:[%s219 + $0x28] sm:$0xff]
      %v233 = vld [vmem:[%s219 + $0x30] sm:$0xff]
      %v234 = vld [vmem:[%s219 + $0x38] sm:$0xff]
      %v235 = vld [vmem:[%s219 + $0x40] sm:$0xff]
      %v236 = vld [vmem:[%s219 + $0x48] sm:$0xff]
      %v237 = vld [vmem:[%s219 + $0x50] sm:$0xff]
      %v238 = vld [vmem:[%s219 + $0x58] sm:$0xff]
      %v239 = vld [vmem:[%s219 + $0x60] sm:$0xff]
      %v240 = vld [vmem:[%s219 + $0x68] sm:$0xff]
      %v241 = vld [vmem:[%s219 + $0x70] sm:$0xff]
      %v242 = vld [vmem:[%s219 + $0x78] sm:$0xff]
      %v243 = vld [vmem:[%s219 + $0x80] sm:$0xff]
      %v244 = vld [vmem:[%s219 + $0x88] sm:$0xff]
      %v245 = vld [vmem:[%s219 + $0x90] sm:$0xff]
      %v246 = vld [vmem:[%s219 + $0x98] sm:$0xff]
      %v247 = vld [vmem:[%s219 + $0xa0] sm:$0xff]
      %v248 = vld [vmem:[%s219 + $0xa8] sm:$0xff]
      %v249 = vld [vmem:[%s219 + $0xb0] sm:$0xff]
      %v250 = vld [vmem:[%s219 + $0xb8] sm:$0xff]
      %v251 = vld [vmem:[%s219 + $0xc0] sm:$0xff]
      %v252 = vld [vmem:[%s219 + $0xc8] sm:$0xff]
      %v253 = vld [vmem:[%s219 + $0xd0] sm:$0xff]
      %v254 = vld [vmem:[%s219 + $0xd8] sm:$0xff]
      %v255 = vld [vmem:[%s219 + $0xe0] sm:$0xff]
      %v256 = vld [vmem:[%s219 + $0xe8] sm:$0xff]
      %v257 = vld [vmem:[%s219 + $0xf0] sm:$0xff]
      %v258 = vld [vmem:[%s219 + $0xf8] sm:$0xff]
      %v259 = vld [vmem:[%s219 + $0x100] sm:$0xff]
      %v260 = vld [vmem:[%s219 + $0x108] sm:$0xff]
      %v261 = vld [vmem:[%s219 + $0x110] sm:$0xff]
      %v262 = vld [vmem:[%s219 + $0x118] sm:$0xff]
      %v263 = vld [vmem:[%s219 + $0x120] sm:$0xff]
      %v264 = vld [vmem:[%s219 + $0x128] sm:$0xff]
      %v265 = vld [vmem:[%s219 + $0x130] sm:$0xff]
      %v266 = vld [vmem:[%s219 + $0x138] sm:$0xff]
      %v267 = vld [vmem:[%s219 + $0x140] sm:$0xff]
      %v268 = vld [vmem:[%s219 + $0x148] sm:$0xff]
      %v269 = vld [vmem:[%s219 + $0x150] sm:$0xff]
      %v270 = vld [vmem:[%s219 + $0x158] sm:$0xff]
      %v271 = vld [vmem:[%s219 + $0x160] sm:$0xff]
      %v272 = vld [vmem:[%s219 + $0x168] sm:$0xff]
      %v273 = vld [vmem:[%s219 + $0x170] sm:$0xff]
      %v274 = vld [vmem:[%s219 + $0x178] sm:$0xff]
      %v275 = vld [vmem:[%s219 + $0x180] sm:$0xff]
      %v276 = vld [vmem:[%s219 + $0x188] sm:$0xff]
      %v277 = vld [vmem:[%s219 + $0x190] sm:$0xff]
      %v278 = vld [vmem:[%s219 + $0x198] sm:$0xff]
      %v279 = vld [vmem:[%s219 + $0x1a0] sm:$0xff]
      %v280 = vld [vmem:[%s219 + $0x1a8] sm:$0xff]
      %v281 = vld [vmem:[%s219 + $0x1b0] sm:$0xff]
      %v282 = vld [vmem:[%s219 + $0x1b8] sm:$0xff]
      %v283 = vld [vmem:[%s219 + $0x1c0] sm:$0xff]
      %v284 = vld [vmem:[%s219 + $0x1c8] sm:$0xff]
      %v285 = vld [vmem:[%s219 + $0x1d0] sm:$0xff]
      %v286 = vld [vmem:[%s219 + $0x1d8] sm:$0xff]
      %v287 = vld [vmem:[%s219 + $0x1e0] sm:$0xff]
      %v288 = vld [vmem:[%s219 + $0x1e8] sm:$0xff]
      %v289 = vld [vmem:[%s219 + $0x1f0] sm:$0xff]
      %v290 = vld [vmem:[%s219 + $0x1f8] sm:$0xff]
      %v291 = vld [vmem:[%s219 + $0x200] sm:$0xff]
      %v292 = vld [vmem:[%s219 + $0x208] sm:$0xff]
      %v293 = vld [vmem:[%s219 + $0x210] sm:$0xff]
      %v294 = vld [vmem:[%s219 + $0x218] sm:$0xff]
      %v295 = vld [vmem:[%s219 + $0x220] sm:$0xff]
      %v296 = vld [vmem:[%s219 + $0x228] sm:$0xff]
      %v297 = vld [vmem:[%s219 + $0x230] sm:$0xff]
      %v298 = vld [vmem:[%s219 + $0x238] sm:$0xff]
      %v299 = vld [vmem:[%s219 + $0x240] sm:$0xff]
      %v300 = vld [vmem:[%s219 + $0x248] sm:$0xff]
      %v301 = vld [vmem:[%s219 + $0x250] sm:$0xff]
      %v302 = vld [vmem:[%s219 + $0x258] sm:$0xff]
      %v303 = vld [vmem:[%s219 + $0x260] sm:$0xff]
      %v304 = vld [vmem:[%s219 + $0x268] sm:$0xff]
      %v305 = vld [vmem:[%s219 + $0x270] sm:$0xff]
      %v306 = vld [vmem:[%s219 + $0x278] sm:$0x7f]
      %v307 = vlaneseq
      %v308 = vshrl.u32 %v307, 7
      %v309 = vsub.s32 0, %v308
      %v310 = vrot.slane %v226, %v309
      %v311 = vadd.f32 %v227, %v310
      %v312 = vadd.f32 %v228, %v310
      %v313 = vadd.f32 %v229, %v310
      %v314 = vadd.f32 %v230, %v310
      %v315 = vadd.f32 %v231, %v310
      %v316 = vadd.f32 %v232, %v310
      %v317 = vadd.f32 %v233, %v310
      %v318 = vadd.f32 %v234, %v310
      %v319 = vadd.f32 %v235, %v310
      %v320 = vadd.f32 %v236, %v310
      %v321 = vadd.f32 %v237, %v310
      %v322 = vadd.f32 %v238, %v310
      %v323 = vadd.f32 %v239, %v310
      %v324 = vadd.f32 %v240, %v310
      %v325 = vadd.f32 %v241, %v310
      %v326 = vadd.f32 %v242, %v310
      %v327 = vadd.f32 %v243, %v310
      %v328 = vadd.f32 %v244, %v310
      %v329 = vadd.f32 %v245, %v310
      %v330 = vadd.f32 %v246, %v310
      %v331 = vadd.f32 %v247, %v310
      %v332 = vadd.f32 %v248, %v310
      %v333 = vadd.f32 %v249, %v310
      %v334 = vadd.f32 %v250, %v310
      %v335 = vadd.f32 %v251, %v310
      %v336 = vadd.f32 %v252, %v310
      %v337 = vadd.f32 %v253, %v310
      %v338 = vadd.f32 %v254, %v310
      %v339 = vadd.f32 %v255, %v310
      %v340 = vadd.f32 %v256, %v310
      %v341 = vadd.f32 %v257, %v310
      %v342 = vadd.f32 %v258, %v310
      %v343 = vadd.f32 %v259, %v310
      %v344 = vadd.f32 %v260, %v310
      %v345 = vadd.f32 %v261, %v310
      %v346 = vadd.f32 %v262, %v310
      %v347 = vadd.f32 %v263, %v310
      %v348 = vadd.f32 %v264, %v310
      %v349 = vadd.f32 %v265, %v310
      %v350 = vadd.f32 %v266, %v310
      %v351 = vadd.f32 %v267, %v310
      %v352 = vadd.f32 %v268, %v310
      %v353 = vadd.f32 %v269, %v310
      %v354 = vadd.f32 %v270, %v310
      %v355 = vadd.f32 %v271, %v310
      %v356 = vadd.f32 %v272, %v310
      %v357 = vadd.f32 %v273, %v310
      %v358 = vadd.f32 %v274, %v310
      %v359 = vadd.f32 %v275, %v310
      %v360 = vadd.f32 %v276, %v310
      %v361 = vadd.f32 %v277, %v310
      %v362 = vadd.f32 %v278, %v310
      %v363 = vadd.f32 %v279, %v310
      %v364 = vadd.f32 %v280, %v310
      %v365 = vadd.f32 %v281, %v310
      %v366 = vadd.f32 %v282, %v310
      %v367 = vadd.f32 %v283, %v310
      %v368 = vadd.f32 %v284, %v310
      %v369 = vadd.f32 %v285, %v310
      %v370 = vadd.f32 %v286, %v310
      %v371 = vadd.f32 %v287, %v310
      %v372 = vadd.f32 %v288, %v310
      %v373 = vadd.f32 %v289, %v310
      %v374 = vadd.f32 %v290, %v310
      %v375 = vadd.f32 %v291, %v310
      %v376 = vadd.f32 %v292, %v310
      %v377 = vadd.f32 %v293, %v310
      %v378 = vadd.f32 %v294, %v310
      %v379 = vadd.f32 %v295, %v310
      %v380 = vadd.f32 %v296, %v310
      %v381 = vadd.f32 %v297, %v310
      %v382 = vadd.f32 %v298, %v310
      %v383 = vadd.f32 %v299, %v310
      %v384 = vadd.f32 %v300, %v310
      %v385 = vadd.f32 %v301, %v310
      %v386 = vadd.f32 %v302, %v310
      %v387 = vadd.f32 %v303, %v310
      %v388 = vadd.f32 %v304, %v310
      %v389 = vadd.f32 %v305, %v310
      %v390 = vadd.f32 %v306, %v310
      %vm391 = vcmask 261120
      %v392 = vsel %vm391, %v311, 0.0
      %393 = vadd.xlane.f32.xlu0 %v392
      %v394 = vpop.xlane.xlu0 %393
      %v395 = vsel %vm391, %v312, 0.0
      %396 = vadd.xlane.f32.xlu0 %v395
      %v397 = vpop.xlane.xlu0 %396
      %v398 = vsel %vm391, %v313, 0.0
      %399 = vadd.xlane.f32.xlu0 %v398
      %v400 = vpop.xlane.xlu0 %399
      %v401 = vsel %vm391, %v314, 0.0
      %402 = vadd.xlane.f32.xlu0 %v401
      %v403 = vpop.xlane.xlu0 %402
      %v404 = vsel %vm391, %v315, 0.0
      %405 = vadd.xlane.f32.xlu0 %v404
      %v406 = vpop.xlane.xlu0 %405
      %v407 = vsel %vm391, %v316, 0.0
      %408 = vadd.xlane.f32.xlu0 %v407
      %v409 = vpop.xlane.xlu0 %408
      %v410 = vsel %vm391, %v317, 0.0
      %411 = vadd.xlane.f32.xlu0 %v410
      %v412 = vpop.xlane.xlu0 %411
      %v413 = vsel %vm391, %v318, 0.0
      %414 = vadd.xlane.f32.xlu0 %v413
      %v415 = vpop.xlane.xlu0 %414
      %v416 = vsel %vm391, %v319, 0.0
      %417 = vadd.xlane.f32.xlu0 %v416
      %v418 = vpop.xlane.xlu0 %417
      %v419 = vsel %vm391, %v320, 0.0
      %420 = vadd.xlane.f32.xlu0 %v419
      %v421 = vpop.xlane.xlu0 %420
      %v422 = vsel %vm391, %v321, 0.0
      %423 = vadd.xlane.f32.xlu0 %v422
      %v424 = vpop.xlane.xlu0 %423
      %v425 = vsel %vm391, %v322, 0.0
      %426 = vadd.xlane.f32.xlu0 %v425
      %v427 = vpop.xlane.xlu0 %426
      %v428 = vsel %vm391, %v323, 0.0
      %429 = vadd.xlane.f32.xlu0 %v428
      %v430 = vpop.xlane.xlu0 %429
      %v431 = vsel %vm391, %v324, 0.0
      %432 = vadd.xlane.f32.xlu0 %v431
      %v433 = vpop.xlane.xlu0 %432
      %v434 = vsel %vm391, %v325, 0.0
      %435 = vadd.xlane.f32.xlu0 %v434
      %v436 = vpop.xlane.xlu0 %435
      %v437 = vsel %vm391, %v326, 0.0
      %438 = vadd.xlane.f32.xlu0 %v437
      %v439 = vpop.xlane.xlu0 %438
      %v440 = vsel %vm391, %v327, 0.0
      %441 = vadd.xlane.f32.xlu0 %v440
      %v442 = vpop.xlane.xlu0 %441
      %v443 = vsel %vm391, %v328, 0.0
      %444 = vadd.xlane.f32.xlu0 %v443
      %v445 = vpop.xlane.xlu0 %444
      %v446 = vsel %vm391, %v329, 0.0
      %447 = vadd.xlane.f32.xlu0 %v446
      %v448 = vpop.xlane.xlu0 %447
      %v449 = vsel %vm391, %v330, 0.0
      %450 = vadd.xlane.f32.xlu0 %v449
      %v451 = vpop.xlane.xlu0 %450
      %v452 = vsel %vm391, %v331, 0.0
      %453 = vadd.xlane.f32.xlu0 %v452
      %v454 = vpop.xlane.xlu0 %453
      %v455 = vsel %vm391, %v332, 0.0
      %456 = vadd.xlane.f32.xlu0 %v455
      %v457 = vpop.xlane.xlu0 %456
      %v458 = vsel %vm391, %v333, 0.0
      %459 = vadd.xlane.f32.xlu0 %v458
      %v460 = vpop.xlane.xlu0 %459
      %v461 = vsel %vm391, %v334, 0.0
      %462 = vadd.xlane.f32.xlu0 %v461
      %v463 = vpop.xlane.xlu0 %462
      %v464 = vsel %vm391, %v335, 0.0
      %465 = vadd.xlane.f32.xlu0 %v464
      %v466 = vpop.xlane.xlu0 %465
      %v467 = vsel %vm391, %v336, 0.0
      %468 = vadd.xlane.f32.xlu0 %v467
      %v469 = vpop.xlane.xlu0 %468
      %v470 = vsel %vm391, %v337, 0.0
      %471 = vadd.xlane.f32.xlu0 %v470
      %v472 = vpop.xlane.xlu0 %471
      %v473 = vsel %vm391, %v338, 0.0
      %474 = vadd.xlane.f32.xlu0 %v473
      %v475 = vpop.xlane.xlu0 %474
      %v476 = vsel %vm391, %v339, 0.0
      %477 = vadd.xlane.f32.xlu0 %v476
      %v478 = vpop.xlane.xlu0 %477
      %v479 = vsel %vm391, %v340, 0.0
      %480 = vadd.xlane.f32.xlu0 %v479
      %v481 = vpop.xlane.xlu0 %480
      %v482 = vsel %vm391, %v341, 0.0
      %483 = vadd.xlane.f32.xlu0 %v482
      %v484 = vpop.xlane.xlu0 %483
      %v485 = vsel %vm391, %v342, 0.0
      %486 = vadd.xlane.f32.xlu0 %v485
      %v487 = vpop.xlane.xlu0 %486
      %v488 = vsel %vm391, %v343, 0.0
      %489 = vadd.xlane.f32.xlu0 %v488
      %v490 = vpop.xlane.xlu0 %489
      %v491 = vsel %vm391, %v344, 0.0
      %492 = vadd.xlane.f32.xlu0 %v491
      %v493 = vpop.xlane.xlu0 %492
      %v494 = vsel %vm391, %v345, 0.0
      %495 = vadd.xlane.f32.xlu0 %v494
      %v496 = vpop.xlane.xlu0 %495
      %v497 = vsel %vm391, %v346, 0.0
      %498 = vadd.xlane.f32.xlu0 %v497
      %v499 = vpop.xlane.xlu0 %498
      %v500 = vsel %vm391, %v347, 0.0
      %501 = vadd.xlane.f32.xlu0 %v500
      %v502 = vpop.xlane.xlu0 %501
      %v503 = vsel %vm391, %v348, 0.0
      %504 = vadd.xlane.f32.xlu0 %v503
      %v505 = vpop.xlane.xlu0 %504
      %v506 = vsel %vm391, %v349, 0.0
      %507 = vadd.xlane.f32.xlu0 %v506
      %v508 = vpop.xlane.xlu0 %507
      %v509 = vsel %vm391, %v350, 0.0
      %510 = vadd.xlane.f32.xlu0 %v509
      %v511 = vpop.xlane.xlu0 %510
      %v512 = vsel %vm391, %v351, 0.0
      %513 = vadd.xlane.f32.xlu0 %v512
      %v514 = vpop.xlane.xlu0 %513
      %v515 = vsel %vm391, %v352, 0.0
      %516 = vadd.xlane.f32.xlu0 %v515
      %v517 = vpop.xlane.xlu0 %516
      %v518 = vsel %vm391, %v353, 0.0
      %519 = vadd.xlane.f32.xlu0 %v518
      %v520 = vpop.xlane.xlu0 %519
      %v521 = vsel %vm391, %v354, 0.0
      %522 = vadd.xlane.f32.xlu0 %v521
      %v523 = vpop.xlane.xlu0 %522
      %v524 = vsel %vm391, %v355, 0.0
      %525 = vadd.xlane.f32.xlu0 %v524
      %v526 = vpop.xlane.xlu0 %525
      %v527 = vsel %vm391, %v356, 0.0
      %528 = vadd.xlane.f32.xlu0 %v527
      %v529 = vpop.xlane.xlu0 %528
      %v530 = vsel %vm391, %v357, 0.0
      %531 = vadd.xlane.f32.xlu0 %v530
      %v532 = vpop.xlane.xlu0 %531
      %v533 = vsel %vm391, %v358, 0.0
      %534 = vadd.xlane.f32.xlu0 %v533
      %v535 = vpop.xlane.xlu0 %534
      %v536 = vsel %vm391, %v359, 0.0
      %537 = vadd.xlane.f32.xlu0 %v536
      %v538 = vpop.xlane.xlu0 %537
      %v539 = vsel %vm391, %v360, 0.0
      %540 = vadd.xlane.f32.xlu0 %v539
      %v541 = vpop.xlane.xlu0 %540
      %v542 = vsel %vm391, %v361, 0.0
      %543 = vadd.xlane.f32.xlu0 %v542
      %v544 = vpop.xlane.xlu0 %543
      %v545 = vsel %vm391, %v362, 0.0
      %546 = vadd.xlane.f32.xlu0 %v545
      %v547 = vpop.xlane.xlu0 %546
      %v548 = vsel %vm391, %v363, 0.0
      %549 = vadd.xlane.f32.xlu0 %v548
      %v550 = vpop.xlane.xlu0 %549
      %v551 = vsel %vm391, %v364, 0.0
      %552 = vadd.xlane.f32.xlu0 %v551
      %v553 = vpop.xlane.xlu0 %552
      %v554 = vsel %vm391, %v365, 0.0
      %555 = vadd.xlane.f32.xlu0 %v554
      %v556 = vpop.xlane.xlu0 %555
      %v557 = vsel %vm391, %v366, 0.0
      %558 = vadd.xlane.f32.xlu0 %v557
      %v559 = vpop.xlane.xlu0 %558
      %v560 = vsel %vm391, %v367, 0.0
      %561 = vadd.xlane.f32.xlu0 %v560
      %v562 = vpop.xlane.xlu0 %561
      %v563 = vsel %vm391, %v368, 0.0
      %564 = vadd.xlane.f32.xlu0 %v563
      %v565 = vpop.xlane.xlu0 %564
      %v566 = vsel %vm391, %v369, 0.0
      %567 = vadd.xlane.f32.xlu0 %v566
      %v568 = vpop.xlane.xlu0 %567
      %v569 = vsel %vm391, %v370, 0.0
      %570 = vadd.xlane.f32.xlu0 %v569
      %v571 = vpop.xlane.xlu0 %570
      %v572 = vsel %vm391, %v371, 0.0
      %573 = vadd.xlane.f32.xlu0 %v572
      %v574 = vpop.xlane.xlu0 %573
      %v575 = vsel %vm391, %v372, 0.0
      %576 = vadd.xlane.f32.xlu0 %v575
      %v577 = vpop.xlane.xlu0 %576
      %v578 = vsel %vm391, %v373, 0.0
      %579 = vadd.xlane.f32.xlu0 %v578
      %v580 = vpop.xlane.xlu0 %579
      %v581 = vsel %vm391, %v374, 0.0
      %582 = vadd.xlane.f32.xlu0 %v581
      %v583 = vpop.xlane.xlu0 %582
      %v584 = vsel %vm391, %v375, 0.0
      %585 = vadd.xlane.f32.xlu0 %v584
      %v586 = vpop.xlane.xlu0 %585
      %v587 = vsel %vm391, %v376, 0.0
      %588 = vadd.xlane.f32.xlu0 %v587
      %v589 = vpop.xlane.xlu0 %588
      %v590 = vsel %vm391, %v377, 0.0
      %591 = vadd.xlane.f32.xlu0 %v590
      %v592 = vpop.xlane.xlu0 %591
      %v593 = vsel %vm391, %v378, 0.0
      %594 = vadd.xlane.f32.xlu0 %v593
      %v595 = vpop.xlane.xlu0 %594
      %v596 = vsel %vm391, %v379, 0.0
      %597 = vadd.xlane.f32.xlu0 %v596
      %v598 = vpop.xlane.xlu0 %597
      %v599 = vsel %vm391, %v380, 0.0
      %600 = vadd.xlane.f32.xlu0 %v599
      %v601 = vpop.xlane.xlu0 %600
      %v602 = vsel %vm391, %v381, 0.0
      %603 = vadd.xlane.f32.xlu0 %v602
      %v604 = vpop.xlane.xlu0 %603
      %v605 = vsel %vm391, %v382, 0.0
      %606 = vadd.xlane.f32.xlu0 %v605
      %v607 = vpop.xlane.xlu0 %606
      %v608 = vsel %vm391, %v383, 0.0
      %609 = vadd.xlane.f32.xlu0 %v608
      %v610 = vpop.xlane.xlu0 %609
      %v611 = vsel %vm391, %v384, 0.0
      %612 = vadd.xlane.f32.xlu0 %v611
      %v613 = vpop.xlane.xlu0 %612
      %v614 = vsel %vm391, %v385, 0.0
      %615 = vadd.xlane.f32.xlu0 %v614
      %v616 = vpop.xlane.xlu0 %615
      %v617 = vsel %vm391, %v386, 0.0
      %618 = vadd.xlane.f32.xlu0 %v617
      %v619 = vpop.xlane.xlu0 %618
      %v620 = vsel %vm391, %v387, 0.0
      %621 = vadd.xlane.f32.xlu0 %v620
      %v622 = vpop.xlane.xlu0 %621
      %v623 = vsel %vm391, %v388, 0.0
      %624 = vadd.xlane.f32.xlu0 %v623
      %v625 = vpop.xlane.xlu0 %624
      %v626 = vsel %vm391, %v389, 0.0
      %627 = vadd.xlane.f32.xlu0 %v626
      %v628 = vpop.xlane.xlu0 %627
      %vm629 = vcmask 260096
      %v630 = vsel %vm629, %v390, 0.0
      %631 = vadd.xlane.f32.xlu0 %v630
      %v632 = vpop.xlane.xlu0 %631
      %v633 = vrcp.pop 32.0
      %v634 = vmul.f32 %v394, %v633
      %v635 = vmul.f32 %v397, %v633
      %v636 = vmul.f32 %v400, %v633
      %v637 = vmul.f32 %v403, %v633
      %v638 = vmul.f32 %v406, %v633
      %v639 = vmul.f32 %v409, %v633
      %v640 = vmul.f32 %v412, %v633
      %v641 = vmul.f32 %v415, %v633
      %v642 = vmul.f32 %v418, %v633
      %v643 = vmul.f32 %v421, %v633
      %v644 = vmul.f32 %v424, %v633
      %v645 = vmul.f32 %v427, %v633
      %v646 = vmul.f32 %v430, %v633
      %v647 = vmul.f32 %v433, %v633
      %v648 = vmul.f32 %v436, %v633
      %v649 = vmul.f32 %v439, %v633
      %v650 = vmul.f32 %v442, %v633
      %v651 = vmul.f32 %v445, %v633
      %v652 = vmul.f32 %v448, %v633
      %v653 = vmul.f32 %v451, %v633
      %v654 = vmul.f32 %v454, %v633
      %v655 = vmul.f32 %v457, %v633
      %v656 = vmul.f32 %v460, %v633
      %v657 = vmul.f32 %v463, %v633
      %v658 = vmul.f32 %v466, %v633
      %v659 = vmul.f32 %v469, %v633
      %v660 = vmul.f32 %v472, %v633
      %v661 = vmul.f32 %v475, %v633
      %v662 = vmul.f32 %v478, %v633
      %v663 = vmul.f32 %v481, %v633
      %v664 = vmul.f32 %v484, %v633
      %v665 = vmul.f32 %v487, %v633
      %v666 = vmul.f32 %v490, %v633
      %v667 = vmul.f32 %v493, %v633
      %v668 = vmul.f32 %v496, %v633
      %v669 = vmul.f32 %v499, %v633
      %v670 = vmul.f32 %v502, %v633
      %v671 = vmul.f32 %v505, %v633
      %v672 = vmul.f32 %v508, %v633
      %v673 = vmul.f32 %v511, %v633
      %v674 = vmul.f32 %v514, %v633
      %v675 = vmul.f32 %v517, %v633
      %v676 = vmul.f32 %v520, %v633
      %v677 = vmul.f32 %v523, %v633
      %v678 = vmul.f32 %v526, %v633
      %v679 = vmul.f32 %v529, %v633
      %v680 = vmul.f32 %v532, %v633
      %v681 = vmul.f32 %v535, %v633
      %v682 = vmul.f32 %v538, %v633
      %v683 = vmul.f32 %v541, %v633
      %v684 = vmul.f32 %v544, %v633
      %v685 = vmul.f32 %v547, %v633
      %v686 = vmul.f32 %v550, %v633
      %v687 = vmul.f32 %v553, %v633
      %v688 = vmul.f32 %v556, %v633
      %v689 = vmul.f32 %v559, %v633
      %v690 = vmul.f32 %v562, %v633
      %v691 = vmul.f32 %v565, %v633
      %v692 = vmul.f32 %v568, %v633
      %v693 = vmul.f32 %v571, %v633
      %v694 = vmul.f32 %v574, %v633
      %v695 = vmul.f32 %v577, %v633
      %v696 = vmul.f32 %v580, %v633
      %v697 = vmul.f32 %v583, %v633
      %v698 = vmul.f32 %v586, %v633
      %v699 = vmul.f32 %v589, %v633
      %v700 = vmul.f32 %v592, %v633
      %v701 = vmul.f32 %v595, %v633
      %v702 = vmul.f32 %v598, %v633
      %v703 = vmul.f32 %v601, %v633
      %v704 = vmul.f32 %v604, %v633
      %v705 = vmul.f32 %v607, %v633
      %v706 = vmul.f32 %v610, %v633
      %v707 = vmul.f32 %v613, %v633
      %v708 = vmul.f32 %v616, %v633
      %v709 = vmul.f32 %v619, %v633
      %v710 = vmul.f32 %v622, %v633
      %v711 = vmul.f32 %v625, %v633
      %v712 = vmul.f32 %v628, %v633
      %v713 = vmul.f32 %v632, %v633
      %v714 = vsub.f32 %v311, %v634
      %v715 = vsub.f32 %v312, %v635
      %v716 = vsub.f32 %v313, %v636
      %v717 = vsub.f32 %v314, %v637
      %v718 = vsub.f32 %v315, %v638
      %v719 = vsub.f32 %v316, %v639
      %v720 = vsub.f32 %v317, %v640
      %v721 = vsub.f32 %v318, %v641
      %v722 = vsub.f32 %v319, %v642
      %v723 = vsub.f32 %v320, %v643
      %v724 = vsub.f32 %v321, %v644
      %v725 = vsub.f32 %v322, %v645
      %v726 = vsub.f32 %v323, %v646
      %v727 = vsub.f32 %v324, %v647
      %v728 = vsub.f32 %v325, %v648
      %v729 = vsub.f32 %v326, %v649
      %v730 = vsub.f32 %v327, %v650
      %v731 = vsub.f32 %v328, %v651
      %v732 = vsub.f32 %v329, %v652
      %v733 = vsub.f32 %v330, %v653
      %v734 = vsub.f32 %v331, %v654
      %v735 = vsub.f32 %v332, %v655
      %v736 = vsub.f32 %v333, %v656
      %v737 = vsub.f32 %v334, %v657
      %v738 = vsub.f32 %v335, %v658
      %v739 = vsub.f32 %v336, %v659
      %v740 = vsub.f32 %v337, %v660
      %v741 = vsub.f32 %v338, %v661
      %v742 = vsub.f32 %v339, %v662
      %v743 = vsub.f32 %v340, %v663
      %v744 = vsub.f32 %v341, %v664
      %v745 = vsub.f32 %v342, %v665
      %v746 = vsub.f32 %v343, %v666
      %v747 = vsub.f32 %v344, %v667
      %v748 = vsub.f32 %v345, %v668
      %v749 = vsub.f32 %v346, %v669
      %v750 = vsub.f32 %v347, %v670
      %v751 = vsub.f32 %v348, %v671
      %v752 = vsub.f32 %v349, %v672
      %v753 = vsub.f32 %v350, %v673
      %v754 = vsub.f32 %v351, %v674
      %v755 = vsub.f32 %v352, %v675
      %v756 = vsub.f32 %v353, %v676
      %v757 = vsub.f32 %v354, %v677
      %v758 = vsub.f32 %v355, %v678
      %v759 = vsub.f32 %v356, %v679
      %v760 = vsub.f32 %v357, %v680
      %v761 = vsub.f32 %v358, %v681
      %v762 = vsub.f32 %v359, %v682
      %v763 = vsub.f32 %v360, %v683
      %v764 = vsub.f32 %v361, %v684
      %v765 = vsub.f32 %v362, %v685
      %v766 = vsub.f32 %v363, %v686
      %v767 = vsub.f32 %v364, %v687
      %v768 = vsub.f32 %v365, %v688
      %v769 = vsub.f32 %v366, %v689
      %v770 = vsub.f32 %v367, %v690
      %v771 = vsub.f32 %v368, %v691
      %v772 = vsub.f32 %v369, %v692
      %v773 = vsub.f32 %v370, %v693
      %v774 = vsub.f32 %v371, %v694
      %v775 = vsub.f32 %v372, %v695
      %v776 = vsub.f32 %v373, %v696
      %v777 = vsub.f32 %v374, %v697
      %v778 = vsub.f32 %v375, %v698
      %v779 = vsub.f32 %v376, %v699
      %v780 = vsub.f32 %v377, %v700
      %v781 = vsub.f32 %v378, %v701
      %v782 = vsub.f32 %v379, %v702
      %v783 = vsub.f32 %v380, %v703
      %v784 = vsub.f32 %v381, %v704
      %v785 = vsub.f32 %v382, %v705
      %v786 = vsub.f32 %v383, %v706
      %v787 = vsub.f32 %v384, %v707
      %v788 = vsub.f32 %v385, %v708
      %v789 = vsub.f32 %v386, %v709
      %v790 = vsub.f32 %v387, %v710
      %v791 = vsub.f32 %v388, %v711
      %v792 = vsub.f32 %v389, %v712
      %v793 = vsub.f32 %v390, %v713
      %v794 = vmul.f32 %v714, %v714
      %v795 = vmul.f32 %v715, %v715
      %v796 = vmul.f32 %v716, %v716
      %v797 = vmul.f32 %v717, %v717
      %v798 = vmul.f32 %v718, %v718
      %v799 = vmul.f32 %v719, %v719
      %v800 = vmul.f32 %v720, %v720
      %v801 = vmul.f32 %v721, %v721
      %v802 = vmul.f32 %v722, %v722
      %v803 = vmul.f32 %v723, %v723
      %v804 = vmul.f32 %v724, %v724
      %v805 = vmul.f32 %v725, %v725
      %v806 = vmul.f32 %v726, %v726
      %v807 = vmul.f32 %v727, %v727
      %v808 = vmul.f32 %v728, %v728
      %v809 = vmul.f32 %v729, %v729
      %v810 = vmul.f32 %v730, %v730
      %v811 = vmul.f32 %v731, %v731
      %v812 = vmul.f32 %v732, %v732
      %v813 = vmul.f32 %v733, %v733
      %v814 = vmul.f32 %v734, %v734
      %v815 = vmul.f32 %v735, %v735
      %v816 = vmul.f32 %v736, %v736
      %v817 = vmul.f32 %v737, %v737
      %v818 = vmul.f32 %v738, %v738
      %v819 = vmul.f32 %v739, %v739
      %v820 = vmul.f32 %v740, %v740
      %v821 = vmul.f32 %v741, %v741
      %v822 = vmul.f32 %v742, %v742
      %v823 = vmul.f32 %v743, %v743
      %v824 = vmul.f32 %v744, %v744
      %v825 = vmul.f32 %v745, %v745
      %v826 = vmul.f32 %v746, %v746
      %v827 = vmul.f32 %v747, %v747
      %v828 = vmul.f32 %v748, %v748
      %v829 = vmul.f32 %v749, %v749
      %v830 = vmul.f32 %v750, %v750
      %v831 = vmul.f32 %v751, %v751
      %v832 = vmul.f32 %v752, %v752
      %v833 = vmul.f32 %v753, %v753
      %v834 = vmul.f32 %v754, %v754
      %v835 = vmul.f32 %v755, %v755
      %v836 = vmul.f32 %v756, %v756
      %v837 = vmul.f32 %v757, %v757
      %v838 = vmul.f32 %v758, %v758
      %v839 = vmul.f32 %v759, %v759
      %v840 = vmul.f32 %v760, %v760
      %v841 = vmul.f32 %v761, %v761
      %v842 = vmul.f32 %v762, %v762
      %v843 = vmul.f32 %v763, %v763
      %v844 = vmul.f32 %v764, %v764
      %v845 = vmul.f32 %v765, %v765
      %v846 = vmul.f32 %v766, %v766
      %v847 = vmul.f32 %v767, %v767
      %v848 = vmul.f32 %v768, %v768
      %v849 = vmul.f32 %v769, %v769
      %v850 = vmul.f32 %v770, %v770
      %v851 = vmul.f32 %v771, %v771
      %v852 = vmul.f32 %v772, %v772
      %v853 = vmul.f32 %v773, %v773
      %v854 = vmul.f32 %v774, %v774
      %v855 = vmul.f32 %v775, %v775
      %v856 = vmul.f32 %v776, %v776
      %v857 = vmul.f32 %v777, %v777
      %v858 = vmul.f32 %v778, %v778
      %v859 = vmul.f32 %v779, %v779
      %v860 = vmul.f32 %v780, %v780
      %v861 = vmul.f32 %v781, %v781
      %v862 = vmul.f32 %v782, %v782
      %v863 = vmul.f32 %v783, %v783
      %v864 = vmul.f32 %v784, %v784
      %v865 = vmul.f32 %v785, %v785
      %v866 = vmul.f32 %v786, %v786
      %v867 = vmul.f32 %v787, %v787
      %v868 = vmul.f32 %v788, %v788
      %v869 = vmul.f32 %v789, %v789
      %v870 = vmul.f32 %v790, %v790
      %v871 = vmul.f32 %v791, %v791
      %v872 = vmul.f32 %v792, %v792
      %v873 = vmul.f32 %v793, %v793
      %v874 = vsel %vm391, %v794, 0.0
      %875 = vadd.xlane.f32.xlu0 %v874
      %v876 = vpop.xlane.xlu0 %875
      %v877 = vsel %vm391, %v795, 0.0
      %878 = vadd.xlane.f32.xlu0 %v877
      %v879 = vpop.xlane.xlu0 %878
      %v880 = vsel %vm391, %v796, 0.0
      %881 = vadd.xlane.f32.xlu0 %v880
      %v882 = vpop.xlane.xlu0 %881
      %v883 = vsel %vm391, %v797, 0.0
      %884 = vadd.xlane.f32.xlu0 %v883
      %v885 = vpop.xlane.xlu0 %884
      %v886 = vsel %vm391, %v798, 0.0
      %887 = vadd.xlane.f32.xlu0 %v886
      %v888 = vpop.xlane.xlu0 %887
      %v889 = vsel %vm391, %v799, 0.0
      %890 = vadd.xlane.f32.xlu0 %v889
      %v891 = vpop.xlane.xlu0 %890
      %v892 = vsel %vm391, %v800, 0.0
      %893 = vadd.xlane.f32.xlu0 %v892
      %v894 = vpop.xlane.xlu0 %893
      %v895 = vsel %vm391, %v801, 0.0
      %896 = vadd.xlane.f32.xlu0 %v895
      %v897 = vpop.xlane.xlu0 %896
      %v898 = vsel %vm391, %v802, 0.0
      %899 = vadd.xlane.f32.xlu0 %v898
      %v900 = vpop.xlane.xlu0 %899
      %v901 = vsel %vm391, %v803, 0.0
      %902 = vadd.xlane.f32.xlu0 %v901
      %v903 = vpop.xlane.xlu0 %902
      %v904 = vsel %vm391, %v804, 0.0
      %905 = vadd.xlane.f32.xlu0 %v904
      %v906 = vpop.xlane.xlu0 %905
      %v907 = vsel %vm391, %v805, 0.0
      %908 = vadd.xlane.f32.xlu0 %v907
      %v909 = vpop.xlane.xlu0 %908
      %v910 = vsel %vm391, %v806, 0.0
      %911 = vadd.xlane.f32.xlu0 %v910
      %v912 = vpop.xlane.xlu0 %911
      %v913 = vsel %vm391, %v807, 0.0
      %914 = vadd.xlane.f32.xlu0 %v913
      %v915 = vpop.xlane.xlu0 %914
      %v916 = vsel %vm391, %v808, 0.0
      %917 = vadd.xlane.f32.xlu0 %v916
      %v918 = vpop.xlane.xlu0 %917
      %v919 = vsel %vm391, %v809, 0.0
      %920 = vadd.xlane.f32.xlu0 %v919
      %v921 = vpop.xlane.xlu0 %920
      %v922 = vsel %vm391, %v810, 0.0
      %923 = vadd.xlane.f32.xlu0 %v922
      %v924 = vpop.xlane.xlu0 %923
      %v925 = vsel %vm391, %v811, 0.0
      %926 = vadd.xlane.f32.xlu0 %v925
      %v927 = vpop.xlane.xlu0 %926
      %v928 = vsel %vm391, %v812, 0.0
      %929 = vadd.xlane.f32.xlu0 %v928
      %v930 = vpop.xlane.xlu0 %929
      %v931 = vsel %vm391, %v813, 0.0
      %932 = vadd.xlane.f32.xlu0 %v931
      %v933 = vpop.xlane.xlu0 %932
      %v934 = vsel %vm391, %v814, 0.0
      %935 = vadd.xlane.f32.xlu0 %v934
      %v936 = vpop.xlane.xlu0 %935
      %v937 = vsel %vm391, %v815, 0.0
      %938 = vadd.xlane.f32.xlu0 %v937
      %v939 = vpop.xlane.xlu0 %938
      %v940 = vsel %vm391, %v816, 0.0
      %941 = vadd.xlane.f32.xlu0 %v940
      %v942 = vpop.xlane.xlu0 %941
      %v943 = vsel %vm391, %v817, 0.0
      %944 = vadd.xlane.f32.xlu0 %v943
      %v945 = vpop.xlane.xlu0 %944
      %v946 = vsel %vm391, %v818, 0.0
      %947 = vadd.xlane.f32.xlu0 %v946
      %v948 = vpop.xlane.xlu0 %947
      %v949 = vsel %vm391, %v819, 0.0
      %950 = vadd.xlane.f32.xlu0 %v949
      %v951 = vpop.xlane.xlu0 %950
      %v952 = vsel %vm391, %v820, 0.0
      %953 = vadd.xlane.f32.xlu0 %v952
      %v954 = vpop.xlane.xlu0 %953
      %v955 = vsel %vm391, %v821, 0.0
      %956 = vadd.xlane.f32.xlu0 %v955
      %v957 = vpop.xlane.xlu0 %956
      %v958 = vsel %vm391, %v822, 0.0
      %959 = vadd.xlane.f32.xlu0 %v958
      %v960 = vpop.xlane.xlu0 %959
      %v961 = vsel %vm391, %v823, 0.0
      %962 = vadd.xlane.f32.xlu0 %v961
      %v963 = vpop.xlane.xlu0 %962
      %v964 = vsel %vm391, %v824, 0.0
      %965 = vadd.xlane.f32.xlu0 %v964
      %v966 = vpop.xlane.xlu0 %965
      %v967 = vsel %vm391, %v825, 0.0
      %968 = vadd.xlane.f32.xlu0 %v967
      %v969 = vpop.xlane.xlu0 %968
      %v970 = vsel %vm391, %v826, 0.0
      %971 = vadd.xlane.f32.xlu0 %v970
      %v972 = vpop.xlane.xlu0 %971
      %v973 = vsel %vm391, %v827, 0.0
      %974 = vadd.xlane.f32.xlu0 %v973
      %v975 = vpop.xlane.xlu0 %974
      %v976 = vsel %vm391, %v828, 0.0
      %977 = vadd.xlane.f32.xlu0 %v976
      %v978 = vpop.xlane.xlu0 %977
      %v979 = vsel %vm391, %v829, 0.0
      %980 = vadd.xlane.f32.xlu0 %v979
      %v981 = vpop.xlane.xlu0 %980
      %v982 = vsel %vm391, %v830, 0.0
      %983 = vadd.xlane.f32.xlu0 %v982
      %v984 = vpop.xlane.xlu0 %983
      %v985 = vsel %vm391, %v831, 0.0
      %986 = vadd.xlane.f32.xlu0 %v985
      %v987 = vpop.xlane.xlu0 %986
      %v988 = vsel %vm391, %v832, 0.0
      %989 = vadd.xlane.f32.xlu0 %v988
      %v990 = vpop.xlane.xlu0 %989
      %v991 = vsel %vm391, %v833, 0.0
      %992 = vadd.xlane.f32.xlu0 %v991
      %v993 = vpop.xlane.xlu0 %992
      %v994 = vsel %vm391, %v834, 0.0
      %995 = vadd.xlane.f32.xlu0 %v994
      %v996 = vpop.xlane.xlu0 %995
      %v997 = vsel %vm391, %v835, 0.0
      %998 = vadd.xlane.f32.xlu0 %v997
      %v999 = vpop.xlane.xlu0 %998
      %v1000 = vsel %vm391, %v836, 0.0
      %1001 = vadd.xlane.f32.xlu0 %v1000
      %v1002 = vpop.xlane.xlu0 %1001
      %v1003 = vsel %vm391, %v837, 0.0
      %1004 = vadd.xlane.f32.xlu0 %v1003
      %v1005 = vpop.xlane.xlu0 %1004
      %v1006 = vsel %vm391, %v838, 0.0
      %1007 = vadd.xlane.f32.xlu0 %v1006
      %v1008 = vpop.xlane.xlu0 %1007
      %v1009 = vsel %vm391, %v839, 0.0
      %1010 = vadd.xlane.f32.xlu0 %v1009
      %v1011 = vpop.xlane.xlu0 %1010
      %v1012 = vsel %vm391, %v840, 0.0
      %1013 = vadd.xlane.f32.xlu0 %v1012
      %v1014 = vpop.xlane.xlu0 %1013
      %v1015 = vsel %vm391, %v841, 0.0
      %1016 = vadd.xlane.f32.xlu0 %v1015
      %v1017 = vpop.xlane.xlu0 %1016
      %v1018 = vsel %vm391, %v842, 0.0
      %1019 = vadd.xlane.f32.xlu0 %v1018
      %v1020 = vpop.xlane.xlu0 %1019
      %v1021 = vsel %vm391, %v843, 0.0
      %1022 = vadd.xlane.f32.xlu0 %v1021
      %v1023 = vpop.xlane.xlu0 %1022
      %v1024 = vsel %vm391, %v844, 0.0
      %1025 = vadd.xlane.f32.xlu0 %v1024
      %v1026 = vpop.xlane.xlu0 %1025
      %v1027 = vsel %vm391, %v845, 0.0
      %1028 = vadd.xlane.f32.xlu0 %v1027
      %v1029 = vpop.xlane.xlu0 %1028
      %v1030 = vsel %vm391, %v846, 0.0
      %1031 = vadd.xlane.f32.xlu0 %v1030
      %v1032 = vpop.xlane.xlu0 %1031
      %v1033 = vsel %vm391, %v847, 0.0
      %1034 = vadd.xlane.f32.xlu0 %v1033
      %v1035 = vpop.xlane.xlu0 %1034
      %v1036 = vsel %vm391, %v848, 0.0
      %1037 = vadd.xlane.f32.xlu0 %v1036
      %v1038 = vpop.xlane.xlu0 %1037
      %v1039 = vsel %vm391, %v849, 0.0
      %1040 = vadd.xlane.f32.xlu0 %v1039
      %v1041 = vpop.xlane.xlu0 %1040
      %v1042 = vsel %vm391, %v850, 0.0
      %1043 = vadd.xlane.f32.xlu0 %v1042
      %v1044 = vpop.xlane.xlu0 %1043
      %v1045 = vsel %vm391, %v851, 0.0
      %1046 = vadd.xlane.f32.xlu0 %v1045
      %v1047 = vpop.xlane.xlu0 %1046
      %v1048 = vsel %vm391, %v852, 0.0
      %1049 = vadd.xlane.f32.xlu0 %v1048
      %v1050 = vpop.xlane.xlu0 %1049
      %v1051 = vsel %vm391, %v853, 0.0
      %1052 = vadd.xlane.f32.xlu0 %v1051
      %v1053 = vpop.xlane.xlu0 %1052
      %v1054 = vsel %vm391, %v854, 0.0
      %1055 = vadd.xlane.f32.xlu0 %v1054
      %v1056 = vpop.xlane.xlu0 %1055
      %v1057 = vsel %vm391, %v855, 0.0
      %1058 = vadd.xlane.f32.xlu0 %v1057
      %v1059 = vpop.xlane.xlu0 %1058
      %v1060 = vsel %vm391, %v856, 0.0
      %1061 = vadd.xlane.f32.xlu0 %v1060
      %v1062 = vpop.xlane.xlu0 %1061
      %v1063 = vsel %vm391, %v857, 0.0
      %1064 = vadd.xlane.f32.xlu0 %v1063
      %v1065 = vpop.xlane.xlu0 %1064
      %v1066 = vsel %vm391, %v858, 0.0
      %1067 = vadd.xlane.f32.xlu0 %v1066
      %v1068 = vpop.xlane.xlu0 %1067
      %v1069 = vsel %vm391, %v859, 0.0
      %1070 = vadd.xlane.f32.xlu0 %v1069
      %v1071 = vpop.xlane.xlu0 %1070
      %v1072 = vsel %vm391, %v860, 0.0
      %1073 = vadd.xlane.f32.xlu0 %v1072
      %v1074 = vpop.xlane.xlu0 %1073
      %v1075 = vsel %vm391, %v861, 0.0
      %1076 = vadd.xlane.f32.xlu0 %v1075
      %v1077 = vpop.xlane.xlu0 %1076
      %v1078 = vsel %vm391, %v862, 0.0
      %1079 = vadd.xlane.f32.xlu0 %v1078
      %v1080 = vpop.xlane.xlu0 %1079
      %v1081 = vsel %vm391, %v863, 0.0
      %1082 = vadd.xlane.f32.xlu0 %v1081
      %v1083 = vpop.xlane.xlu0 %1082
      %v1084 = vsel %vm391, %v864, 0.0
      %1085 = vadd.xlane.f32.xlu0 %v1084
      %v1086 = vpop.xlane.xlu0 %1085
      %v1087 = vsel %vm391, %v865, 0.0
      %1088 = vadd.xlane.f32.xlu0 %v1087
      %v1089 = vpop.xlane.xlu0 %1088
      %v1090 = vsel %vm391, %v866, 0.0
      %1091 = vadd.xlane.f32.xlu0 %v1090
      %v1092 = vpop.xlane.xlu0 %1091
      %v1093 = vsel %vm391, %v867, 0.0
      %1094 = vadd.xlane.f32.xlu0 %v1093
      %v1095 = vpop.xlane.xlu0 %1094
      %v1096 = vsel %vm391, %v868, 0.0
      %1097 = vadd.xlane.f32.xlu0 %v1096
      %v1098 = vpop.xlane.xlu0 %1097
      %v1099 = vsel %vm391, %v869, 0.0
      %1100 = vadd.xlane.f32.xlu0 %v1099
      %v1101 = vpop.xlane.xlu0 %1100
      %v1102 = vsel %vm391, %v870, 0.0
      %1103 = vadd.xlane.f32.xlu0 %v1102
      %v1104 = vpop.xlane.xlu0 %1103
      %v1105 = vsel %vm391, %v871, 0.0
      %1106 = vadd.xlane.f32.xlu0 %v1105
      %v1107 = vpop.xlane.xlu0 %1106
      %v1108 = vsel %vm391, %v872, 0.0
      %1109 = vadd.xlane.f32.xlu0 %v1108
      %v1110 = vpop.xlane.xlu0 %1109
      %v1111 = vsel %vm629, %v873, 0.0
      %1112 = vadd.xlane.f32.xlu0 %v1111
      %v1113 = vpop.xlane.xlu0 %1112
      %v1114 = vmul.f32 %v876, %v633
      %v1115 = vmul.f32 %v879, %v633
      %v1116 = vmul.f32 %v882, %v633
      %v1117 = vmul.f32 %v885, %v633
      %v1118 = vmul.f32 %v888, %v633
      %v1119 = vmul.f32 %v891, %v633
      %v1120 = vmul.f32 %v894, %v633
      %v1121 = vmul.f32 %v897, %v633
      %v1122 = vmul.f32 %v900, %v633
      %v1123 = vmul.f32 %v903, %v633
      %v1124 = vmul.f32 %v906, %v633
      %v1125 = vmul.f32 %v909, %v633
      %v1126 = vmul.f32 %v912, %v633
      %v1127 = vmul.f32 %v915, %v633
      %v1128 = vmul.f32 %v918, %v633
      %v1129 = vmul.f32 %v921, %v633
      %v1130 = vmul.f32 %v924, %v633
      %v1131 = vmul.f32 %v927, %v633
      %v1132 = vmul.f32 %v930, %v633
      %v1133 = vmul.f32 %v933, %v633
      %v1134 = vmul.f32 %v936, %v633
      %v1135 = vmul.f32 %v939, %v633
      %v1136 = vmul.f32 %v942, %v633
      %v1137 = vmul.f32 %v945, %v633
      %v1138 = vmul.f32 %v948, %v633
      %v1139 = vmul.f32 %v951, %v633
      %v1140 = vmul.f32 %v954, %v633
      %v1141 = vmul.f32 %v957, %v633
      %v1142 = vmul.f32 %v960, %v633
      %v1143 = vmul.f32 %v963, %v633
      %v1144 = vmul.f32 %v966, %v633
      %v1145 = vmul.f32 %v969, %v633
      %v1146 = vmul.f32 %v972, %v633
      %v1147 = vmul.f32 %v975, %v633
      %v1148 = vmul.f32 %v978, %v633
      %v1149 = vmul.f32 %v981, %v633
      %v1150 = vmul.f32 %v984, %v633
      %v1151 = vmul.f32 %v987, %v633
      %v1152 = vmul.f32 %v990, %v633
      %v1153 = vmul.f32 %v993, %v633
      %v1154 = vmul.f32 %v996, %v633
      %v1155 = vmul.f32 %v999, %v633
      %v1156 = vmul.f32 %v1002, %v633
      %v1157 = vmul.f32 %v1005, %v633
      %v1158 = vmul.f32 %v1008, %v633
      %v1159 = vmul.f32 %v1011, %v633
      %v1160 = vmul.f32 %v1014, %v633
      %v1161 = vmul.f32 %v1017, %v633
      %v1162 = vmul.f32 %v1020, %v633
      %v1163 = vmul.f32 %v1023, %v633
      %v1164 = vmul.f32 %v1026, %v633
      %v1165 = vmul.f32 %v1029, %v633
      %v1166 = vmul.f32 %v1032, %v633
      %v1167 = vmul.f32 %v1035, %v633
      %v1168 = vmul.f32 %v1038, %v633
      %v1169 = vmul.f32 %v1041, %v633
      %v1170 = vmul.f32 %v1044, %v633
      %v1171 = vmul.f32 %v1047, %v633
      %v1172 = vmul.f32 %v1050, %v633
      %v1173 = vmul.f32 %v1053, %v633
      %v1174 = vmul.f32 %v1056, %v633
      %v1175 = vmul.f32 %v1059, %v633
      %v1176 = vmul.f32 %v1062, %v633
      %v1177 = vmul.f32 %v1065, %v633
      %v1178 = vmul.f32 %v1068, %v633
      %v1179 = vmul.f32 %v1071, %v633
      %v1180 = vmul.f32 %v1074, %v633
      %v1181 = vmul.f32 %v1077, %v633
      %v1182 = vmul.f32 %v1080, %v633
      %v1183 = vmul.f32 %v1083, %v633
      %v1184 = vmul.f32 %v1086, %v633
      %v1185 = vmul.f32 %v1089, %v633
      %v1186 = vmul.f32 %v1092, %v633
      %v1187 = vmul.f32 %v1095, %v633
      %v1188 = vmul.f32 %v1098, %v633
      %v1189 = vmul.f32 %v1101, %v633
      %v1190 = vmul.f32 %v1104, %v633
      %v1191 = vmul.f32 %v1107, %v633
      %v1192 = vmul.f32 %v1110, %v633
      %v1193 = vmul.f32 %v1113, %v633
      %v1194 = vadd.f32 %v1114, 1e-05
      %v1195 = vadd.f32 %v1115, 1e-05
      %v1196 = vadd.f32 %v1116, 1e-05
      %v1197 = vadd.f32 %v1117, 1e-05
      %v1198 = vadd.f32 %v1118, 1e-05
      %v1199 = vadd.f32 %v1119, 1e-05
      %v1200 = vadd.f32 %v1120, 1e-05
      %v1201 = vadd.f32 %v1121, 1e-05
      %v1202 = vadd.f32 %v1122, 1e-05
      %v1203 = vadd.f32 %v1123, 1e-05
      %v1204 = vadd.f32 %v1124, 1e-05
      %v1205 = vadd.f32 %v1125, 1e-05
      %v1206 = vadd.f32 %v1126, 1e-05
      %v1207 = vadd.f32 %v1127, 1e-05
      %v1208 = vadd.f32 %v1128, 1e-05
      %v1209 = vadd.f32 %v1129, 1e-05
      %v1210 = vadd.f32 %v1130, 1e-05
      %v1211 = vadd.f32 %v1131, 1e-05
      %v1212 = vadd.f32 %v1132, 1e-05
      %v1213 = vadd.f32 %v1133, 1e-05
      %v1214 = vadd.f32 %v1134, 1e-05
      %v1215 = vadd.f32 %v1135, 1e-05
      %v1216 = vadd.f32 %v1136, 1e-05
      %v1217 = vadd.f32 %v1137, 1e-05
      %v1218 = vadd.f32 %v1138, 1e-05
      %v1219 = vadd.f32 %v1139, 1e-05
      %v1220 = vadd.f32 %v1140, 1e-05
      %v1221 = vadd.f32 %v1141, 1e-05
      %v1222 = vadd.f32 %v1142, 1e-05
      %v1223 = vadd.f32 %v1143, 1e-05
      %v1224 = vadd.f32 %v1144, 1e-05
      %v1225 = vadd.f32 %v1145, 1e-05
      %v1226 = vadd.f32 %v1146, 1e-05
      %v1227 = vadd.f32 %v1147, 1e-05
      %v1228 = vadd.f32 %v1148, 1e-05
      %v1229 = vadd.f32 %v1149, 1e-05
      %v1230 = vadd.f32 %v1150, 1e-05
      %v1231 = vadd.f32 %v1151, 1e-05
      %v1232 = vadd.f32 %v1152, 1e-05
      %v1233 = vadd.f32 %v1153, 1e-05
      %v1234 = vadd.f32 %v1154, 1e-05
      %v1235 = vadd.f32 %v1155, 1e-05
      %v1236 = vadd.f32 %v1156, 1e-05
      %v1237 = vadd.f32 %v1157, 1e-05
      %v1238 = vadd.f32 %v1158, 1e-05
      %v1239 = vadd.f32 %v1159, 1e-05
      %v1240 = vadd.f32 %v1160, 1e-05
      %v1241 = vadd.f32 %v1161, 1e-05
      %v1242 = vadd.f32 %v1162, 1e-05
      %v1243 = vadd.f32 %v1163, 1e-05
      %v1244 = vadd.f32 %v1164, 1e-05
      %v1245 = vadd.f32 %v1165, 1e-05
      %v1246 = vadd.f32 %v1166, 1e-05
      %v1247 = vadd.f32 %v1167, 1e-05
      %v1248 = vadd.f32 %v1168, 1e-05
      %v1249 = vadd.f32 %v1169, 1e-05
      %v1250 = vadd.f32 %v1170, 1e-05
      %v1251 = vadd.f32 %v1171, 1e-05
      %v1252 = vadd.f32 %v1172, 1e-05
      %v1253 = vadd.f32 %v1173, 1e-05
      %v1254 = vadd.f32 %v1174, 1e-05
      %v1255 = vadd.f32 %v1175, 1e-05
      %v1256 = vadd.f32 %v1176, 1e-05
      %v1257 = vadd.f32 %v1177, 1e-05
      %v1258 = vadd.f32 %v1178, 1e-05
      %v1259 = vadd.f32 %v1179, 1e-05
      %v1260 = vadd.f32 %v1180, 1e-05
      %v1261 = vadd.f32 %v1181, 1e-05
      %v1262 = vadd.f32 %v1182, 1e-05
      %v1263 = vadd.f32 %v1183, 1e-05
      %v1264 = vadd.f32 %v1184, 1e-05
      %v1265 = vadd.f32 %v1185, 1e-05
      %v1266 = vadd.f32 %v1186, 1e-05
      %v1267 = vadd.f32 %v1187, 1e-05
      %v1268 = vadd.f32 %v1188, 1e-05
      %v1269 = vadd.f32 %v1189, 1e-05
      %v1270 = vadd.f32 %v1190, 1e-05
      %v1271 = vadd.f32 %v1191, 1e-05
      %v1272 = vadd.f32 %v1192, 1e-05
      %v1273 = vadd.f32 %v1193, 1e-05
      %v1274 = vrsqrt.pop %v1194
      %v1275 = vrsqrt.pop %v1195
      %v1276 = vrsqrt.pop %v1196
      %v1277 = vrsqrt.pop %v1197
      %v1278 = vrsqrt.pop %v1198
      %v1279 = vrsqrt.pop %v1199
      %v1280 = vrsqrt.pop %v1200
      %v1281 = vrsqrt.pop %v1201
      %v1282 = vrsqrt.pop %v1202
      %v1283 = vrsqrt.pop %v1203
      %v1284 = vrsqrt.pop %v1204
      %v1285 = vrsqrt.pop %v1205
      %v1286 = vrsqrt.pop %v1206
      %v1287 = vrsqrt.pop %v1207
      %v1288 = vrsqrt.pop %v1208
      %v1289 = vrsqrt.pop %v1209
      %v1290 = vrsqrt.pop %v1210
      %v1291 = vrsqrt.pop %v1211
      %v1292 = vrsqrt.pop %v1212
      %v1293 = vrsqrt.pop %v1213
      %v1294 = vrsqrt.pop %v1214
      %v1295 = vrsqrt.pop %v1215
      %v1296 = vrsqrt.pop %v1216
      %v1297 = vrsqrt.pop %v1217
      %v1298 = vrsqrt.pop %v1218
      %v1299 = vrsqrt.pop %v1219
      %v1300 = vrsqrt.pop %v1220
      %v1301 = vrsqrt.pop %v1221
      %v1302 = vrsqrt.pop %v1222
      %v1303 = vrsqrt.pop %v1223
      %v1304 = vrsqrt.pop %v1224
      %v1305 = vrsqrt.pop %v1225
      %v1306 = vrsqrt.pop %v1226
      %v1307 = vrsqrt.pop %v1227
      %v1308 = vrsqrt.pop %v1228
      %v1309 = vrsqrt.pop %v1229
      %v1310 = vrsqrt.pop %v1230
      %v1311 = vrsqrt.pop %v1231
      %v1312 = vrsqrt.pop %v1232
      %v1313 = vrsqrt.pop %v1233
      %v1314 = vrsqrt.pop %v1234
      %v1315 = vrsqrt.pop %v1235
      %v1316 = vrsqrt.pop %v1236
      %v1317 = vrsqrt.pop %v1237
      %v1318 = vrsqrt.pop %v1238
      %v1319 = vrsqrt.pop %v1239
      %v1320 = vrsqrt.pop %v1240
      %v1321 = vrsqrt.pop %v1241
      %v1322 = vrsqrt.pop %v1242
      %v1323 = vrsqrt.pop %v1243
      %v1324 = vrsqrt.pop %v1244
      %v1325 = vrsqrt.pop %v1245
      %v1326 = vrsqrt.pop %v1246
      %v1327 = vrsqrt.pop %v1247
      %v1328 = vrsqrt.pop %v1248
      %v1329 = vrsqrt.pop %v1249
      %v1330 = vrsqrt.pop %v1250
      %v1331 = vrsqrt.pop %v1251
      %v1332 = vrsqrt.pop %v1252
      %v1333 = vrsqrt.pop %v1253
      %v1334 = vrsqrt.pop %v1254
      %v1335 = vrsqrt.pop %v1255
      %v1336 = vrsqrt.pop %v1256
      %v1337 = vrsqrt.pop %v1257
      %v1338 = vrsqrt.pop %v1258
      %v1339 = vrsqrt.pop %v1259
      %v1340 = vrsqrt.pop %v1260
      %v1341 = vrsqrt.pop %v1261
      %v1342 = vrsqrt.pop %v1262
      %v1343 = vrsqrt.pop %v1263
      %v1344 = vrsqrt.pop %v1264
      %v1345 = vrsqrt.pop %v1265
      %v1346 = vrsqrt.pop %v1266
      %v1347 = vrsqrt.pop %v1267
      %v1348 = vrsqrt.pop %v1268
      %v1349 = vrsqrt.pop %v1269
      %v1350 = vrsqrt.pop %v1270
      %v1351 = vrsqrt.pop %v1271
      %v1352 = vrsqrt.pop %v1272
      %v1353 = vrsqrt.pop %v1273
      %v1354 = vmul.f32 %v714, %v1274
      %v1355 = vmul.f32 %v715, %v1275
      %v1356 = vmul.f32 %v716, %v1276
      %v1357 = vmul.f32 %v717, %v1277
      %v1358 = vmul.f32 %v718, %v1278
      %v1359 = vmul.f32 %v719, %v1279
      %v1360 = vmul.f32 %v720, %v1280
      %v1361 = vmul.f32 %v721, %v1281
      %v1362 = vmul.f32 %v722, %v1282
      %v1363 = vmul.f32 %v723, %v1283
      %v1364 = vmul.f32 %v724, %v1284
      %v1365 = vmul.f32 %v725, %v1285
      %v1366 = vmul.f32 %v726, %v1286
      %v1367 = vmul.f32 %v727, %v1287
      %v1368 = vmul.f32 %v728, %v1288
      %v1369 = vmul.f32 %v729, %v1289
      %v1370 = vmul.f32 %v730, %v1290
      %v1371 = vmul.f32 %v731, %v1291
      %v1372 = vmul.f32 %v732, %v1292
      %v1373 = vmul.f32 %v733, %v1293
      %v1374 = vmul.f32 %v734, %v1294
      %v1375 = vmul.f32 %v735, %v1295
      %v1376 = vmul.f32 %v736, %v1296
      %v1377 = vmul.f32 %v737, %v1297
      %v1378 = vmul.f32 %v738, %v1298
      %v1379 = vmul.f32 %v739, %v1299
      %v1380 = vmul.f32 %v740, %v1300
      %v1381 = vmul.f32 %v741, %v1301
      %v1382 = vmul.f32 %v742, %v1302
      %v1383 = vmul.f32 %v743, %v1303
      %v1384 = vmul.f32 %v744, %v1304
      %v1385 = vmul.f32 %v745, %v1305
      %v1386 = vmul.f32 %v746, %v1306
      %v1387 = vmul.f32 %v747, %v1307
      %v1388 = vmul.f32 %v748, %v1308
      %v1389 = vmul.f32 %v749, %v1309
      %v1390 = vmul.f32 %v750, %v1310
      %v1391 = vmul.f32 %v751, %v1311
      %v1392 = vmul.f32 %v752, %v1312
      %v1393 = vmul.f32 %v753, %v1313
      %v1394 = vmul.f32 %v754, %v1314
      %v1395 = vmul.f32 %v755, %v1315
      %v1396 = vmul.f32 %v756, %v1316
      %v1397 = vmul.f32 %v757, %v1317
      %v1398 = vmul.f32 %v758, %v1318
      %v1399 = vmul.f32 %v759, %v1319
      %v1400 = vmul.f32 %v760, %v1320
      %v1401 = vmul.f32 %v761, %v1321
      %v1402 = vmul.f32 %v762, %v1322
      %v1403 = vmul.f32 %v763, %v1323
      %v1404 = vmul.f32 %v764, %v1324
      %v1405 = vmul.f32 %v765, %v1325
      %v1406 = vmul.f32 %v766, %v1326
      %v1407 = vmul.f32 %v767, %v1327
      %v1408 = vmul.f32 %v768, %v1328
      %v1409 = vmul.f32 %v769, %v1329
      %v1410 = vmul.f32 %v770, %v1330
      %v1411 = vmul.f32 %v771, %v1331
      %v1412 = vmul.f32 %v772, %v1332
      %v1413 = vmul.f32 %v773, %v1333
      %v1414 = vmul.f32 %v774, %v1334
      %v1415 = vmul.f32 %v775, %v1335
      %v1416 = vmul.f32 %v776, %v1336
      %v1417 = vmul.f32 %v777, %v1337
      %v1418 = vmul.f32 %v778, %v1338
      %v1419 = vmul.f32 %v779, %v1339
      %v1420 = vmul.f32 %v780, %v1340
      %v1421 = vmul.f32 %v781, %v1341
      %v1422 = vmul.f32 %v782, %v1342
      %v1423 = vmul.f32 %v783, %v1343
      %v1424 = vmul.f32 %v784, %v1344
      %v1425 = vmul.f32 %v785, %v1345
      %v1426 = vmul.f32 %v786, %v1346
      %v1427 = vmul.f32 %v787, %v1347
      %v1428 = vmul.f32 %v788, %v1348
      %v1429 = vmul.f32 %v789, %v1349
      %v1430 = vmul.f32 %v790, %v1350
      %v1431 = vmul.f32 %v791, %v1351
      %v1432 = vmul.f32 %v792, %v1352
      %v1433 = vmul.f32 %v793, %v1353
      %v1434 = vlaneseq
      %v1435 = vshrl.u32 %v1434, 7
      %v1436 = vsub.s32 1, %v1435
      %v1437 = vrot.slane %v226, %v1436
      %v1438 = vmul.f32 %v1354, %v1437
      %v1439 = vmul.f32 %v1355, %v1437
      %v1440 = vmul.f32 %v1356, %v1437
      %v1441 = vmul.f32 %v1357, %v1437
      %v1442 = vmul.f32 %v1358, %v1437
      %v1443 = vmul.f32 %v1359, %v1437
      %v1444 = vmul.f32 %v1360, %v1437
      %v1445 = vmul.f32 %v1361, %v1437
      %v1446 = vmul.f32 %v1362, %v1437
      %v1447 = vmul.f32 %v1363, %v1437
      %v1448 = vmul.f32 %v1364, %v1437
      %v1449 = vmul.f32 %v1365, %v1437
      %v1450 = vmul.f32 %v1366, %v1437
      %v1451 = vmul.f32 %v1367, %v1437
      %v1452 = vmul.f32 %v1368, %v1437
      %v1453 = vmul.f32 %v1369, %v1437
      %v1454 = vmul.f32 %v1370, %v1437
      %v1455 = vmul.f32 %v1371, %v1437
      %v1456 = vmul.f32 %v1372, %v1437
      %v1457 = vmul.f32 %v1373, %v1437
      %v1458 = vmul.f32 %v1374, %v1437
      %v1459 = vmul.f32 %v1375, %v1437
      %v1460 = vmul.f32 %v1376, %v1437
      %v1461 = vmul.f32 %v1377, %v1437
      %v1462 = vmul.f32 %v1378, %v1437
      %v1463 = vmul.f32 %v1379, %v1437
      %v1464 = vmul.f32 %v1380, %v1437
      %v1465 = vmul.f32 %v1381, %v1437
      %v1466 = vmul.f32 %v1382, %v1437
      %v1467 = vmul.f32 %v1383, %v1437
      %v1468 = vmul.f32 %v1384, %v1437
      %v1469 = vmul.f32 %v1385, %v1437
      %v1470 = vmul.f32 %v1386, %v1437
      %v1471 = vmul.f32 %v1387, %v1437
      %v1472 = vmul.f32 %v1388, %v1437
      %v1473 = vmul.f32 %v1389, %v1437
      %v1474 = vmul.f32 %v1390, %v1437
      %v1475 = vmul.f32 %v1391, %v1437
      %v1476 = vmul.f32 %v1392, %v1437
      %v1477 = vmul.f32 %v1393, %v1437
      %v1478 = vmul.f32 %v1394, %v1437
      %v1479 = vmul.f32 %v1395, %v1437
      %v1480 = vmul.f32 %v1396, %v1437
      %v1481 = vmul.f32 %v1397, %v1437
      %v1482 = vmul.f32 %v1398, %v1437
      %v1483 = vmul.f32 %v1399, %v1437
      %v1484 = vmul.f32 %v1400, %v1437
      %v1485 = vmul.f32 %v1401, %v1437
      %v1486 = vmul.f32 %v1402, %v1437
      %v1487 = vmul.f32 %v1403, %v1437
      %v1488 = vmul.f32 %v1404, %v1437
      %v1489 = vmul.f32 %v1405, %v1437
      %v1490 = vmul.f32 %v1406, %v1437
      %v1491 = vmul.f32 %v1407, %v1437
      %v1492 = vmul.f32 %v1408, %v1437
      %v1493 = vmul.f32 %v1409, %v1437
      %v1494 = vmul.f32 %v1410, %v1437
      %v1495 = vmul.f32 %v1411, %v1437
      %v1496 = vmul.f32 %v1412, %v1437
      %v1497 = vmul.f32 %v1413, %v1437
      %v1498 = vmul.f32 %v1414, %v1437
      %v1499 = vmul.f32 %v1415, %v1437
      %v1500 = vmul.f32 %v1416, %v1437
      %v1501 = vmul.f32 %v1417, %v1437
      %v1502 = vmul.f32 %v1418, %v1437
      %v1503 = vmul.f32 %v1419, %v1437
      %v1504 = vmul.f32 %v1420, %v1437
      %v1505 = vmul.f32 %v1421, %v1437
      %v1506 = vmul.f32 %v1422, %v1437
      %v1507 = vmul.f32 %v1423, %v1437
      %v1508 = vmul.f32 %v1424, %v1437
      %v1509 = vmul.f32 %v1425, %v1437
      %v1510 = vmul.f32 %v1426, %v1437
      %v1511 = vmul.f32 %v1427, %v1437
      %v1512 = vmul.f32 %v1428, %v1437
      %v1513 = vmul.f32 %v1429, %v1437
      %v1514 = vmul.f32 %v1430, %v1437
      %v1515 = vmul.f32 %v1431, %v1437
      %v1516 = vmul.f32 %v1432, %v1437
      %v1517 = vmul.f32 %v1433, %v1437
      %v1518 = vlaneseq
      %v1519 = vshrl.u32 %v1518, 7
      %v1520 = vsub.s32 2, %v1519
      %v1521 = vrot.slane %v226, %v1520
      %v1522 = vadd.f32 %v1438, %v1521
      %v1523 = vadd.f32 %v1439, %v1521
      %v1524 = vadd.f32 %v1440, %v1521
      %v1525 = vadd.f32 %v1441, %v1521
      %v1526 = vadd.f32 %v1442, %v1521
      %v1527 = vadd.f32 %v1443, %v1521
      %v1528 = vadd.f32 %v1444, %v1521
      %v1529 = vadd.f32 %v1445, %v1521
      %v1530 = vadd.f32 %v1446, %v1521
      %v1531 = vadd.f32 %v1447, %v1521
      %v1532 = vadd.f32 %v1448, %v1521
      %v1533 = vadd.f32 %v1449, %v1521
      %v1534 = vadd.f32 %v1450, %v1521
      %v1535 = vadd.f32 %v1451, %v1521
      %v1536 = vadd.f32 %v1452, %v1521
      %v1537 = vadd.f32 %v1453, %v1521
      %v1538 = vadd.f32 %v1454, %v1521
      %v1539 = vadd.f32 %v1455, %v1521
      %v1540 = vadd.f32 %v1456, %v1521
      %v1541 = vadd.f32 %v1457, %v1521
      %v1542 = vadd.f32 %v1458, %v1521
      %v1543 = vadd.f32 %v1459, %v1521
      %v1544 = vadd.f32 %v1460, %v1521
      %v1545 = vadd.f32 %v1461, %v1521
      %v1546 = vadd.f32 %v1462, %v1521
      %v1547 = vadd.f32 %v1463, %v1521
      %v1548 = vadd.f32 %v1464, %v1521
      %v1549 = vadd.f32 %v1465, %v1521
      %v1550 = vadd.f32 %v1466, %v1521
      %v1551 = vadd.f32 %v1467, %v1521
      %v1552 = vadd.f32 %v1468, %v1521
      %v1553 = vadd.f32 %v1469, %v1521
      %v1554 = vadd.f32 %v1470, %v1521
      %v1555 = vadd.f32 %v1471, %v1521
      %v1556 = vadd.f32 %v1472, %v1521
      %v1557 = vadd.f32 %v1473, %v1521
      %v1558 = vadd.f32 %v1474, %v1521
      %v1559 = vadd.f32 %v1475, %v1521
      %v1560 = vadd.f32 %v1476, %v1521
      %v1561 = vadd.f32 %v1477, %v1521
      %v1562 = vadd.f32 %v1478, %v1521
      %v1563 = vadd.f32 %v1479, %v1521
      %v1564 = vadd.f32 %v1480, %v1521
      %v1565 = vadd.f32 %v1481, %v1521
      %v1566 = vadd.f32 %v1482, %v1521
      %v1567 = vadd.f32 %v1483, %v1521
      %v1568 = vadd.f32 %v1484, %v1521
      %v1569 = vadd.f32 %v1485, %v1521
      %v1570 = vadd.f32 %v1486, %v1521
      %v1571 = vadd.f32 %v1487, %v1521
      %v1572 = vadd.f32 %v1488, %v1521
      %v1573 = vadd.f32 %v1489, %v1521
      %v1574 = vadd.f32 %v1490, %v1521
      %v1575 = vadd.f32 %v1491, %v1521
      %v1576 = vadd.f32 %v1492, %v1521
      %v1577 = vadd.f32 %v1493, %v1521
      %v1578 = vadd.f32 %v1494, %v1521
      %v1579 = vadd.f32 %v1495, %v1521
      %v1580 = vadd.f32 %v1496, %v1521
      %v1581 = vadd.f32 %v1497, %v1521
      %v1582 = vadd.f32 %v1498, %v1521
      %v1583 = vadd.f32 %v1499, %v1521
      %v1584 = vadd.f32 %v1500, %v1521
      %v1585 = vadd.f32 %v1501, %v1521
      %v1586 = vadd.f32 %v1502, %v1521
      %v1587 = vadd.f32 %v1503, %v1521
      %v1588 = vadd.f32 %v1504, %v1521
      %v1589 = vadd.f32 %v1505, %v1521
      %v1590 = vadd.f32 %v1506, %v1521
      %v1591 = vadd.f32 %v1507, %v1521
      %v1592 = vadd.f32 %v1508, %v1521
      %v1593 = vadd.f32 %v1509, %v1521
      %v1594 = vadd.f32 %v1510, %v1521
      %v1595 = vadd.f32 %v1511, %v1521
      %v1596 = vadd.f32 %v1512, %v1521
      %v1597 = vadd.f32 %v1513, %v1521
      %v1598 = vadd.f32 %v1514, %v1521
      %v1599 = vadd.f32 %v1515, %v1521
      %v1600 = vadd.f32 %v1516, %v1521
      %v1601 = vadd.f32 %v1517, %v1521
      %v1602 = vmul.f32 %v1522, %v1522
      %v1603 = vmul.f32 %v1523, %v1523
      %v1604 = vmul.f32 %v1524, %v1524
      %v1605 = vmul.f32 %v1525, %v1525
      %v1606 = vmul.f32 %v1526, %v1526
      %v1607 = vmul.f32 %v1527, %v1527
      %v1608 = vmul.f32 %v1528, %v1528
      %v1609 = vmul.f32 %v1529, %v1529
      %v1610 = vmul.f32 %v1530, %v1530
      %v1611 = vmul.f32 %v1531, %v1531
      %v1612 = vmul.f32 %v1532, %v1532
      %v1613 = vmul.f32 %v1533, %v1533
      %v1614 = vmul.f32 %v1534, %v1534
      %v1615 = vmul.f32 %v1535, %v1535
      %v1616 = vmul.f32 %v1536, %v1536
      %v1617 = vmul.f32 %v1537, %v1537
      %v1618 = vmul.f32 %v1538, %v1538
      %v1619 = vmul.f32 %v1539, %v1539
      %v1620 = vmul.f32 %v1540, %v1540
      %v1621 = vmul.f32 %v1541, %v1541
      %v1622 = vmul.f32 %v1542, %v1542
      %v1623 = vmul.f32 %v1543, %v1543
      %v1624 = vmul.f32 %v1544, %v1544
      %v1625 = vmul.f32 %v1545, %v1545
      %v1626 = vmul.f32 %v1546, %v1546
      %v1627 = vmul.f32 %v1547, %v1547
      %v1628 = vmul.f32 %v1548, %v1548
      %v1629 = vmul.f32 %v1549, %v1549
      %v1630 = vmul.f32 %v1550, %v1550
      %v1631 = vmul.f32 %v1551, %v1551
      %v1632 = vmul.f32 %v1552, %v1552
      %v1633 = vmul.f32 %v1553, %v1553
      %v1634 = vmul.f32 %v1554, %v1554
      %v1635 = vmul.f32 %v1555, %v1555
      %v1636 = vmul.f32 %v1556, %v1556
      %v1637 = vmul.f32 %v1557, %v1557
      %v1638 = vmul.f32 %v1558, %v1558
      %v1639 = vmul.f32 %v1559, %v1559
      %v1640 = vmul.f32 %v1560, %v1560
      %v1641 = vmul.f32 %v1561, %v1561
      %v1642 = vmul.f32 %v1562, %v1562
      %v1643 = vmul.f32 %v1563, %v1563
      %v1644 = vmul.f32 %v1564, %v1564
      %v1645 = vmul.f32 %v1565, %v1565
      %v1646 = vmul.f32 %v1566, %v1566
      %v1647 = vmul.f32 %v1567, %v1567
      %v1648 = vmul.f32 %v1568, %v1568
      %v1649 = vmul.f32 %v1569, %v1569
      %v1650 = vmul.f32 %v1570, %v1570
      %v1651 = vmul.f32 %v1571, %v1571
      %v1652 = vmul.f32 %v1572, %v1572
      %v1653 = vmul.f32 %v1573, %v1573
      %v1654 = vmul.f32 %v1574, %v1574
      %v1655 = vmul.f32 %v1575, %v1575
      %v1656 = vmul.f32 %v1576, %v1576
      %v1657 = vmul.f32 %v1577, %v1577
      %v1658 = vmul.f32 %v1578, %v1578
      %v1659 = vmul.f32 %v1579, %v1579
      %v1660 = vmul.f32 %v1580, %v1580
      %v1661 = vmul.f32 %v1581, %v1581
      %v1662 = vmul.f32 %v1582, %v1582
      %v1663 = vmul.f32 %v1583, %v1583
      %v1664 = vmul.f32 %v1584, %v1584
      %v1665 = vmul.f32 %v1585, %v1585
      %v1666 = vmul.f32 %v1586, %v1586
      %v1667 = vmul.f32 %v1587, %v1587
      %v1668 = vmul.f32 %v1588, %v1588
      %v1669 = vmul.f32 %v1589, %v1589
      %v1670 = vmul.f32 %v1590, %v1590
      %v1671 = vmul.f32 %v1591, %v1591
      %v1672 = vmul.f32 %v1592, %v1592
      %v1673 = vmul.f32 %v1593, %v1593
      %v1674 = vmul.f32 %v1594, %v1594
      %v1675 = vmul.f32 %v1595, %v1595
      %v1676 = vmul.f32 %v1596, %v1596
      %v1677 = vmul.f32 %v1597, %v1597
      %v1678 = vmul.f32 %v1598, %v1598
      %v1679 = vmul.f32 %v1599, %v1599
      %v1680 = vmul.f32 %v1600, %v1600
      %v1681 = vmul.f32 %v1601, %v1601
      %v1682 = vmul.f32 %v1522, %v1602
      %v1683 = vmul.f32 %v1523, %v1603
      %v1684 = vmul.f32 %v1524, %v1604
      %v1685 = vmul.f32 %v1525, %v1605
      %v1686 = vmul.f32 %v1526, %v1606
      %v1687 = vmul.f32 %v1527, %v1607
      %v1688 = vmul.f32 %v1528, %v1608
      %v1689 = vmul.f32 %v1529, %v1609
      %v1690 = vmul.f32 %v1530, %v1610
      %v1691 = vmul.f32 %v1531, %v1611
      %v1692 = vmul.f32 %v1532, %v1612
      %v1693 = vmul.f32 %v1533, %v1613
      %v1694 = vmul.f32 %v1534, %v1614
      %v1695 = vmul.f32 %v1535, %v1615
      %v1696 = vmul.f32 %v1536, %v1616
      %v1697 = vmul.f32 %v1537, %v1617
      %v1698 = vmul.f32 %v1538, %v1618
      %v1699 = vmul.f32 %v1539, %v1619
      %v1700 = vmul.f32 %v1540, %v1620
      %v1701 = vmul.f32 %v1541, %v1621
      %v1702 = vmul.f32 %v1542, %v1622
      %v1703 = vmul.f32 %v1543, %v1623
      %v1704 = vmul.f32 %v1544, %v1624
      %v1705 = vmul.f32 %v1545, %v1625
      %v1706 = vmul.f32 %v1546, %v1626
      %v1707 = vmul.f32 %v1547, %v1627
      %v1708 = vmul.f32 %v1548, %v1628
      %v1709 = vmul.f32 %v1549, %v1629
      %v1710 = vmul.f32 %v1550, %v1630
      %v1711 = vmul.f32 %v1551, %v1631
      %v1712 = vmul.f32 %v1552, %v1632
      %v1713 = vmul.f32 %v1553, %v1633
      %v1714 = vmul.f32 %v1554, %v1634
      %v1715 = vmul.f32 %v1555, %v1635
      %v1716 = vmul.f32 %v1556, %v1636
      %v1717 = vmul.f32 %v1557, %v1637
      %v1718 = vmul.f32 %v1558, %v1638
      %v1719 = vmul.f32 %v1559, %v1639
      %v1720 = vmul.f32 %v1560, %v1640
      %v1721 = vmul.f32 %v1561, %v1641
      %v1722 = vmul.f32 %v1562, %v1642
      %v1723 = vmul.f32 %v1563, %v1643
      %v1724 = vmul.f32 %v1564, %v1644
      %v1725 = vmul.f32 %v1565, %v1645
      %v1726 = vmul.f32 %v1566, %v1646
      %v1727 = vmul.f32 %v1567, %v1647
      %v1728 = vmul.f32 %v1568, %v1648
      %v1729 = vmul.f32 %v1569, %v1649
      %v1730 = vmul.f32 %v1570, %v1650
      %v1731 = vmul.f32 %v1571, %v1651
      %v1732 = vmul.f32 %v1572, %v1652
      %v1733 = vmul.f32 %v1573, %v1653
      %v1734 = vmul.f32 %v1574, %v1654
      %v1735 = vmul.f32 %v1575, %v1655
      %v1736 = vmul.f32 %v1576, %v1656
      %v1737 = vmul.f32 %v1577, %v1657
      %v1738 = vmul.f32 %v1578, %v1658
      %v1739 = vmul.f32 %v1579, %v1659
      %v1740 = vmul.f32 %v1580, %v1660
      %v1741 = vmul.f32 %v1581, %v1661
      %v1742 = vmul.f32 %v1582, %v1662
      %v1743 = vmul.f32 %v1583, %v1663
      %v1744 = vmul.f32 %v1584, %v1664
      %v1745 = vmul.f32 %v1585, %v1665
      %v1746 = vmul.f32 %v1586, %v1666
      %v1747 = vmul.f32 %v1587, %v1667
      %v1748 = vmul.f32 %v1588, %v1668
      %v1749 = vmul.f32 %v1589, %v1669
      %v1750 = vmul.f32 %v1590, %v1670
      %v1751 = vmul.f32 %v1591, %v1671
      %v1752 = vmul.f32 %v1592, %v1672
      %v1753 = vmul.f32 %v1593, %v1673
      %v1754 = vmul.f32 %v1594, %v1674
      %v1755 = vmul.f32 %v1595, %v1675
      %v1756 = vmul.f32 %v1596, %v1676
      %v1757 = vmul.f32 %v1597, %v1677
      %v1758 = vmul.f32 %v1598, %v1678
      %v1759 = vmul.f32 %v1599, %v1679
      %v1760 = vmul.f32 %v1600, %v1680
      %v1761 = vmul.f32 %v1601, %v1681
      %v1762 = vmul.f32 %v1682, 0.044715
      %v1763 = vmul.f32 %v1683, 0.044715
      %v1764 = vmul.f32 %v1684, 0.044715
      %v1765 = vmul.f32 %v1685, 0.044715
      %v1766 = vmul.f32 %v1686, 0.044715
      %v1767 = vmul.f32 %v1687, 0.044715
      %v1768 = vmul.f32 %v1688, 0.044715
      %v1769 = vmul.f32 %v1689, 0.044715
      %v1770 = vmul.f32 %v1690, 0.044715
      %v1771 = vmul.f32 %v1691, 0.044715
      %v1772 = vmul.f32 %v1692, 0.044715
      %v1773 = vmul.f32 %v1693, 0.044715
      %v1774 = vmul.f32 %v1694, 0.044715
      %v1775 = vmul.f32 %v1695, 0.044715
      %v1776 = vmul.f32 %v1696, 0.044715
      %v1777 = vmul.f32 %v1697, 0.044715
      %v1778 = vmul.f32 %v1698, 0.044715
      %v1779 = vmul.f32 %v1699, 0.044715
      %v1780 = vmul.f32 %v1700, 0.044715
      %v1781 = vmul.f32 %v1701, 0.044715
      %v1782 = vmul.f32 %v1702, 0.044715
      %v1783 = vmul.f32 %v1703, 0.044715
      %v1784 = vmul.f32 %v1704, 0.044715
      %v1785 = vmul.f32 %v1705, 0.044715
      %v1786 = vmul.f32 %v1706, 0.044715
      %v1787 = vmul.f32 %v1707, 0.044715
      %v1788 = vmul.f32 %v1708, 0.044715
      %v1789 = vmul.f32 %v1709, 0.044715
      %v1790 = vmul.f32 %v1710, 0.044715
      %v1791 = vmul.f32 %v1711, 0.044715
      %v1792 = vmul.f32 %v1712, 0.044715
      %v1793 = vmul.f32 %v1713, 0.044715
      %v1794 = vmul.f32 %v1714, 0.044715
      %v1795 = vmul.f32 %v1715, 0.044715
      %v1796 = vmul.f32 %v1716, 0.044715
      %v1797 = vmul.f32 %v1717, 0.044715
      %v1798 = vmul.f32 %v1718, 0.044715
      %v1799 = vmul.f32 %v1719, 0.044715
      %v1800 = vmul.f32 %v1720, 0.044715
      %v1801 = vmul.f32 %v1721, 0.044715
      %v1802 = vmul.f32 %v1722, 0.044715
      %v1803 = vmul.f32 %v1723, 0.044715
      %v1804 = vmul.f32 %v1724, 0.044715
      %v1805 = vmul.f32 %v1725, 0.044715
      %v1806 = vmul.f32 %v1726, 0.044715
      %v1807 = vmul.f32 %v1727, 0.044715
      %v1808 = vmul.f32 %v1728, 0.044715
      %v1809 = vmul.f32 %v1729, 0.044715
      %v1810 = vmul.f32 %v1730, 0.044715
      %v1811 = vmul.f32 %v1731, 0.044715
      %v1812 = vmul.f32 %v1732, 0.044715
      %v1813 = vmul.f32 %v1733, 0.044715
      %v1814 = vmul.f32 %v1734, 0.044715
      %v1815 = vmul.f32 %v1735, 0.044715
      %v1816 = vmul.f32 %v1736, 0.044715
      %v1817 = vmul.f32 %v1737, 0.044715
      %v1818 = vmul.f32 %v1738, 0.044715
      %v1819 = vmul.f32 %v1739, 0.044715
      %v1820 = vmul.f32 %v1740, 0.044715
      %v1821 = vmul.f32 %v1741, 0.044715
      %v1822 = vmul.f32 %v1742, 0.044715
      %v1823 = vmul.f32 %v1743, 0.044715
      %v1824 = vmul.f32 %v1744, 0.044715
      %v1825 = vmul.f32 %v1745, 0.044715
      %v1826 = vmul.f32 %v1746, 0.044715
      %v1827 = vmul.f32 %v1747, 0.044715
      %v1828 = vmul.f32 %v1748, 0.044715
      %v1829 = vmul.f32 %v1749, 0.044715
      %v1830 = vmul.f32 %v1750, 0.044715
      %v1831 = vmul.f32 %v1751, 0.044715
      %v1832 = vmul.f32 %v1752, 0.044715
      %v1833 = vmul.f32 %v1753, 0.044715
      %v1834 = vmul.f32 %v1754, 0.044715
      %v1835 = vmul.f32 %v1755, 0.044715
      %v1836 = vmul.f32 %v1756, 0.044715
      %v1837 = vmul.f32 %v1757, 0.044715
      %v1838 = vmul.f32 %v1758, 0.044715
      %v1839 = vmul.f32 %v1759, 0.044715
      %v1840 = vmul.f32 %v1760, 0.044715
      %v1841 = vmul.f32 %v1761, 0.044715
      %v1842 = vadd.f32 %v1522, %v1762
      %v1843 = vadd.f32 %v1523, %v1763
      %v1844 = vadd.f32 %v1524, %v1764
      %v1845 = vadd.f32 %v1525, %v1765
      %v1846 = vadd.f32 %v1526, %v1766
      %v1847 = vadd.f32 %v1527, %v1767
      %v1848 = vadd.f32 %v1528, %v1768
      %v1849 = vadd.f32 %v1529, %v1769
      %v1850 = vadd.f32 %v1530, %v1770
      %v1851 = vadd.f32 %v1531, %v1771
      %v1852 = vadd.f32 %v1532, %v1772
      %v1853 = vadd.f32 %v1533, %v1773
      %v1854 = vadd.f32 %v1534, %v1774
      %v1855 = vadd.f32 %v1535, %v1775
      %v1856 = vadd.f32 %v1536, %v1776
      %v1857 = vadd.f32 %v1537, %v1777
      %v1858 = vadd.f32 %v1538, %v1778
      %v1859 = vadd.f32 %v1539, %v1779
      %v1860 = vadd.f32 %v1540, %v1780
      %v1861 = vadd.f32 %v1541, %v1781
      %v1862 = vadd.f32 %v1542, %v1782
      %v1863 = vadd.f32 %v1543, %v1783
      %v1864 = vadd.f32 %v1544, %v1784
      %v1865 = vadd.f32 %v1545, %v1785
      %v1866 = vadd.f32 %v1546, %v1786
      %v1867 = vadd.f32 %v1547, %v1787
      %v1868 = vadd.f32 %v1548, %v1788
      %v1869 = vadd.f32 %v1549, %v1789
      %v1870 = vadd.f32 %v1550, %v1790
      %v1871 = vadd.f32 %v1551, %v1791
      %v1872 = vadd.f32 %v1552, %v1792
      %v1873 = vadd.f32 %v1553, %v1793
      %v1874 = vadd.f32 %v1554, %v1794
      %v1875 = vadd.f32 %v1555, %v1795
      %v1876 = vadd.f32 %v1556, %v1796
      %v1877 = vadd.f32 %v1557, %v1797
      %v1878 = vadd.f32 %v1558, %v1798
      %v1879 = vadd.f32 %v1559, %v1799
      %v1880 = vadd.f32 %v1560, %v1800
      %v1881 = vadd.f32 %v1561, %v1801
      %v1882 = vadd.f32 %v1562, %v1802
      %v1883 = vadd.f32 %v1563, %v1803
      %v1884 = vadd.f32 %v1564, %v1804
      %v1885 = vadd.f32 %v1565, %v1805
      %v1886 = vadd.f32 %v1566, %v1806
      %v1887 = vadd.f32 %v1567, %v1807
      %v1888 = vadd.f32 %v1568, %v1808
      %v1889 = vadd.f32 %v1569, %v1809
      %v1890 = vadd.f32 %v1570, %v1810
      %v1891 = vadd.f32 %v1571, %v1811
      %v1892 = vadd.f32 %v1572, %v1812
      %v1893 = vadd.f32 %v1573, %v1813
      %v1894 = vadd.f32 %v1574, %v1814
      %v1895 = vadd.f32 %v1575, %v1815
      %v1896 = vadd.f32 %v1576, %v1816
      %v1897 = vadd.f32 %v1577, %v1817
      %v1898 = vadd.f32 %v1578, %v1818
      %v1899 = vadd.f32 %v1579, %v1819
      %v1900 = vadd.f32 %v1580, %v1820
      %v1901 = vadd.f32 %v1581, %v1821
      %v1902 = vadd.f32 %v1582, %v1822
      %v1903 = vadd.f32 %v1583, %v1823
      %v1904 = vadd.f32 %v1584, %v1824
      %v1905 = vadd.f32 %v1585, %v1825
      %v1906 = vadd.f32 %v1586, %v1826
      %v1907 = vadd.f32 %v1587, %v1827
      %v1908 = vadd.f32 %v1588, %v1828
      %v1909 = vadd.f32 %v1589, %v1829
      %v1910 = vadd.f32 %v1590, %v1830
      %v1911 = vadd.f32 %v1591, %v1831
      %v1912 = vadd.f32 %v1592, %v1832
      %v1913 = vadd.f32 %v1593, %v1833
      %v1914 = vadd.f32 %v1594, %v1834
      %v1915 = vadd.f32 %v1595, %v1835
      %v1916 = vadd.f32 %v1596, %v1836
      %v1917 = vadd.f32 %v1597, %v1837
      %v1918 = vadd.f32 %v1598, %v1838
      %v1919 = vadd.f32 %v1599, %v1839
      %v1920 = vadd.f32 %v1600, %v1840
      %v1921 = vadd.f32 %v1601, %v1841
      %v1922 = vmul.f32 %v1842, 0.7978846
      %v1923 = vmul.f32 %v1843, 0.7978846
      %v1924 = vmul.f32 %v1844, 0.7978846
      %v1925 = vmul.f32 %v1845, 0.7978846
      %v1926 = vmul.f32 %v1846, 0.7978846
      %v1927 = vmul.f32 %v1847, 0.7978846
      %v1928 = vmul.f32 %v1848, 0.7978846
      %v1929 = vmul.f32 %v1849, 0.7978846
      %v1930 = vmul.f32 %v1850, 0.7978846
      %v1931 = vmul.f32 %v1851, 0.7978846
      %v1932 = vmul.f32 %v1852, 0.7978846
      %v1933 = vmul.f32 %v1853, 0.7978846
      %v1934 = vmul.f32 %v1854, 0.7978846
      %v1935 = vmul.f32 %v1855, 0.7978846
      %v1936 = vmul.f32 %v1856, 0.7978846
      %v1937 = vmul.f32 %v1857, 0.7978846
      %v1938 = vmul.f32 %v1858, 0.7978846
      %v1939 = vmul.f32 %v1859, 0.7978846
      %v1940 = vmul.f32 %v1860, 0.7978846
      %v1941 = vmul.f32 %v1861, 0.7978846
      %v1942 = vmul.f32 %v1862, 0.7978846
      %v1943 = vmul.f32 %v1863, 0.7978846
      %v1944 = vmul.f32 %v1864, 0.7978846
      %v1945 = vmul.f32 %v1865, 0.7978846
      %v1946 = vmul.f32 %v1866, 0.7978846
      %v1947 = vmul.f32 %v1867, 0.7978846
      %v1948 = vmul.f32 %v1868, 0.7978846
      %v1949 = vmul.f32 %v1869, 0.7978846
      %v1950 = vmul.f32 %v1870, 0.7978846
      %v1951 = vmul.f32 %v1871, 0.7978846
      %v1952 = vmul.f32 %v1872, 0.7978846
      %v1953 = vmul.f32 %v1873, 0.7978846
      %v1954 = vmul.f32 %v1874, 0.7978846
      %v1955 = vmul.f32 %v1875, 0.7978846
      %v1956 = vmul.f32 %v1876, 0.7978846
      %v1957 = vmul.f32 %v1877, 0.7978846
      %v1958 = vmul.f32 %v1878, 0.7978846
      %v1959 = vmul.f32 %v1879, 0.7978846
      %v1960 = vmul.f32 %v1880, 0.7978846
      %v1961 = vmul.f32 %v1881, 0.7978846
      %v1962 = vmul.f32 %v1882, 0.7978846
      %v1963 = vmul.f32 %v1883, 0.7978846
      %v1964 = vmul.f32 %v1884, 0.7978846
      %v1965 = vmul.f32 %v1885, 0.7978846
      %v1966 = vmul.f32 %v1886, 0.7978846
      %v1967 = vmul.f32 %v1887, 0.7978846
      %v1968 = vmul.f32 %v1888, 0.7978846
      %v1969 = vmul.f32 %v1889, 0.7978846
      %v1970 = vmul.f32 %v1890, 0.7978846
      %v1971 = vmul.f32 %v1891, 0.7978846
      %v1972 = vmul.f32 %v1892, 0.7978846
      %v1973 = vmul.f32 %v1893, 0.7978846
      %v1974 = vmul.f32 %v1894, 0.7978846
      %v1975 = vmul.f32 %v1895, 0.7978846
      %v1976 = vmul.f32 %v1896, 0.7978846
      %v1977 = vmul.f32 %v1897, 0.7978846
      %v1978 = vmul.f32 %v1898, 0.7978846
      %v1979 = vmul.f32 %v1899, 0.7978846
      %v1980 = vmul.f32 %v1900, 0.7978846
      %v1981 = vmul.f32 %v1901, 0.7978846
      %v1982 = vmul.f32 %v1902, 0.7978846
      %v1983 = vmul.f32 %v1903, 0.7978846
      %v1984 = vmul.f32 %v1904, 0.7978846
      %v1985 = vmul.f32 %v1905, 0.7978846
      %v1986 = vmul.f32 %v1906, 0.7978846
      %v1987 = vmul.f32 %v1907, 0.7978846
      %v1988 = vmul.f32 %v1908, 0.7978846
      %v1989 = vmul.f32 %v1909, 0.7978846
      %v1990 = vmul.f32 %v1910, 0.7978846
      %v1991 = vmul.f32 %v1911, 0.7978846
      %v1992 = vmul.f32 %v1912, 0.7978846
      %v1993 = vmul.f32 %v1913, 0.7978846
      %v1994 = vmul.f32 %v1914, 0.7978846
      %v1995 = vmul.f32 %v1915, 0.7978846
      %v1996 = vmul.f32 %v1916, 0.7978846
      %v1997 = vmul.f32 %v1917, 0.7978846
      %v1998 = vmul.f32 %v1918, 0.7978846
      %v1999 = vmul.f32 %v1919, 0.7978846
      %v2000 = vmul.f32 %v1920, 0.7978846
      %v2001 = vmul.f32 %v1921, 0.7978846
      %v2002 = vtanh.pop %v1922
      %v2003 = vtanh.pop %v1923
      %v2004 = vtanh.pop %v1924
      %v2005 = vtanh.pop %v1925
      %v2006 = vtanh.pop %v1926
      %v2007 = vtanh.pop %v1927
      %v2008 = vtanh.pop %v1928
      %v2009 = vtanh.pop %v1929
      %v2010 = vtanh.pop %v1930
      %v2011 = vtanh.pop %v1931
      %v2012 = vtanh.pop %v1932
      %v2013 = vtanh.pop %v1933
      %v2014 = vtanh.pop %v1934
      %v2015 = vtanh.pop %v1935
      %v2016 = vtanh.pop %v1936
      %v2017 = vtanh.pop %v1937
      %v2018 = vtanh.pop %v1938
      %v2019 = vtanh.pop %v1939
      %v2020 = vtanh.pop %v1940
      %v2021 = vtanh.pop %v1941
      %v2022 = vtanh.pop %v1942
      %v2023 = vtanh.pop %v1943
      %v2024 = vtanh.pop %v1944
      %v2025 = vtanh.pop %v1945
      %v2026 = vtanh.pop %v1946
      %v2027 = vtanh.pop %v1947
      %v2028 = vtanh.pop %v1948
      %v2029 = vtanh.pop %v1949
      %v2030 = vtanh.pop %v1950
      %v2031 = vtanh.pop %v1951
      %v2032 = vtanh.pop %v1952
      %v2033 = vtanh.pop %v1953
      %v2034 = vtanh.pop %v1954
      %v2035 = vtanh.pop %v1955
      %v2036 = vtanh.pop %v1956
      %v2037 = vtanh.pop %v1957
      %v2038 = vtanh.pop %v1958
      %v2039 = vtanh.pop %v1959
      %v2040 = vtanh.pop %v1960
      %v2041 = vtanh.pop %v1961
      %v2042 = vtanh.pop %v1962
      %v2043 = vtanh.pop %v1963
      %v2044 = vtanh.pop %v1964
      %v2045 = vtanh.pop %v1965
      %v2046 = vtanh.pop %v1966
      %v2047 = vtanh.pop %v1967
      %v2048 = vtanh.pop %v1968
      %v2049 = vtanh.pop %v1969
      %v2050 = vtanh.pop %v1970
      %v2051 = vtanh.pop %v1971
      %v2052 = vtanh.pop %v1972
      %v2053 = vtanh.pop %v1973
      %v2054 = vtanh.pop %v1974
      %v2055 = vtanh.pop %v1975
      %v2056 = vtanh.pop %v1976
      %v2057 = vtanh.pop %v1977
      %v2058 = vtanh.pop %v1978
      %v2059 = vtanh.pop %v1979
      %v2060 = vtanh.pop %v1980
      %v2061 = vtanh.pop %v1981
      %v2062 = vtanh.pop %v1982
      %v2063 = vtanh.pop %v1983
      %v2064 = vtanh.pop %v1984
      %v2065 = vtanh.pop %v1985
      %v2066 = vtanh.pop %v1986
      %v2067 = vtanh.pop %v1987
      %v2068 = vtanh.pop %v1988
      %v2069 = vtanh.pop %v1989
      %v2070 = vtanh.pop %v1990
      %v2071 = vtanh.pop %v1991
      %v2072 = vtanh.pop %v1992
      %v2073 = vtanh.pop %v1993
      %v2074 = vtanh.pop %v1994
      %v2075 = vtanh.pop %v1995
      %v2076 = vtanh.pop %v1996
      %v2077 = vtanh.pop %v1997
      %v2078 = vtanh.pop %v1998
      %v2079 = vtanh.pop %v1999
      %v2080 = vtanh.pop %v2000
      %v2081 = vtanh.pop %v2001
      %v2082 = vadd.f32 %v2002, 1.0
      %v2083 = vadd.f32 %v2003, 1.0
      %v2084 = vadd.f32 %v2004, 1.0
      %v2085 = vadd.f32 %v2005, 1.0
      %v2086 = vadd.f32 %v2006, 1.0
      %v2087 = vadd.f32 %v2007, 1.0
      %v2088 = vadd.f32 %v2008, 1.0
      %v2089 = vadd.f32 %v2009, 1.0
      %v2090 = vadd.f32 %v2010, 1.0
      %v2091 = vadd.f32 %v2011, 1.0
      %v2092 = vadd.f32 %v2012, 1.0
      %v2093 = vadd.f32 %v2013, 1.0
      %v2094 = vadd.f32 %v2014, 1.0
      %v2095 = vadd.f32 %v2015, 1.0
      %v2096 = vadd.f32 %v2016, 1.0
      %v2097 = vadd.f32 %v2017, 1.0
      %v2098 = vadd.f32 %v2018, 1.0
      %v2099 = vadd.f32 %v2019, 1.0
      %v2100 = vadd.f32 %v2020, 1.0
      %v2101 = vadd.f32 %v2021, 1.0
      %v2102 = vadd.f32 %v2022, 1.0
      %v2103 = vadd.f32 %v2023, 1.0
      %v2104 = vadd.f32 %v2024, 1.0
      %v2105 = vadd.f32 %v2025, 1.0
      %v2106 = vadd.f32 %v2026, 1.0
      %v2107 = vadd.f32 %v2027, 1.0
      %v2108 = vadd.f32 %v2028, 1.0
      %v2109 = vadd.f32 %v2029, 1.0
      %v2110 = vadd.f32 %v2030, 1.0
      %v2111 = vadd.f32 %v2031, 1.0
      %v2112 = vadd.f32 %v2032, 1.0
      %v2113 = vadd.f32 %v2033, 1.0
      %v2114 = vadd.f32 %v2034, 1.0
      %v2115 = vadd.f32 %v2035, 1.0
      %v2116 = vadd.f32 %v2036, 1.0
      %v2117 = vadd.f32 %v2037, 1.0
      %v2118 = vadd.f32 %v2038, 1.0
      %v2119 = vadd.f32 %v2039, 1.0
      %v2120 = vadd.f32 %v2040, 1.0
      %v2121 = vadd.f32 %v2041, 1.0
      %v2122 = vadd.f32 %v2042, 1.0
      %v2123 = vadd.f32 %v2043, 1.0
      %v2124 = vadd.f32 %v2044, 1.0
      %v2125 = vadd.f32 %v2045, 1.0
      %v2126 = vadd.f32 %v2046, 1.0
      %v2127 = vadd.f32 %v2047, 1.0
      %v2128 = vadd.f32 %v2048, 1.0
      %v2129 = vadd.f32 %v2049, 1.0
      %v2130 = vadd.f32 %v2050, 1.0
      %v2131 = vadd.f32 %v2051, 1.0
      %v2132 = vadd.f32 %v2052, 1.0
      %v2133 = vadd.f32 %v2053, 1.0
      %v2134 = vadd.f32 %v2054, 1.0
      %v2135 = vadd.f32 %v2055, 1.0
      %v2136 = vadd.f32 %v2056, 1.0
      %v2137 = vadd.f32 %v2057, 1.0
      %v2138 = vadd.f32 %v2058, 1.0
      %v2139 = vadd.f32 %v2059, 1.0
      %v2140 = vadd.f32 %v2060, 1.0
      %v2141 = vadd.f32 %v2061, 1.0
      %v2142 = vadd.f32 %v2062, 1.0
      %v2143 = vadd.f32 %v2063, 1.0
      %v2144 = vadd.f32 %v2064, 1.0
      %v2145 = vadd.f32 %v2065, 1.0
      %v2146 = vadd.f32 %v2066, 1.0
      %v2147 = vadd.f32 %v2067, 1.0
      %v2148 = vadd.f32 %v2068, 1.0
      %v2149 = vadd.f32 %v2069, 1.0
      %v2150 = vadd.f32 %v2070, 1.0
      %v2151 = vadd.f32 %v2071, 1.0
      %v2152 = vadd.f32 %v2072, 1.0
      %v2153 = vadd.f32 %v2073, 1.0
      %v2154 = vadd.f32 %v2074, 1.0
      %v2155 = vadd.f32 %v2075, 1.0
      %v2156 = vadd.f32 %v2076, 1.0
      %v2157 = vadd.f32 %v2077, 1.0
      %v2158 = vadd.f32 %v2078, 1.0
      %v2159 = vadd.f32 %v2079, 1.0
      %v2160 = vadd.f32 %v2080, 1.0
      %v2161 = vadd.f32 %v2081, 1.0
      %v2162 = vmul.f32 %v2082, 0.5
      %v2163 = vmul.f32 %v2083, 0.5
      %v2164 = vmul.f32 %v2084, 0.5
      %v2165 = vmul.f32 %v2085, 0.5
      %v2166 = vmul.f32 %v2086, 0.5
      %v2167 = vmul.f32 %v2087, 0.5
      %v2168 = vmul.f32 %v2088, 0.5
      %v2169 = vmul.f32 %v2089, 0.5
      %v2170 = vmul.f32 %v2090, 0.5
      %v2171 = vmul.f32 %v2091, 0.5
      %v2172 = vmul.f32 %v2092, 0.5
      %v2173 = vmul.f32 %v2093, 0.5
      %v2174 = vmul.f32 %v2094, 0.5
      %v2175 = vmul.f32 %v2095, 0.5
      %v2176 = vmul.f32 %v2096, 0.5
      %v2177 = vmul.f32 %v2097, 0.5
      %v2178 = vmul.f32 %v2098, 0.5
      %v2179 = vmul.f32 %v2099, 0.5
      %v2180 = vmul.f32 %v2100, 0.5
      %v2181 = vmul.f32 %v2101, 0.5
      %v2182 = vmul.f32 %v2102, 0.5
      %v2183 = vmul.f32 %v2103, 0.5
      %v2184 = vmul.f32 %v2104, 0.5
      %v2185 = vmul.f32 %v2105, 0.5
      %v2186 = vmul.f32 %v2106, 0.5
      %v2187 = vmul.f32 %v2107, 0.5
      %v2188 = vmul.f32 %v2108, 0.5
      %v2189 = vmul.f32 %v2109, 0.5
      %v2190 = vmul.f32 %v2110, 0.5
      %v2191 = vmul.f32 %v2111, 0.5
      %v2192 = vmul.f32 %v2112, 0.5
      %v2193 = vmul.f32 %v2113, 0.5
      %v2194 = vmul.f32 %v2114, 0.5
      %v2195 = vmul.f32 %v2115, 0.5
      %v2196 = vmul.f32 %v2116, 0.5
      %v2197 = vmul.f32 %v2117, 0.5
      %v2198 = vmul.f32 %v2118, 0.5
      %v2199 = vmul.f32 %v2119, 0.5
      %v2200 = vmul.f32 %v2120, 0.5
      %v2201 = vmul.f32 %v2121, 0.5
      %v2202 = vmul.f32 %v2122, 0.5
      %v2203 = vmul.f32 %v2123, 0.5
      %v2204 = vmul.f32 %v2124, 0.5
      %v2205 = vmul.f32 %v2125, 0.5
      %v2206 = vmul.f32 %v2126, 0.5
      %v2207 = vmul.f32 %v2127, 0.5
      %v2208 = vmul.f32 %v2128, 0.5
      %v2209 = vmul.f32 %v2129, 0.5
      %v2210 = vmul.f32 %v2130, 0.5
      %v2211 = vmul.f32 %v2131, 0.5
      %v2212 = vmul.f32 %v2132, 0.5
      %v2213 = vmul.f32 %v2133, 0.5
      %v2214 = vmul.f32 %v2134, 0.5
      %v2215 = vmul.f32 %v2135, 0.5
      %v2216 = vmul.f32 %v2136, 0.5
      %v2217 = vmul.f32 %v2137, 0.5
      %v2218 = vmul.f32 %v2138, 0.5
      %v2219 = vmul.f32 %v2139, 0.5
      %v2220 = vmul.f32 %v2140, 0.5
      %v2221 = vmul.f32 %v2141, 0.5
      %v2222 = vmul.f32 %v2142, 0.5
      %v2223 = vmul.f32 %v2143, 0.5
      %v2224 = vmul.f32 %v2144, 0.5
      %v2225 = vmul.f32 %v2145, 0.5
      %v2226 = vmul.f32 %v2146, 0.5
      %v2227 = vmul.f32 %v2147, 0.5
      %v2228 = vmul.f32 %v2148, 0.5
      %v2229 = vmul.f32 %v2149, 0.5
      %v2230 = vmul.f32 %v2150, 0.5
      %v2231 = vmul.f32 %v2151, 0.5
      %v2232 = vmul.f32 %v2152, 0.5
      %v2233 = vmul.f32 %v2153, 0.5
      %v2234 = vmul.f32 %v2154, 0.5
      %v2235 = vmul.f32 %v2155, 0.5
      %v2236 = vmul.f32 %v2156, 0.5
      %v2237 = vmul.f32 %v2157, 0.5
      %v2238 = vmul.f32 %v2158, 0.5
      %v2239 = vmul.f32 %v2159, 0.5
      %v2240 = vmul.f32 %v2160, 0.5
      %v2241 = vmul.f32 %v2161, 0.5
      %v2242 = vmul.f32 %v1522, %v2162
      %v2243 = vmul.f32 %v1523, %v2163
      %v2244 = vmul.f32 %v1524, %v2164
      %v2245 = vmul.f32 %v1525, %v2165
      %v2246 = vmul.f32 %v1526, %v2166
      %v2247 = vmul.f32 %v1527, %v2167
      %v2248 = vmul.f32 %v1528, %v2168
      %v2249 = vmul.f32 %v1529, %v2169
      %v2250 = vmul.f32 %v1530, %v2170
      %v2251 = vmul.f32 %v1531, %v2171
      %v2252 = vmul.f32 %v1532, %v2172
      %v2253 = vmul.f32 %v1533, %v2173
      %v2254 = vmul.f32 %v1534, %v2174
      %v2255 = vmul.f32 %v1535, %v2175
      %v2256 = vmul.f32 %v1536, %v2176
      %v2257 = vmul.f32 %v1537, %v2177
      %v2258 = vmul.f32 %v1538, %v2178
      %v2259 = vmul.f32 %v1539, %v2179
      %v2260 = vmul.f32 %v1540, %v2180
      %v2261 = vmul.f32 %v1541, %v2181
      %v2262 = vmul.f32 %v1542, %v2182
      %v2263 = vmul.f32 %v1543, %v2183
      %v2264 = vmul.f32 %v1544, %v2184
      %v2265 = vmul.f32 %v1545, %v2185
      %v2266 = vmul.f32 %v1546, %v2186
      %v2267 = vmul.f32 %v1547, %v2187
      %v2268 = vmul.f32 %v1548, %v2188
      %v2269 = vmul.f32 %v1549, %v2189
      %v2270 = vmul.f32 %v1550, %v2190
      %v2271 = vmul.f32 %v1551, %v2191
      %v2272 = vmul.f32 %v1552, %v2192
      %v2273 = vmul.f32 %v1553, %v2193
      %v2274 = vmul.f32 %v1554, %v2194
      %v2275 = vmul.f32 %v1555, %v2195
      %v2276 = vmul.f32 %v1556, %v2196
      %v2277 = vmul.f32 %v1557, %v2197
      %v2278 = vmul.f32 %v1558, %v2198
      %v2279 = vmul.f32 %v1559, %v2199
      %v2280 = vmul.f32 %v1560, %v2200
      %v2281 = vmul.f32 %v1561, %v2201
      %v2282 = vmul.f32 %v1562, %v2202
      %v2283 = vmul.f32 %v1563, %v2203
      %v2284 = vmul.f32 %v1564, %v2204
      %v2285 = vmul.f32 %v1565, %v2205
      %v2286 = vmul.f32 %v1566, %v2206
      %v2287 = vmul.f32 %v1567, %v2207
      %v2288 = vmul.f32 %v1568, %v2208
      %v2289 = vmul.f32 %v1569, %v2209
      %v2290 = vmul.f32 %v1570, %v2210
      %v2291 = vmul.f32 %v1571, %v2211
      %v2292 = vmul.f32 %v1572, %v2212
      %v2293 = vmul.f32 %v1573, %v2213
      %v2294 = vmul.f32 %v1574, %v2214
      %v2295 = vmul.f32 %v1575, %v2215
      %v2296 = vmul.f32 %v1576, %v2216
      %v2297 = vmul.f32 %v1577, %v2217
      %v2298 = vmul.f32 %v1578, %v2218
      %v2299 = vmul.f32 %v1579, %v2219
      %v2300 = vmul.f32 %v1580, %v2220
      %v2301 = vmul.f32 %v1581, %v2221
      %v2302 = vmul.f32 %v1582, %v2222
      %v2303 = vmul.f32 %v1583, %v2223
      %v2304 = vmul.f32 %v1584, %v2224
      %v2305 = vmul.f32 %v1585, %v2225
      %v2306 = vmul.f32 %v1586, %v2226
      %v2307 = vmul.f32 %v1587, %v2227
      %v2308 = vmul.f32 %v1588, %v2228
      %v2309 = vmul.f32 %v1589, %v2229
      %v2310 = vmul.f32 %v1590, %v2230
      %v2311 = vmul.f32 %v1591, %v2231
      %v2312 = vmul.f32 %v1592, %v2232
      %v2313 = vmul.f32 %v1593, %v2233
      %v2314 = vmul.f32 %v1594, %v2234
      %v2315 = vmul.f32 %v1595, %v2235
      %v2316 = vmul.f32 %v1596, %v2236
      %v2317 = vmul.f32 %v1597, %v2237
      %v2318 = vmul.f32 %v1598, %v2238
      %v2319 = vmul.f32 %v1599, %v2239
      %v2320 = vmul.f32 %v1600, %v2240
      %v2321 = vmul.f32 %v1601, %v2241
      %2322 = vst.msk [vmem:[#allocation2] sm:$0xff] %vm391, %v2242
      %2323 = vst.msk [vmem:[#allocation2 + $0x8] sm:$0xff] %vm391, %v2243
      %2324 = vst.msk [vmem:[#allocation2 + $0x10] sm:$0xff] %vm391, %v2244
      %2325 = vst.msk [vmem:[#allocation2 + $0x18] sm:$0xff] %vm391, %v2245
      %2326 = vst.msk [vmem:[#allocation2 + $0x20] sm:$0xff] %vm391, %v2246
      %2327 = vst.msk [vmem:[#allocation2 + $0x28] sm:$0xff] %vm391, %v2247
      %2328 = vst.msk [vmem:[#allocation2 + $0x30] sm:$0xff] %vm391, %v2248
      %2329 = vst.msk [vmem:[#allocation2 + $0x38] sm:$0xff] %vm391, %v2249
      %2330 = vst.msk [vmem:[#allocation2 + $0x40] sm:$0xff] %vm391, %v2250
      %2331 = vst.msk [vmem:[#allocation2 + $0x48] sm:$0xff] %vm391, %v2251
      %2332 = vst.msk [vmem:[#allocation2 + $0x50] sm:$0xff] %vm391, %v2252
      %2333 = vst.msk [vmem:[#allocation2 + $0x58] sm:$0xff] %vm391, %v2253
      %2334 = vst.msk [vmem:[#allocation2 + $0x60] sm:$0xff] %vm391, %v2254
      %2335 = vst.msk [vmem:[#allocation2 + $0x68] sm:$0xff] %vm391, %v2255
      %2336 = vst.msk [vmem:[#allocation2 + $0x70] sm:$0xff] %vm391, %v2256
      %2337 = vst.msk [vmem:[#allocation2 + $0x78] sm:$0xff] %vm391, %v2257
      %2338 = vst.msk [vmem:[#allocation2 + $0x80] sm:$0xff] %vm391, %v2258
      %2339 = vst.msk [vmem:[#allocation2 + $0x88] sm:$0xff] %vm391, %v2259
      %2340 = vst.msk [vmem:[#allocation2 + $0x90] sm:$0xff] %vm391, %v2260
      %2341 = vst.msk [vmem:[#allocation2 + $0x98] sm:$0xff] %vm391, %v2261
      %2342 = vst.msk [vmem:[#allocation2 + $0xa0] sm:$0xff] %vm391, %v2262
      %2343 = vst.msk [vmem:[#allocation2 + $0xa8] sm:$0xff] %vm391, %v2263
      %2344 = vst.msk [vmem:[#allocation2 + $0xb0] sm:$0xff] %vm391, %v2264
      %2345 = vst.msk [vmem:[#allocation2 + $0xb8] sm:$0xff] %vm391, %v2265
      %2346 = vst.msk [vmem:[#allocation2 + $0xc0] sm:$0xff] %vm391, %v2266
      %2347 = vst.msk [vmem:[#allocation2 + $0xc8] sm:$0xff] %vm391, %v2267
      %2348 = vst.msk [vmem:[#allocation2 + $0xd0] sm:$0xff] %vm391, %v2268
      %2349 = vst.msk [vmem:[#allocation2 + $0xd8] sm:$0xff] %vm391, %v2269
      %2350 = vst.msk [vmem:[#allocation2 + $0xe0] sm:$0xff] %vm391, %v2270
      %2351 = vst.msk [vmem:[#allocation2 + $0xe8] sm:$0xff] %vm391, %v2271
      %2352 = vst.msk [vmem:[#allocation2 + $0xf0] sm:$0xff] %vm391, %v2272
      %2353 = vst.msk [vmem:[#allocation2 + $0xf8] sm:$0xff] %vm391, %v2273
      %2354 = vst.msk [vmem:[#allocation2 + $0x100] sm:$0xff] %vm391, %v2274
      %2355 = vst.msk [vmem:[#allocation2 + $0x108] sm:$0xff] %vm391, %v2275
      %2356 = vst.msk [vmem:[#allocation2 + $0x110] sm:$0xff] %vm391, %v2276
      %2357 = vst.msk [vmem:[#allocation2 + $0x118] sm:$0xff] %vm391, %v2277
      %2358 = vst.msk [vmem:[#allocation2 + $0x120] sm:$0xff] %vm391, %v2278
      %2359 = vst.msk [vmem:[#allocation2 + $0x128] sm:$0xff] %vm391, %v2279
      %2360 = vst.msk [vmem:[#allocation2 + $0x130] sm:$0xff] %vm391, %v2280
      %2361 = vst.msk [vmem:[#allocation2 + $0x138] sm:$0xff] %vm391, %v2281
      %2362 = vst.msk [vmem:[#allocation2 + $0x140] sm:$0xff] %vm391, %v2282
      %2363 = vst.msk [vmem:[#allocation2 + $0x148] sm:$0xff] %vm391, %v2283
      %2364 = vst.msk [vmem:[#allocation2 + $0x150] sm:$0xff] %vm391, %v2284
      %2365 = vst.msk [vmem:[#allocation2 + $0x158] sm:$0xff] %vm391, %v2285
      %2366 = vst.msk [vmem:[#allocation2 + $0x160] sm:$0xff] %vm391, %v2286
      %2367 = vst.msk [vmem:[#allocation2 + $0x168] sm:$0xff] %vm391, %v2287
      %2368 = vst.msk [vmem:[#allocation2 + $0x170] sm:$0xff] %vm391, %v2288
      %2369 = vst.msk [vmem:[#allocation2 + $0x178] sm:$0xff] %vm391, %v2289
      %2370 = vst.msk [vmem:[#allocation2 + $0x180] sm:$0xff] %vm391, %v2290
      %2371 = vst.msk [vmem:[#allocation2 + $0x188] sm:$0xff] %vm391, %v2291
      %2372 = vst.msk [vmem:[#allocation2 + $0x190] sm:$0xff] %vm391, %v2292
      %2373 = vst.msk [vmem:[#allocation2 + $0x198] sm:$0xff] %vm391, %v2293
      %2374 = vst.msk [vmem:[#allocation2 + $0x1a0] sm:$0xff] %vm391, %v2294
      %2375 = vst.msk [vmem:[#allocation2 + $0x1a8] sm:$0xff] %vm391, %v2295
      %2376 = vst.msk [vmem:[#allocation2 + $0x1b0] sm:$0xff] %vm391, %v2296
      %2377 = vst.msk [vmem:[#allocation2 + $0x1b8] sm:$0xff] %vm391, %v2297
      %2378 = vst.msk [vmem:[#allocation2 + $0x1c0] sm:$0xff] %vm391, %v2298
      %2379 = vst.msk [vmem:[#allocation2 + $0x1c8] sm:$0xff] %vm391, %v2299
      %2380 = vst.msk [vmem:[#allocation2 + $0x1d0] sm:$0xff] %vm391, %v2300
      %2381 = vst.msk [vmem:[#allocation2 + $0x1d8] sm:$0xff] %vm391, %v2301
      %2382 = vst.msk [vmem:[#allocation2 + $0x1e0] sm:$0xff] %vm391, %v2302
      %2383 = vst.msk [vmem:[#allocation2 + $0x1e8] sm:$0xff] %vm391, %v2303
      %2384 = vst.msk [vmem:[#allocation2 + $0x1f0] sm:$0xff] %vm391, %v2304
      %2385 = vst.msk [vmem:[#allocation2 + $0x1f8] sm:$0xff] %vm391, %v2305
      %2386 = vst.msk [vmem:[#allocation2 + $0x200] sm:$0xff] %vm391, %v2306
      %2387 = vst.msk [vmem:[#allocation2 + $0x208] sm:$0xff] %vm391, %v2307
      %2388 = vst.msk [vmem:[#allocation2 + $0x210] sm:$0xff] %vm391, %v2308
      %2389 = vst.msk [vmem:[#allocation2 + $0x218] sm:$0xff] %vm391, %v2309
      %2390 = vst.msk [vmem:[#allocation2 + $0x220] sm:$0xff] %vm391, %v2310
      %2391 = vst.msk [vmem:[#allocation2 + $0x228] sm:$0xff] %vm391, %v2311
      %2392 = vst.msk [vmem:[#allocation2 + $0x230] sm:$0xff] %vm391, %v2312
      %2393 = vst.msk [vmem:[#allocation2 + $0x238] sm:$0xff] %vm391, %v2313
      %2394 = vst.msk [vmem:[#allocation2 + $0x240] sm:$0xff] %vm391, %v2314
      %2395 = vst.msk [vmem:[#allocation2 + $0x248] sm:$0xff] %vm391, %v2315
      %2396 = vst.msk [vmem:[#allocation2 + $0x250] sm:$0xff] %vm391, %v2316
      %2397 = vst.msk [vmem:[#allocation2 + $0x258] sm:$0xff] %vm391, %v2317
      %2398 = vst.msk [vmem:[#allocation2 + $0x260] sm:$0xff] %vm391, %v2318
      %2399 = vst.msk [vmem:[#allocation2 + $0x268] sm:$0xff] %vm391, %v2319
      %2400 = vst.msk [vmem:[#allocation2 + $0x270] sm:$0xff] %vm391, %v2320
      %2401 = vst.msk [vmem:[#allocation2 + $0x278] sm:$0x7f] %vm629, %v2321
      %v2402 = vld [vmem:[#allocation2] ss:$2 sm:$0xff]
      %s2403 = scalar_lea.vmem [#allocation2], 16
      %v2404 = vld [vmem:[%s2403] ss:$2 sm:$0xff]
      %s2405 = scalar_lea.vmem [#allocation2], 32
      %v2406 = vld [vmem:[%s2405] ss:$2 sm:$0xff]
      %s2407 = scalar_lea.vmem [#allocation2], 48
      %v2408 = vld [vmem:[%s2407] ss:$2 sm:$0xff]
      %s2409 = scalar_lea.vmem [#allocation2], 64
      %v2410 = vld [vmem:[%s2409] ss:$2 sm:$0xff]
      %s2411 = scalar_lea.vmem [#allocation2], 80
      %v2412 = vld [vmem:[%s2411] ss:$2 sm:$0xff]
      %s2413 = scalar_lea.vmem [#allocation2], 96
      %v2414 = vld [vmem:[%s2413] ss:$2 sm:$0xff]
      %s2415 = scalar_lea.vmem [#allocation2], 112
      %v2416 = vld [vmem:[%s2415] ss:$2 sm:$0xff]
      %s2417 = scalar_lea.vmem [#allocation2], 128
      %v2418 = vld [vmem:[%s2417] ss:$2 sm:$0xff]
      %s2419 = scalar_lea.vmem [#allocation2], 144
      %v2420 = vld [vmem:[%s2419] ss:$2 sm:$0xff]
      %s2421 = scalar_lea.vmem [#allocation2], 160
      %v2422 = vld [vmem:[%s2421] ss:$2 sm:$0xff]
      %s2423 = scalar_lea.vmem [#allocation2], 176
      %v2424 = vld [vmem:[%s2423] ss:$2 sm:$0xff]
      %s2425 = scalar_lea.vmem [#allocation2], 192
      %v2426 = vld [vmem:[%s2425] ss:$2 sm:$0xff]
      %s2427 = scalar_lea.vmem [#allocation2], 208
      %v2428 = vld [vmem:[%s2427] ss:$2 sm:$0xff]
      %s2429 = scalar_lea.vmem [#allocation2], 224
      %v2430 = vld [vmem:[%s2429] ss:$2 sm:$0xff]
      %s2431 = scalar_lea.vmem [#allocation2], 240
      %v2432 = vld [vmem:[%s2431] ss:$2 sm:$0xff]
      %s2433 = scalar_lea.vmem [#allocation2], 256
      %v2434 = vld [vmem:[%s2433] ss:$2 sm:$0xff]
      %s2435 = scalar_lea.vmem [#allocation2], 272
      %v2436 = vld [vmem:[%s2435] ss:$2 sm:$0xff]
      %s2437 = scalar_lea.vmem [#allocation2], 288
      %v2438 = vld [vmem:[%s2437] ss:$2 sm:$0xff]
      %s2439 = scalar_lea.vmem [#allocation2], 304
      %v2440 = vld [vmem:[%s2439] ss:$2 sm:$0xff]
      %s2441 = scalar_lea.vmem [#allocation2], 320
      %v2442 = vld [vmem:[%s2441] ss:$2 sm:$0xff]
      %s2443 = scalar_lea.vmem [#allocation2], 336
      %v2444 = vld [vmem:[%s2443] ss:$2 sm:$0xff]
      %s2445 = scalar_lea.vmem [#allocation2], 352
      %v2446 = vld [vmem:[%s2445] ss:$2 sm:$0xff]
      %s2447 = scalar_lea.vmem [#allocation2], 368
      %v2448 = vld [vmem:[%s2447] ss:$2 sm:$0xff]
      %s2449 = scalar_lea.vmem [#allocation2], 384
      %v2450 = vld [vmem:[%s2449] ss:$2 sm:$0xff]
      %s2451 = scalar_lea.vmem [#allocation2], 400
      %v2452 = vld [vmem:[%s2451] ss:$2 sm:$0xff]
      %s2453 = scalar_lea.vmem [#allocation2], 416
      %v2454 = vld [vmem:[%s2453] ss:$2 sm:$0xff]
      %s2455 = scalar_lea.vmem [#allocation2], 432
      %v2456 = vld [vmem:[%s2455] ss:$2 sm:$0xff]
      %s2457 = scalar_lea.vmem [#allocation2], 448
      %v2458 = vld [vmem:[%s2457] ss:$2 sm:$0xff]
      %s2459 = scalar_lea.vmem [#allocation2], 464
      %v2460 = vld [vmem:[%s2459] ss:$2 sm:$0xff]
      %s2461 = scalar_lea.vmem [#allocation2], 480
      %v2462 = vld [vmem:[%s2461] ss:$2 sm:$0xff]
      %s2463 = scalar_lea.vmem [#allocation2], 496
      %v2464 = vld [vmem:[%s2463] ss:$2 sm:$0xff]
      %s2465 = scalar_lea.vmem [#allocation2], 512
      %v2466 = vld [vmem:[%s2465] ss:$2 sm:$0xff]
      %s2467 = scalar_lea.vmem [#allocation2], 528
      %v2468 = vld [vmem:[%s2467] ss:$2 sm:$0xff]
      %s2469 = scalar_lea.vmem [#allocation2], 544
      %v2470 = vld [vmem:[%s2469] ss:$2 sm:$0xff]
      %s2471 = scalar_lea.vmem [#allocation2], 560
      %v2472 = vld [vmem:[%s2471] ss:$2 sm:$0xff]
      %s2473 = scalar_lea.vmem [#allocation2], 576
      %v2474 = vld [vmem:[%s2473] ss:$2 sm:$0xff]
      %s2475 = scalar_lea.vmem [#allocation2], 592
      %v2476 = vld [vmem:[%s2475] ss:$2 sm:$0xff]
      %s2477 = scalar_lea.vmem [#allocation2], 608
      %v2478 = vld [vmem:[%s2477] ss:$2 sm:$0xff]
      %s2479 = scalar_lea.vmem [#allocation2], 624
      %v2480 = vld [vmem:[%s2479] ss:$2 sm:$0xff]
      %s2481 = scalar_lea.vmem [#allocation2], 1
      %v2482 = vld [vmem:[%s2481] ss:$2 sm:$0xff]
      %s2483 = scalar_lea.vmem [#allocation2], 17
      %v2484 = vld [vmem:[%s2483] ss:$2 sm:$0xff]
      %s2485 = scalar_lea.vmem [#allocation2], 33
      %v2486 = vld [vmem:[%s2485] ss:$2 sm:$0xff]
      %s2487 = scalar_lea.vmem [#allocation2], 49
      %v2488 = vld [vmem:[%s2487] ss:$2 sm:$0xff]
      %s2489 = scalar_lea.vmem [#allocation2], 65
      %v2490 = vld [vmem:[%s2489] ss:$2 sm:$0xff]
      %s2491 = scalar_lea.vmem [#allocation2], 81
      %v2492 = vld [vmem:[%s2491] ss:$2 sm:$0xff]
      %s2493 = scalar_lea.vmem [#allocation2], 97
      %v2494 = vld [vmem:[%s2493] ss:$2 sm:$0xff]
      %s2495 = scalar_lea.vmem [#allocation2], 113
      %v2496 = vld [vmem:[%s2495] ss:$2 sm:$0xff]
      %s2497 = scalar_lea.vmem [#allocation2], 129
      %v2498 = vld [vmem:[%s2497] ss:$2 sm:$0xff]
      %s2499 = scalar_lea.vmem [#allocation2], 145
      %v2500 = vld [vmem:[%s2499] ss:$2 sm:$0xff]
      %s2501 = scalar_lea.vmem [#allocation2], 161
      %v2502 = vld [vmem:[%s2501] ss:$2 sm:$0xff]
      %s2503 = scalar_lea.vmem [#allocation2], 177
      %v2504 = vld [vmem:[%s2503] ss:$2 sm:$0xff]
      %s2505 = scalar_lea.vmem [#allocation2], 193
      %v2506 = vld [vmem:[%s2505] ss:$2 sm:$0xff]
      %s2507 = scalar_lea.vmem [#allocation2], 209
      %v2508 = vld [vmem:[%s2507] ss:$2 sm:$0xff]
      %s2509 = scalar_lea.vmem [#allocation2], 225
      %v2510 = vld [vmem:[%s2509] ss:$2 sm:$0xff]
      %s2511 = scalar_lea.vmem [#allocation2], 241
      %v2512 = vld [vmem:[%s2511] ss:$2 sm:$0xff]
      %s2513 = scalar_lea.vmem [#allocation2], 257
      %v2514 = vld [vmem:[%s2513] ss:$2 sm:$0xff]
      %s2515 = scalar_lea.vmem [#allocation2], 273
      %v2516 = vld [vmem:[%s2515] ss:$2 sm:$0xff]
      %s2517 = scalar_lea.vmem [#allocation2], 289
      %v2518 = vld [vmem:[%s2517] ss:$2 sm:$0xff]
      %s2519 = scalar_lea.vmem [#allocation2], 305
      %v2520 = vld [vmem:[%s2519] ss:$2 sm:$0xff]
      %s2521 = scalar_lea.vmem [#allocation2], 321
      %v2522 = vld [vmem:[%s2521] ss:$2 sm:$0xff]
      %s2523 = scalar_lea.vmem [#allocation2], 337
      %v2524 = vld [vmem:[%s2523] ss:$2 sm:$0xff]
      %s2525 = scalar_lea.vmem [#allocation2], 353
      %v2526 = vld [vmem:[%s2525] ss:$2 sm:$0xff]
      %s2527 = scalar_lea.vmem [#allocation2], 369
      %v2528 = vld [vmem:[%s2527] ss:$2 sm:$0xff]
      %s2529 = scalar_lea.vmem [#allocation2], 385
      %v2530 = vld [vmem:[%s2529] ss:$2 sm:$0xff]
      %s2531 = scalar_lea.vmem [#allocation2], 401
      %v2532 = vld [vmem:[%s2531] ss:$2 sm:$0xff]
      %s2533 = scalar_lea.vmem [#allocation2], 417
      %v2534 = vld [vmem:[%s2533] ss:$2 sm:$0xff]
      %s2535 = scalar_lea.vmem [#allocation2], 433
      %v2536 = vld [vmem:[%s2535] ss:$2 sm:$0xff]
      %s2537 = scalar_lea.vmem [#allocation2], 449
      %v2538 = vld [vmem:[%s2537] ss:$2 sm:$0xff]
      %s2539 = scalar_lea.vmem [#allocation2], 465
      %v2540 = vld [vmem:[%s2539] ss:$2 sm:$0xff]
      %s2541 = scalar_lea.vmem [#allocation2], 481
      %v2542 = vld [vmem:[%s2541] ss:$2 sm:$0xff]
      %s2543 = scalar_lea.vmem [#allocation2], 497
      %v2544 = vld [vmem:[%s2543] ss:$2 sm:$0xff]
      %s2545 = scalar_lea.vmem [#allocation2], 513
      %v2546 = vld [vmem:[%s2545] ss:$2 sm:$0xff]
      %s2547 = scalar_lea.vmem [#allocation2], 529
      %v2548 = vld [vmem:[%s2547] ss:$2 sm:$0xff]
      %s2549 = scalar_lea.vmem [#allocation2], 545
      %v2550 = vld [vmem:[%s2549] ss:$2 sm:$0xff]
      %s2551 = scalar_lea.vmem [#allocation2], 561
      %v2552 = vld [vmem:[%s2551] ss:$2 sm:$0xff]
      %s2553 = scalar_lea.vmem [#allocation2], 577
      %v2554 = vld [vmem:[%s2553] ss:$2 sm:$0xff]
      %s2555 = scalar_lea.vmem [#allocation2], 593
      %v2556 = vld [vmem:[%s2555] ss:$2 sm:$0xff]
      %s2557 = scalar_lea.vmem [#allocation2], 609
      %v2558 = vld [vmem:[%s2557] ss:$2 sm:$0xff]
      %s2559 = scalar_lea.vmem [#allocation2], 625
      %v2560 = vld [vmem:[%s2559] ss:$2 sm:$0x7f]
      %2601 = vrot.lane.b32.xlu0 %v2482, 32
      %v2602 = vpop.permute.xlu0 %2601
      %2603 = vrot.lane.b32.xlu0 %v2484, 32
      %v2604 = vpop.permute.xlu0 %2603
      %2605 = vrot.lane.b32.xlu0 %v2486, 32
      %v2606 = vpop.permute.xlu0 %2605
      %2607 = vrot.lane.b32.xlu0 %v2488, 32
      %v2608 = vpop.permute.xlu0 %2607
      %2609 = vrot.lane.b32.xlu0 %v2490, 32
      %v2610 = vpop.permute.xlu0 %2609
      %2611 = vrot.lane.b32.xlu0 %v2492, 32
      %v2612 = vpop.permute.xlu0 %2611
      %2613 = vrot.lane.b32.xlu0 %v2494, 32
      %v2614 = vpop.permute.xlu0 %2613
      %2615 = vrot.lane.b32.xlu0 %v2496, 32
      %v2616 = vpop.permute.xlu0 %2615
      %2617 = vrot.lane.b32.xlu0 %v2498, 32
      %v2618 = vpop.permute.xlu0 %2617
      %2619 = vrot.lane.b32.xlu0 %v2500, 32
      %v2620 = vpop.permute.xlu0 %2619
      %2621 = vrot.lane.b32.xlu0 %v2502, 32
      %v2622 = vpop.permute.xlu0 %2621
      %2623 = vrot.lane.b32.xlu0 %v2504, 32
      %v2624 = vpop.permute.xlu0 %2623
      %2625 = vrot.lane.b32.xlu0 %v2506, 32
      %v2626 = vpop.permute.xlu0 %2625
      %2627 = vrot.lane.b32.xlu0 %v2508, 32
      %v2628 = vpop.permute.xlu0 %2627
      %2629 = vrot.lane.b32.xlu0 %v2510, 32
      %v2630 = vpop.permute.xlu0 %2629
      %2631 = vrot.lane.b32.xlu0 %v2512, 32
      %v2632 = vpop.permute.xlu0 %2631
      %2633 = vrot.lane.b32.xlu0 %v2514, 32
      %v2634 = vpop.permute.xlu0 %2633
      %2635 = vrot.lane.b32.xlu0 %v2516, 32
      %v2636 = vpop.permute.xlu0 %2635
      %2637 = vrot.lane.b32.xlu0 %v2518, 32
      %v2638 = vpop.permute.xlu0 %2637
      %2639 = vrot.lane.b32.xlu0 %v2520, 32
      %v2640 = vpop.permute.xlu0 %2639
      %2641 = vrot.lane.b32.xlu0 %v2522, 32
      %v2642 = vpop.permute.xlu0 %2641
      %2643 = vrot.lane.b32.xlu0 %v2524, 32
      %v2644 = vpop.permute.xlu0 %2643
      %2645 = vrot.lane.b32.xlu0 %v2526, 32
      %v2646 = vpop.permute.xlu0 %2645
      %2647 = vrot.lane.b32.xlu0 %v2528, 32
      %v2648 = vpop.permute.xlu0 %2647
      %2649 = vrot.lane.b32.xlu0 %v2530, 32
      %v2650 = vpop.permute.xlu0 %2649
      %2651 = vrot.lane.b32.xlu0 %v2532, 32
      %v2652 = vpop.permute.xlu0 %2651
      %2653 = vrot.lane.b32.xlu0 %v2534, 32
      %v2654 = vpop.permute.xlu0 %2653
      %2655 = vrot.lane.b32.xlu0 %v2536, 32
      %v2656 = vpop.permute.xlu0 %2655
      %2657 = vrot.lane.b32.xlu0 %v2538, 32
      %v2658 = vpop.permute.xlu0 %2657
      %2659 = vrot.lane.b32.xlu0 %v2540, 32
      %v2660 = vpop.permute.xlu0 %2659
      %2661 = vrot.lane.b32.xlu0 %v2542, 32
      %v2662 = vpop.permute.xlu0 %2661
      %2663 = vrot.lane.b32.xlu0 %v2544, 32
      %v2664 = vpop.permute.xlu0 %2663
      %2665 = vrot.lane.b32.xlu0 %v2546, 32
      %v2666 = vpop.permute.xlu0 %2665
      %2667 = vrot.lane.b32.xlu0 %v2548, 32
      %v2668 = vpop.permute.xlu0 %2667
      %2669 = vrot.lane.b32.xlu0 %v2550, 32
      %v2670 = vpop.permute.xlu0 %2669
      %2671 = vrot.lane.b32.xlu0 %v2552, 32
      %v2672 = vpop.permute.xlu0 %2671
      %2673 = vrot.lane.b32.xlu0 %v2554, 32
      %v2674 = vpop.permute.xlu0 %2673
      %2675 = vrot.lane.b32.xlu0 %v2556, 32
      %v2676 = vpop.permute.xlu0 %2675
      %2677 = vrot.lane.b32.xlu0 %v2558, 32
      %v2678 = vpop.permute.xlu0 %2677
      %2679 = vrot.lane.b32.xlu0 %v2560, 32
      %v2680 = vpop.permute.xlu0 %2679
      %vm2761 = vcmask 1046528
      %v2762 = vrot.slane %v2402, 1
      %v2763 = vrot.slane %v2404, 1
      %v2764 = vsel %vm2761, %v2762, %v2763
      %v2765 = vrot.slane %v2406, 1
      %v2766 = vsel %vm2761, %v2763, %v2765
      %v2767 = vrot.slane %v2408, 1
      %v2768 = vsel %vm2761, %v2765, %v2767
      %v2769 = vrot.slane %v2410, 1
      %v2770 = vsel %vm2761, %v2767, %v2769
      %v2771 = vrot.slane %v2412, 1
      %v2772 = vsel %vm2761, %v2769, %v2771
      %v2773 = vrot.slane %v2414, 1
      %v2774 = vsel %vm2761, %v2771, %v2773
      %v2775 = vrot.slane %v2416, 1
      %v2776 = vsel %vm2761, %v2773, %v2775
      %v2777 = vrot.slane %v2418, 1
      %v2778 = vsel %vm2761, %v2775, %v2777
      %v2779 = vrot.slane %v2420, 1
      %v2780 = vsel %vm2761, %v2777, %v2779
      %v2781 = vrot.slane %v2422, 1
      %v2782 = vsel %vm2761, %v2779, %v2781
      %v2783 = vrot.slane %v2424, 1
      %v2784 = vsel %vm2761, %v2781, %v2783
      %v2785 = vrot.slane %v2426, 1
      %v2786 = vsel %vm2761, %v2783, %v2785
      %v2787 = vrot.slane %v2428, 1
      %v2788 = vsel %vm2761, %v2785, %v2787
      %v2789 = vrot.slane %v2430, 1
      %v2790 = vsel %vm2761, %v2787, %v2789
      %v2791 = vrot.slane %v2432, 1
      %v2792 = vsel %vm2761, %v2789, %v2791
      %v2793 = vrot.slane %v2434, 1
      %v2794 = vsel %vm2761, %v2791, %v2793
      %v2795 = vrot.slane %v2436, 1
      %v2796 = vsel %vm2761, %v2793, %v2795
      %v2797 = vrot.slane %v2438, 1
      %v2798 = vsel %vm2761, %v2795, %v2797
      %v2799 = vrot.slane %v2440, 1
      %v2800 = vsel %vm2761, %v2797, %v2799
      %v2801 = vrot.slane %v2442, 1
      %v2802 = vsel %vm2761, %v2799, %v2801
      %v2803 = vrot.slane %v2444, 1
      %v2804 = vsel %vm2761, %v2801, %v2803
      %v2805 = vrot.slane %v2446, 1
      %v2806 = vsel %vm2761, %v2803, %v2805
      %v2807 = vrot.slane %v2448, 1
      %v2808 = vsel %vm2761, %v2805, %v2807
      %v2809 = vrot.slane %v2450, 1
      %v2810 = vsel %vm2761, %v2807, %v2809
      %v2811 = vrot.slane %v2452, 1
      %v2812 = vsel %vm2761, %v2809, %v2811
      %v2813 = vrot.slane %v2454, 1
      %v2814 = vsel %vm2761, %v2811, %v2813
      %v2815 = vrot.slane %v2456, 1
      %v2816 = vsel %vm2761, %v2813, %v2815
      %v2817 = vrot.slane %v2458, 1
      %v2818 = vsel %vm2761, %v2815, %v2817
      %v2819 = vrot.slane %v2460, 1
      %v2820 = vsel %vm2761, %v2817, %v2819
      %v2821 = vrot.slane %v2462, 1
      %v2822 = vsel %vm2761, %v2819, %v2821
      %v2823 = vrot.slane %v2464, 1
      %v2824 = vsel %vm2761, %v2821, %v2823
      %v2825 = vrot.slane %v2466, 1
      %v2826 = vsel %vm2761, %v2823, %v2825
      %v2827 = vrot.slane %v2468, 1
      %v2828 = vsel %vm2761, %v2825, %v2827
      %v2829 = vrot.slane %v2470, 1
      %v2830 = vsel %vm2761, %v2827, %v2829
      %v2831 = vrot.slane %v2472, 1
      %v2832 = vsel %vm2761, %v2829, %v2831
      %v2833 = vrot.slane %v2474, 1
      %v2834 = vsel %vm2761, %v2831, %v2833
      %v2835 = vrot.slane %v2476, 1
      %v2836 = vsel %vm2761, %v2833, %v2835
      %v2837 = vrot.slane %v2478, 1
      %v2838 = vsel %vm2761, %v2835, %v2837
      %v2839 = vrot.slane %v2480, 1
      %v2840 = vsel %vm2761, %v2837, %v2839
      %2841 = vrot.lane.b32.xlu0 %v2764, 64
      %v2842 = vpop.permute.xlu0 %2841
      %2843 = vrot.lane.b32.xlu0 %v2766, 64
      %v2844 = vpop.permute.xlu0 %2843
      %2845 = vrot.lane.b32.xlu0 %v2768, 64
      %v2846 = vpop.permute.xlu0 %2845
      %2847 = vrot.lane.b32.xlu0 %v2770, 64
      %v2848 = vpop.permute.xlu0 %2847
      %2849 = vrot.lane.b32.xlu0 %v2772, 64
      %v2850 = vpop.permute.xlu0 %2849
      %2851 = vrot.lane.b32.xlu0 %v2774, 64
      %v2852 = vpop.permute.xlu0 %2851
      %2853 = vrot.lane.b32.xlu0 %v2776, 64
      %v2854 = vpop.permute.xlu0 %2853
      %2855 = vrot.lane.b32.xlu0 %v2778, 64
      %v2856 = vpop.permute.xlu0 %2855
      %2857 = vrot.lane.b32.xlu0 %v2780, 64
      %v2858 = vpop.permute.xlu0 %2857
      %2859 = vrot.lane.b32.xlu0 %v2782, 64
      %v2860 = vpop.permute.xlu0 %2859
      %2861 = vrot.lane.b32.xlu0 %v2784, 64
      %v2862 = vpop.permute.xlu0 %2861
      %2863 = vrot.lane.b32.xlu0 %v2786, 64
      %v2864 = vpop.permute.xlu0 %2863
      %2865 = vrot.lane.b32.xlu0 %v2788, 64
      %v2866 = vpop.permute.xlu0 %2865
      %2867 = vrot.lane.b32.xlu0 %v2790, 64
      %v2868 = vpop.permute.xlu0 %2867
      %2869 = vrot.lane.b32.xlu0 %v2792, 64
      %v2870 = vpop.permute.xlu0 %2869
      %2871 = vrot.lane.b32.xlu0 %v2794, 64
      %v2872 = vpop.permute.xlu0 %2871
      %2873 = vrot.lane.b32.xlu0 %v2796, 64
      %v2874 = vpop.permute.xlu0 %2873
      %2875 = vrot.lane.b32.xlu0 %v2798, 64
      %v2876 = vpop.permute.xlu0 %2875
      %2877 = vrot.lane.b32.xlu0 %v2800, 64
      %v2878 = vpop.permute.xlu0 %2877
      %2879 = vrot.lane.b32.xlu0 %v2802, 64
      %v2880 = vpop.permute.xlu0 %2879
      %2881 = vrot.lane.b32.xlu0 %v2804, 64
      %v2882 = vpop.permute.xlu0 %2881
      %2883 = vrot.lane.b32.xlu0 %v2806, 64
      %v2884 = vpop.permute.xlu0 %2883
      %2885 = vrot.lane.b32.xlu0 %v2808, 64
      %v2886 = vpop.permute.xlu0 %2885
      %2887 = vrot.lane.b32.xlu0 %v2810, 64
      %v2888 = vpop.permute.xlu0 %2887
      %2889 = vrot.lane.b32.xlu0 %v2812, 64
      %v2890 = vpop.permute.xlu0 %2889
      %2891 = vrot.lane.b32.xlu0 %v2814, 64
      %v2892 = vpop.permute.xlu0 %2891
      %2893 = vrot.lane.b32.xlu0 %v2816, 64
      %v2894 = vpop.permute.xlu0 %2893
      %2895 = vrot.lane.b32.xlu0 %v2818, 64
      %v2896 = vpop.permute.xlu0 %2895
      %2897 = vrot.lane.b32.xlu0 %v2820, 64
      %v2898 = vpop.permute.xlu0 %2897
      %2899 = vrot.lane.b32.xlu0 %v2822, 64
      %v2900 = vpop.permute.xlu0 %2899
      %2901 = vrot.lane.b32.xlu0 %v2824, 64
      %v2902 = vpop.permute.xlu0 %2901
      %2903 = vrot.lane.b32.xlu0 %v2826, 64
      %v2904 = vpop.permute.xlu0 %2903
      %2905 = vrot.lane.b32.xlu0 %v2828, 64
      %v2906 = vpop.permute.xlu0 %2905
      %2907 = vrot.lane.b32.xlu0 %v2830, 64
      %v2908 = vpop.permute.xlu0 %2907
      %2909 = vrot.lane.b32.xlu0 %v2832, 64
      %v2910 = vpop.permute.xlu0 %2909
      %2911 = vrot.lane.b32.xlu0 %v2834, 64
      %v2912 = vpop.permute.xlu0 %2911
      %2913 = vrot.lane.b32.xlu0 %v2836, 64
      %v2914 = vpop.permute.xlu0 %2913
      %2915 = vrot.lane.b32.xlu0 %v2838, 64
      %v2916 = vpop.permute.xlu0 %2915
      %2917 = vrot.lane.b32.xlu0 %v2840, 64
      %v2918 = vpop.permute.xlu0 %2917
      %2919 = vrot.lane.b32.xlu0 %v2839, 64
      %v2920 = vpop.permute.xlu0 %2919
      %v2961 = vsel %vm391, %v2402, %v2602
      %v2962 = vsel %vm391, %v2404, %v2604
      %v2963 = vsel %vm391, %v2406, %v2606
      %v2964 = vsel %vm391, %v2408, %v2608
      %v2965 = vsel %vm391, %v2410, %v2610
      %v2966 = vsel %vm391, %v2412, %v2612
      %v2967 = vsel %vm391, %v2414, %v2614
      %v2968 = vsel %vm391, %v2416, %v2616
      %v2969 = vsel %vm391, %v2418, %v2618
      %v2970 = vsel %vm391, %v2420, %v2620
      %v2971 = vsel %vm391, %v2422, %v2622
      %v2972 = vsel %vm391, %v2424, %v2624
      %v2973 = vsel %vm391, %v2426, %v2626
      %v2974 = vsel %vm391, %v2428, %v2628
      %v2975 = vsel %vm391, %v2430, %v2630
      %v2976 = vsel %vm391, %v2432, %v2632
      %v2977 = vsel %vm391, %v2434, %v2634
      %v2978 = vsel %vm391, %v2436, %v2636
      %v2979 = vsel %vm391, %v2438, %v2638
      %v2980 = vsel %vm391, %v2440, %v2640
      %v2981 = vsel %vm391, %v2442, %v2642
      %v2982 = vsel %vm391, %v2444, %v2644
      %v2983 = vsel %vm391, %v2446, %v2646
      %v2984 = vsel %vm391, %v2448, %v2648
      %v2985 = vsel %vm391, %v2450, %v2650
      %v2986 = vsel %vm391, %v2452, %v2652
      %v2987 = vsel %vm391, %v2454, %v2654
      %v2988 = vsel %vm391, %v2456, %v2656
      %v2989 = vsel %vm391, %v2458, %v2658
      %v2990 = vsel %vm391, %v2460, %v2660
      %v2991 = vsel %vm391, %v2462, %v2662
      %v2992 = vsel %vm391, %v2464, %v2664
      %v2993 = vsel %vm391, %v2466, %v2666
      %v2994 = vsel %vm391, %v2468, %v2668
      %v2995 = vsel %vm391, %v2470, %v2670
      %v2996 = vsel %vm391, %v2472, %v2672
      %v2997 = vsel %vm391, %v2474, %v2674
      %v2998 = vsel %vm391, %v2476, %v2676
      %v2999 = vsel %vm391, %v2478, %v2678
      %v3000 = vsel %vm391, %v2480, %v2680
      %vm3001 = vcmask 523264
      %v3002 = vsel %vm3001, %v2961, %v2842
      %v3003 = vsel %vm3001, %v2962, %v2844
      %v3004 = vsel %vm3001, %v2963, %v2846
      %v3005 = vsel %vm3001, %v2964, %v2848
      %v3006 = vsel %vm3001, %v2965, %v2850
      %v3007 = vsel %vm3001, %v2966, %v2852
      %v3008 = vsel %vm3001, %v2967, %v2854
      %v3009 = vsel %vm3001, %v2968, %v2856
      %v3010 = vsel %vm3001, %v2969, %v2858
      %v3011 = vsel %vm3001, %v2970, %v2860
      %v3012 = vsel %vm3001, %v2971, %v2862
      %v3013 = vsel %vm3001, %v2972, %v2864
      %v3014 = vsel %vm3001, %v2973, %v2866
      %v3015 = vsel %vm3001, %v2974, %v2868
      %v3016 = vsel %vm3001, %v2975, %v2870
      %v3017 = vsel %vm3001, %v2976, %v2872
      %v3018 = vsel %vm3001, %v2977, %v2874
      %v3019 = vsel %vm3001, %v2978, %v2876
      %v3020 = vsel %vm3001, %v2979, %v2878
      %v3021 = vsel %vm3001, %v2980, %v2880
      %v3022 = vsel %vm3001, %v2981, %v2882
      %v3023 = vsel %vm3001, %v2982, %v2884
      %v3024 = vsel %vm3001, %v2983, %v2886
      %v3025 = vsel %vm3001, %v2984, %v2888
      %v3026 = vsel %vm3001, %v2985, %v2890
      %v3027 = vsel %vm3001, %v2986, %v2892
      %v3028 = vsel %vm3001, %v2987, %v2894
      %v3029 = vsel %vm3001, %v2988, %v2896
      %v3030 = vsel %vm3001, %v2989, %v2898
      %v3031 = vsel %vm3001, %v2990, %v2900
      %v3032 = vsel %vm3001, %v2991, %v2902
      %v3033 = vsel %vm3001, %v2992, %v2904
      %v3034 = vsel %vm3001, %v2993, %v2906
      %v3035 = vsel %vm3001, %v2994, %v2908
      %v3036 = vsel %vm3001, %v2995, %v2910
      %v3037 = vsel %vm3001, %v2996, %v2912
      %v3038 = vsel %vm3001, %v2997, %v2914
      %v3039 = vsel %vm3001, %v2998, %v2916
      %v3040 = vsel %vm3001, %v2999, %v2918
      %v3041 = vsel %vm3001, %v3000, %v2920
      %v3042 = vpack.c.bf16 %v3003, %v3002
      %v3043 = vpack.c.bf16 %v3005, %v3004
      %v3044 = vpack.c.bf16 %v3007, %v3006
      %v3045 = vpack.c.bf16 %v3009, %v3008
      %v3046 = vpack.c.bf16 %v3011, %v3010
      %v3047 = vpack.c.bf16 %v3013, %v3012
      %v3048 = vpack.c.bf16 %v3015, %v3014
      %v3049 = vpack.c.bf16 %v3017, %v3016
      %v3050 = vpack.c.bf16 %v3019, %v3018
      %v3051 = vpack.c.bf16 %v3021, %v3020
      %v3052 = vpack.c.bf16 %v3023, %v3022
      %v3053 = vpack.c.bf16 %v3025, %v3024
      %v3054 = vpack.c.bf16 %v3027, %v3026
      %v3055 = vpack.c.bf16 %v3029, %v3028
      %v3056 = vpack.c.bf16 %v3031, %v3030
      %v3057 = vpack.c.bf16 %v3033, %v3032
      %v3058 = vpack.c.bf16 %v3035, %v3034
      %v3059 = vpack.c.bf16 %v3037, %v3036
      %v3060 = vpack.c.bf16 %v3039, %v3038
      %v3061 = vpack.c.bf16 %v3041, %v3040
      %v3062 = vld [vmem:[%s1] sm:$0xf]
      %v3063 = vld [vmem:[%s1 + $0x4] sm:$0xf]
      %v3064 = vld [vmem:[%s1 + $0x8] sm:$0xf]
      %v3065 = vld [vmem:[%s1 + $0xc] sm:$0xf]
      %v3066 = vld [vmem:[%s1 + $0x10] sm:$0xf]
      %v3067 = vld [vmem:[%s1 + $0x14] sm:$0xf]
      %v3068 = vld [vmem:[%s1 + $0x18] sm:$0xf]
      %v3069 = vld [vmem:[%s1 + $0x1c] sm:$0xf]
      %v3070 = vld [vmem:[%s1 + $0x20] sm:$0xf]
      %v3071 = vld [vmem:[%s1 + $0x24] sm:$0xf]
      %v3072 = vld [vmem:[%s1 + $0x28] sm:$0xf]
      %v3073 = vld [vmem:[%s1 + $0x2c] sm:$0xf]
      %s3074 = scalar_lea.vmem %s2, 8
      %v3075 = vld [vmem:[%s3074] sm:$0xff]
      %v3076 = vlaneseq
      %v3077 = vshrl.u32 %v3076, 7
      %v3078 = vsub.s32 0, %v3077
      %v3079 = vrot.slane %v3075, %v3078
      %v3092 = vunpack.c.l.b16 %v3062
      %v3093 = vunpack.c.l.b16 %v3063
      %v3094 = vunpack.c.l.b16 %v3064
      %v3095 = vunpack.c.l.b16 %v3065
      %v3096 = vunpack.c.l.b16 %v3066
      %v3097 = vunpack.c.l.b16 %v3067
      %v3098 = vunpack.c.l.b16 %v3068
      %v3099 = vunpack.c.l.b16 %v3069
      %v3100 = vunpack.c.l.b16 %v3070
      %v3101 = vunpack.c.l.b16 %v3071
      %v3102 = vunpack.c.l.b16 %v3072
      %v3103 = vunpack.c.l.b16 %v3073
      %v3104 = vpack.c.b16 %v3093, %v3092
      %v3105 = vpack.c.b16 %v3095, %v3094
      %v3106 = vpack.c.b16 %v3097, %v3096
      %v3107 = vpack.c.b16 %v3099, %v3098
      %v3108 = vpack.c.b16 %v3101, %v3100
      %v3109 = vpack.c.b16 %v3103, %v3102
      %vm3116 = vcmask 785408
      %v3118 = vsel %vm3116, %v3042, 0
      %v3121 = vsel %vm3116, %v3043, 0
      %v3124 = vsel %vm3116, %v3044, 0
      %v3127 = vsel %vm3116, %v3045, 0
      %v3130 = vsel %vm3116, %v3046, 0
      %v3133 = vsel %vm3116, %v3047, 0
      %v3136 = vsel %vm3116, %v3048, 0
      %v3139 = vsel %vm3116, %v3049, 0
      %v3142 = vsel %vm3116, %v3050, 0
      %v3145 = vsel %vm3116, %v3051, 0
      %v3148 = vsel %vm3116, %v3052, 0
      %v3151 = vsel %vm3116, %v3053, 0
      %v3154 = vsel %vm3116, %v3054, 0
      %v3157 = vsel %vm3116, %v3055, 0
      %v3160 = vsel %vm3116, %v3056, 0
      %v3163 = vsel %vm3116, %v3057, 0
      %v3166 = vsel %vm3116, %v3058, 0
      %v3169 = vsel %vm3116, %v3059, 0
      %v3172 = vsel %vm3116, %v3060, 0
      %v3175 = vsel %vm3116, %v3061, 0
      %3177 = vmatprep.subr.bf16.mxu0 0
      %3178 = vmatpush1.bf16.msra.mxu0 0
      %3179 = vmatprep.subr.bf16.mxu0 0
      %3180 = vmatpush1.bf16.msra.mxu0 0
      %3181 = vmatprep.subr.bf16.mxu0 0
      %3182 = vmatpush1.bf16.msra.mxu0 %v3109
      %3183 = vmatprep.subr.bf16.mxu0 0
      %3184 = vmatpush1.bf16.msra.mxu0 %v3108
      %3185 = vmatprep.subr.bf16.mxu0 0
      %3186 = vmatpush1.bf16.msra.mxu0 %v3107
      %3187 = vmatprep.subr.bf16.mxu0 0
      %3188 = vmatpush1.bf16.msra.mxu0 %v3106
      %3189 = vmatprep.subr.bf16.mxu0 0
      %3190 = vmatpush1.bf16.msra.mxu0 %v3105
      %3191 = vmatprep.subr.bf16.mxu0 0
      %3192 = vmatpush1.bf16.msra.mxu0 %v3104
      %3193 = vmatprep.subr.bf16.mxu0 0
      %3194 = vmatpush2.bf16.msra.mxu0 0
      %3195 = vmatprep.subr.bf16.mxu0 0
      %3196 = vmatpush2.bf16.msra.mxu0 0
      %3197 = vmatprep.subr.bf16.mxu0 0
      %3198 = vmatpush2.bf16.msra.mxu0 0
      %3199 = vmatprep.subr.bf16.mxu0 0
      %3200 = vmatpush2.bf16.msra.mxu0 0
      %3201 = vmatprep.subr.bf16.mxu0 0
      %3202 = vmatpush2.bf16.msra.mxu0 0
      %3203 = vmatprep.subr.bf16.mxu0 0
      %3204 = vmatpush2.bf16.msra.mxu0 0
      %3205 = vmatprep.subr.bf16.mxu0 0
      %3206 = vmatpush2.bf16.msra.mxu0 0
      %3207 = vmatprep.subr.bf16.mxu0 0
      %3208 = vmatpush2.bf16.msra.mxu0 0
      %3209 = vmatprep.mubr.bf16.mxu0 0
      %3210 = vmatmul.mubr.bf16.gmra.mxu0 %v3118
      %v3211 = vpop.f32.mrf.mxu0
      %v3212 = vadd.f32 %v3079, %v3211
      %v3213 = vpop.f32.mrf.mxu0
      %v3214 = vpop.f32.mrf.mxu0
      %v3215 = vadd.f32 %v3079, %v3214
      %v3216 = vpop.f32.mrf.mxu0
      %3217 = vmatprep.mubr.bf16.mxu0 0
      %3218 = vmatmul.mubr.bf16.gmra.mxu0 %v3121
      %v3219 = vpop.f32.mrf.mxu0
      %v3220 = vadd.f32 %v3079, %v3219
      %v3221 = vpop.f32.mrf.mxu0
      %v3222 = vpop.f32.mrf.mxu0
      %v3223 = vadd.f32 %v3079, %v3222
      %v3224 = vpop.f32.mrf.mxu0
      %3225 = vmatprep.mubr.bf16.mxu0 0
      %3226 = vmatmul.mubr.bf16.gmra.mxu0 %v3124
      %v3227 = vpop.f32.mrf.mxu0
      %v3228 = vadd.f32 %v3079, %v3227
      %v3229 = vpop.f32.mrf.mxu0
      %v3230 = vpop.f32.mrf.mxu0
      %v3231 = vadd.f32 %v3079, %v3230
      %v3232 = vpop.f32.mrf.mxu0
      %3233 = vmatprep.mubr.bf16.mxu0 0
      %3234 = vmatmul.mubr.bf16.gmra.mxu0 %v3127
      %v3235 = vpop.f32.mrf.mxu0
      %v3236 = vadd.f32 %v3079, %v3235
      %v3237 = vpop.f32.mrf.mxu0
      %v3238 = vpop.f32.mrf.mxu0
      %v3239 = vadd.f32 %v3079, %v3238
      %v3240 = vpop.f32.mrf.mxu0
      %3241 = vmatprep.mubr.bf16.mxu0 0
      %3242 = vmatmul.mubr.bf16.gmra.mxu0 %v3130
      %v3243 = vpop.f32.mrf.mxu0
      %v3244 = vadd.f32 %v3079, %v3243
      %v3245 = vpop.f32.mrf.mxu0
      %v3246 = vpop.f32.mrf.mxu0
      %v3247 = vadd.f32 %v3079, %v3246
      %v3248 = vpop.f32.mrf.mxu0
      %3249 = vmatprep.mubr.bf16.mxu0 0
      %3250 = vmatmul.mubr.bf16.gmra.mxu0 %v3133
      %v3251 = vpop.f32.mrf.mxu0
      %v3252 = vadd.f32 %v3079, %v3251
      %v3253 = vpop.f32.mrf.mxu0
      %v3254 = vpop.f32.mrf.mxu0
      %v3255 = vadd.f32 %v3079, %v3254
      %v3256 = vpop.f32.mrf.mxu0
      %3257 = vmatprep.mubr.bf16.mxu0 0
      %3258 = vmatmul.mubr.bf16.gmra.mxu0 %v3136
      %v3259 = vpop.f32.mrf.mxu0
      %v3260 = vadd.f32 %v3079, %v3259
      %v3261 = vpop.f32.mrf.mxu0
      %v3262 = vpop.f32.mrf.mxu0
      %v3263 = vadd.f32 %v3079, %v3262
      %v3264 = vpop.f32.mrf.mxu0
      %3265 = vmatprep.mubr.bf16.mxu0 0
      %3266 = vmatmul.mubr.bf16.gmra.mxu0 %v3139
      %v3267 = vpop.f32.mrf.mxu0
      %v3268 = vadd.f32 %v3079, %v3267
      %v3269 = vpop.f32.mrf.mxu0
      %v3270 = vpop.f32.mrf.mxu0
      %v3271 = vadd.f32 %v3079, %v3270
      %v3272 = vpop.f32.mrf.mxu0
      %3273 = vmatprep.mubr.bf16.mxu0 0
      %3274 = vmatmul.mubr.bf16.gmra.mxu0 %v3142
      %v3275 = vpop.f32.mrf.mxu0
      %v3276 = vadd.f32 %v3079, %v3275
      %v3277 = vpop.f32.mrf.mxu0
      %v3278 = vpop.f32.mrf.mxu0
      %v3279 = vadd.f32 %v3079, %v3278
      %v3280 = vpop.f32.mrf.mxu0
      %3281 = vmatprep.mubr.bf16.mxu0 0
      %3282 = vmatmul.mubr.bf16.gmra.mxu0 %v3145
      %v3283 = vpop.f32.mrf.mxu0
      %v3284 = vadd.f32 %v3079, %v3283
      %v3285 = vpop.f32.mrf.mxu0
      %v3286 = vpop.f32.mrf.mxu0
      %v3287 = vadd.f32 %v3079, %v3286
      %v3288 = vpop.f32.mrf.mxu0
      %3289 = vmatprep.mubr.bf16.mxu0 0
      %3290 = vmatmul.mubr.bf16.gmra.mxu0 %v3148
      %v3291 = vpop.f32.mrf.mxu0
      %v3292 = vadd.f32 %v3079, %v3291
      %v3293 = vpop.f32.mrf.mxu0
      %v3294 = vpop.f32.mrf.mxu0
      %v3295 = vadd.f32 %v3079, %v3294
      %v3296 = vpop.f32.mrf.mxu0
      %3297 = vmatprep.mubr.bf16.mxu0 0
      %3298 = vmatmul.mubr.bf16.gmra.mxu0 %v3151
      %v3299 = vpop.f32.mrf.mxu0
      %v3300 = vadd.f32 %v3079, %v3299
      %v3301 = vpop.f32.mrf.mxu0
      %v3302 = vpop.f32.mrf.mxu0
      %v3303 = vadd.f32 %v3079, %v3302
      %v3304 = vpop.f32.mrf.mxu0
      %3305 = vmatprep.mubr.bf16.mxu0 0
      %3306 = vmatmul.mubr.bf16.gmra.mxu0 %v3154
      %v3307 = vpop.f32.mrf.mxu0
      %v3308 = vadd.f32 %v3079, %v3307
      %v3309 = vpop.f32.mrf.mxu0
      %v3310 = vpop.f32.mrf.mxu0
      %v3311 = vadd.f32 %v3079, %v3310
      %v3312 = vpop.f32.mrf.mxu0
      %3313 = vmatprep.mubr.bf16.mxu0 0
      %3314 = vmatmul.mubr.bf16.gmra.mxu0 %v3157
      %v3315 = vpop.f32.mrf.mxu0
      %v3316 = vadd.f32 %v3079, %v3315
      %v3317 = vpop.f32.mrf.mxu0
      %v3318 = vpop.f32.mrf.mxu0
      %v3319 = vadd.f32 %v3079, %v3318
      %v3320 = vpop.f32.mrf.mxu0
      %3321 = vmatprep.mubr.bf16.mxu0 0
      %3322 = vmatmul.mubr.bf16.gmra.mxu0 %v3160
      %v3323 = vpop.f32.mrf.mxu0
      %v3324 = vadd.f32 %v3079, %v3323
      %v3325 = vpop.f32.mrf.mxu0
      %v3326 = vpop.f32.mrf.mxu0
      %v3327 = vadd.f32 %v3079, %v3326
      %v3328 = vpop.f32.mrf.mxu0
      %3329 = vmatprep.mubr.bf16.mxu0 0
      %3330 = vmatmul.mubr.bf16.gmra.mxu0 %v3163
      %v3331 = vpop.f32.mrf.mxu0
      %v3332 = vadd.f32 %v3079, %v3331
      %v3333 = vpop.f32.mrf.mxu0
      %v3334 = vpop.f32.mrf.mxu0
      %v3335 = vadd.f32 %v3079, %v3334
      %v3336 = vpop.f32.mrf.mxu0
      %3337 = vmatprep.mubr.bf16.mxu0 0
      %3338 = vmatmul.mubr.bf16.gmra.mxu0 %v3166
      %v3339 = vpop.f32.mrf.mxu0
      %v3340 = vadd.f32 %v3079, %v3339
      %v3341 = vpop.f32.mrf.mxu0
      %v3342 = vpop.f32.mrf.mxu0
      %v3343 = vadd.f32 %v3079, %v3342
      %v3344 = vpop.f32.mrf.mxu0
      %3345 = vmatprep.mubr.bf16.mxu0 0
      %3346 = vmatmul.mubr.bf16.gmra.mxu0 %v3169
      %v3347 = vpop.f32.mrf.mxu0
      %v3348 = vadd.f32 %v3079, %v3347
      %v3349 = vpop.f32.mrf.mxu0
      %v3350 = vpop.f32.mrf.mxu0
      %v3351 = vadd.f32 %v3079, %v3350
      %v3352 = vpop.f32.mrf.mxu0
      %3353 = vmatprep.mubr.bf16.mxu0 0
      %3354 = vmatmul.mubr.bf16.gmra.mxu0 %v3172
      %v3355 = vpop.f32.mrf.mxu0
      %v3356 = vadd.f32 %v3079, %v3355
      %v3357 = vpop.f32.mrf.mxu0
      %v3358 = vpop.f32.mrf.mxu0
      %v3359 = vadd.f32 %v3079, %v3358
      %v3360 = vpop.f32.mrf.mxu0
      %3361 = vmatprep.mubr.bf16.mxu0 0
      %3362 = vmatmul.mubr.bf16.gmra.mxu0 %v3175
      %v3363 = vpop.f32.mrf.mxu0
      %v3364 = vadd.f32 %v3079, %v3363
      %v3365 = vpop.f32.mrf.mxu0
      %v3366 = vpop.f32.mrf.mxu0
      %v3367 = vadd.f32 %v3079, %v3366
      %v3368 = vpop.f32.mrf.mxu0
      %3369 = vdwg.mxu0
      %v3370 = vsel %vm391, %v3212, 0.0
      %3371 = vadd.xlane.f32.xlu0 %v3370
      %v3372 = vpop.xlane.xlu0 %3371
      %v3373 = vsel %vm391, %v3215, 0.0
      %3374 = vadd.xlane.f32.xlu0 %v3373
      %v3375 = vpop.xlane.xlu0 %3374
      %v3376 = vsel %vm391, %v3220, 0.0
      %3377 = vadd.xlane.f32.xlu0 %v3376
      %v3378 = vpop.xlane.xlu0 %3377
      %v3379 = vsel %vm391, %v3223, 0.0
      %3380 = vadd.xlane.f32.xlu0 %v3379
      %v3381 = vpop.xlane.xlu0 %3380
      %v3382 = vsel %vm391, %v3228, 0.0
      %3383 = vadd.xlane.f32.xlu0 %v3382
      %v3384 = vpop.xlane.xlu0 %3383
      %v3385 = vsel %vm391, %v3231, 0.0
      %3386 = vadd.xlane.f32.xlu0 %v3385
      %v3387 = vpop.xlane.xlu0 %3386
      %v3388 = vsel %vm391, %v3236, 0.0
      %3389 = vadd.xlane.f32.xlu0 %v3388
      %v3390 = vpop.xlane.xlu0 %3389
      %v3391 = vsel %vm391, %v3239, 0.0
      %3392 = vadd.xlane.f32.xlu0 %v3391
      %v3393 = vpop.xlane.xlu0 %3392
      %v3394 = vsel %vm391, %v3244, 0.0
      %3395 = vadd.xlane.f32.xlu0 %v3394
      %v3396 = vpop.xlane.xlu0 %3395
      %v3397 = vsel %vm391, %v3247, 0.0
      %3398 = vadd.xlane.f32.xlu0 %v3397
      %v3399 = vpop.xlane.xlu0 %3398
      %v3400 = vsel %vm391, %v3252, 0.0
      %3401 = vadd.xlane.f32.xlu0 %v3400
      %v3402 = vpop.xlane.xlu0 %3401
      %v3403 = vsel %vm391, %v3255, 0.0
      %3404 = vadd.xlane.f32.xlu0 %v3403
      %v3405 = vpop.xlane.xlu0 %3404
      %v3406 = vsel %vm391, %v3260, 0.0
      %3407 = vadd.xlane.f32.xlu0 %v3406
      %v3408 = vpop.xlane.xlu0 %3407
      %v3409 = vsel %vm391, %v3263, 0.0
      %3410 = vadd.xlane.f32.xlu0 %v3409
      %v3411 = vpop.xlane.xlu0 %3410
      %v3412 = vsel %vm391, %v3268, 0.0
      %3413 = vadd.xlane.f32.xlu0 %v3412
      %v3414 = vpop.xlane.xlu0 %3413
      %v3415 = vsel %vm391, %v3271, 0.0
      %3416 = vadd.xlane.f32.xlu0 %v3415
      %v3417 = vpop.xlane.xlu0 %3416
      %v3418 = vsel %vm391, %v3276, 0.0
      %3419 = vadd.xlane.f32.xlu0 %v3418
      %v3420 = vpop.xlane.xlu0 %3419
      %v3421 = vsel %vm391, %v3279, 0.0
      %3422 = vadd.xlane.f32.xlu0 %v3421
      %v3423 = vpop.xlane.xlu0 %3422
      %v3424 = vsel %vm391, %v3284, 0.0
      %3425 = vadd.xlane.f32.xlu0 %v3424
      %v3426 = vpop.xlane.xlu0 %3425
      %v3427 = vsel %vm391, %v3287, 0.0
      %3428 = vadd.xlane.f32.xlu0 %v3427
      %v3429 = vpop.xlane.xlu0 %3428
      %v3430 = vsel %vm391, %v3292, 0.0
      %3431 = vadd.xlane.f32.xlu0 %v3430
      %v3432 = vpop.xlane.xlu0 %3431
      %v3433 = vsel %vm391, %v3295, 0.0
      %3434 = vadd.xlane.f32.xlu0 %v3433
      %v3435 = vpop.xlane.xlu0 %3434
      %v3436 = vsel %vm391, %v3300, 0.0
      %3437 = vadd.xlane.f32.xlu0 %v3436
      %v3438 = vpop.xlane.xlu0 %3437
      %v3439 = vsel %vm391, %v3303, 0.0
      %3440 = vadd.xlane.f32.xlu0 %v3439
      %v3441 = vpop.xlane.xlu0 %3440
      %v3442 = vsel %vm391, %v3308, 0.0
      %3443 = vadd.xlane.f32.xlu0 %v3442
      %v3444 = vpop.xlane.xlu0 %3443
      %v3445 = vsel %vm391, %v3311, 0.0
      %3446 = vadd.xlane.f32.xlu0 %v3445
      %v3447 = vpop.xlane.xlu0 %3446
      %v3448 = vsel %vm391, %v3316, 0.0
      %3449 = vadd.xlane.f32.xlu0 %v3448
      %v3450 = vpop.xlane.xlu0 %3449
      %v3451 = vsel %vm391, %v3319, 0.0
      %3452 = vadd.xlane.f32.xlu0 %v3451
      %v3453 = vpop.xlane.xlu0 %3452
      %v3454 = vsel %vm391, %v3324, 0.0
      %3455 = vadd.xlane.f32.xlu0 %v3454
      %v3456 = vpop.xlane.xlu0 %3455
      %v3457 = vsel %vm391, %v3327, 0.0
      %3458 = vadd.xlane.f32.xlu0 %v3457
      %v3459 = vpop.xlane.xlu0 %3458
      %v3460 = vsel %vm391, %v3332, 0.0
      %3461 = vadd.xlane.f32.xlu0 %v3460
      %v3462 = vpop.xlane.xlu0 %3461
      %v3463 = vsel %vm391, %v3335, 0.0
      %3464 = vadd.xlane.f32.xlu0 %v3463
      %v3465 = vpop.xlane.xlu0 %3464
      %v3466 = vsel %vm391, %v3340, 0.0
      %3467 = vadd.xlane.f32.xlu0 %v3466
      %v3468 = vpop.xlane.xlu0 %3467
      %v3469 = vsel %vm391, %v3343, 0.0
      %3470 = vadd.xlane.f32.xlu0 %v3469
      %v3471 = vpop.xlane.xlu0 %3470
      %v3472 = vsel %vm391, %v3348, 0.0
      %3473 = vadd.xlane.f32.xlu0 %v3472
      %v3474 = vpop.xlane.xlu0 %3473
      %v3475 = vsel %vm391, %v3351, 0.0
      %3476 = vadd.xlane.f32.xlu0 %v3475
      %v3477 = vpop.xlane.xlu0 %3476
      %v3478 = vsel %vm391, %v3356, 0.0
      %3479 = vadd.xlane.f32.xlu0 %v3478
      %v3480 = vpop.xlane.xlu0 %3479
      %v3481 = vsel %vm391, %v3359, 0.0
      %3482 = vadd.xlane.f32.xlu0 %v3481
      %v3483 = vpop.xlane.xlu0 %3482
      %v3484 = vsel %vm391, %v3364, 0.0
      %3485 = vadd.xlane.f32.xlu0 %v3484
      %v3486 = vpop.xlane.xlu0 %3485
      %v3487 = vsel %vm629, %v3367, 0.0
      %3488 = vadd.xlane.f32.xlu0 %v3487
      %v3489 = vpop.xlane.xlu0 %3488
      %v3490 = vmul.f32 %v3372, %v633
      %v3491 = vmul.f32 %v3375, %v633
      %v3492 = vmul.f32 %v3378, %v633
      %v3493 = vmul.f32 %v3381, %v633
      %v3494 = vmul.f32 %v3384, %v633
      %v3495 = vmul.f32 %v3387, %v633
      %v3496 = vmul.f32 %v3390, %v633
      %v3497 = vmul.f32 %v3393, %v633
      %v3498 = vmul.f32 %v3396, %v633
      %v3499 = vmul.f32 %v3399, %v633
      %v3500 = vmul.f32 %v3402, %v633
      %v3501 = vmul.f32 %v3405, %v633
      %v3502 = vmul.f32 %v3408, %v633
      %v3503 = vmul.f32 %v3411, %v633
      %v3504 = vmul.f32 %v3414, %v633
      %v3505 = vmul.f32 %v3417, %v633
      %v3506 = vmul.f32 %v3420, %v633
      %v3507 = vmul.f32 %v3423, %v633
      %v3508 = vmul.f32 %v3426, %v633
      %v3509 = vmul.f32 %v3429, %v633
      %v3510 = vmul.f32 %v3432, %v633
      %v3511 = vmul.f32 %v3435, %v633
      %v3512 = vmul.f32 %v3438, %v633
      %v3513 = vmul.f32 %v3441, %v633
      %v3514 = vmul.f32 %v3444, %v633
      %v3515 = vmul.f32 %v3447, %v633
      %v3516 = vmul.f32 %v3450, %v633
      %v3517 = vmul.f32 %v3453, %v633
      %v3518 = vmul.f32 %v3456, %v633
      %v3519 = vmul.f32 %v3459, %v633
      %v3520 = vmul.f32 %v3462, %v633
      %v3521 = vmul.f32 %v3465, %v633
      %v3522 = vmul.f32 %v3468, %v633
      %v3523 = vmul.f32 %v3471, %v633
      %v3524 = vmul.f32 %v3474, %v633
      %v3525 = vmul.f32 %v3477, %v633
      %v3526 = vmul.f32 %v3480, %v633
      %v3527 = vmul.f32 %v3483, %v633
      %v3528 = vmul.f32 %v3486, %v633
      %v3529 = vmul.f32 %v3489, %v633
      %v3530 = vsub.f32 %v3212, %v3490
      %v3531 = vsub.f32 %v3215, %v3491
      %v3532 = vsub.f32 %v3220, %v3492
      %v3533 = vsub.f32 %v3223, %v3493
      %v3534 = vsub.f32 %v3228, %v3494
      %v3535 = vsub.f32 %v3231, %v3495
      %v3536 = vsub.f32 %v3236, %v3496
      %v3537 = vsub.f32 %v3239, %v3497
      %v3538 = vsub.f32 %v3244, %v3498
      %v3539 = vsub.f32 %v3247, %v3499
      %v3540 = vsub.f32 %v3252, %v3500
      %v3541 = vsub.f32 %v3255, %v3501
      %v3542 = vsub.f32 %v3260, %v3502
      %v3543 = vsub.f32 %v3263, %v3503
      %v3544 = vsub.f32 %v3268, %v3504
      %v3545 = vsub.f32 %v3271, %v3505
      %v3546 = vsub.f32 %v3276, %v3506
      %v3547 = vsub.f32 %v3279, %v3507
      %v3548 = vsub.f32 %v3284, %v3508
      %v3549 = vsub.f32 %v3287, %v3509
      %v3550 = vsub.f32 %v3292, %v3510
      %v3551 = vsub.f32 %v3295, %v3511
      %v3552 = vsub.f32 %v3300, %v3512
      %v3553 = vsub.f32 %v3303, %v3513
      %v3554 = vsub.f32 %v3308, %v3514
      %v3555 = vsub.f32 %v3311, %v3515
      %v3556 = vsub.f32 %v3316, %v3516
      %v3557 = vsub.f32 %v3319, %v3517
      %v3558 = vsub.f32 %v3324, %v3518
      %v3559 = vsub.f32 %v3327, %v3519
      %v3560 = vsub.f32 %v3332, %v3520
      %v3561 = vsub.f32 %v3335, %v3521
      %v3562 = vsub.f32 %v3340, %v3522
      %v3563 = vsub.f32 %v3343, %v3523
      %v3564 = vsub.f32 %v3348, %v3524
      %v3565 = vsub.f32 %v3351, %v3525
      %v3566 = vsub.f32 %v3356, %v3526
      %v3567 = vsub.f32 %v3359, %v3527
      %v3568 = vsub.f32 %v3364, %v3528
      %v3569 = vsub.f32 %v3367, %v3529
      %v3570 = vmul.f32 %v3530, %v3530
      %v3571 = vmul.f32 %v3531, %v3531
      %v3572 = vmul.f32 %v3532, %v3532
      %v3573 = vmul.f32 %v3533, %v3533
      %v3574 = vmul.f32 %v3534, %v3534
      %v3575 = vmul.f32 %v3535, %v3535
      %v3576 = vmul.f32 %v3536, %v3536
      %v3577 = vmul.f32 %v3537, %v3537
      %v3578 = vmul.f32 %v3538, %v3538
      %v3579 = vmul.f32 %v3539, %v3539
      %v3580 = vmul.f32 %v3540, %v3540
      %v3581 = vmul.f32 %v3541, %v3541
      %v3582 = vmul.f32 %v3542, %v3542
      %v3583 = vmul.f32 %v3543, %v3543
      %v3584 = vmul.f32 %v3544, %v3544
      %v3585 = vmul.f32 %v3545, %v3545
      %v3586 = vmul.f32 %v3546, %v3546
      %v3587 = vmul.f32 %v3547, %v3547
      %v3588 = vmul.f32 %v3548, %v3548
      %v3589 = vmul.f32 %v3549, %v3549
      %v3590 = vmul.f32 %v3550, %v3550
      %v3591 = vmul.f32 %v3551, %v3551
      %v3592 = vmul.f32 %v3552, %v3552
      %v3593 = vmul.f32 %v3553, %v3553
      %v3594 = vmul.f32 %v3554, %v3554
      %v3595 = vmul.f32 %v3555, %v3555
      %v3596 = vmul.f32 %v3556, %v3556
      %v3597 = vmul.f32 %v3557, %v3557
      %v3598 = vmul.f32 %v3558, %v3558
      %v3599 = vmul.f32 %v3559, %v3559
      %v3600 = vmul.f32 %v3560, %v3560
      %v3601 = vmul.f32 %v3561, %v3561
      %v3602 = vmul.f32 %v3562, %v3562
      %v3603 = vmul.f32 %v3563, %v3563
      %v3604 = vmul.f32 %v3564, %v3564
      %v3605 = vmul.f32 %v3565, %v3565
      %v3606 = vmul.f32 %v3566, %v3566
      %v3607 = vmul.f32 %v3567, %v3567
      %v3608 = vmul.f32 %v3568, %v3568
      %v3609 = vmul.f32 %v3569, %v3569
      %v3610 = vsel %vm391, %v3570, 0.0
      %3611 = vadd.xlane.f32.xlu0 %v3610
      %v3612 = vpop.xlane.xlu0 %3611
      %v3613 = vsel %vm391, %v3571, 0.0
      %3614 = vadd.xlane.f32.xlu0 %v3613
      %v3615 = vpop.xlane.xlu0 %3614
      %v3616 = vsel %vm391, %v3572, 0.0
      %3617 = vadd.xlane.f32.xlu0 %v3616
      %v3618 = vpop.xlane.xlu0 %3617
      %v3619 = vsel %vm391, %v3573, 0.0
      %3620 = vadd.xlane.f32.xlu0 %v3619
      %v3621 = vpop.xlane.xlu0 %3620
      %v3622 = vsel %vm391, %v3574, 0.0
      %3623 = vadd.xlane.f32.xlu0 %v3622
      %v3624 = vpop.xlane.xlu0 %3623
      %v3625 = vsel %vm391, %v3575, 0.0
      %3626 = vadd.xlane.f32.xlu0 %v3625
      %v3627 = vpop.xlane.xlu0 %3626
      %v3628 = vsel %vm391, %v3576, 0.0
      %3629 = vadd.xlane.f32.xlu0 %v3628
      %v3630 = vpop.xlane.xlu0 %3629
      %v3631 = vsel %vm391, %v3577, 0.0
      %3632 = vadd.xlane.f32.xlu0 %v3631
      %v3633 = vpop.xlane.xlu0 %3632
      %v3634 = vsel %vm391, %v3578, 0.0
      %3635 = vadd.xlane.f32.xlu0 %v3634
      %v3636 = vpop.xlane.xlu0 %3635
      %v3637 = vsel %vm391, %v3579, 0.0
      %3638 = vadd.xlane.f32.xlu0 %v3637
      %v3639 = vpop.xlane.xlu0 %3638
      %v3640 = vsel %vm391, %v3580, 0.0
      %3641 = vadd.xlane.f32.xlu0 %v3640
      %v3642 = vpop.xlane.xlu0 %3641
      %v3643 = vsel %vm391, %v3581, 0.0
      %3644 = vadd.xlane.f32.xlu0 %v3643
      %v3645 = vpop.xlane.xlu0 %3644
      %v3646 = vsel %vm391, %v3582, 0.0
      %3647 = vadd.xlane.f32.xlu0 %v3646
      %v3648 = vpop.xlane.xlu0 %3647
      %v3649 = vsel %vm391, %v3583, 0.0
      %3650 = vadd.xlane.f32.xlu0 %v3649
      %v3651 = vpop.xlane.xlu0 %3650
      %v3652 = vsel %vm391, %v3584, 0.0
      %3653 = vadd.xlane.f32.xlu0 %v3652
      %v3654 = vpop.xlane.xlu0 %3653
      %v3655 = vsel %vm391, %v3585, 0.0
      %3656 = vadd.xlane.f32.xlu0 %v3655
      %v3657 = vpop.xlane.xlu0 %3656
      %v3658 = vsel %vm391, %v3586, 0.0
      %3659 = vadd.xlane.f32.xlu0 %v3658
      %v3660 = vpop.xlane.xlu0 %3659
      %v3661 = vsel %vm391, %v3587, 0.0
      %3662 = vadd.xlane.f32.xlu0 %v3661
      %v3663 = vpop.xlane.xlu0 %3662
      %v3664 = vsel %vm391, %v3588, 0.0
      %3665 = vadd.xlane.f32.xlu0 %v3664
      %v3666 = vpop.xlane.xlu0 %3665
      %v3667 = vsel %vm391, %v3589, 0.0
      %3668 = vadd.xlane.f32.xlu0 %v3667
      %v3669 = vpop.xlane.xlu0 %3668
      %v3670 = vsel %vm391, %v3590, 0.0
      %3671 = vadd.xlane.f32.xlu0 %v3670
      %v3672 = vpop.xlane.xlu0 %3671
      %v3673 = vsel %vm391, %v3591, 0.0
      %3674 = vadd.xlane.f32.xlu0 %v3673
      %v3675 = vpop.xlane.xlu0 %3674
      %v3676 = vsel %vm391, %v3592, 0.0
      %3677 = vadd.xlane.f32.xlu0 %v3676
      %v3678 = vpop.xlane.xlu0 %3677
      %v3679 = vsel %vm391, %v3593, 0.0
      %3680 = vadd.xlane.f32.xlu0 %v3679
      %v3681 = vpop.xlane.xlu0 %3680
      %v3682 = vsel %vm391, %v3594, 0.0
      %3683 = vadd.xlane.f32.xlu0 %v3682
      %v3684 = vpop.xlane.xlu0 %3683
      %v3685 = vsel %vm391, %v3595, 0.0
      %3686 = vadd.xlane.f32.xlu0 %v3685
      %v3687 = vpop.xlane.xlu0 %3686
      %v3688 = vsel %vm391, %v3596, 0.0
      %3689 = vadd.xlane.f32.xlu0 %v3688
      %v3690 = vpop.xlane.xlu0 %3689
      %v3691 = vsel %vm391, %v3597, 0.0
      %3692 = vadd.xlane.f32.xlu0 %v3691
      %v3693 = vpop.xlane.xlu0 %3692
      %v3694 = vsel %vm391, %v3598, 0.0
      %3695 = vadd.xlane.f32.xlu0 %v3694
      %v3696 = vpop.xlane.xlu0 %3695
      %v3697 = vsel %vm391, %v3599, 0.0
      %3698 = vadd.xlane.f32.xlu0 %v3697
      %v3699 = vpop.xlane.xlu0 %3698
      %v3700 = vsel %vm391, %v3600, 0.0
      %3701 = vadd.xlane.f32.xlu0 %v3700
      %v3702 = vpop.xlane.xlu0 %3701
      %v3703 = vsel %vm391, %v3601, 0.0
      %3704 = vadd.xlane.f32.xlu0 %v3703
      %v3705 = vpop.xlane.xlu0 %3704
      %v3706 = vsel %vm391, %v3602, 0.0
      %3707 = vadd.xlane.f32.xlu0 %v3706
      %v3708 = vpop.xlane.xlu0 %3707
      %v3709 = vsel %vm391, %v3603, 0.0
      %3710 = vadd.xlane.f32.xlu0 %v3709
      %v3711 = vpop.xlane.xlu0 %3710
      %v3712 = vsel %vm391, %v3604, 0.0
      %3713 = vadd.xlane.f32.xlu0 %v3712
      %v3714 = vpop.xlane.xlu0 %3713
      %v3715 = vsel %vm391, %v3605, 0.0
      %3716 = vadd.xlane.f32.xlu0 %v3715
      %v3717 = vpop.xlane.xlu0 %3716
      %v3718 = vsel %vm391, %v3606, 0.0
      %3719 = vadd.xlane.f32.xlu0 %v3718
      %v3720 = vpop.xlane.xlu0 %3719
      %v3721 = vsel %vm391, %v3607, 0.0
      %3722 = vadd.xlane.f32.xlu0 %v3721
      %v3723 = vpop.xlane.xlu0 %3722
      %v3724 = vsel %vm391, %v3608, 0.0
      %3725 = vadd.xlane.f32.xlu0 %v3724
      %v3726 = vpop.xlane.xlu0 %3725
      %v3727 = vsel %vm629, %v3609, 0.0
      %3728 = vadd.xlane.f32.xlu0 %v3727
      %v3729 = vpop.xlane.xlu0 %3728
      %v3730 = vmul.f32 %v3612, %v633
      %v3731 = vmul.f32 %v3615, %v633
      %v3732 = vmul.f32 %v3618, %v633
      %v3733 = vmul.f32 %v3621, %v633
      %v3734 = vmul.f32 %v3624, %v633
      %v3735 = vmul.f32 %v3627, %v633
      %v3736 = vmul.f32 %v3630, %v633
      %v3737 = vmul.f32 %v3633, %v633
      %v3738 = vmul.f32 %v3636, %v633
      %v3739 = vmul.f32 %v3639, %v633
      %v3740 = vmul.f32 %v3642, %v633
      %v3741 = vmul.f32 %v3645, %v633
      %v3742 = vmul.f32 %v3648, %v633
      %v3743 = vmul.f32 %v3651, %v633
      %v3744 = vmul.f32 %v3654, %v633
      %v3745 = vmul.f32 %v3657, %v633
      %v3746 = vmul.f32 %v3660, %v633
      %v3747 = vmul.f32 %v3663, %v633
      %v3748 = vmul.f32 %v3666, %v633
      %v3749 = vmul.f32 %v3669, %v633
      %v3750 = vmul.f32 %v3672, %v633
      %v3751 = vmul.f32 %v3675, %v633
      %v3752 = vmul.f32 %v3678, %v633
      %v3753 = vmul.f32 %v3681, %v633
      %v3754 = vmul.f32 %v3684, %v633
      %v3755 = vmul.f32 %v3687, %v633
      %v3756 = vmul.f32 %v3690, %v633
      %v3757 = vmul.f32 %v3693, %v633
      %v3758 = vmul.f32 %v3696, %v633
      %v3759 = vmul.f32 %v3699, %v633
      %v3760 = vmul.f32 %v3702, %v633
      %v3761 = vmul.f32 %v3705, %v633
      %v3762 = vmul.f32 %v3708, %v633
      %v3763 = vmul.f32 %v3711, %v633
      %v3764 = vmul.f32 %v3714, %v633
      %v3765 = vmul.f32 %v3717, %v633
      %v3766 = vmul.f32 %v3720, %v633
      %v3767 = vmul.f32 %v3723, %v633
      %v3768 = vmul.f32 %v3726, %v633
      %v3769 = vmul.f32 %v3729, %v633
      %v3770 = vadd.f32 %v3730, 1e-05
      %v3771 = vadd.f32 %v3731, 1e-05
      %v3772 = vadd.f32 %v3732, 1e-05
      %v3773 = vadd.f32 %v3733, 1e-05
      %v3774 = vadd.f32 %v3734, 1e-05
      %v3775 = vadd.f32 %v3735, 1e-05
      %v3776 = vadd.f32 %v3736, 1e-05
      %v3777 = vadd.f32 %v3737, 1e-05
      %v3778 = vadd.f32 %v3738, 1e-05
      %v3779 = vadd.f32 %v3739, 1e-05
      %v3780 = vadd.f32 %v3740, 1e-05
      %v3781 = vadd.f32 %v3741, 1e-05
      %v3782 = vadd.f32 %v3742, 1e-05
      %v3783 = vadd.f32 %v3743, 1e-05
      %v3784 = vadd.f32 %v3744, 1e-05
      %v3785 = vadd.f32 %v3745, 1e-05
      %v3786 = vadd.f32 %v3746, 1e-05
      %v3787 = vadd.f32 %v3747, 1e-05
      %v3788 = vadd.f32 %v3748, 1e-05
      %v3789 = vadd.f32 %v3749, 1e-05
      %v3790 = vadd.f32 %v3750, 1e-05
      %v3791 = vadd.f32 %v3751, 1e-05
      %v3792 = vadd.f32 %v3752, 1e-05
      %v3793 = vadd.f32 %v3753, 1e-05
      %v3794 = vadd.f32 %v3754, 1e-05
      %v3795 = vadd.f32 %v3755, 1e-05
      %v3796 = vadd.f32 %v3756, 1e-05
      %v3797 = vadd.f32 %v3757, 1e-05
      %v3798 = vadd.f32 %v3758, 1e-05
      %v3799 = vadd.f32 %v3759, 1e-05
      %v3800 = vadd.f32 %v3760, 1e-05
      %v3801 = vadd.f32 %v3761, 1e-05
      %v3802 = vadd.f32 %v3762, 1e-05
      %v3803 = vadd.f32 %v3763, 1e-05
      %v3804 = vadd.f32 %v3764, 1e-05
      %v3805 = vadd.f32 %v3765, 1e-05
      %v3806 = vadd.f32 %v3766, 1e-05
      %v3807 = vadd.f32 %v3767, 1e-05
      %v3808 = vadd.f32 %v3768, 1e-05
      %v3809 = vadd.f32 %v3769, 1e-05
      %v3810 = vrsqrt.pop %v3770
      %v3811 = vrsqrt.pop %v3771
      %v3812 = vrsqrt.pop %v3772
      %v3813 = vrsqrt.pop %v3773
      %v3814 = vrsqrt.pop %v3774
      %v3815 = vrsqrt.pop %v3775
      %v3816 = vrsqrt.pop %v3776
      %v3817 = vrsqrt.pop %v3777
      %v3818 = vrsqrt.pop %v3778
      %v3819 = vrsqrt.pop %v3779
      %v3820 = vrsqrt.pop %v3780
      %v3821 = vrsqrt.pop %v3781
      %v3822 = vrsqrt.pop %v3782
      %v3823 = vrsqrt.pop %v3783
      %v3824 = vrsqrt.pop %v3784
      %v3825 = vrsqrt.pop %v3785
      %v3826 = vrsqrt.pop %v3786
      %v3827 = vrsqrt.pop %v3787
      %v3828 = vrsqrt.pop %v3788
      %v3829 = vrsqrt.pop %v3789
      %v3830 = vrsqrt.pop %v3790
      %v3831 = vrsqrt.pop %v3791
      %v3832 = vrsqrt.pop %v3792
      %v3833 = vrsqrt.pop %v3793
      %v3834 = vrsqrt.pop %v3794
      %v3835 = vrsqrt.pop %v3795
      %v3836 = vrsqrt.pop %v3796
      %v3837 = vrsqrt.pop %v3797
      %v3838 = vrsqrt.pop %v3798
      %v3839 = vrsqrt.pop %v3799
      %v3840 = vrsqrt.pop %v3800
      %v3841 = vrsqrt.pop %v3801
      %v3842 = vrsqrt.pop %v3802
      %v3843 = vrsqrt.pop %v3803
      %v3844 = vrsqrt.pop %v3804
      %v3845 = vrsqrt.pop %v3805
      %v3846 = vrsqrt.pop %v3806
      %v3847 = vrsqrt.pop %v3807
      %v3848 = vrsqrt.pop %v3808
      %v3849 = vrsqrt.pop %v3809
      %v3850 = vmul.f32 %v3530, %v3810
      %v3851 = vmul.f32 %v3531, %v3811
      %v3852 = vmul.f32 %v3532, %v3812
      %v3853 = vmul.f32 %v3533, %v3813
      %v3854 = vmul.f32 %v3534, %v3814
      %v3855 = vmul.f32 %v3535, %v3815
      %v3856 = vmul.f32 %v3536, %v3816
      %v3857 = vmul.f32 %v3537, %v3817
      %v3858 = vmul.f32 %v3538, %v3818
      %v3859 = vmul.f32 %v3539, %v3819
      %v3860 = vmul.f32 %v3540, %v3820
      %v3861 = vmul.f32 %v3541, %v3821
      %v3862 = vmul.f32 %v3542, %v3822
      %v3863 = vmul.f32 %v3543, %v3823
      %v3864 = vmul.f32 %v3544, %v3824
      %v3865 = vmul.f32 %v3545, %v3825
      %v3866 = vmul.f32 %v3546, %v3826
      %v3867 = vmul.f32 %v3547, %v3827
      %v3868 = vmul.f32 %v3548, %v3828
      %v3869 = vmul.f32 %v3549, %v3829
      %v3870 = vmul.f32 %v3550, %v3830
      %v3871 = vmul.f32 %v3551, %v3831
      %v3872 = vmul.f32 %v3552, %v3832
      %v3873 = vmul.f32 %v3553, %v3833
      %v3874 = vmul.f32 %v3554, %v3834
      %v3875 = vmul.f32 %v3555, %v3835
      %v3876 = vmul.f32 %v3556, %v3836
      %v3877 = vmul.f32 %v3557, %v3837
      %v3878 = vmul.f32 %v3558, %v3838
      %v3879 = vmul.f32 %v3559, %v3839
      %v3880 = vmul.f32 %v3560, %v3840
      %v3881 = vmul.f32 %v3561, %v3841
      %v3882 = vmul.f32 %v3562, %v3842
      %v3883 = vmul.f32 %v3563, %v3843
      %v3884 = vmul.f32 %v3564, %v3844
      %v3885 = vmul.f32 %v3565, %v3845
      %v3886 = vmul.f32 %v3566, %v3846
      %v3887 = vmul.f32 %v3567, %v3847
      %v3888 = vmul.f32 %v3568, %v3848
      %v3889 = vmul.f32 %v3569, %v3849
      %v3890 = vlaneseq
      %v3891 = vshrl.u32 %v3890, 7
      %v3892 = vsub.s32 1, %v3891
      %v3893 = vrot.slane %v3075, %v3892
      %v3894 = vmul.f32 %v3850, %v3893
      %v3895 = vmul.f32 %v3851, %v3893
      %v3896 = vmul.f32 %v3852, %v3893
      %v3897 = vmul.f32 %v3853, %v3893
      %v3898 = vmul.f32 %v3854, %v3893
      %v3899 = vmul.f32 %v3855, %v3893
      %v3900 = vmul.f32 %v3856, %v3893
      %v3901 = vmul.f32 %v3857, %v3893
      %v3902 = vmul.f32 %v3858, %v3893
      %v3903 = vmul.f32 %v3859, %v3893
      %v3904 = vmul.f32 %v3860, %v3893
      %v3905 = vmul.f32 %v3861, %v3893
      %v3906 = vmul.f32 %v3862, %v3893
      %v3907 = vmul.f32 %v3863, %v3893
      %v3908 = vmul.f32 %v3864, %v3893
      %v3909 = vmul.f32 %v3865, %v3893
      %v3910 = vmul.f32 %v3866, %v3893
      %v3911 = vmul.f32 %v3867, %v3893
      %v3912 = vmul.f32 %v3868, %v3893
      %v3913 = vmul.f32 %v3869, %v3893
      %v3914 = vmul.f32 %v3870, %v3893
      %v3915 = vmul.f32 %v3871, %v3893
      %v3916 = vmul.f32 %v3872, %v3893
      %v3917 = vmul.f32 %v3873, %v3893
      %v3918 = vmul.f32 %v3874, %v3893
      %v3919 = vmul.f32 %v3875, %v3893
      %v3920 = vmul.f32 %v3876, %v3893
      %v3921 = vmul.f32 %v3877, %v3893
      %v3922 = vmul.f32 %v3878, %v3893
      %v3923 = vmul.f32 %v3879, %v3893
      %v3924 = vmul.f32 %v3880, %v3893
      %v3925 = vmul.f32 %v3881, %v3893
      %v3926 = vmul.f32 %v3882, %v3893
      %v3927 = vmul.f32 %v3883, %v3893
      %v3928 = vmul.f32 %v3884, %v3893
      %v3929 = vmul.f32 %v3885, %v3893
      %v3930 = vmul.f32 %v3886, %v3893
      %v3931 = vmul.f32 %v3887, %v3893
      %v3932 = vmul.f32 %v3888, %v3893
      %v3933 = vmul.f32 %v3889, %v3893
      %v3934 = vlaneseq
      %v3935 = vshrl.u32 %v3934, 7
      %v3936 = vsub.s32 2, %v3935
      %v3937 = vrot.slane %v3075, %v3936
      %v3938 = vadd.f32 %v3894, %v3937
      %v3939 = vadd.f32 %v3895, %v3937
      %v3940 = vadd.f32 %v3896, %v3937
      %v3941 = vadd.f32 %v3897, %v3937
      %v3942 = vadd.f32 %v3898, %v3937
      %v3943 = vadd.f32 %v3899, %v3937
      %v3944 = vadd.f32 %v3900, %v3937
      %v3945 = vadd.f32 %v3901, %v3937
      %v3946 = vadd.f32 %v3902, %v3937
      %v3947 = vadd.f32 %v3903, %v3937
      %v3948 = vadd.f32 %v3904, %v3937
      %v3949 = vadd.f32 %v3905, %v3937
      %v3950 = vadd.f32 %v3906, %v3937
      %v3951 = vadd.f32 %v3907, %v3937
      %v3952 = vadd.f32 %v3908, %v3937
      %v3953 = vadd.f32 %v3909, %v3937
      %v3954 = vadd.f32 %v3910, %v3937
      %v3955 = vadd.f32 %v3911, %v3937
      %v3956 = vadd.f32 %v3912, %v3937
      %v3957 = vadd.f32 %v3913, %v3937
      %v3958 = vadd.f32 %v3914, %v3937
      %v3959 = vadd.f32 %v3915, %v3937
      %v3960 = vadd.f32 %v3916, %v3937
      %v3961 = vadd.f32 %v3917, %v3937
      %v3962 = vadd.f32 %v3918, %v3937
      %v3963 = vadd.f32 %v3919, %v3937
      %v3964 = vadd.f32 %v3920, %v3937
      %v3965 = vadd.f32 %v3921, %v3937
      %v3966 = vadd.f32 %v3922, %v3937
      %v3967 = vadd.f32 %v3923, %v3937
      %v3968 = vadd.f32 %v3924, %v3937
      %v3969 = vadd.f32 %v3925, %v3937
      %v3970 = vadd.f32 %v3926, %v3937
      %v3971 = vadd.f32 %v3927, %v3937
      %v3972 = vadd.f32 %v3928, %v3937
      %v3973 = vadd.f32 %v3929, %v3937
      %v3974 = vadd.f32 %v3930, %v3937
      %v3975 = vadd.f32 %v3931, %v3937
      %v3976 = vadd.f32 %v3932, %v3937
      %v3977 = vadd.f32 %v3933, %v3937
      %v3978 = vmul.f32 %v3938, %v3938
      %v3979 = vmul.f32 %v3939, %v3939
      %v3980 = vmul.f32 %v3940, %v3940
      %v3981 = vmul.f32 %v3941, %v3941
      %v3982 = vmul.f32 %v3942, %v3942
      %v3983 = vmul.f32 %v3943, %v3943
      %v3984 = vmul.f32 %v3944, %v3944
      %v3985 = vmul.f32 %v3945, %v3945
      %v3986 = vmul.f32 %v3946, %v3946
      %v3987 = vmul.f32 %v3947, %v3947
      %v3988 = vmul.f32 %v3948, %v3948
      %v3989 = vmul.f32 %v3949, %v3949
      %v3990 = vmul.f32 %v3950, %v3950
      %v3991 = vmul.f32 %v3951, %v3951
      %v3992 = vmul.f32 %v3952, %v3952
      %v3993 = vmul.f32 %v3953, %v3953
      %v3994 = vmul.f32 %v3954, %v3954
      %v3995 = vmul.f32 %v3955, %v3955
      %v3996 = vmul.f32 %v3956, %v3956
      %v3997 = vmul.f32 %v3957, %v3957
      %v3998 = vmul.f32 %v3958, %v3958
      %v3999 = vmul.f32 %v3959, %v3959
      %v4000 = vmul.f32 %v3960, %v3960
      %v4001 = vmul.f32 %v3961, %v3961
      %v4002 = vmul.f32 %v3962, %v3962
      %v4003 = vmul.f32 %v3963, %v3963
      %v4004 = vmul.f32 %v3964, %v3964
      %v4005 = vmul.f32 %v3965, %v3965
      %v4006 = vmul.f32 %v3966, %v3966
      %v4007 = vmul.f32 %v3967, %v3967
      %v4008 = vmul.f32 %v3968, %v3968
      %v4009 = vmul.f32 %v3969, %v3969
      %v4010 = vmul.f32 %v3970, %v3970
      %v4011 = vmul.f32 %v3971, %v3971
      %v4012 = vmul.f32 %v3972, %v3972
      %v4013 = vmul.f32 %v3973, %v3973
      %v4014 = vmul.f32 %v3974, %v3974
      %v4015 = vmul.f32 %v3975, %v3975
      %v4016 = vmul.f32 %v3976, %v3976
      %v4017 = vmul.f32 %v3977, %v3977
      %v4018 = vmul.f32 %v3938, %v3978
      %v4019 = vmul.f32 %v3939, %v3979
      %v4020 = vmul.f32 %v3940, %v3980
      %v4021 = vmul.f32 %v3941, %v3981
      %v4022 = vmul.f32 %v3942, %v3982
      %v4023 = vmul.f32 %v3943, %v3983
      %v4024 = vmul.f32 %v3944, %v3984
      %v4025 = vmul.f32 %v3945, %v3985
      %v4026 = vmul.f32 %v3946, %v3986
      %v4027 = vmul.f32 %v3947, %v3987
      %v4028 = vmul.f32 %v3948, %v3988
      %v4029 = vmul.f32 %v3949, %v3989
      %v4030 = vmul.f32 %v3950, %v3990
      %v4031 = vmul.f32 %v3951, %v3991
      %v4032 = vmul.f32 %v3952, %v3992
      %v4033 = vmul.f32 %v3953, %v3993
      %v4034 = vmul.f32 %v3954, %v3994
      %v4035 = vmul.f32 %v3955, %v3995
      %v4036 = vmul.f32 %v3956, %v3996
      %v4037 = vmul.f32 %v3957, %v3997
      %v4038 = vmul.f32 %v3958, %v3998
      %v4039 = vmul.f32 %v3959, %v3999
      %v4040 = vmul.f32 %v3960, %v4000
      %v4041 = vmul.f32 %v3961, %v4001
      %v4042 = vmul.f32 %v3962, %v4002
      %v4043 = vmul.f32 %v3963, %v4003
      %v4044 = vmul.f32 %v3964, %v4004
      %v4045 = vmul.f32 %v3965, %v4005
      %v4046 = vmul.f32 %v3966, %v4006
      %v4047 = vmul.f32 %v3967, %v4007
      %v4048 = vmul.f32 %v3968, %v4008
      %v4049 = vmul.f32 %v3969, %v4009
      %v4050 = vmul.f32 %v3970, %v4010
      %v4051 = vmul.f32 %v3971, %v4011
      %v4052 = vmul.f32 %v3972, %v4012
      %v4053 = vmul.f32 %v3973, %v4013
      %v4054 = vmul.f32 %v3974, %v4014
      %v4055 = vmul.f32 %v3975, %v4015
      %v4056 = vmul.f32 %v3976, %v4016
      %v4057 = vmul.f32 %v3977, %v4017
      %v4058 = vmul.f32 %v4018, 0.044715
      %v4059 = vmul.f32 %v4019, 0.044715
      %v4060 = vmul.f32 %v4020, 0.044715
      %v4061 = vmul.f32 %v4021, 0.044715
      %v4062 = vmul.f32 %v4022, 0.044715
      %v4063 = vmul.f32 %v4023, 0.044715
      %v4064 = vmul.f32 %v4024, 0.044715
      %v4065 = vmul.f32 %v4025, 0.044715
      %v4066 = vmul.f32 %v4026, 0.044715
      %v4067 = vmul.f32 %v4027, 0.044715
      %v4068 = vmul.f32 %v4028, 0.044715
      %v4069 = vmul.f32 %v4029, 0.044715
      %v4070 = vmul.f32 %v4030, 0.044715
      %v4071 = vmul.f32 %v4031, 0.044715
      %v4072 = vmul.f32 %v4032, 0.044715
      %v4073 = vmul.f32 %v4033, 0.044715
      %v4074 = vmul.f32 %v4034, 0.044715
      %v4075 = vmul.f32 %v4035, 0.044715
      %v4076 = vmul.f32 %v4036, 0.044715
      %v4077 = vmul.f32 %v4037, 0.044715
      %v4078 = vmul.f32 %v4038, 0.044715
      %v4079 = vmul.f32 %v4039, 0.044715
      %v4080 = vmul.f32 %v4040, 0.044715
      %v4081 = vmul.f32 %v4041, 0.044715
      %v4082 = vmul.f32 %v4042, 0.044715
      %v4083 = vmul.f32 %v4043, 0.044715
      %v4084 = vmul.f32 %v4044, 0.044715
      %v4085 = vmul.f32 %v4045, 0.044715
      %v4086 = vmul.f32 %v4046, 0.044715
      %v4087 = vmul.f32 %v4047, 0.044715
      %v4088 = vmul.f32 %v4048, 0.044715
      %v4089 = vmul.f32 %v4049, 0.044715
      %v4090 = vmul.f32 %v4050, 0.044715
      %v4091 = vmul.f32 %v4051, 0.044715
      %v4092 = vmul.f32 %v4052, 0.044715
      %v4093 = vmul.f32 %v4053, 0.044715
      %v4094 = vmul.f32 %v4054, 0.044715
      %v4095 = vmul.f32 %v4055, 0.044715
      %v4096 = vmul.f32 %v4056, 0.044715
      %v4097 = vmul.f32 %v4057, 0.044715
      %v4098 = vadd.f32 %v3938, %v4058
      %v4099 = vadd.f32 %v3939, %v4059
      %v4100 = vadd.f32 %v3940, %v4060
      %v4101 = vadd.f32 %v3941, %v4061
      %v4102 = vadd.f32 %v3942, %v4062
      %v4103 = vadd.f32 %v3943, %v4063
      %v4104 = vadd.f32 %v3944, %v4064
      %v4105 = vadd.f32 %v3945, %v4065
      %v4106 = vadd.f32 %v3946, %v4066
      %v4107 = vadd.f32 %v3947, %v4067
      %v4108 = vadd.f32 %v3948, %v4068
      %v4109 = vadd.f32 %v3949, %v4069
      %v4110 = vadd.f32 %v3950, %v4070
      %v4111 = vadd.f32 %v3951, %v4071
      %v4112 = vadd.f32 %v3952, %v4072
      %v4113 = vadd.f32 %v3953, %v4073
      %v4114 = vadd.f32 %v3954, %v4074
      %v4115 = vadd.f32 %v3955, %v4075
      %v4116 = vadd.f32 %v3956, %v4076
      %v4117 = vadd.f32 %v3957, %v4077
      %v4118 = vadd.f32 %v3958, %v4078
      %v4119 = vadd.f32 %v3959, %v4079
      %v4120 = vadd.f32 %v3960, %v4080
      %v4121 = vadd.f32 %v3961, %v4081
      %v4122 = vadd.f32 %v3962, %v4082
      %v4123 = vadd.f32 %v3963, %v4083
      %v4124 = vadd.f32 %v3964, %v4084
      %v4125 = vadd.f32 %v3965, %v4085
      %v4126 = vadd.f32 %v3966, %v4086
      %v4127 = vadd.f32 %v3967, %v4087
      %v4128 = vadd.f32 %v3968, %v4088
      %v4129 = vadd.f32 %v3969, %v4089
      %v4130 = vadd.f32 %v3970, %v4090
      %v4131 = vadd.f32 %v3971, %v4091
      %v4132 = vadd.f32 %v3972, %v4092
      %v4133 = vadd.f32 %v3973, %v4093
      %v4134 = vadd.f32 %v3974, %v4094
      %v4135 = vadd.f32 %v3975, %v4095
      %v4136 = vadd.f32 %v3976, %v4096
      %v4137 = vadd.f32 %v3977, %v4097
      %v4138 = vmul.f32 %v4098, 0.7978846
      %v4139 = vmul.f32 %v4099, 0.7978846
      %v4140 = vmul.f32 %v4100, 0.7978846
      %v4141 = vmul.f32 %v4101, 0.7978846
      %v4142 = vmul.f32 %v4102, 0.7978846
      %v4143 = vmul.f32 %v4103, 0.7978846
      %v4144 = vmul.f32 %v4104, 0.7978846
      %v4145 = vmul.f32 %v4105, 0.7978846
      %v4146 = vmul.f32 %v4106, 0.7978846
      %v4147 = vmul.f32 %v4107, 0.7978846
      %v4148 = vmul.f32 %v4108, 0.7978846
      %v4149 = vmul.f32 %v4109, 0.7978846
      %v4150 = vmul.f32 %v4110, 0.7978846
      %v4151 = vmul.f32 %v4111, 0.7978846
      %v4152 = vmul.f32 %v4112, 0.7978846
      %v4153 = vmul.f32 %v4113, 0.7978846
      %v4154 = vmul.f32 %v4114, 0.7978846
      %v4155 = vmul.f32 %v4115, 0.7978846
      %v4156 = vmul.f32 %v4116, 0.7978846
      %v4157 = vmul.f32 %v4117, 0.7978846
      %v4158 = vmul.f32 %v4118, 0.7978846
      %v4159 = vmul.f32 %v4119, 0.7978846
      %v4160 = vmul.f32 %v4120, 0.7978846
      %v4161 = vmul.f32 %v4121, 0.7978846
      %v4162 = vmul.f32 %v4122, 0.7978846
      %v4163 = vmul.f32 %v4123, 0.7978846
      %v4164 = vmul.f32 %v4124, 0.7978846
      %v4165 = vmul.f32 %v4125, 0.7978846
      %v4166 = vmul.f32 %v4126, 0.7978846
      %v4167 = vmul.f32 %v4127, 0.7978846
      %v4168 = vmul.f32 %v4128, 0.7978846
      %v4169 = vmul.f32 %v4129, 0.7978846
      %v4170 = vmul.f32 %v4130, 0.7978846
      %v4171 = vmul.f32 %v4131, 0.7978846
      %v4172 = vmul.f32 %v4132, 0.7978846
      %v4173 = vmul.f32 %v4133, 0.7978846
      %v4174 = vmul.f32 %v4134, 0.7978846
      %v4175 = vmul.f32 %v4135, 0.7978846
      %v4176 = vmul.f32 %v4136, 0.7978846
      %v4177 = vmul.f32 %v4137, 0.7978846
      %v4178 = vtanh.pop %v4138
      %v4179 = vtanh.pop %v4139
      %v4180 = vtanh.pop %v4140
      %v4181 = vtanh.pop %v4141
      %v4182 = vtanh.pop %v4142
      %v4183 = vtanh.pop %v4143
      %v4184 = vtanh.pop %v4144
      %v4185 = vtanh.pop %v4145
      %v4186 = vtanh.pop %v4146
      %v4187 = vtanh.pop %v4147
      %v4188 = vtanh.pop %v4148
      %v4189 = vtanh.pop %v4149
      %v4190 = vtanh.pop %v4150
      %v4191 = vtanh.pop %v4151
      %v4192 = vtanh.pop %v4152
      %v4193 = vtanh.pop %v4153
      %v4194 = vtanh.pop %v4154
      %v4195 = vtanh.pop %v4155
      %v4196 = vtanh.pop %v4156
      %v4197 = vtanh.pop %v4157
      %v4198 = vtanh.pop %v4158
      %v4199 = vtanh.pop %v4159
      %v4200 = vtanh.pop %v4160
      %v4201 = vtanh.pop %v4161
      %v4202 = vtanh.pop %v4162
      %v4203 = vtanh.pop %v4163
      %v4204 = vtanh.pop %v4164
      %v4205 = vtanh.pop %v4165
      %v4206 = vtanh.pop %v4166
      %v4207 = vtanh.pop %v4167
      %v4208 = vtanh.pop %v4168
      %v4209 = vtanh.pop %v4169
      %v4210 = vtanh.pop %v4170
      %v4211 = vtanh.pop %v4171
      %v4212 = vtanh.pop %v4172
      %v4213 = vtanh.pop %v4173
      %v4214 = vtanh.pop %v4174
      %v4215 = vtanh.pop %v4175
      %v4216 = vtanh.pop %v4176
      %v4217 = vtanh.pop %v4177
      %v4218 = vadd.f32 %v4178, 1.0
      %v4219 = vadd.f32 %v4179, 1.0
      %v4220 = vadd.f32 %v4180, 1.0
      %v4221 = vadd.f32 %v4181, 1.0
      %v4222 = vadd.f32 %v4182, 1.0
      %v4223 = vadd.f32 %v4183, 1.0
      %v4224 = vadd.f32 %v4184, 1.0
      %v4225 = vadd.f32 %v4185, 1.0
      %v4226 = vadd.f32 %v4186, 1.0
      %v4227 = vadd.f32 %v4187, 1.0
      %v4228 = vadd.f32 %v4188, 1.0
      %v4229 = vadd.f32 %v4189, 1.0
      %v4230 = vadd.f32 %v4190, 1.0
      %v4231 = vadd.f32 %v4191, 1.0
      %v4232 = vadd.f32 %v4192, 1.0
      %v4233 = vadd.f32 %v4193, 1.0
      %v4234 = vadd.f32 %v4194, 1.0
      %v4235 = vadd.f32 %v4195, 1.0
      %v4236 = vadd.f32 %v4196, 1.0
      %v4237 = vadd.f32 %v4197, 1.0
      %v4238 = vadd.f32 %v4198, 1.0
      %v4239 = vadd.f32 %v4199, 1.0
      %v4240 = vadd.f32 %v4200, 1.0
      %v4241 = vadd.f32 %v4201, 1.0
      %v4242 = vadd.f32 %v4202, 1.0
      %v4243 = vadd.f32 %v4203, 1.0
      %v4244 = vadd.f32 %v4204, 1.0
      %v4245 = vadd.f32 %v4205, 1.0
      %v4246 = vadd.f32 %v4206, 1.0
      %v4247 = vadd.f32 %v4207, 1.0
      %v4248 = vadd.f32 %v4208, 1.0
      %v4249 = vadd.f32 %v4209, 1.0
      %v4250 = vadd.f32 %v4210, 1.0
      %v4251 = vadd.f32 %v4211, 1.0
      %v4252 = vadd.f32 %v4212, 1.0
      %v4253 = vadd.f32 %v4213, 1.0
      %v4254 = vadd.f32 %v4214, 1.0
      %v4255 = vadd.f32 %v4215, 1.0
      %v4256 = vadd.f32 %v4216, 1.0
      %v4257 = vadd.f32 %v4217, 1.0
      %v4258 = vmul.f32 %v4218, 0.5
      %v4259 = vmul.f32 %v4219, 0.5
      %v4260 = vmul.f32 %v4220, 0.5
      %v4261 = vmul.f32 %v4221, 0.5
      %v4262 = vmul.f32 %v4222, 0.5
      %v4263 = vmul.f32 %v4223, 0.5
      %v4264 = vmul.f32 %v4224, 0.5
      %v4265 = vmul.f32 %v4225, 0.5
      %v4266 = vmul.f32 %v4226, 0.5
      %v4267 = vmul.f32 %v4227, 0.5
      %v4268 = vmul.f32 %v4228, 0.5
      %v4269 = vmul.f32 %v4229, 0.5
      %v4270 = vmul.f32 %v4230, 0.5
      %v4271 = vmul.f32 %v4231, 0.5
      %v4272 = vmul.f32 %v4232, 0.5
      %v4273 = vmul.f32 %v4233, 0.5
      %v4274 = vmul.f32 %v4234, 0.5
      %v4275 = vmul.f32 %v4235, 0.5
      %v4276 = vmul.f32 %v4236, 0.5
      %v4277 = vmul.f32 %v4237, 0.5
      %v4278 = vmul.f32 %v4238, 0.5
      %v4279 = vmul.f32 %v4239, 0.5
      %v4280 = vmul.f32 %v4240, 0.5
      %v4281 = vmul.f32 %v4241, 0.5
      %v4282 = vmul.f32 %v4242, 0.5
      %v4283 = vmul.f32 %v4243, 0.5
      %v4284 = vmul.f32 %v4244, 0.5
      %v4285 = vmul.f32 %v4245, 0.5
      %v4286 = vmul.f32 %v4246, 0.5
      %v4287 = vmul.f32 %v4247, 0.5
      %v4288 = vmul.f32 %v4248, 0.5
      %v4289 = vmul.f32 %v4249, 0.5
      %v4290 = vmul.f32 %v4250, 0.5
      %v4291 = vmul.f32 %v4251, 0.5
      %v4292 = vmul.f32 %v4252, 0.5
      %v4293 = vmul.f32 %v4253, 0.5
      %v4294 = vmul.f32 %v4254, 0.5
      %v4295 = vmul.f32 %v4255, 0.5
      %v4296 = vmul.f32 %v4256, 0.5
      %v4297 = vmul.f32 %v4257, 0.5
      %v4298 = vmul.f32 %v3938, %v4258
      %v4299 = vmul.f32 %v3939, %v4259
      %v4300 = vmul.f32 %v3940, %v4260
      %v4301 = vmul.f32 %v3941, %v4261
      %v4302 = vmul.f32 %v3942, %v4262
      %v4303 = vmul.f32 %v3943, %v4263
      %v4304 = vmul.f32 %v3944, %v4264
      %v4305 = vmul.f32 %v3945, %v4265
      %v4306 = vmul.f32 %v3946, %v4266
      %v4307 = vmul.f32 %v3947, %v4267
      %v4308 = vmul.f32 %v3948, %v4268
      %v4309 = vmul.f32 %v3949, %v4269
      %v4310 = vmul.f32 %v3950, %v4270
      %v4311 = vmul.f32 %v3951, %v4271
      %v4312 = vmul.f32 %v3952, %v4272
      %v4313 = vmul.f32 %v3953, %v4273
      %v4314 = vmul.f32 %v3954, %v4274
      %v4315 = vmul.f32 %v3955, %v4275
      %v4316 = vmul.f32 %v3956, %v4276
      %v4317 = vmul.f32 %v3957, %v4277
      %v4318 = vmul.f32 %v3958, %v4278
      %v4319 = vmul.f32 %v3959, %v4279
      %v4320 = vmul.f32 %v3960, %v4280
      %v4321 = vmul.f32 %v3961, %v4281
      %v4322 = vmul.f32 %v3962, %v4282
      %v4323 = vmul.f32 %v3963, %v4283
      %v4324 = vmul.f32 %v3964, %v4284
      %v4325 = vmul.f32 %v3965, %v4285
      %v4326 = vmul.f32 %v3966, %v4286
      %v4327 = vmul.f32 %v3967, %v4287
      %v4328 = vmul.f32 %v3968, %v4288
      %v4329 = vmul.f32 %v3969, %v4289
      %v4330 = vmul.f32 %v3970, %v4290
      %v4331 = vmul.f32 %v3971, %v4291
      %v4332 = vmul.f32 %v3972, %v4292
      %v4333 = vmul.f32 %v3973, %v4293
      %v4334 = vmul.f32 %v3974, %v4294
      %v4335 = vmul.f32 %v3975, %v4295
      %v4336 = vmul.f32 %v3976, %v4296
      %v4337 = vmul.f32 %v3977, %v4297
      %4338 = vst.msk [vmem:[#allocation3] sm:$0xff] %vm391, %v4298
      %4339 = vst.msk [vmem:[#allocation3 + $0x8] sm:$0xff] %vm391, %v4299
      %4340 = vst.msk [vmem:[#allocation3 + $0x10] sm:$0xff] %vm391, %v4300
      %4341 = vst.msk [vmem:[#allocation3 + $0x18] sm:$0xff] %vm391, %v4301
      %4342 = vst.msk [vmem:[#allocation3 + $0x20] sm:$0xff] %vm391, %v4302
      %4343 = vst.msk [vmem:[#allocation3 + $0x28] sm:$0xff] %vm391, %v4303
      %4344 = vst.msk [vmem:[#allocation3 + $0x30] sm:$0xff] %vm391, %v4304
      %4345 = vst.msk [vmem:[#allocation3 + $0x38] sm:$0xff] %vm391, %v4305
      %4346 = vst.msk [vmem:[#allocation3 + $0x40] sm:$0xff] %vm391, %v4306
      %4347 = vst.msk [vmem:[#allocation3 + $0x48] sm:$0xff] %vm391, %v4307
      %4348 = vst.msk [vmem:[#allocation3 + $0x50] sm:$0xff] %vm391, %v4308
      %4349 = vst.msk [vmem:[#allocation3 + $0x58] sm:$0xff] %vm391, %v4309
      %4350 = vst.msk [vmem:[#allocation3 + $0x60] sm:$0xff] %vm391, %v4310
      %4351 = vst.msk [vmem:[#allocation3 + $0x68] sm:$0xff] %vm391, %v4311
      %4352 = vst.msk [vmem:[#allocation3 + $0x70] sm:$0xff] %vm391, %v4312
      %4353 = vst.msk [vmem:[#allocation3 + $0x78] sm:$0xff] %vm391, %v4313
      %4354 = vst.msk [vmem:[#allocation3 + $0x80] sm:$0xff] %vm391, %v4314
      %4355 = vst.msk [vmem:[#allocation3 + $0x88] sm:$0xff] %vm391, %v4315
      %4356 = vst.msk [vmem:[#allocation3 + $0x90] sm:$0xff] %vm391, %v4316
      %4357 = vst.msk [vmem:[#allocation3 + $0x98] sm:$0xff] %vm391, %v4317
      %4358 = vst.msk [vmem:[#allocation3 + $0xa0] sm:$0xff] %vm391, %v4318
      %4359 = vst.msk [vmem:[#allocation3 + $0xa8] sm:$0xff] %vm391, %v4319
      %4360 = vst.msk [vmem:[#allocation3 + $0xb0] sm:$0xff] %vm391, %v4320
      %4361 = vst.msk [vmem:[#allocation3 + $0xb8] sm:$0xff] %vm391, %v4321
      %4362 = vst.msk [vmem:[#allocation3 + $0xc0] sm:$0xff] %vm391, %v4322
      %4363 = vst.msk [vmem:[#allocation3 + $0xc8] sm:$0xff] %vm391, %v4323
      %4364 = vst.msk [vmem:[#allocation3 + $0xd0] sm:$0xff] %vm391, %v4324
      %4365 = vst.msk [vmem:[#allocation3 + $0xd8] sm:$0xff] %vm391, %v4325
      %4366 = vst.msk [vmem:[#allocation3 + $0xe0] sm:$0xff] %vm391, %v4326
      %4367 = vst.msk [vmem:[#allocation3 + $0xe8] sm:$0xff] %vm391, %v4327
      %4368 = vst.msk [vmem:[#allocation3 + $0xf0] sm:$0xff] %vm391, %v4328
      %4369 = vst.msk [vmem:[#allocation3 + $0xf8] sm:$0xff] %vm391, %v4329
      %4370 = vst.msk [vmem:[#allocation3 + $0x100] sm:$0xff] %vm391, %v4330
      %4371 = vst.msk [vmem:[#allocation3 + $0x108] sm:$0xff] %vm391, %v4331
      %4372 = vst.msk [vmem:[#allocation3 + $0x110] sm:$0xff] %vm391, %v4332
      %4373 = vst.msk [vmem:[#allocation3 + $0x118] sm:$0xff] %vm391, %v4333
      %4374 = vst.msk [vmem:[#allocation3 + $0x120] sm:$0xff] %vm391, %v4334
      %4375 = vst.msk [vmem:[#allocation3 + $0x128] sm:$0xff] %vm391, %v4335
      %4376 = vst.msk [vmem:[#allocation3 + $0x130] sm:$0xff] %vm391, %v4336
      %4377 = vst.msk [vmem:[#allocation3 + $0x138] sm:$0x7f] %vm629, %v4337
      %v4378 = vld [vmem:[#allocation3] ss:$2 sm:$0xff]
      %s4379 = scalar_lea.vmem [#allocation3], 16
      %v4380 = vld [vmem:[%s4379] ss:$2 sm:$0xff]
      %s4381 = scalar_lea.vmem [#allocation3], 32
      %v4382 = vld [vmem:[%s4381] ss:$2 sm:$0xff]
      %s4383 = scalar_lea.vmem [#allocation3], 48
      %v4384 = vld [vmem:[%s4383] ss:$2 sm:$0xff]
      %s4385 = scalar_lea.vmem [#allocation3], 64
      %v4386 = vld [vmem:[%s4385] ss:$2 sm:$0xff]
      %s4387 = scalar_lea.vmem [#allocation3], 80
      %v4388 = vld [vmem:[%s4387] ss:$2 sm:$0xff]
      %s4389 = scalar_lea.vmem [#allocation3], 96
      %v4390 = vld [vmem:[%s4389] ss:$2 sm:$0xff]
      %s4391 = scalar_lea.vmem [#allocation3], 112
      %v4392 = vld [vmem:[%s4391] ss:$2 sm:$0xff]
      %s4393 = scalar_lea.vmem [#allocation3], 128
      %v4394 = vld [vmem:[%s4393] ss:$2 sm:$0xff]
      %s4395 = scalar_lea.vmem [#allocation3], 144
      %v4396 = vld [vmem:[%s4395] ss:$2 sm:$0xff]
      %s4397 = scalar_lea.vmem [#allocation3], 160
      %v4398 = vld [vmem:[%s4397] ss:$2 sm:$0xff]
      %s4399 = scalar_lea.vmem [#allocation3], 176
      %v4400 = vld [vmem:[%s4399] ss:$2 sm:$0xff]
      %s4401 = scalar_lea.vmem [#allocation3], 192
      %v4402 = vld [vmem:[%s4401] ss:$2 sm:$0xff]
      %s4403 = scalar_lea.vmem [#allocation3], 208
      %v4404 = vld [vmem:[%s4403] ss:$2 sm:$0xff]
      %s4405 = scalar_lea.vmem [#allocation3], 224
      %v4406 = vld [vmem:[%s4405] ss:$2 sm:$0xff]
      %s4407 = scalar_lea.vmem [#allocation3], 240
      %v4408 = vld [vmem:[%s4407] ss:$2 sm:$0xff]
      %s4409 = scalar_lea.vmem [#allocation3], 256
      %v4410 = vld [vmem:[%s4409] ss:$2 sm:$0xff]
      %s4411 = scalar_lea.vmem [#allocation3], 272
      %v4412 = vld [vmem:[%s4411] ss:$2 sm:$0xff]
      %s4413 = scalar_lea.vmem [#allocation3], 288
      %v4414 = vld [vmem:[%s4413] ss:$2 sm:$0xff]
      %s4415 = scalar_lea.vmem [#allocation3], 304
      %v4416 = vld [vmem:[%s4415] ss:$2 sm:$0xff]
      %s4417 = scalar_lea.vmem [#allocation3], 1
      %v4418 = vld [vmem:[%s4417] ss:$2 sm:$0xff]
      %s4419 = scalar_lea.vmem [#allocation3], 17
      %v4420 = vld [vmem:[%s4419] ss:$2 sm:$0xff]
      %s4421 = scalar_lea.vmem [#allocation3], 33
      %v4422 = vld [vmem:[%s4421] ss:$2 sm:$0xff]
      %s4423 = scalar_lea.vmem [#allocation3], 49
      %v4424 = vld [vmem:[%s4423] ss:$2 sm:$0xff]
      %s4425 = scalar_lea.vmem [#allocation3], 65
      %v4426 = vld [vmem:[%s4425] ss:$2 sm:$0xff]
      %s4427 = scalar_lea.vmem [#allocation3], 81
      %v4428 = vld [vmem:[%s4427] ss:$2 sm:$0xff]
      %s4429 = scalar_lea.vmem [#allocation3], 97
      %v4430 = vld [vmem:[%s4429] ss:$2 sm:$0xff]
      %s4431 = scalar_lea.vmem [#allocation3], 113
      %v4432 = vld [vmem:[%s4431] ss:$2 sm:$0xff]
      %s4433 = scalar_lea.vmem [#allocation3], 129
      %v4434 = vld [vmem:[%s4433] ss:$2 sm:$0xff]
      %s4435 = scalar_lea.vmem [#allocation3], 145
      %v4436 = vld [vmem:[%s4435] ss:$2 sm:$0xff]
      %s4437 = scalar_lea.vmem [#allocation3], 161
      %v4438 = vld [vmem:[%s4437] ss:$2 sm:$0xff]
      %s4439 = scalar_lea.vmem [#allocation3], 177
      %v4440 = vld [vmem:[%s4439] ss:$2 sm:$0xff]
      %s4441 = scalar_lea.vmem [#allocation3], 193
      %v4442 = vld [vmem:[%s4441] ss:$2 sm:$0xff]
      %s4443 = scalar_lea.vmem [#allocation3], 209
      %v4444 = vld [vmem:[%s4443] ss:$2 sm:$0xff]
      %s4445 = scalar_lea.vmem [#allocation3], 225
      %v4446 = vld [vmem:[%s4445] ss:$2 sm:$0xff]
      %s4447 = scalar_lea.vmem [#allocation3], 241
      %v4448 = vld [vmem:[%s4447] ss:$2 sm:$0xff]
      %s4449 = scalar_lea.vmem [#allocation3], 257
      %v4450 = vld [vmem:[%s4449] ss:$2 sm:$0xff]
      %s4451 = scalar_lea.vmem [#allocation3], 273
      %v4452 = vld [vmem:[%s4451] ss:$2 sm:$0xff]
      %s4453 = scalar_lea.vmem [#allocation3], 289
      %v4454 = vld [vmem:[%s4453] ss:$2 sm:$0xff]
      %s4455 = scalar_lea.vmem [#allocation3], 305
      %v4456 = vld [vmem:[%s4455] ss:$2 sm:$0x7f]
      %4477 = vrot.lane.b32.xlu0 %v4418, 32
      %v4478 = vpop.permute.xlu0 %4477
      %4479 = vrot.lane.b32.xlu0 %v4420, 32
      %v4480 = vpop.permute.xlu0 %4479
      %4481 = vrot.lane.b32.xlu0 %v4422, 32
      %v4482 = vpop.permute.xlu0 %4481
      %4483 = vrot.lane.b32.xlu0 %v4424, 32
      %v4484 = vpop.permute.xlu0 %4483
      %4485 = vrot.lane.b32.xlu0 %v4426, 32
      %v4486 = vpop.permute.xlu0 %4485
      %4487 = vrot.lane.b32.xlu0 %v4428, 32
      %v4488 = vpop.permute.xlu0 %4487
      %4489 = vrot.lane.b32.xlu0 %v4430, 32
      %v4490 = vpop.permute.xlu0 %4489
      %4491 = vrot.lane.b32.xlu0 %v4432, 32
      %v4492 = vpop.permute.xlu0 %4491
      %4493 = vrot.lane.b32.xlu0 %v4434, 32
      %v4494 = vpop.permute.xlu0 %4493
      %4495 = vrot.lane.b32.xlu0 %v4436, 32
      %v4496 = vpop.permute.xlu0 %4495
      %4497 = vrot.lane.b32.xlu0 %v4438, 32
      %v4498 = vpop.permute.xlu0 %4497
      %4499 = vrot.lane.b32.xlu0 %v4440, 32
      %v4500 = vpop.permute.xlu0 %4499
      %4501 = vrot.lane.b32.xlu0 %v4442, 32
      %v4502 = vpop.permute.xlu0 %4501
      %4503 = vrot.lane.b32.xlu0 %v4444, 32
      %v4504 = vpop.permute.xlu0 %4503
      %4505 = vrot.lane.b32.xlu0 %v4446, 32
      %v4506 = vpop.permute.xlu0 %4505
      %4507 = vrot.lane.b32.xlu0 %v4448, 32
      %v4508 = vpop.permute.xlu0 %4507
      %4509 = vrot.lane.b32.xlu0 %v4450, 32
      %v4510 = vpop.permute.xlu0 %4509
      %4511 = vrot.lane.b32.xlu0 %v4452, 32
      %v4512 = vpop.permute.xlu0 %4511
      %4513 = vrot.lane.b32.xlu0 %v4454, 32
      %v4514 = vpop.permute.xlu0 %4513
      %4515 = vrot.lane.b32.xlu0 %v4456, 32
      %v4516 = vpop.permute.xlu0 %4515
      %v4557 = vrot.slane %v4378, 1
      %v4558 = vrot.slane %v4380, 1
      %v4559 = vsel %vm2761, %v4557, %v4558
      %v4560 = vrot.slane %v4382, 1
      %v4561 = vsel %vm2761, %v4558, %v4560
      %v4562 = vrot.slane %v4384, 1
      %v4563 = vsel %vm2761, %v4560, %v4562
      %v4564 = vrot.slane %v4386, 1
      %v4565 = vsel %vm2761, %v4562, %v4564
      %v4566 = vrot.slane %v4388, 1
      %v4567 = vsel %vm2761, %v4564, %v4566
      %v4568 = vrot.slane %v4390, 1
      %v4569 = vsel %vm2761, %v4566, %v4568
      %v4570 = vrot.slane %v4392, 1
      %v4571 = vsel %vm2761, %v4568, %v4570
      %v4572 = vrot.slane %v4394, 1
      %v4573 = vsel %vm2761, %v4570, %v4572
      %v4574 = vrot.slane %v4396, 1
      %v4575 = vsel %vm2761, %v4572, %v4574
      %v4576 = vrot.slane %v4398, 1
      %v4577 = vsel %vm2761, %v4574, %v4576
      %v4578 = vrot.slane %v4400, 1
      %v4579 = vsel %vm2761, %v4576, %v4578
      %v4580 = vrot.slane %v4402, 1
      %v4581 = vsel %vm2761, %v4578, %v4580
      %v4582 = vrot.slane %v4404, 1
      %v4583 = vsel %vm2761, %v4580, %v4582
      %v4584 = vrot.slane %v4406, 1
      %v4585 = vsel %vm2761, %v4582, %v4584
      %v4586 = vrot.slane %v4408, 1
      %v4587 = vsel %vm2761, %v4584, %v4586
      %v4588 = vrot.slane %v4410, 1
      %v4589 = vsel %vm2761, %v4586, %v4588
      %v4590 = vrot.slane %v4412, 1
      %v4591 = vsel %vm2761, %v4588, %v4590
      %v4592 = vrot.slane %v4414, 1
      %v4593 = vsel %vm2761, %v4590, %v4592
      %v4594 = vrot.slane %v4416, 1
      %v4595 = vsel %vm2761, %v4592, %v4594
      %4596 = vrot.lane.b32.xlu0 %v4559, 64
      %v4597 = vpop.permute.xlu0 %4596
      %4598 = vrot.lane.b32.xlu0 %v4561, 64
      %v4599 = vpop.permute.xlu0 %4598
      %4600 = vrot.lane.b32.xlu0 %v4563, 64
      %v4601 = vpop.permute.xlu0 %4600
      %4602 = vrot.lane.b32.xlu0 %v4565, 64
      %v4603 = vpop.permute.xlu0 %4602
      %4604 = vrot.lane.b32.xlu0 %v4567, 64
      %v4605 = vpop.permute.xlu0 %4604
      %4606 = vrot.lane.b32.xlu0 %v4569, 64
      %v4607 = vpop.permute.xlu0 %4606
      %4608 = vrot.lane.b32.xlu0 %v4571, 64
      %v4609 = vpop.permute.xlu0 %4608
      %4610 = vrot.lane.b32.xlu0 %v4573, 64
      %v4611 = vpop.permute.xlu0 %4610
      %4612 = vrot.lane.b32.xlu0 %v4575, 64
      %v4613 = vpop.permute.xlu0 %4612
      %4614 = vrot.lane.b32.xlu0 %v4577, 64
      %v4615 = vpop.permute.xlu0 %4614
      %4616 = vrot.lane.b32.xlu0 %v4579, 64
      %v4617 = vpop.permute.xlu0 %4616
      %4618 = vrot.lane.b32.xlu0 %v4581, 64
      %v4619 = vpop.permute.xlu0 %4618
      %4620 = vrot.lane.b32.xlu0 %v4583, 64
      %v4621 = vpop.permute.xlu0 %4620
      %4622 = vrot.lane.b32.xlu0 %v4585, 64
      %v4623 = vpop.permute.xlu0 %4622
      %4624 = vrot.lane.b32.xlu0 %v4587, 64
      %v4625 = vpop.permute.xlu0 %4624
      %4626 = vrot.lane.b32.xlu0 %v4589, 64
      %v4627 = vpop.permute.xlu0 %4626
      %4628 = vrot.lane.b32.xlu0 %v4591, 64
      %v4629 = vpop.permute.xlu0 %4628
      %4630 = vrot.lane.b32.xlu0 %v4593, 64
      %v4631 = vpop.permute.xlu0 %4630
      %4632 = vrot.lane.b32.xlu0 %v4595, 64
      %v4633 = vpop.permute.xlu0 %4632
      %4634 = vrot.lane.b32.xlu0 %v4594, 64
      %v4635 = vpop.permute.xlu0 %4634
      %v4656 = vsel %vm391, %v4378, %v4478
      %v4657 = vsel %vm391, %v4380, %v4480
      %v4658 = vsel %vm391, %v4382, %v4482
      %v4659 = vsel %vm391, %v4384, %v4484
      %v4660 = vsel %vm391, %v4386, %v4486
      %v4661 = vsel %vm391, %v4388, %v4488
      %v4662 = vsel %vm391, %v4390, %v4490
      %v4663 = vsel %vm391, %v4392, %v4492
      %v4664 = vsel %vm391, %v4394, %v4494
      %v4665 = vsel %vm391, %v4396, %v4496
      %v4666 = vsel %vm391, %v4398, %v4498
      %v4667 = vsel %vm391, %v4400, %v4500
      %v4668 = vsel %vm391, %v4402, %v4502
      %v4669 = vsel %vm391, %v4404, %v4504
      %v4670 = vsel %vm391, %v4406, %v4506
      %v4671 = vsel %vm391, %v4408, %v4508
      %v4672 = vsel %vm391, %v4410, %v4510
      %v4673 = vsel %vm391, %v4412, %v4512
      %v4674 = vsel %vm391, %v4414, %v4514
      %v4675 = vsel %vm391, %v4416, %v4516
      %v4676 = vsel %vm3001, %v4656, %v4597
      %v4677 = vsel %vm3001, %v4657, %v4599
      %v4678 = vsel %vm3001, %v4658, %v4601
      %v4679 = vsel %vm3001, %v4659, %v4603
      %v4680 = vsel %vm3001, %v4660, %v4605
      %v4681 = vsel %vm3001, %v4661, %v4607
      %v4682 = vsel %vm3001, %v4662, %v4609
      %v4683 = vsel %vm3001, %v4663, %v4611
      %v4684 = vsel %vm3001, %v4664, %v4613
      %v4685 = vsel %vm3001, %v4665, %v4615
      %v4686 = vsel %vm3001, %v4666, %v4617
      %v4687 = vsel %vm3001, %v4667, %v4619
      %v4688 = vsel %vm3001, %v4668, %v4621
      %v4689 = vsel %vm3001, %v4669, %v4623
      %v4690 = vsel %vm3001, %v4670, %v4625
      %v4691 = vsel %vm3001, %v4671, %v4627
      %v4692 = vsel %vm3001, %v4672, %v4629
      %v4693 = vsel %vm3001, %v4673, %v4631
      %v4694 = vsel %vm3001, %v4674, %v4633
      %v4695 = vsel %vm3001, %v4675, %v4635
      %v4696 = vpack.c.bf16 %v4677, %v4676
      %v4697 = vpack.c.bf16 %v4679, %v4678
      %v4698 = vpack.c.bf16 %v4681, %v4680
      %v4699 = vpack.c.bf16 %v4683, %v4682
      %v4700 = vpack.c.bf16 %v4685, %v4684
      %v4701 = vpack.c.bf16 %v4687, %v4686
      %v4702 = vpack.c.bf16 %v4689, %v4688
      %v4703 = vpack.c.bf16 %v4691, %v4690
      %v4704 = vpack.c.bf16 %v4693, %v4692
      %v4705 = vpack.c.bf16 %v4695, %v4694
      %s4706 = scalar_lea.vmem %s1, 48
      %v4707 = vld [vmem:[%s4706] sm:$0xf]
      %v4708 = vld [vmem:[%s4706 + $0x4] sm:$0xf]
      %v4709 = vld [vmem:[%s4706 + $0x8] sm:$0xf]
      %v4710 = vld [vmem:[%s4706 + $0xc] sm:$0xf]
      %v4711 = vld [vmem:[%s4706 + $0x10] sm:$0xf]
      %v4712 = vld [vmem:[%s4706 + $0x14] sm:$0xf]
      %v4713 = vld [vmem:[%s4706 + $0x18] sm:$0xf]
      %v4714 = vld [vmem:[%s4706 + $0x1c] sm:$0xf]
      %v4715 = vld [vmem:[%s4706 + $0x20] sm:$0xf]
      %v4716 = vld [vmem:[%s4706 + $0x24] sm:$0xf]
      %v4717 = vld [vmem:[%s4706 + $0x28] sm:$0xf]
      %v4718 = vld [vmem:[%s4706 + $0x2c] sm:$0xf]
      %s4719 = scalar_lea.vmem %s2, 16
      %v4720 = vld [vmem:[%s4719] sm:$0xff]
      %v4721 = vlaneseq
      %v4722 = vshrl.u32 %v4721, 7
      %v4723 = vsub.s32 0, %v4722
      %v4724 = vrot.slane %v4720, %v4723
      %v4737 = vunpack.c.l.b16 %v4707
      %v4738 = vunpack.c.l.b16 %v4708
      %v4739 = vunpack.c.l.b16 %v4709
      %v4740 = vunpack.c.l.b16 %v4710
      %v4741 = vunpack.c.l.b16 %v4711
      %v4742 = vunpack.c.l.b16 %v4712
      %v4743 = vunpack.c.l.b16 %v4713
      %v4744 = vunpack.c.l.b16 %v4714
      %v4745 = vunpack.c.l.b16 %v4715
      %v4746 = vunpack.c.l.b16 %v4716
      %v4747 = vunpack.c.l.b16 %v4717
      %v4748 = vunpack.c.l.b16 %v4718
      %v4749 = vpack.c.b16 %v4738, %v4737
      %v4750 = vpack.c.b16 %v4740, %v4739
      %v4751 = vpack.c.b16 %v4742, %v4741
      %v4752 = vpack.c.b16 %v4744, %v4743
      %v4753 = vpack.c.b16 %v4746, %v4745
      %v4754 = vpack.c.b16 %v4748, %v4747
      %v4762 = vsel %vm3116, %v4696, 0
      %v4765 = vsel %vm3116, %v4697, 0
      %v4768 = vsel %vm3116, %v4698, 0
      %v4771 = vsel %vm3116, %v4699, 0
      %v4774 = vsel %vm3116, %v4700, 0
      %v4777 = vsel %vm3116, %v4701, 0
      %v4780 = vsel %vm3116, %v4702, 0
      %v4783 = vsel %vm3116, %v4703, 0
      %v4786 = vsel %vm3116, %v4704, 0
      %v4789 = vsel %vm3116, %v4705, 0
      %4791 = vmatprep.subr.bf16.mxu0 0
      %4792 = vmatpush1.bf16.msra.mxu0 0
      %4793 = vmatprep.subr.bf16.mxu0 0
      %4794 = vmatpush1.bf16.msra.mxu0 0
      %4795 = vmatprep.subr.bf16.mxu0 0
      %4796 = vmatpush1.bf16.msra.mxu0 %v4754
      %4797 = vmatprep.subr.bf16.mxu0 0
      %4798 = vmatpush1.bf16.msra.mxu0 %v4753
      %4799 = vmatprep.subr.bf16.mxu0 0
      %4800 = vmatpush1.bf16.msra.mxu0 %v4752
      %4801 = vmatprep.subr.bf16.mxu0 0
      %4802 = vmatpush1.bf16.msra.mxu0 %v4751
      %4803 = vmatprep.subr.bf16.mxu0 0
      %4804 = vmatpush1.bf16.msra.mxu0 %v4750
      %4805 = vmatprep.subr.bf16.mxu0 0
      %4806 = vmatpush1.bf16.msra.mxu0 %v4749
      %4807 = vmatprep.subr.bf16.mxu0 0
      %4808 = vmatpush2.bf16.msra.mxu0 0
      %4809 = vmatprep.subr.bf16.mxu0 0
      %4810 = vmatpush2.bf16.msra.mxu0 0
      %4811 = vmatprep.subr.bf16.mxu0 0
      %4812 = vmatpush2.bf16.msra.mxu0 0
      %4813 = vmatprep.subr.bf16.mxu0 0
      %4814 = vmatpush2.bf16.msra.mxu0 0
      %4815 = vmatprep.subr.bf16.mxu0 0
      %4816 = vmatpush2.bf16.msra.mxu0 0
      %4817 = vmatprep.subr.bf16.mxu0 0
      %4818 = vmatpush2.bf16.msra.mxu0 0
      %4819 = vmatprep.subr.bf16.mxu0 0
      %4820 = vmatpush2.bf16.msra.mxu0 0
      %4821 = vmatprep.subr.bf16.mxu0 0
      %4822 = vmatpush2.bf16.msra.mxu0 0
      %4823 = vmatprep.mubr.bf16.mxu0 0
      %4824 = vmatmul.mubr.bf16.gmra.mxu0 %v4762
      %v4825 = vpop.f32.mrf.mxu0
      %v4826 = vadd.f32 %v4724, %v4825
      %v4827 = vpop.f32.mrf.mxu0
      %v4828 = vpop.f32.mrf.mxu0
      %v4829 = vadd.f32 %v4724, %v4828
      %v4830 = vpop.f32.mrf.mxu0
      %4831 = vmatprep.mubr.bf16.mxu0 0
      %4832 = vmatmul.mubr.bf16.gmra.mxu0 %v4765
      %v4833 = vpop.f32.mrf.mxu0
      %v4834 = vadd.f32 %v4724, %v4833
      %v4835 = vpop.f32.mrf.mxu0
      %v4836 = vpop.f32.mrf.mxu0
      %v4837 = vadd.f32 %v4724, %v4836
      %v4838 = vpop.f32.mrf.mxu0
      %4839 = vmatprep.mubr.bf16.mxu0 0
      %4840 = vmatmul.mubr.bf16.gmra.mxu0 %v4768
      %v4841 = vpop.f32.mrf.mxu0
      %v4842 = vadd.f32 %v4724, %v4841
      %v4843 = vpop.f32.mrf.mxu0
      %v4844 = vpop.f32.mrf.mxu0
      %v4845 = vadd.f32 %v4724, %v4844
      %v4846 = vpop.f32.mrf.mxu0
      %4847 = vmatprep.mubr.bf16.mxu0 0
      %4848 = vmatmul.mubr.bf16.gmra.mxu0 %v4771
      %v4849 = vpop.f32.mrf.mxu0
      %v4850 = vadd.f32 %v4724, %v4849
      %v4851 = vpop.f32.mrf.mxu0
      %v4852 = vpop.f32.mrf.mxu0
      %v4853 = vadd.f32 %v4724, %v4852
      %v4854 = vpop.f32.mrf.mxu0
      %4855 = vmatprep.mubr.bf16.mxu0 0
      %4856 = vmatmul.mubr.bf16.gmra.mxu0 %v4774
      %v4857 = vpop.f32.mrf.mxu0
      %v4858 = vadd.f32 %v4724, %v4857
      %v4859 = vpop.f32.mrf.mxu0
      %v4860 = vpop.f32.mrf.mxu0
      %v4861 = vadd.f32 %v4724, %v4860
      %v4862 = vpop.f32.mrf.mxu0
      %4863 = vmatprep.mubr.bf16.mxu0 0
      %4864 = vmatmul.mubr.bf16.gmra.mxu0 %v4777
      %v4865 = vpop.f32.mrf.mxu0
      %v4866 = vadd.f32 %v4724, %v4865
      %v4867 = vpop.f32.mrf.mxu0
      %v4868 = vpop.f32.mrf.mxu0
      %v4869 = vadd.f32 %v4724, %v4868
      %v4870 = vpop.f32.mrf.mxu0
      %4871 = vmatprep.mubr.bf16.mxu0 0
      %4872 = vmatmul.mubr.bf16.gmra.mxu0 %v4780
      %v4873 = vpop.f32.mrf.mxu0
      %v4874 = vadd.f32 %v4724, %v4873
      %v4875 = vpop.f32.mrf.mxu0
      %v4876 = vpop.f32.mrf.mxu0
      %v4877 = vadd.f32 %v4724, %v4876
      %v4878 = vpop.f32.mrf.mxu0
      %4879 = vmatprep.mubr.bf16.mxu0 0
      %4880 = vmatmul.mubr.bf16.gmra.mxu0 %v4783
      %v4881 = vpop.f32.mrf.mxu0
      %v4882 = vadd.f32 %v4724, %v4881
      %v4883 = vpop.f32.mrf.mxu0
      %v4884 = vpop.f32.mrf.mxu0
      %v4885 = vadd.f32 %v4724, %v4884
      %v4886 = vpop.f32.mrf.mxu0
      %4887 = vmatprep.mubr.bf16.mxu0 0
      %4888 = vmatmul.mubr.bf16.gmra.mxu0 %v4786
      %v4889 = vpop.f32.mrf.mxu0
      %v4890 = vadd.f32 %v4724, %v4889
      %v4891 = vpop.f32.mrf.mxu0
      %v4892 = vpop.f32.mrf.mxu0
      %v4893 = vadd.f32 %v4724, %v4892
      %v4894 = vpop.f32.mrf.mxu0
      %4895 = vmatprep.mubr.bf16.mxu0 0
      %4896 = vmatmul.mubr.bf16.gmra.mxu0 %v4789
      %v4897 = vpop.f32.mrf.mxu0
      %v4898 = vadd.f32 %v4724, %v4897
      %v4899 = vpop.f32.mrf.mxu0
      %v4900 = vpop.f32.mrf.mxu0
      %v4901 = vadd.f32 %v4724, %v4900
      %v4902 = vpop.f32.mrf.mxu0
      %4903 = vdwg.mxu0
      %v4904 = vsel %vm391, %v4826, 0.0
      %4905 = vadd.xlane.f32.xlu0 %v4904
      %v4906 = vpop.xlane.xlu0 %4905
      %v4907 = vsel %vm391, %v4829, 0.0
      %4908 = vadd.xlane.f32.xlu0 %v4907
      %v4909 = vpop.xlane.xlu0 %4908
      %v4910 = vsel %vm391, %v4834, 0.0
      %4911 = vadd.xlane.f32.xlu0 %v4910
      %v4912 = vpop.xlane.xlu0 %4911
      %v4913 = vsel %vm391, %v4837, 0.0
      %4914 = vadd.xlane.f32.xlu0 %v4913
      %v4915 = vpop.xlane.xlu0 %4914
      %v4916 = vsel %vm391, %v4842, 0.0
      %4917 = vadd.xlane.f32.xlu0 %v4916
      %v4918 = vpop.xlane.xlu0 %4917
      %v4919 = vsel %vm391, %v4845, 0.0
      %4920 = vadd.xlane.f32.xlu0 %v4919
      %v4921 = vpop.xlane.xlu0 %4920
      %v4922 = vsel %vm391, %v4850, 0.0
      %4923 = vadd.xlane.f32.xlu0 %v4922
      %v4924 = vpop.xlane.xlu0 %4923
      %v4925 = vsel %vm391, %v4853, 0.0
      %4926 = vadd.xlane.f32.xlu0 %v4925
      %v4927 = vpop.xlane.xlu0 %4926
      %v4928 = vsel %vm391, %v4858, 0.0
      %4929 = vadd.xlane.f32.xlu0 %v4928
      %v4930 = vpop.xlane.xlu0 %4929
      %v4931 = vsel %vm391, %v4861, 0.0
      %4932 = vadd.xlane.f32.xlu0 %v4931
      %v4933 = vpop.xlane.xlu0 %4932
      %v4934 = vsel %vm391, %v4866, 0.0
      %4935 = vadd.xlane.f32.xlu0 %v4934
      %v4936 = vpop.xlane.xlu0 %4935
      %v4937 = vsel %vm391, %v4869, 0.0
      %4938 = vadd.xlane.f32.xlu0 %v4937
      %v4939 = vpop.xlane.xlu0 %4938
      %v4940 = vsel %vm391, %v4874, 0.0
      %4941 = vadd.xlane.f32.xlu0 %v4940
      %v4942 = vpop.xlane.xlu0 %4941
      %v4943 = vsel %vm391, %v4877, 0.0
      %4944 = vadd.xlane.f32.xlu0 %v4943
      %v4945 = vpop.xlane.xlu0 %4944
      %v4946 = vsel %vm391, %v4882, 0.0
      %4947 = vadd.xlane.f32.xlu0 %v4946
      %v4948 = vpop.xlane.xlu0 %4947
      %v4949 = vsel %vm391, %v4885, 0.0
      %4950 = vadd.xlane.f32.xlu0 %v4949
      %v4951 = vpop.xlane.xlu0 %4950
      %v4952 = vsel %vm391, %v4890, 0.0
      %4953 = vadd.xlane.f32.xlu0 %v4952
      %v4954 = vpop.xlane.xlu0 %4953
      %v4955 = vsel %vm391, %v4893, 0.0
      %4956 = vadd.xlane.f32.xlu0 %v4955
      %v4957 = vpop.xlane.xlu0 %4956
      %v4958 = vsel %vm391, %v4898, 0.0
      %4959 = vadd.xlane.f32.xlu0 %v4958
      %v4960 = vpop.xlane.xlu0 %4959
      %v4961 = vsel %vm629, %v4901, 0.0
      %4962 = vadd.xlane.f32.xlu0 %v4961
      %v4963 = vpop.xlane.xlu0 %4962
      %v4964 = vmul.f32 %v4906, %v633
      %v4965 = vmul.f32 %v4909, %v633
      %v4966 = vmul.f32 %v4912, %v633
      %v4967 = vmul.f32 %v4915, %v633
      %v4968 = vmul.f32 %v4918, %v633
      %v4969 = vmul.f32 %v4921, %v633
      %v4970 = vmul.f32 %v4924, %v633
      %v4971 = vmul.f32 %v4927, %v633
      %v4972 = vmul.f32 %v4930, %v633
      %v4973 = vmul.f32 %v4933, %v633
      %v4974 = vmul.f32 %v4936, %v633
      %v4975 = vmul.f32 %v4939, %v633
      %v4976 = vmul.f32 %v4942, %v633
      %v4977 = vmul.f32 %v4945, %v633
      %v4978 = vmul.f32 %v4948, %v633
      %v4979 = vmul.f32 %v4951, %v633
      %v4980 = vmul.f32 %v4954, %v633
      %v4981 = vmul.f32 %v4957, %v633
      %v4982 = vmul.f32 %v4960, %v633
      %v4983 = vmul.f32 %v4963, %v633
      %v4984 = vsub.f32 %v4826, %v4964
      %v4985 = vsub.f32 %v4829, %v4965
      %v4986 = vsub.f32 %v4834, %v4966
      %v4987 = vsub.f32 %v4837, %v4967
      %v4988 = vsub.f32 %v4842, %v4968
      %v4989 = vsub.f32 %v4845, %v4969
      %v4990 = vsub.f32 %v4850, %v4970
      %v4991 = vsub.f32 %v4853, %v4971
      %v4992 = vsub.f32 %v4858, %v4972
      %v4993 = vsub.f32 %v4861, %v4973
      %v4994 = vsub.f32 %v4866, %v4974
      %v4995 = vsub.f32 %v4869, %v4975
      %v4996 = vsub.f32 %v4874, %v4976
      %v4997 = vsub.f32 %v4877, %v4977
      %v4998 = vsub.f32 %v4882, %v4978
      %v4999 = vsub.f32 %v4885, %v4979
      %v5000 = vsub.f32 %v4890, %v4980
      %v5001 = vsub.f32 %v4893, %v4981
      %v5002 = vsub.f32 %v4898, %v4982
      %v5003 = vsub.f32 %v4901, %v4983
      %v5004 = vmul.f32 %v4984, %v4984
      %v5005 = vmul.f32 %v4985, %v4985
      %v5006 = vmul.f32 %v4986, %v4986
      %v5007 = vmul.f32 %v4987, %v4987
      %v5008 = vmul.f32 %v4988, %v4988
      %v5009 = vmul.f32 %v4989, %v4989
      %v5010 = vmul.f32 %v4990, %v4990
      %v5011 = vmul.f32 %v4991, %v4991
      %v5012 = vmul.f32 %v4992, %v4992
      %v5013 = vmul.f32 %v4993, %v4993
      %v5014 = vmul.f32 %v4994, %v4994
      %v5015 = vmul.f32 %v4995, %v4995
      %v5016 = vmul.f32 %v4996, %v4996
      %v5017 = vmul.f32 %v4997, %v4997
      %v5018 = vmul.f32 %v4998, %v4998
      %v5019 = vmul.f32 %v4999, %v4999
      %v5020 = vmul.f32 %v5000, %v5000
      %v5021 = vmul.f32 %v5001, %v5001
      %v5022 = vmul.f32 %v5002, %v5002
      %v5023 = vmul.f32 %v5003, %v5003
      %v5024 = vsel %vm391, %v5004, 0.0
      %5025 = vadd.xlane.f32.xlu0 %v5024
      %v5026 = vpop.xlane.xlu0 %5025
      %v5027 = vsel %vm391, %v5005, 0.0
      %5028 = vadd.xlane.f32.xlu0 %v5027
      %v5029 = vpop.xlane.xlu0 %5028
      %v5030 = vsel %vm391, %v5006, 0.0
      %5031 = vadd.xlane.f32.xlu0 %v5030
      %v5032 = vpop.xlane.xlu0 %5031
      %v5033 = vsel %vm391, %v5007, 0.0
      %5034 = vadd.xlane.f32.xlu0 %v5033
      %v5035 = vpop.xlane.xlu0 %5034
      %v5036 = vsel %vm391, %v5008, 0.0
      %5037 = vadd.xlane.f32.xlu0 %v5036
      %v5038 = vpop.xlane.xlu0 %5037
      %v5039 = vsel %vm391, %v5009, 0.0
      %5040 = vadd.xlane.f32.xlu0 %v5039
      %v5041 = vpop.xlane.xlu0 %5040
      %v5042 = vsel %vm391, %v5010, 0.0
      %5043 = vadd.xlane.f32.xlu0 %v5042
      %v5044 = vpop.xlane.xlu0 %5043
      %v5045 = vsel %vm391, %v5011, 0.0
      %5046 = vadd.xlane.f32.xlu0 %v5045
      %v5047 = vpop.xlane.xlu0 %5046
      %v5048 = vsel %vm391, %v5012, 0.0
      %5049 = vadd.xlane.f32.xlu0 %v5048
      %v5050 = vpop.xlane.xlu0 %5049
      %v5051 = vsel %vm391, %v5013, 0.0
      %5052 = vadd.xlane.f32.xlu0 %v5051
      %v5053 = vpop.xlane.xlu0 %5052
      %v5054 = vsel %vm391, %v5014, 0.0
      %5055 = vadd.xlane.f32.xlu0 %v5054
      %v5056 = vpop.xlane.xlu0 %5055
      %v5057 = vsel %vm391, %v5015, 0.0
      %5058 = vadd.xlane.f32.xlu0 %v5057
      %v5059 = vpop.xlane.xlu0 %5058
      %v5060 = vsel %vm391, %v5016, 0.0
      %5061 = vadd.xlane.f32.xlu0 %v5060
      %v5062 = vpop.xlane.xlu0 %5061
      %v5063 = vsel %vm391, %v5017, 0.0
      %5064 = vadd.xlane.f32.xlu0 %v5063
      %v5065 = vpop.xlane.xlu0 %5064
      %v5066 = vsel %vm391, %v5018, 0.0
      %5067 = vadd.xlane.f32.xlu0 %v5066
      %v5068 = vpop.xlane.xlu0 %5067
      %v5069 = vsel %vm391, %v5019, 0.0
      %5070 = vadd.xlane.f32.xlu0 %v5069
      %v5071 = vpop.xlane.xlu0 %5070
      %v5072 = vsel %vm391, %v5020, 0.0
      %5073 = vadd.xlane.f32.xlu0 %v5072
      %v5074 = vpop.xlane.xlu0 %5073
      %v5075 = vsel %vm391, %v5021, 0.0
      %5076 = vadd.xlane.f32.xlu0 %v5075
      %v5077 = vpop.xlane.xlu0 %5076
      %v5078 = vsel %vm391, %v5022, 0.0
      %5079 = vadd.xlane.f32.xlu0 %v5078
      %v5080 = vpop.xlane.xlu0 %5079
      %v5081 = vsel %vm629, %v5023, 0.0
      %5082 = vadd.xlane.f32.xlu0 %v5081
      %v5083 = vpop.xlane.xlu0 %5082
      %v5084 = vmul.f32 %v5026, %v633
      %v5085 = vmul.f32 %v5029, %v633
      %v5086 = vmul.f32 %v5032, %v633
      %v5087 = vmul.f32 %v5035, %v633
      %v5088 = vmul.f32 %v5038, %v633
      %v5089 = vmul.f32 %v5041, %v633
      %v5090 = vmul.f32 %v5044, %v633
      %v5091 = vmul.f32 %v5047, %v633
      %v5092 = vmul.f32 %v5050, %v633
      %v5093 = vmul.f32 %v5053, %v633
      %v5094 = vmul.f32 %v5056, %v633
      %v5095 = vmul.f32 %v5059, %v633
      %v5096 = vmul.f32 %v5062, %v633
      %v5097 = vmul.f32 %v5065, %v633
      %v5098 = vmul.f32 %v5068, %v633
      %v5099 = vmul.f32 %v5071, %v633
      %v5100 = vmul.f32 %v5074, %v633
      %v5101 = vmul.f32 %v5077, %v633
      %v5102 = vmul.f32 %v5080, %v633
      %v5103 = vmul.f32 %v5083, %v633
      %v5104 = vadd.f32 %v5084, 1e-05
      %v5105 = vadd.f32 %v5085, 1e-05
      %v5106 = vadd.f32 %v5086, 1e-05
      %v5107 = vadd.f32 %v5087, 1e-05
      %v5108 = vadd.f32 %v5088, 1e-05
      %v5109 = vadd.f32 %v5089, 1e-05
      %v5110 = vadd.f32 %v5090, 1e-05
      %v5111 = vadd.f32 %v5091, 1e-05
      %v5112 = vadd.f32 %v5092, 1e-05
      %v5113 = vadd.f32 %v5093, 1e-05
      %v5114 = vadd.f32 %v5094, 1e-05
      %v5115 = vadd.f32 %v5095, 1e-05
      %v5116 = vadd.f32 %v5096, 1e-05
      %v5117 = vadd.f32 %v5097, 1e-05
      %v5118 = vadd.f32 %v5098, 1e-05
      %v5119 = vadd.f32 %v5099, 1e-05
      %v5120 = vadd.f32 %v5100, 1e-05
      %v5121 = vadd.f32 %v5101, 1e-05
      %v5122 = vadd.f32 %v5102, 1e-05
      %v5123 = vadd.f32 %v5103, 1e-05
      %v5124 = vrsqrt.pop %v5104
      %v5125 = vrsqrt.pop %v5105
      %v5126 = vrsqrt.pop %v5106
      %v5127 = vrsqrt.pop %v5107
      %v5128 = vrsqrt.pop %v5108
      %v5129 = vrsqrt.pop %v5109
      %v5130 = vrsqrt.pop %v5110
      %v5131 = vrsqrt.pop %v5111
      %v5132 = vrsqrt.pop %v5112
      %v5133 = vrsqrt.pop %v5113
      %v5134 = vrsqrt.pop %v5114
      %v5135 = vrsqrt.pop %v5115
      %v5136 = vrsqrt.pop %v5116
      %v5137 = vrsqrt.pop %v5117
      %v5138 = vrsqrt.pop %v5118
      %v5139 = vrsqrt.pop %v5119
      %v5140 = vrsqrt.pop %v5120
      %v5141 = vrsqrt.pop %v5121
      %v5142 = vrsqrt.pop %v5122
      %v5143 = vrsqrt.pop %v5123
      %v5144 = vmul.f32 %v4984, %v5124
      %v5145 = vmul.f32 %v4985, %v5125
      %v5146 = vmul.f32 %v4986, %v5126
      %v5147 = vmul.f32 %v4987, %v5127
      %v5148 = vmul.f32 %v4988, %v5128
      %v5149 = vmul.f32 %v4989, %v5129
      %v5150 = vmul.f32 %v4990, %v5130
      %v5151 = vmul.f32 %v4991, %v5131
      %v5152 = vmul.f32 %v4992, %v5132
      %v5153 = vmul.f32 %v4993, %v5133
      %v5154 = vmul.f32 %v4994, %v5134
      %v5155 = vmul.f32 %v4995, %v5135
      %v5156 = vmul.f32 %v4996, %v5136
      %v5157 = vmul.f32 %v4997, %v5137
      %v5158 = vmul.f32 %v4998, %v5138
      %v5159 = vmul.f32 %v4999, %v5139
      %v5160 = vmul.f32 %v5000, %v5140
      %v5161 = vmul.f32 %v5001, %v5141
      %v5162 = vmul.f32 %v5002, %v5142
      %v5163 = vmul.f32 %v5003, %v5143
      %v5164 = vlaneseq
      %v5165 = vshrl.u32 %v5164, 7
      %v5166 = vsub.s32 1, %v5165
      %v5167 = vrot.slane %v4720, %v5166
      %v5168 = vmul.f32 %v5144, %v5167
      %v5169 = vmul.f32 %v5145, %v5167
      %v5170 = vmul.f32 %v5146, %v5167
      %v5171 = vmul.f32 %v5147, %v5167
      %v5172 = vmul.f32 %v5148, %v5167
      %v5173 = vmul.f32 %v5149, %v5167
      %v5174 = vmul.f32 %v5150, %v5167
      %v5175 = vmul.f32 %v5151, %v5167
      %v5176 = vmul.f32 %v5152, %v5167
      %v5177 = vmul.f32 %v5153, %v5167
      %v5178 = vmul.f32 %v5154, %v5167
      %v5179 = vmul.f32 %v5155, %v5167
      %v5180 = vmul.f32 %v5156, %v5167
      %v5181 = vmul.f32 %v5157, %v5167
      %v5182 = vmul.f32 %v5158, %v5167
      %v5183 = vmul.f32 %v5159, %v5167
      %v5184 = vmul.f32 %v5160, %v5167
      %v5185 = vmul.f32 %v5161, %v5167
      %v5186 = vmul.f32 %v5162, %v5167
      %v5187 = vmul.f32 %v5163, %v5167
      %v5188 = vlaneseq
      %v5189 = vshrl.u32 %v5188, 7
      %v5190 = vsub.s32 2, %v5189
      %v5191 = vrot.slane %v4720, %v5190
      %v5192 = vadd.f32 %v5168, %v5191
      %v5193 = vadd.f32 %v5169, %v5191
      %v5194 = vadd.f32 %v5170, %v5191
      %v5195 = vadd.f32 %v5171, %v5191
      %v5196 = vadd.f32 %v5172, %v5191
      %v5197 = vadd.f32 %v5173, %v5191
      %v5198 = vadd.f32 %v5174, %v5191
      %v5199 = vadd.f32 %v5175, %v5191
      %v5200 = vadd.f32 %v5176, %v5191
      %v5201 = vadd.f32 %v5177, %v5191
      %v5202 = vadd.f32 %v5178, %v5191
      %v5203 = vadd.f32 %v5179, %v5191
      %v5204 = vadd.f32 %v5180, %v5191
      %v5205 = vadd.f32 %v5181, %v5191
      %v5206 = vadd.f32 %v5182, %v5191
      %v5207 = vadd.f32 %v5183, %v5191
      %v5208 = vadd.f32 %v5184, %v5191
      %v5209 = vadd.f32 %v5185, %v5191
      %v5210 = vadd.f32 %v5186, %v5191
      %v5211 = vadd.f32 %v5187, %v5191
      %v5212 = vmul.f32 %v5192, %v5192
      %v5213 = vmul.f32 %v5193, %v5193
      %v5214 = vmul.f32 %v5194, %v5194
      %v5215 = vmul.f32 %v5195, %v5195
      %v5216 = vmul.f32 %v5196, %v5196
      %v5217 = vmul.f32 %v5197, %v5197
      %v5218 = vmul.f32 %v5198, %v5198
      %v5219 = vmul.f32 %v5199, %v5199
      %v5220 = vmul.f32 %v5200, %v5200
      %v5221 = vmul.f32 %v5201, %v5201
      %v5222 = vmul.f32 %v5202, %v5202
      %v5223 = vmul.f32 %v5203, %v5203
      %v5224 = vmul.f32 %v5204, %v5204
      %v5225 = vmul.f32 %v5205, %v5205
      %v5226 = vmul.f32 %v5206, %v5206
      %v5227 = vmul.f32 %v5207, %v5207
      %v5228 = vmul.f32 %v5208, %v5208
      %v5229 = vmul.f32 %v5209, %v5209
      %v5230 = vmul.f32 %v5210, %v5210
      %v5231 = vmul.f32 %v5211, %v5211
      %v5232 = vmul.f32 %v5192, %v5212
      %v5233 = vmul.f32 %v5193, %v5213
      %v5234 = vmul.f32 %v5194, %v5214
      %v5235 = vmul.f32 %v5195, %v5215
      %v5236 = vmul.f32 %v5196, %v5216
      %v5237 = vmul.f32 %v5197, %v5217
      %v5238 = vmul.f32 %v5198, %v5218
      %v5239 = vmul.f32 %v5199, %v5219
      %v5240 = vmul.f32 %v5200, %v5220
      %v5241 = vmul.f32 %v5201, %v5221
      %v5242 = vmul.f32 %v5202, %v5222
      %v5243 = vmul.f32 %v5203, %v5223
      %v5244 = vmul.f32 %v5204, %v5224
      %v5245 = vmul.f32 %v5205, %v5225
      %v5246 = vmul.f32 %v5206, %v5226
      %v5247 = vmul.f32 %v5207, %v5227
      %v5248 = vmul.f32 %v5208, %v5228
      %v5249 = vmul.f32 %v5209, %v5229
      %v5250 = vmul.f32 %v5210, %v5230
      %v5251 = vmul.f32 %v5211, %v5231
      %v5252 = vmul.f32 %v5232, 0.044715
      %v5253 = vmul.f32 %v5233, 0.044715
      %v5254 = vmul.f32 %v5234, 0.044715
      %v5255 = vmul.f32 %v5235, 0.044715
      %v5256 = vmul.f32 %v5236, 0.044715
      %v5257 = vmul.f32 %v5237, 0.044715
      %v5258 = vmul.f32 %v5238, 0.044715
      %v5259 = vmul.f32 %v5239, 0.044715
      %v5260 = vmul.f32 %v5240, 0.044715
      %v5261 = vmul.f32 %v5241, 0.044715
      %v5262 = vmul.f32 %v5242, 0.044715
      %v5263 = vmul.f32 %v5243, 0.044715
      %v5264 = vmul.f32 %v5244, 0.044715
      %v5265 = vmul.f32 %v5245, 0.044715
      %v5266 = vmul.f32 %v5246, 0.044715
      %v5267 = vmul.f32 %v5247, 0.044715
      %v5268 = vmul.f32 %v5248, 0.044715
      %v5269 = vmul.f32 %v5249, 0.044715
      %v5270 = vmul.f32 %v5250, 0.044715
      %v5271 = vmul.f32 %v5251, 0.044715
      %v5272 = vadd.f32 %v5192, %v5252
      %v5273 = vadd.f32 %v5193, %v5253
      %v5274 = vadd.f32 %v5194, %v5254
      %v5275 = vadd.f32 %v5195, %v5255
      %v5276 = vadd.f32 %v5196, %v5256
      %v5277 = vadd.f32 %v5197, %v5257
      %v5278 = vadd.f32 %v5198, %v5258
      %v5279 = vadd.f32 %v5199, %v5259
      %v5280 = vadd.f32 %v5200, %v5260
      %v5281 = vadd.f32 %v5201, %v5261
      %v5282 = vadd.f32 %v5202, %v5262
      %v5283 = vadd.f32 %v5203, %v5263
      %v5284 = vadd.f32 %v5204, %v5264
      %v5285 = vadd.f32 %v5205, %v5265
      %v5286 = vadd.f32 %v5206, %v5266
      %v5287 = vadd.f32 %v5207, %v5267
      %v5288 = vadd.f32 %v5208, %v5268
      %v5289 = vadd.f32 %v5209, %v5269
      %v5290 = vadd.f32 %v5210, %v5270
      %v5291 = vadd.f32 %v5211, %v5271
      %v5292 = vmul.f32 %v5272, 0.7978846
      %v5293 = vmul.f32 %v5273, 0.7978846
      %v5294 = vmul.f32 %v5274, 0.7978846
      %v5295 = vmul.f32 %v5275, 0.7978846
      %v5296 = vmul.f32 %v5276, 0.7978846
      %v5297 = vmul.f32 %v5277, 0.7978846
      %v5298 = vmul.f32 %v5278, 0.7978846
      %v5299 = vmul.f32 %v5279, 0.7978846
      %v5300 = vmul.f32 %v5280, 0.7978846
      %v5301 = vmul.f32 %v5281, 0.7978846
      %v5302 = vmul.f32 %v5282, 0.7978846
      %v5303 = vmul.f32 %v5283, 0.7978846
      %v5304 = vmul.f32 %v5284, 0.7978846
      %v5305 = vmul.f32 %v5285, 0.7978846
      %v5306 = vmul.f32 %v5286, 0.7978846
      %v5307 = vmul.f32 %v5287, 0.7978846
      %v5308 = vmul.f32 %v5288, 0.7978846
      %v5309 = vmul.f32 %v5289, 0.7978846
      %v5310 = vmul.f32 %v5290, 0.7978846
      %v5311 = vmul.f32 %v5291, 0.7978846
      %v5312 = vtanh.pop %v5292
      %v5313 = vtanh.pop %v5293
      %v5314 = vtanh.pop %v5294
      %v5315 = vtanh.pop %v5295
      %v5316 = vtanh.pop %v5296
      %v5317 = vtanh.pop %v5297
      %v5318 = vtanh.pop %v5298
      %v5319 = vtanh.pop %v5299
      %v5320 = vtanh.pop %v5300
      %v5321 = vtanh.pop %v5301
      %v5322 = vtanh.pop %v5302
      %v5323 = vtanh.pop %v5303
      %v5324 = vtanh.pop %v5304
      %v5325 = vtanh.pop %v5305
      %v5326 = vtanh.pop %v5306
      %v5327 = vtanh.pop %v5307
      %v5328 = vtanh.pop %v5308
      %v5329 = vtanh.pop %v5309
      %v5330 = vtanh.pop %v5310
      %v5331 = vtanh.pop %v5311
      %v5332 = vadd.f32 %v5312, 1.0
      %v5333 = vadd.f32 %v5313, 1.0
      %v5334 = vadd.f32 %v5314, 1.0
      %v5335 = vadd.f32 %v5315, 1.0
      %v5336 = vadd.f32 %v5316, 1.0
      %v5337 = vadd.f32 %v5317, 1.0
      %v5338 = vadd.f32 %v5318, 1.0
      %v5339 = vadd.f32 %v5319, 1.0
      %v5340 = vadd.f32 %v5320, 1.0
      %v5341 = vadd.f32 %v5321, 1.0
      %v5342 = vadd.f32 %v5322, 1.0
      %v5343 = vadd.f32 %v5323, 1.0
      %v5344 = vadd.f32 %v5324, 1.0
      %v5345 = vadd.f32 %v5325, 1.0
      %v5346 = vadd.f32 %v5326, 1.0
      %v5347 = vadd.f32 %v5327, 1.0
      %v5348 = vadd.f32 %v5328, 1.0
      %v5349 = vadd.f32 %v5329, 1.0
      %v5350 = vadd.f32 %v5330, 1.0
      %v5351 = vadd.f32 %v5331, 1.0
      %v5352 = vmul.f32 %v5332, 0.5
      %v5353 = vmul.f32 %v5333, 0.5
      %v5354 = vmul.f32 %v5334, 0.5
      %v5355 = vmul.f32 %v5335, 0.5
      %v5356 = vmul.f32 %v5336, 0.5
      %v5357 = vmul.f32 %v5337, 0.5
      %v5358 = vmul.f32 %v5338, 0.5
      %v5359 = vmul.f32 %v5339, 0.5
      %v5360 = vmul.f32 %v5340, 0.5
      %v5361 = vmul.f32 %v5341, 0.5
      %v5362 = vmul.f32 %v5342, 0.5
      %v5363 = vmul.f32 %v5343, 0.5
      %v5364 = vmul.f32 %v5344, 0.5
      %v5365 = vmul.f32 %v5345, 0.5
      %v5366 = vmul.f32 %v5346, 0.5
      %v5367 = vmul.f32 %v5347, 0.5
      %v5368 = vmul.f32 %v5348, 0.5
      %v5369 = vmul.f32 %v5349, 0.5
      %v5370 = vmul.f32 %v5350, 0.5
      %v5371 = vmul.f32 %v5351, 0.5
      %v5372 = vmul.f32 %v5192, %v5352
      %v5373 = vmul.f32 %v5193, %v5353
      %v5374 = vmul.f32 %v5194, %v5354
      %v5375 = vmul.f32 %v5195, %v5355
      %v5376 = vmul.f32 %v5196, %v5356
      %v5377 = vmul.f32 %v5197, %v5357
      %v5378 = vmul.f32 %v5198, %v5358
      %v5379 = vmul.f32 %v5199, %v5359
      %v5380 = vmul.f32 %v5200, %v5360
      %v5381 = vmul.f32 %v5201, %v5361
      %v5382 = vmul.f32 %v5202, %v5362
      %v5383 = vmul.f32 %v5203, %v5363
      %v5384 = vmul.f32 %v5204, %v5364
      %v5385 = vmul.f32 %v5205, %v5365
      %v5386 = vmul.f32 %v5206, %v5366
      %v5387 = vmul.f32 %v5207, %v5367
      %v5388 = vmul.f32 %v5208, %v5368
      %v5389 = vmul.f32 %v5209, %v5369
      %v5390 = vmul.f32 %v5210, %v5370
      %v5391 = vmul.f32 %v5211, %v5371
      %5392 = vst.msk [vmem:[#allocation2] sm:$0xff] %vm391, %v5372
      %5393 = vst.msk [vmem:[#allocation2 + $0x8] sm:$0xff] %vm391, %v5373
      %5394 = vst.msk [vmem:[#allocation2 + $0x10] sm:$0xff] %vm391, %v5374
      %5395 = vst.msk [vmem:[#allocation2 + $0x18] sm:$0xff] %vm391, %v5375
      %5396 = vst.msk [vmem:[#allocation2 + $0x20] sm:$0xff] %vm391, %v5376
      %5397 = vst.msk [vmem:[#allocation2 + $0x28] sm:$0xff] %vm391, %v5377
      %5398 = vst.msk [vmem:[#allocation2 + $0x30] sm:$0xff] %vm391, %v5378
      %5399 = vst.msk [vmem:[#allocation2 + $0x38] sm:$0xff] %vm391, %v5379
      %5400 = vst.msk [vmem:[#allocation2 + $0x40] sm:$0xff] %vm391, %v5380
      %5401 = vst.msk [vmem:[#allocation2 + $0x48] sm:$0xff] %vm391, %v5381
      %5402 = vst.msk [vmem:[#allocation2 + $0x50] sm:$0xff] %vm391, %v5382
      %5403 = vst.msk [vmem:[#allocation2 + $0x58] sm:$0xff] %vm391, %v5383
      %5404 = vst.msk [vmem:[#allocation2 + $0x60] sm:$0xff] %vm391, %v5384
      %5405 = vst.msk [vmem:[#allocation2 + $0x68] sm:$0xff] %vm391, %v5385
      %5406 = vst.msk [vmem:[#allocation2 + $0x70] sm:$0xff] %vm391, %v5386
      %5407 = vst.msk [vmem:[#allocation2 + $0x78] sm:$0xff] %vm391, %v5387
      %5408 = vst.msk [vmem:[#allocation2 + $0x80] sm:$0xff] %vm391, %v5388
      %5409 = vst.msk [vmem:[#allocation2 + $0x88] sm:$0xff] %vm391, %v5389
      %5410 = vst.msk [vmem:[#allocation2 + $0x90] sm:$0xff] %vm391, %v5390
      %5411 = vst.msk [vmem:[#allocation2 + $0x98] sm:$0x7f] %vm629, %v5391
      %v5412 = vld [vmem:[#allocation2] ss:$2 sm:$0xff]
      %v5413 = vld [vmem:[%s2403] ss:$2 sm:$0xff]
      %v5414 = vld [vmem:[%s2405] ss:$2 sm:$0xff]
      %v5415 = vld [vmem:[%s2407] ss:$2 sm:$0xff]
      %v5416 = vld [vmem:[%s2409] ss:$2 sm:$0xff]
      %v5417 = vld [vmem:[%s2411] ss:$2 sm:$0xff]
      %v5418 = vld [vmem:[%s2413] ss:$2 sm:$0xff]
      %v5419 = vld [vmem:[%s2415] ss:$2 sm:$0xff]
      %v5420 = vld [vmem:[%s2417] ss:$2 sm:$0xff]
      %v5421 = vld [vmem:[%s2419] ss:$2 sm:$0xff]
      %v5422 = vld [vmem:[%s2481] ss:$2 sm:$0xff]
      %v5423 = vld [vmem:[%s2483] ss:$2 sm:$0xff]
      %v5424 = vld [vmem:[%s2485] ss:$2 sm:$0xff]
      %v5425 = vld [vmem:[%s2487] ss:$2 sm:$0xff]
      %v5426 = vld [vmem:[%s2489] ss:$2 sm:$0xff]
      %v5427 = vld [vmem:[%s2491] ss:$2 sm:$0xff]
      %v5428 = vld [vmem:[%s2493] ss:$2 sm:$0xff]
      %v5429 = vld [vmem:[%s2495] ss:$2 sm:$0xff]
      %v5430 = vld [vmem:[%s2497] ss:$2 sm:$0xff]
      %v5431 = vld [vmem:[%s2499] ss:$2 sm:$0x7f]
      %5442 = vrot.lane.b32.xlu0 %v5422, 32
      %v5443 = vpop.permute.xlu0 %5442
      %5444 = vrot.lane.b32.xlu0 %v5423, 32
      %v5445 = vpop.permute.xlu0 %5444
      %5446 = vrot.lane.b32.xlu0 %v5424, 32
      %v5447 = vpop.permute.xlu0 %5446
      %5448 = vrot.lane.b32.xlu0 %v5425, 32
      %v5449 = vpop.permute.xlu0 %5448
      %5450 = vrot.lane.b32.xlu0 %v5426, 32
      %v5451 = vpop.permute.xlu0 %5450
      %5452 = vrot.lane.b32.xlu0 %v5427, 32
      %v5453 = vpop.permute.xlu0 %5452
      %5454 = vrot.lane.b32.xlu0 %v5428, 32
      %v5455 = vpop.permute.xlu0 %5454
      %5456 = vrot.lane.b32.xlu0 %v5429, 32
      %v5457 = vpop.permute.xlu0 %5456
      %5458 = vrot.lane.b32.xlu0 %v5430, 32
      %v5459 = vpop.permute.xlu0 %5458
      %5460 = vrot.lane.b32.xlu0 %v5431, 32
      %v5461 = vpop.permute.xlu0 %5460
      %v5482 = vrot.slane %v5412, 1
      %v5483 = vrot.slane %v5413, 1
      %v5484 = vsel %vm2761, %v5482, %v5483
      %v5485 = vrot.slane %v5414, 1
      %v5486 = vsel %vm2761, %v5483, %v5485
      %v5487 = vrot.slane %v5415, 1
      %v5488 = vsel %vm2761, %v5485, %v5487
      %v5489 = vrot.slane %v5416, 1
      %v5490 = vsel %vm2761, %v5487, %v5489
      %v5491 = vrot.slane %v5417, 1
      %v5492 = vsel %vm2761, %v5489, %v5491
      %v5493 = vrot.slane %v5418, 1
      %v5494 = vsel %vm2761, %v5491, %v5493
      %v5495 = vrot.slane %v5419, 1
      %v5496 = vsel %vm2761, %v5493, %v5495
      %v5497 = vrot.slane %v5420, 1
      %v5498 = vsel %vm2761, %v5495, %v5497
      %v5499 = vrot.slane %v5421, 1
      %v5500 = vsel %vm2761, %v5497, %v5499
      %5501 = vrot.lane.b32.xlu0 %v5484, 64
      %v5502 = vpop.permute.xlu0 %5501
      %5503 = vrot.lane.b32.xlu0 %v5486, 64
      %v5504 = vpop.permute.xlu0 %5503
      %5505 = vrot.lane.b32.xlu0 %v5488, 64
      %v5506 = vpop.permute.xlu0 %5505
      %5507 = vrot.lane.b32.xlu0 %v5490, 64
      %v5508 = vpop.permute.xlu0 %5507
      %5509 = vrot.lane.b32.xlu0 %v5492, 64
      %v5510 = vpop.permute.xlu0 %5509
      %5511 = vrot.lane.b32.xlu0 %v5494, 64
      %v5512 = vpop.permute.xlu0 %5511
      %5513 = vrot.lane.b32.xlu0 %v5496, 64
      %v5514 = vpop.permute.xlu0 %5513
      %5515 = vrot.lane.b32.xlu0 %v5498, 64
      %v5516 = vpop.permute.xlu0 %5515
      %5517 = vrot.lane.b32.xlu0 %v5500, 64
      %v5518 = vpop.permute.xlu0 %5517
      %5519 = vrot.lane.b32.xlu0 %v5499, 64
      %v5520 = vpop.permute.xlu0 %5519
      %v5531 = vsel %vm391, %v5412, %v5443
      %v5532 = vsel %vm391, %v5413, %v5445
      %v5533 = vsel %vm391, %v5414, %v5447
      %v5534 = vsel %vm391, %v5415, %v5449
      %v5535 = vsel %vm391, %v5416, %v5451
      %v5536 = vsel %vm391, %v5417, %v5453
      %v5537 = vsel %vm391, %v5418, %v5455
      %v5538 = vsel %vm391, %v5419, %v5457
      %v5539 = vsel %vm391, %v5420, %v5459
      %v5540 = vsel %vm391, %v5421, %v5461
      %v5541 = vsel %vm3001, %v5531, %v5502
      %v5542 = vsel %vm3001, %v5532, %v5504
      %v5543 = vsel %vm3001, %v5533, %v5506
      %v5544 = vsel %vm3001, %v5534, %v5508
      %v5545 = vsel %vm3001, %v5535, %v5510
      %v5546 = vsel %vm3001, %v5536, %v5512
      %v5547 = vsel %vm3001, %v5537, %v5514
      %v5548 = vsel %vm3001, %v5538, %v5516
      %v5549 = vsel %vm3001, %v5539, %v5518
      %v5550 = vsel %vm3001, %v5540, %v5520
      %v5551 = vpack.c.bf16 %v5542, %v5541
      %v5552 = vpack.c.bf16 %v5544, %v5543
      %v5553 = vpack.c.bf16 %v5546, %v5545
      %v5554 = vpack.c.bf16 %v5548, %v5547
      %v5555 = vpack.c.bf16 %v5550, %v5549
      %s5556 = scalar_lea.vmem %s1, 96
      %v5557 = vld [vmem:[%s5556] sm:$0xf]
      %v5558 = vld [vmem:[%s5556 + $0x4] sm:$0xf]
      %v5559 = vld [vmem:[%s5556 + $0x8] sm:$0xf]
      %v5560 = vld [vmem:[%s5556 + $0xc] sm:$0xf]
      %v5561 = vld [vmem:[%s5556 + $0x10] sm:$0xf]
      %v5562 = vld [vmem:[%s5556 + $0x14] sm:$0xf]
      %v5563 = vld [vmem:[%s5556 + $0x18] sm:$0xf]
      %v5564 = vld [vmem:[%s5556 + $0x1c] sm:$0xf]
      %v5565 = vld [vmem:[%s5556 + $0x20] sm:$0xf]
      %v5566 = vld [vmem:[%s5556 + $0x24] sm:$0xf]
      %v5567 = vld [vmem:[%s5556 + $0x28] sm:$0xf]
      %v5568 = vld [vmem:[%s5556 + $0x2c] sm:$0xf]
      %s5569 = scalar_lea.vmem %s2, 24
      %v5570 = vld [vmem:[%s5569] sm:$0xff]
      %v5571 = vlaneseq
      %v5572 = vshrl.u32 %v5571, 7
      %v5573 = vsub.s32 0, %v5572
      %v5574 = vrot.slane %v5570, %v5573
      %v5587 = vunpack.c.l.b16 %v5557
      %v5588 = vunpack.c.l.b16 %v5558
      %v5589 = vunpack.c.l.b16 %v5559
      %v5590 = vunpack.c.l.b16 %v5560
      %v5591 = vunpack.c.l.b16 %v5561
      %v5592 = vunpack.c.l.b16 %v5562
      %v5593 = vunpack.c.l.b16 %v5563
      %v5594 = vunpack.c.l.b16 %v5564
      %v5595 = vunpack.c.l.b16 %v5565
      %v5596 = vunpack.c.l.b16 %v5566
      %v5597 = vunpack.c.l.b16 %v5567
      %v5598 = vunpack.c.l.b16 %v5568
      %v5599 = vpack.c.b16 %v5588, %v5587
      %v5600 = vpack.c.b16 %v5590, %v5589
      %v5601 = vpack.c.b16 %v5592, %v5591
      %v5602 = vpack.c.b16 %v5594, %v5593
      %v5603 = vpack.c.b16 %v5596, %v5595
      %v5604 = vpack.c.b16 %v5598, %v5597
      %v5612 = vsel %vm3116, %v5551, 0
      %v5615 = vsel %vm3116, %v5552, 0
      %v5618 = vsel %vm3116, %v5553, 0
      %v5621 = vsel %vm3116, %v5554, 0
      %v5624 = vsel %vm3116, %v5555, 0
      %5626 = vmatprep.subr.bf16.mxu0 0
      %5627 = vmatpush1.bf16.msra.mxu0 0
      %5628 = vmatprep.subr.bf16.mxu0 0
      %5629 = vmatpush1.bf16.msra.mxu0 0
      %5630 = vmatprep.subr.bf16.mxu0 0
      %5631 = vmatpush1.bf16.msra.mxu0 %v5604
      %5632 = vmatprep.subr.bf16.mxu0 0
      %5633 = vmatpush1.bf16.msra.mxu0 %v5603
      %5634 = vmatprep.subr.bf16.mxu0 0
      %5635 = vmatpush1.bf16.msra.mxu0 %v5602
      %5636 = vmatprep.subr.bf16.mxu0 0
      %5637 = vmatpush1.bf16.msra.mxu0 %v5601
      %5638 = vmatprep.subr.bf16.mxu0 0
      %5639 = vmatpush1.bf16.msra.mxu0 %v5600
      %5640 = vmatprep.subr.bf16.mxu0 0
      %5641 = vmatpush1.bf16.msra.mxu0 %v5599
      %5642 = vmatprep.subr.bf16.mxu0 0
      %5643 = vmatpush2.bf16.msra.mxu0 0
      %5644 = vmatprep.subr.bf16.mxu0 0
      %5645 = vmatpush2.bf16.msra.mxu0 0
      %5646 = vmatprep.subr.bf16.mxu0 0
      %5647 = vmatpush2.bf16.msra.mxu0 0
      %5648 = vmatprep.subr.bf16.mxu0 0
      %5649 = vmatpush2.bf16.msra.mxu0 0
      %5650 = vmatprep.subr.bf16.mxu0 0
      %5651 = vmatpush2.bf16.msra.mxu0 0
      %5652 = vmatprep.subr.bf16.mxu0 0
      %5653 = vmatpush2.bf16.msra.mxu0 0
      %5654 = vmatprep.subr.bf16.mxu0 0
      %5655 = vmatpush2.bf16.msra.mxu0 0
      %5656 = vmatprep.subr.bf16.mxu0 0
      %5657 = vmatpush2.bf16.msra.mxu0 0
      %5658 = vmatprep.mubr.bf16.mxu0 0
      %5659 = vmatmul.mubr.bf16.gmra.mxu0 %v5612
      %v5660 = vpop.f32.mrf.mxu0
      %v5661 = vadd.f32 %v5574, %v5660
      %v5662 = vpop.f32.mrf.mxu0
      %v5663 = vpop.f32.mrf.mxu0
      %v5664 = vadd.f32 %v5574, %v5663
      %v5665 = vpop.f32.mrf.mxu0
      %5666 = vmatprep.mubr.bf16.mxu0 0
      %5667 = vmatmul.mubr.bf16.gmra.mxu0 %v5615
      %v5668 = vpop.f32.mrf.mxu0
      %v5669 = vadd.f32 %v5574, %v5668
      %v5670 = vpop.f32.mrf.mxu0
      %v5671 = vpop.f32.mrf.mxu0
      %v5672 = vadd.f32 %v5574, %v5671
      %v5673 = vpop.f32.mrf.mxu0
      %5674 = vmatprep.mubr.bf16.mxu0 0
      %5675 = vmatmul.mubr.bf16.gmra.mxu0 %v5618
      %v5676 = vpop.f32.mrf.mxu0
      %v5677 = vadd.f32 %v5574, %v5676
      %v5678 = vpop.f32.mrf.mxu0
      %v5679 = vpop.f32.mrf.mxu0
      %v5680 = vadd.f32 %v5574, %v5679
      %v5681 = vpop.f32.mrf.mxu0
      %5682 = vmatprep.mubr.bf16.mxu0 0
      %5683 = vmatmul.mubr.bf16.gmra.mxu0 %v5621
      %v5684 = vpop.f32.mrf.mxu0
      %v5685 = vadd.f32 %v5574, %v5684
      %v5686 = vpop.f32.mrf.mxu0
      %v5687 = vpop.f32.mrf.mxu0
      %v5688 = vadd.f32 %v5574, %v5687
      %v5689 = vpop.f32.mrf.mxu0
      %5690 = vmatprep.mubr.bf16.mxu0 0
      %5691 = vmatmul.mubr.bf16.gmra.mxu0 %v5624
      %v5692 = vpop.f32.mrf.mxu0
      %v5693 = vadd.f32 %v5574, %v5692
      %v5694 = vpop.f32.mrf.mxu0
      %v5695 = vpop.f32.mrf.mxu0
      %v5696 = vadd.f32 %v5574, %v5695
      %v5697 = vpop.f32.mrf.mxu0
      %5698 = vdwg.mxu0
      %v5699 = vsel %vm391, %v5661, 0.0
      %5700 = vadd.xlane.f32.xlu0 %v5699
      %v5701 = vpop.xlane.xlu0 %5700
      %v5702 = vsel %vm391, %v5664, 0.0
      %5703 = vadd.xlane.f32.xlu0 %v5702
      %v5704 = vpop.xlane.xlu0 %5703
      %v5705 = vsel %vm391, %v5669, 0.0
      %5706 = vadd.xlane.f32.xlu0 %v5705
      %v5707 = vpop.xlane.xlu0 %5706
      %v5708 = vsel %vm391, %v5672, 0.0
      %5709 = vadd.xlane.f32.xlu0 %v5708
      %v5710 = vpop.xlane.xlu0 %5709
      %v5711 = vsel %vm391, %v5677, 0.0
      %5712 = vadd.xlane.f32.xlu0 %v5711
      %v5713 = vpop.xlane.xlu0 %5712
      %v5714 = vsel %vm391, %v5680, 0.0
      %5715 = vadd.xlane.f32.xlu0 %v5714
      %v5716 = vpop.xlane.xlu0 %5715
      %v5717 = vsel %vm391, %v5685, 0.0
      %5718 = vadd.xlane.f32.xlu0 %v5717
      %v5719 = vpop.xlane.xlu0 %5718
      %v5720 = vsel %vm391, %v5688, 0.0
      %5721 = vadd.xlane.f32.xlu0 %v5720
      %v5722 = vpop.xlane.xlu0 %5721
      %v5723 = vsel %vm391, %v5693, 0.0
      %5724 = vadd.xlane.f32.xlu0 %v5723
      %v5725 = vpop.xlane.xlu0 %5724
      %v5726 = vsel %vm629, %v5696, 0.0
      %5727 = vadd.xlane.f32.xlu0 %v5726
      %v5728 = vpop.xlane.xlu0 %5727
      %v5729 = vmul.f32 %v5701, %v633
      %v5730 = vmul.f32 %v5704, %v633
      %v5731 = vmul.f32 %v5707, %v633
      %v5732 = vmul.f32 %v5710, %v633
      %v5733 = vmul.f32 %v5713, %v633
      %v5734 = vmul.f32 %v5716, %v633
      %v5735 = vmul.f32 %v5719, %v633
      %v5736 = vmul.f32 %v5722, %v633
      %v5737 = vmul.f32 %v5725, %v633
      %v5738 = vmul.f32 %v5728, %v633
      %v5739 = vsub.f32 %v5661, %v5729
      %v5740 = vsub.f32 %v5664, %v5730
      %v5741 = vsub.f32 %v5669, %v5731
      %v5742 = vsub.f32 %v5672, %v5732
      %v5743 = vsub.f32 %v5677, %v5733
      %v5744 = vsub.f32 %v5680, %v5734
      %v5745 = vsub.f32 %v5685, %v5735
      %v5746 = vsub.f32 %v5688, %v5736
      %v5747 = vsub.f32 %v5693, %v5737
      %v5748 = vsub.f32 %v5696, %v5738
      %v5749 = vmul.f32 %v5739, %v5739
      %v5750 = vmul.f32 %v5740, %v5740
      %v5751 = vmul.f32 %v5741, %v5741
      %v5752 = vmul.f32 %v5742, %v5742
      %v5753 = vmul.f32 %v5743, %v5743
      %v5754 = vmul.f32 %v5744, %v5744
      %v5755 = vmul.f32 %v5745, %v5745
      %v5756 = vmul.f32 %v5746, %v5746
      %v5757 = vmul.f32 %v5747, %v5747
      %v5758 = vmul.f32 %v5748, %v5748
      %v5759 = vsel %vm391, %v5749, 0.0
      %5760 = vadd.xlane.f32.xlu0 %v5759
      %v5761 = vpop.xlane.xlu0 %5760
      %v5762 = vsel %vm391, %v5750, 0.0
      %5763 = vadd.xlane.f32.xlu0 %v5762
      %v5764 = vpop.xlane.xlu0 %5763
      %v5765 = vsel %vm391, %v5751, 0.0
      %5766 = vadd.xlane.f32.xlu0 %v5765
      %v5767 = vpop.xlane.xlu0 %5766
      %v5768 = vsel %vm391, %v5752, 0.0
      %5769 = vadd.xlane.f32.xlu0 %v5768
      %v5770 = vpop.xlane.xlu0 %5769
      %v5771 = vsel %vm391, %v5753, 0.0
      %5772 = vadd.xlane.f32.xlu0 %v5771
      %v5773 = vpop.xlane.xlu0 %5772
      %v5774 = vsel %vm391, %v5754, 0.0
      %5775 = vadd.xlane.f32.xlu0 %v5774
      %v5776 = vpop.xlane.xlu0 %5775
      %v5777 = vsel %vm391, %v5755, 0.0
      %5778 = vadd.xlane.f32.xlu0 %v5777
      %v5779 = vpop.xlane.xlu0 %5778
      %v5780 = vsel %vm391, %v5756, 0.0
      %5781 = vadd.xlane.f32.xlu0 %v5780
      %v5782 = vpop.xlane.xlu0 %5781
      %v5783 = vsel %vm391, %v5757, 0.0
      %5784 = vadd.xlane.f32.xlu0 %v5783
      %v5785 = vpop.xlane.xlu0 %5784
      %v5786 = vsel %vm629, %v5758, 0.0
      %5787 = vadd.xlane.f32.xlu0 %v5786
      %v5788 = vpop.xlane.xlu0 %5787
      %v5789 = vmul.f32 %v5761, %v633
      %v5790 = vmul.f32 %v5764, %v633
      %v5791 = vmul.f32 %v5767, %v633
      %v5792 = vmul.f32 %v5770, %v633
      %v5793 = vmul.f32 %v5773, %v633
      %v5794 = vmul.f32 %v5776, %v633
      %v5795 = vmul.f32 %v5779, %v633
      %v5796 = vmul.f32 %v5782, %v633
      %v5797 = vmul.f32 %v5785, %v633
      %v5798 = vmul.f32 %v5788, %v633
      %v5799 = vadd.f32 %v5789, 1e-05
      %v5800 = vadd.f32 %v5790, 1e-05
      %v5801 = vadd.f32 %v5791, 1e-05
      %v5802 = vadd.f32 %v5792, 1e-05
      %v5803 = vadd.f32 %v5793, 1e-05
      %v5804 = vadd.f32 %v5794, 1e-05
      %v5805 = vadd.f32 %v5795, 1e-05
      %v5806 = vadd.f32 %v5796, 1e-05
      %v5807 = vadd.f32 %v5797, 1e-05
      %v5808 = vadd.f32 %v5798, 1e-05
      %v5809 = vrsqrt.pop %v5799
      %v5810 = vrsqrt.pop %v5800
      %v5811 = vrsqrt.pop %v5801
      %v5812 = vrsqrt.pop %v5802
      %v5813 = vrsqrt.pop %v5803
      %v5814 = vrsqrt.pop %v5804
      %v5815 = vrsqrt.pop %v5805
      %v5816 = vrsqrt.pop %v5806
      %v5817 = vrsqrt.pop %v5807
      %v5818 = vrsqrt.pop %v5808
      %v5819 = vmul.f32 %v5739, %v5809
      %v5820 = vmul.f32 %v5740, %v5810
      %v5821 = vmul.f32 %v5741, %v5811
      %v5822 = vmul.f32 %v5742, %v5812
      %v5823 = vmul.f32 %v5743, %v5813
      %v5824 = vmul.f32 %v5744, %v5814
      %v5825 = vmul.f32 %v5745, %v5815
      %v5826 = vmul.f32 %v5746, %v5816
      %v5827 = vmul.f32 %v5747, %v5817
      %v5828 = vmul.f32 %v5748, %v5818
      %v5829 = vlaneseq
      %v5830 = vshrl.u32 %v5829, 7
      %v5831 = vsub.s32 1, %v5830
      %v5832 = vrot.slane %v5570, %v5831
      %v5833 = vmul.f32 %v5819, %v5832
      %v5834 = vmul.f32 %v5820, %v5832
      %v5835 = vmul.f32 %v5821, %v5832
      %v5836 = vmul.f32 %v5822, %v5832
      %v5837 = vmul.f32 %v5823, %v5832
      %v5838 = vmul.f32 %v5824, %v5832
      %v5839 = vmul.f32 %v5825, %v5832
      %v5840 = vmul.f32 %v5826, %v5832
      %v5841 = vmul.f32 %v5827, %v5832
      %v5842 = vmul.f32 %v5828, %v5832
      %v5843 = vlaneseq
      %v5844 = vshrl.u32 %v5843, 7
      %v5845 = vsub.s32 2, %v5844
      %v5846 = vrot.slane %v5570, %v5845
      %v5847 = vadd.f32 %v5833, %v5846
      %v5848 = vadd.f32 %v5834, %v5846
      %v5849 = vadd.f32 %v5835, %v5846
      %v5850 = vadd.f32 %v5836, %v5846
      %v5851 = vadd.f32 %v5837, %v5846
      %v5852 = vadd.f32 %v5838, %v5846
      %v5853 = vadd.f32 %v5839, %v5846
      %v5854 = vadd.f32 %v5840, %v5846
      %v5855 = vadd.f32 %v5841, %v5846
      %v5856 = vadd.f32 %v5842, %v5846
      %v5857 = vmul.f32 %v5847, %v5847
      %v5858 = vmul.f32 %v5848, %v5848
      %v5859 = vmul.f32 %v5849, %v5849
      %v5860 = vmul.f32 %v5850, %v5850
      %v5861 = vmul.f32 %v5851, %v5851
      %v5862 = vmul.f32 %v5852, %v5852
      %v5863 = vmul.f32 %v5853, %v5853
      %v5864 = vmul.f32 %v5854, %v5854
      %v5865 = vmul.f32 %v5855, %v5855
      %v5866 = vmul.f32 %v5856, %v5856
      %v5867 = vmul.f32 %v5847, %v5857
      %v5868 = vmul.f32 %v5848, %v5858
      %v5869 = vmul.f32 %v5849, %v5859
      %v5870 = vmul.f32 %v5850, %v5860
      %v5871 = vmul.f32 %v5851, %v5861
      %v5872 = vmul.f32 %v5852, %v5862
      %v5873 = vmul.f32 %v5853, %v5863
      %v5874 = vmul.f32 %v5854, %v5864
      %v5875 = vmul.f32 %v5855, %v5865
      %v5876 = vmul.f32 %v5856, %v5866
      %v5877 = vmul.f32 %v5867, 0.044715
      %v5878 = vmul.f32 %v5868, 0.044715
      %v5879 = vmul.f32 %v5869, 0.044715
      %v5880 = vmul.f32 %v5870, 0.044715
      %v5881 = vmul.f32 %v5871, 0.044715
      %v5882 = vmul.f32 %v5872, 0.044715
      %v5883 = vmul.f32 %v5873, 0.044715
      %v5884 = vmul.f32 %v5874, 0.044715
      %v5885 = vmul.f32 %v5875, 0.044715
      %v5886 = vmul.f32 %v5876, 0.044715
      %v5887 = vadd.f32 %v5847, %v5877
      %v5888 = vadd.f32 %v5848, %v5878
      %v5889 = vadd.f32 %v5849, %v5879
      %v5890 = vadd.f32 %v5850, %v5880
      %v5891 = vadd.f32 %v5851, %v5881
      %v5892 = vadd.f32 %v5852, %v5882
      %v5893 = vadd.f32 %v5853, %v5883
      %v5894 = vadd.f32 %v5854, %v5884
      %v5895 = vadd.f32 %v5855, %v5885
      %v5896 = vadd.f32 %v5856, %v5886
      %v5897 = vmul.f32 %v5887, 0.7978846
      %v5898 = vmul.f32 %v5888, 0.7978846
      %v5899 = vmul.f32 %v5889, 0.7978846
      %v5900 = vmul.f32 %v5890, 0.7978846
      %v5901 = vmul.f32 %v5891, 0.7978846
      %v5902 = vmul.f32 %v5892, 0.7978846
      %v5903 = vmul.f32 %v5893, 0.7978846
      %v5904 = vmul.f32 %v5894, 0.7978846
      %v5905 = vmul.f32 %v5895, 0.7978846
      %v5906 = vmul.f32 %v5896, 0.7978846
      %v5907 = vtanh.pop %v5897
      %v5908 = vtanh.pop %v5898
      %v5909 = vtanh.pop %v5899
      %v5910 = vtanh.pop %v5900
      %v5911 = vtanh.pop %v5901
      %v5912 = vtanh.pop %v5902
      %v5913 = vtanh.pop %v5903
      %v5914 = vtanh.pop %v5904
      %v5915 = vtanh.pop %v5905
      %v5916 = vtanh.pop %v5906
      %v5917 = vadd.f32 %v5907, 1.0
      %v5918 = vadd.f32 %v5908, 1.0
      %v5919 = vadd.f32 %v5909, 1.0
      %v5920 = vadd.f32 %v5910, 1.0
      %v5921 = vadd.f32 %v5911, 1.0
      %v5922 = vadd.f32 %v5912, 1.0
      %v5923 = vadd.f32 %v5913, 1.0
      %v5924 = vadd.f32 %v5914, 1.0
      %v5925 = vadd.f32 %v5915, 1.0
      %v5926 = vadd.f32 %v5916, 1.0
      %v5927 = vmul.f32 %v5917, 0.5
      %v5928 = vmul.f32 %v5918, 0.5
      %v5929 = vmul.f32 %v5919, 0.5
      %v5930 = vmul.f32 %v5920, 0.5
      %v5931 = vmul.f32 %v5921, 0.5
      %v5932 = vmul.f32 %v5922, 0.5
      %v5933 = vmul.f32 %v5923, 0.5
      %v5934 = vmul.f32 %v5924, 0.5
      %v5935 = vmul.f32 %v5925, 0.5
      %v5936 = vmul.f32 %v5926, 0.5
      %v5937 = vmul.f32 %v5847, %v5927
      %v5938 = vmul.f32 %v5848, %v5928
      %v5939 = vmul.f32 %v5849, %v5929
      %v5940 = vmul.f32 %v5850, %v5930
      %v5941 = vmul.f32 %v5851, %v5931
      %v5942 = vmul.f32 %v5852, %v5932
      %v5943 = vmul.f32 %v5853, %v5933
      %v5944 = vmul.f32 %v5854, %v5934
      %v5945 = vmul.f32 %v5855, %v5935
      %v5946 = vmul.f32 %v5856, %v5936
      %5947 = vst.msk [vmem:[#allocation3] sm:$0xff] %vm391, %v5937
      %5948 = vst.msk [vmem:[#allocation3 + $0x8] sm:$0xff] %vm391, %v5938
      %5949 = vst.msk [vmem:[#allocation3 + $0x10] sm:$0xff] %vm391, %v5939
      %5950 = vst.msk [vmem:[#allocation3 + $0x18] sm:$0xff] %vm391, %v5940
      %5951 = vst.msk [vmem:[#allocation3 + $0x20] sm:$0xff] %vm391, %v5941
      %5952 = vst.msk [vmem:[#allocation3 + $0x28] sm:$0xff] %vm391, %v5942
      %5953 = vst.msk [vmem:[#allocation3 + $0x30] sm:$0xff] %vm391, %v5943
      %5954 = vst.msk [vmem:[#allocation3 + $0x38] sm:$0xff] %vm391, %v5944
      %5955 = vst.msk [vmem:[#allocation3 + $0x40] sm:$0xff] %vm391, %v5945
      %5956 = vst.msk [vmem:[#allocation3 + $0x48] sm:$0x7f] %vm629, %v5946
      %v5957 = vld [vmem:[#allocation3] ss:$2 sm:$0xff]
      %v5958 = vld [vmem:[%s4379] ss:$2 sm:$0xff]
      %v5959 = vld [vmem:[%s4381] ss:$2 sm:$0xff]
      %v5960 = vld [vmem:[%s4383] ss:$2 sm:$0xff]
      %v5961 = vld [vmem:[%s4385] ss:$2 sm:$0xff]
      %v5962 = vld [vmem:[%s4417] ss:$2 sm:$0xff]
      %v5963 = vld [vmem:[%s4419] ss:$2 sm:$0xff]
      %v5964 = vld [vmem:[%s4421] ss:$2 sm:$0xff]
      %v5965 = vld [vmem:[%s4423] ss:$2 sm:$0xff]
      %v5966 = vld [vmem:[%s4425] ss:$2 sm:$0x7f]
      %5972 = vrot.lane.b32.xlu0 %v5962, 32
      %v5973 = vpop.permute.xlu0 %5972
      %5974 = vrot.lane.b32.xlu0 %v5963, 32
      %v5975 = vpop.permute.xlu0 %5974
      %5976 = vrot.lane.b32.xlu0 %v5964, 32
      %v5977 = vpop.permute.xlu0 %5976
      %5978 = vrot.lane.b32.xlu0 %v5965, 32
      %v5979 = vpop.permute.xlu0 %5978
      %5980 = vrot.lane.b32.xlu0 %v5966, 32
      %v5981 = vpop.permute.xlu0 %5980
      %v5992 = vrot.slane %v5957, 1
      %v5993 = vrot.slane %v5958, 1
      %v5994 = vsel %vm2761, %v5992, %v5993
      %v5995 = vrot.slane %v5959, 1
      %v5996 = vsel %vm2761, %v5993, %v5995
      %v5997 = vrot.slane %v5960, 1
      %v5998 = vsel %vm2761, %v5995, %v5997
      %v5999 = vrot.slane %v5961, 1
      %v6000 = vsel %vm2761, %v5997, %v5999
      %6001 = vrot.lane.b32.xlu0 %v5994, 64
      %v6002 = vpop.permute.xlu0 %6001
      %6003 = vrot.lane.b32.xlu0 %v5996, 64
      %v6004 = vpop.permute.xlu0 %6003
      %6005 = vrot.lane.b32.xlu0 %v5998, 64
      %v6006 = vpop.permute.xlu0 %6005
      %6007 = vrot.lane.b32.xlu0 %v6000, 64
      %v6008 = vpop.permute.xlu0 %6007
      %6009 = vrot.lane.b32.xlu0 %v5999, 64
      %v6010 = vpop.permute.xlu0 %6009
      %v6016 = vsel %vm391, %v5957, %v5973
      %v6017 = vsel %vm391, %v5958, %v5975
      %v6018 = vsel %vm391, %v5959, %v5977
      %v6019 = vsel %vm391, %v5960, %v5979
      %v6020 = vsel %vm391, %v5961, %v5981
      %v6021 = vsel %vm3001, %v6016, %v6002
      %v6022 = vsel %vm3001, %v6017, %v6004
      %v6023 = vsel %vm3001, %v6018, %v6006
      %v6024 = vsel %vm3001, %v6019, %v6008
      %v6025 = vsel %vm3001, %v6020, %v6010
      %v6026 = vpack.c.bf16 %v6022, %v6021
      %v6027 = vpack.c.bf16 %v6024, %v6023
      %v6028 = vpack.c.bf16 %v6025, %v6025
      %s6029 = scalar_lea.vmem %s1, 144
      %v6030 = vld [vmem:[%s6029] sm:$0xf]
      %v6031 = vld [vmem:[%s6029 + $0x4] sm:$0xf]
      %v6032 = vld [vmem:[%s6029 + $0x8] sm:$0xf]
      %v6033 = vld [vmem:[%s6029 + $0xc] sm:$0xf]
      %v6034 = vld [vmem:[%s6029 + $0x10] sm:$0xf]
      %v6035 = vld [vmem:[%s6029 + $0x14] sm:$0xf]
      %v6036 = vld [vmem:[%s6029 + $0x18] sm:$0xf]
      %v6037 = vld [vmem:[%s6029 + $0x1c] sm:$0xf]
      %v6038 = vld [vmem:[%s6029 + $0x20] sm:$0xf]
      %v6039 = vld [vmem:[%s6029 + $0x24] sm:$0xf]
      %v6040 = vld [vmem:[%s6029 + $0x28] sm:$0xf]
      %v6041 = vld [vmem:[%s6029 + $0x2c] sm:$0xf]
      %s6042 = scalar_lea.vmem %s2, 32
      %v6043 = vld [vmem:[%s6042] sm:$0xff]
      %v6044 = vlaneseq
      %v6045 = vshrl.u32 %v6044, 7
      %v6046 = vsub.s32 0, %v6045
      %v6047 = vrot.slane %v6043, %v6046
      %v6060 = vunpack.c.l.b16 %v6030
      %v6061 = vunpack.c.l.b16 %v6031
      %v6062 = vunpack.c.l.b16 %v6032
      %v6063 = vunpack.c.l.b16 %v6033
      %v6064 = vunpack.c.l.b16 %v6034
      %v6065 = vunpack.c.l.b16 %v6035
      %v6066 = vunpack.c.l.b16 %v6036
      %v6067 = vunpack.c.l.b16 %v6037
      %v6068 = vunpack.c.l.b16 %v6038
      %v6069 = vunpack.c.l.b16 %v6039
      %v6070 = vunpack.c.l.b16 %v6040
      %v6071 = vunpack.c.l.b16 %v6041
      %v6072 = vpack.c.b16 %v6061, %v6060
      %v6073 = vpack.c.b16 %v6063, %v6062
      %v6074 = vpack.c.b16 %v6065, %v6064
      %v6075 = vpack.c.b16 %v6067, %v6066
      %v6076 = vpack.c.b16 %v6069, %v6068
      %v6077 = vpack.c.b16 %v6071, %v6070
      %v6085 = vsel %vm3116, %v6026, 0
      %v6088 = vsel %vm3116, %v6027, 0
      %v6091 = vsel %vm3116, %v6028, 0
      %6093 = vmatprep.subr.bf16.mxu0 0
      %6094 = vmatpush1.bf16.msra.mxu0 0
      %6095 = vmatprep.subr.bf16.mxu0 0
      %6096 = vmatpush1.bf16.msra.mxu0 0
      %6097 = vmatprep.subr.bf16.mxu0 0
      %6098 = vmatpush1.bf16.msra.mxu0 %v6077
      %6099 = vmatprep.subr.bf16.mxu0 0
      %6100 = vmatpush1.bf16.msra.mxu0 %v6076
      %6101 = vmatprep.subr.bf16.mxu0 0
      %6102 = vmatpush1.bf16.msra.mxu0 %v6075
      %6103 = vmatprep.subr.bf16.mxu0 0
      %6104 = vmatpush1.bf16.msra.mxu0 %v6074
      %6105 = vmatprep.subr.bf16.mxu0 0
      %6106 = vmatpush1.bf16.msra.mxu0 %v6073
      %6107 = vmatprep.subr.bf16.mxu0 0
      %6108 = vmatpush1.bf16.msra.mxu0 %v6072
      %6109 = vmatprep.subr.bf16.mxu0 0
      %6110 = vmatpush2.bf16.msra.mxu0 0
      %6111 = vmatprep.subr.bf16.mxu0 0
      %6112 = vmatpush2.bf16.msra.mxu0 0
      %6113 = vmatprep.subr.bf16.mxu0 0
      %6114 = vmatpush2.bf16.msra.mxu0 0
      %6115 = vmatprep.subr.bf16.mxu0 0
      %6116 = vmatpush2.bf16.msra.mxu0 0
      %6117 = vmatprep.subr.bf16.mxu0 0
      %6118 = vmatpush2.bf16.msra.mxu0 0
      %6119 = vmatprep.subr.bf16.mxu0 0
      %6120 = vmatpush2.bf16.msra.mxu0 0
      %6121 = vmatprep.subr.bf16.mxu0 0
      %6122 = vmatpush2.bf16.msra.mxu0 0
      %6123 = vmatprep.subr.bf16.mxu0 0
      %6124 = vmatpush2.bf16.msra.mxu0 0
      %6125 = vmatprep.mubr.bf16.mxu0 0
      %6126 = vmatmul.mubr.bf16.gmra.mxu0 %v6085
      %v6127 = vpop.f32.mrf.mxu0
      %v6128 = vadd.f32 %v6047, %v6127
      %v6129 = vpop.f32.mrf.mxu0
      %v6130 = vpop.f32.mrf.mxu0
      %v6131 = vadd.f32 %v6047, %v6130
      %v6132 = vpop.f32.mrf.mxu0
      %6133 = vmatprep.mubr.bf16.mxu0 0
      %6134 = vmatmul.mubr.bf16.gmra.mxu0 %v6088
      %v6135 = vpop.f32.mrf.mxu0
      %v6136 = vadd.f32 %v6047, %v6135
      %v6137 = vpop.f32.mrf.mxu0
      %v6138 = vpop.f32.mrf.mxu0
      %v6139 = vadd.f32 %v6047, %v6138
      %v6140 = vpop.f32.mrf.mxu0
      %6141 = vmatprep.mubr.bf16.mxu0 0
      %6142 = vmatmul.mubr.bf16.gmra.mxu0 %v6091
      %v6143 = vpop.f32.mrf.mxu0
      %v6144 = vadd.f32 %v6047, %v6143
      %v6145 = vpop.f32.mrf.mxu0
      %v6146 = vpop.f32.mrf.mxu0
      %v6147 = vpop.f32.mrf.mxu0
      %6148 = vdwg.mxu0
      %v6149 = vsel %vm391, %v6128, 0.0
      %6150 = vadd.xlane.f32.xlu0 %v6149
      %v6151 = vpop.xlane.xlu0 %6150
      %v6152 = vsel %vm391, %v6131, 0.0
      %6153 = vadd.xlane.f32.xlu0 %v6152
      %v6154 = vpop.xlane.xlu0 %6153
      %v6155 = vsel %vm391, %v6136, 0.0
      %6156 = vadd.xlane.f32.xlu0 %v6155
      %v6157 = vpop.xlane.xlu0 %6156
      %v6158 = vsel %vm391, %v6139, 0.0
      %6159 = vadd.xlane.f32.xlu0 %v6158
      %v6160 = vpop.xlane.xlu0 %6159
      %v6161 = vsel %vm629, %v6144, 0.0
      %6162 = vadd.xlane.f32.xlu0 %v6161
      %v6163 = vpop.xlane.xlu0 %6162
      %v6164 = vmul.f32 %v6151, %v633
      %v6165 = vmul.f32 %v6154, %v633
      %v6166 = vmul.f32 %v6157, %v633
      %v6167 = vmul.f32 %v6160, %v633
      %v6168 = vmul.f32 %v6163, %v633
      %v6169 = vsub.f32 %v6128, %v6164
      %v6170 = vsub.f32 %v6131, %v6165
      %v6171 = vsub.f32 %v6136, %v6166
      %v6172 = vsub.f32 %v6139, %v6167
      %v6173 = vsub.f32 %v6144, %v6168
      %v6174 = vmul.f32 %v6169, %v6169
      %v6175 = vmul.f32 %v6170, %v6170
      %v6176 = vmul.f32 %v6171, %v6171
      %v6177 = vmul.f32 %v6172, %v6172
      %v6178 = vmul.f32 %v6173, %v6173
      %v6179 = vsel %vm391, %v6174, 0.0
      %6180 = vadd.xlane.f32.xlu0 %v6179
      %v6181 = vpop.xlane.xlu0 %6180
      %v6182 = vsel %vm391, %v6175, 0.0
      %6183 = vadd.xlane.f32.xlu0 %v6182
      %v6184 = vpop.xlane.xlu0 %6183
      %v6185 = vsel %vm391, %v6176, 0.0
      %6186 = vadd.xlane.f32.xlu0 %v6185
      %v6187 = vpop.xlane.xlu0 %6186
      %v6188 = vsel %vm391, %v6177, 0.0
      %6189 = vadd.xlane.f32.xlu0 %v6188
      %v6190 = vpop.xlane.xlu0 %6189
      %v6191 = vsel %vm629, %v6178, 0.0
      %6192 = vadd.xlane.f32.xlu0 %v6191
      %v6193 = vpop.xlane.xlu0 %6192
      %v6194 = vmul.f32 %v6181, %v633
      %v6195 = vmul.f32 %v6184, %v633
      %v6196 = vmul.f32 %v6187, %v633
      %v6197 = vmul.f32 %v6190, %v633
      %v6198 = vmul.f32 %v6193, %v633
      %v6199 = vadd.f32 %v6194, 1e-05
      %v6200 = vadd.f32 %v6195, 1e-05
      %v6201 = vadd.f32 %v6196, 1e-05
      %v6202 = vadd.f32 %v6197, 1e-05
      %v6203 = vadd.f32 %v6198, 1e-05
      %v6204 = vrsqrt.pop %v6199
      %v6205 = vrsqrt.pop %v6200
      %v6206 = vrsqrt.pop %v6201
      %v6207 = vrsqrt.pop %v6202
      %v6208 = vrsqrt.pop %v6203
      %v6209 = vmul.f32 %v6169, %v6204
      %v6210 = vmul.f32 %v6170, %v6205
      %v6211 = vmul.f32 %v6171, %v6206
      %v6212 = vmul.f32 %v6172, %v6207
      %v6213 = vmul.f32 %v6173, %v6208
      %v6214 = vlaneseq
      %v6215 = vshrl.u32 %v6214, 7
      %v6216 = vsub.s32 1, %v6215
      %v6217 = vrot.slane %v6043, %v6216
      %v6218 = vmul.f32 %v6209, %v6217
      %v6219 = vmul.f32 %v6210, %v6217
      %v6220 = vmul.f32 %v6211, %v6217
      %v6221 = vmul.f32 %v6212, %v6217
      %v6222 = vmul.f32 %v6213, %v6217
      %v6223 = vlaneseq
      %v6224 = vshrl.u32 %v6223, 7
      %v6225 = vsub.s32 2, %v6224
      %v6226 = vrot.slane %v6043, %v6225
      %v6227 = vadd.f32 %v6218, %v6226
      %v6228 = vadd.f32 %v6219, %v6226
      %v6229 = vadd.f32 %v6220, %v6226
      %v6230 = vadd.f32 %v6221, %v6226
      %v6231 = vadd.f32 %v6222, %v6226
      %v6232 = vmul.f32 %v6227, %v6227
      %v6233 = vmul.f32 %v6228, %v6228
      %v6234 = vmul.f32 %v6229, %v6229
      %v6235 = vmul.f32 %v6230, %v6230
      %v6236 = vmul.f32 %v6231, %v6231
      %v6237 = vmul.f32 %v6227, %v6232
      %v6238 = vmul.f32 %v6228, %v6233
      %v6239 = vmul.f32 %v6229, %v6234
      %v6240 = vmul.f32 %v6230, %v6235
      %v6241 = vmul.f32 %v6231, %v6236
      %v6242 = vmul.f32 %v6237, 0.044715
      %v6243 = vmul.f32 %v6238, 0.044715
      %v6244 = vmul.f32 %v6239, 0.044715
      %v6245 = vmul.f32 %v6240, 0.044715
      %v6246 = vmul.f32 %v6241, 0.044715
      %v6247 = vadd.f32 %v6227, %v6242
      %v6248 = vadd.f32 %v6228, %v6243
      %v6249 = vadd.f32 %v6229, %v6244
      %v6250 = vadd.f32 %v6230, %v6245
      %v6251 = vadd.f32 %v6231, %v6246
      %v6252 = vmul.f32 %v6247, 0.7978846
      %v6253 = vmul.f32 %v6248, 0.7978846
      %v6254 = vmul.f32 %v6249, 0.7978846
      %v6255 = vmul.f32 %v6250, 0.7978846
      %v6256 = vmul.f32 %v6251, 0.7978846
      %v6257 = vtanh.pop %v6252
      %v6258 = vtanh.pop %v6253
      %v6259 = vtanh.pop %v6254
      %v6260 = vtanh.pop %v6255
      %v6261 = vtanh.pop %v6256
      %v6262 = vadd.f32 %v6257, 1.0
      %v6263 = vadd.f32 %v6258, 1.0
      %v6264 = vadd.f32 %v6259, 1.0
      %v6265 = vadd.f32 %v6260, 1.0
      %v6266 = vadd.f32 %v6261, 1.0
      %v6267 = vmul.f32 %v6262, 0.5
      %v6268 = vmul.f32 %v6263, 0.5
      %v6269 = vmul.f32 %v6264, 0.5
      %v6270 = vmul.f32 %v6265, 0.5
      %v6271 = vmul.f32 %v6266, 0.5
      %v6272 = vmul.f32 %v6227, %v6267
      %v6273 = vmul.f32 %v6228, %v6268
      %v6274 = vmul.f32 %v6229, %v6269
      %v6275 = vmul.f32 %v6230, %v6270
      %v6276 = vmul.f32 %v6231, %v6271
      %6277 = vst.msk [vmem:[#allocation2] sm:$0xff] %vm391, %v6272
      %6278 = vst.msk [vmem:[#allocation2 + $0x8] sm:$0xff] %vm391, %v6273
      %6279 = vst.msk [vmem:[#allocation2 + $0x10] sm:$0xff] %vm391, %v6274
      %6280 = vst.msk [vmem:[#allocation2 + $0x18] sm:$0xff] %vm391, %v6275
      %6281 = vst.msk [vmem:[#allocation2 + $0x20] sm:$0x7f] %vm629, %v6276
      %v6282 = vld [vmem:[#allocation2] ss:$2 sm:$0xff]
      %v6283 = vld [vmem:[%s2403] ss:$2 sm:$0xff]
      %v6284 = vld [vmem:[%s2405] ss:$2 sm:$0x7]
      %v6285 = vld [vmem:[%s2481] ss:$2 sm:$0xff]
      %v6286 = vld [vmem:[%s2483] ss:$2 sm:$0xff]
      %v6287 = vld [vmem:[%s2485] ss:$2 sm:$0x7]
      %6291 = vrot.lane.b32.xlu0 %v6285, 32
      %v6292 = vpop.permute.xlu0 %6291
      %6293 = vrot.lane.b32.xlu0 %v6286, 32
      %v6294 = vpop.permute.xlu0 %6293
      %6295 = vrot.lane.b32.xlu0 %v6287, 32
      %v6296 = vpop.permute.xlu0 %6295
      %v6300 = vsel %vm391, %v6282, %v6292
      %v6301 = vsel %vm391, %v6283, %v6294
      %v6302 = vsel %vm391, %v6284, %v6296
      %v6303 = vpack.c.bf16 %v6301, %v6300
      %v6304 = vpack.c.bf16 %v6302, %v6302
      %s6305 = scalar_lea.vmem %s1, 192
      %v6306 = vld [vmem:[%s6305] sm:$0xf]
      %v6307 = vld [vmem:[%s6305 + $0x4] sm:$0xf]
      %v6308 = vld [vmem:[%s6305 + $0x8] sm:$0xf]
      %v6309 = vld [vmem:[%s6305 + $0xc] sm:$0xf]
      %v6310 = vld [vmem:[%s6305 + $0x10] sm:$0xf]
      %v6311 = vld [vmem:[%s6305 + $0x14] sm:$0xf]
      %v6312 = vld [vmem:[%s6305 + $0x18] sm:$0xf]
      %v6313 = vld [vmem:[%s6305 + $0x1c] sm:$0xf]
      %s6314 = scalar_lea.vmem %s2, 40
      %v6315 = vld [vmem:[%s6314] sm:$0xff]
      %v6316 = vlaneseq
      %v6317 = vshrl.u32 %v6316, 7
      %v6318 = vsub.s32 0, %v6317
      %v6319 = vrot.slane %v6315, %v6318
      %v6328 = vunpack.c.l.b16 %v6306
      %v6329 = vunpack.c.l.b16 %v6307
      %v6330 = vunpack.c.l.b16 %v6308
      %v6331 = vunpack.c.l.b16 %v6309
      %v6332 = vunpack.c.l.b16 %v6310
      %v6333 = vunpack.c.l.b16 %v6311
      %v6334 = vunpack.c.l.b16 %v6312
      %v6335 = vunpack.c.l.b16 %v6313
      %v6336 = vpack.c.b16 %v6329, %v6328
      %v6337 = vpack.c.b16 %v6331, %v6330
      %v6338 = vpack.c.b16 %v6333, %v6332
      %v6339 = vpack.c.b16 %v6335, %v6334
      %v6345 = vsel %vm3001, %v6303, 0
      %v6348 = vsel %vm3001, %v6304, 0
      %6350 = vmatprep.subr.bf16.mxu0 0
      %6351 = vmatpush1.bf16.msra.mxu0 0
      %6352 = vmatprep.subr.bf16.mxu0 0
      %6353 = vmatpush1.bf16.msra.mxu0 0
      %6354 = vmatprep.subr.bf16.mxu0 0
      %6355 = vmatpush1.bf16.msra.mxu0 0
      %6356 = vmatprep.subr.bf16.mxu0 0
      %6357 = vmatpush1.bf16.msra.mxu0 0
      %6358 = vmatprep.subr.bf16.mxu0 0
      %6359 = vmatpush1.bf16.msra.mxu0 %v6339
      %6360 = vmatprep.subr.bf16.mxu0 0
      %6361 = vmatpush1.bf16.msra.mxu0 %v6338
      %6362 = vmatprep.subr.bf16.mxu0 0
      %6363 = vmatpush1.bf16.msra.mxu0 %v6337
      %6364 = vmatprep.subr.bf16.mxu0 0
      %6365 = vmatpush1.bf16.msra.mxu0 %v6336
      %6366 = vmatprep.subr.bf16.mxu0 0
      %6367 = vmatpush2.bf16.msra.mxu0 0
      %6368 = vmatprep.subr.bf16.mxu0 0
      %6369 = vmatpush2.bf16.msra.mxu0 0
      %6370 = vmatprep.subr.bf16.mxu0 0
      %6371 = vmatpush2.bf16.msra.mxu0 0
      %6372 = vmatprep.subr.bf16.mxu0 0
      %6373 = vmatpush2.bf16.msra.mxu0 0
      %6374 = vmatprep.subr.bf16.mxu0 0
      %6375 = vmatpush2.bf16.msra.mxu0 0
      %6376 = vmatprep.subr.bf16.mxu0 0
      %6377 = vmatpush2.bf16.msra.mxu0 0
      %6378 = vmatprep.subr.bf16.mxu0 0
      %6379 = vmatpush2.bf16.msra.mxu0 0
      %6380 = vmatprep.subr.bf16.mxu0 0
      %6381 = vmatpush2.bf16.msra.mxu0 0
      %6382 = vmatprep.mubr.bf16.mxu0 0
      %6383 = vmatmul.mubr.bf16.gmra.mxu0 %v6345
      %v6384 = vpop.f32.mrf.mxu0
      %v6385 = vadd.f32 %v6319, %v6384
      %v6386 = vpop.f32.mrf.mxu0
      %v6387 = vpop.f32.mrf.mxu0
      %v6388 = vadd.f32 %v6319, %v6387
      %v6389 = vpop.f32.mrf.mxu0
      %6390 = vmatprep.mubr.bf16.mxu0 0
      %6391 = vmatmul.mubr.bf16.gmra.mxu0 %v6348
      %v6392 = vpop.f32.mrf.mxu0
      %v6393 = vadd.f32 %v6319, %v6392
      %v6394 = vpop.f32.mrf.mxu0
      %v6395 = vpop.f32.mrf.mxu0
      %v6396 = vpop.f32.mrf.mxu0
      %6397 = vdwg.mxu0
      %v6398 = vsel %vm391, %v6385, 0.0
      %6399 = vadd.xlane.f32.xlu0 %v6398
      %v6400 = vpop.xlane.xlu0 %6399
      %v6401 = vsel %vm391, %v6388, 0.0
      %6402 = vadd.xlane.f32.xlu0 %v6401
      %v6403 = vpop.xlane.xlu0 %6402
      %vm6404 = vcmask 256000
      %v6405 = vsel %vm6404, %v6393, 0.0
      %6406 = vadd.xlane.f32.xlu0 %v6405
      %v6407 = vpop.xlane.xlu0 %6406
      %v6408 = vmul.f32 %v6400, %v633
      %v6409 = vmul.f32 %v6403, %v633
      %v6410 = vmul.f32 %v6407, %v633
      %v6411 = vsub.f32 %v6385, %v6408
      %v6412 = vsub.f32 %v6388, %v6409
      %v6413 = vsub.f32 %v6393, %v6410
      %v6414 = vmul.f32 %v6411, %v6411
      %v6415 = vmul.f32 %v6412, %v6412
      %v6416 = vmul.f32 %v6413, %v6413
      %v6417 = vsel %vm391, %v6414, 0.0
      %6418 = vadd.xlane.f32.xlu0 %v6417
      %v6419 = vpop.xlane.xlu0 %6418
      %v6420 = vsel %vm391, %v6415, 0.0
      %6421 = vadd.xlane.f32.xlu0 %v6420
      %v6422 = vpop.xlane.xlu0 %6421
      %v6423 = vsel %vm6404, %v6416, 0.0
      %6424 = vadd.xlane.f32.xlu0 %v6423
      %v6425 = vpop.xlane.xlu0 %6424
      %v6426 = vmul.f32 %v6419, %v633
      %v6427 = vmul.f32 %v6422, %v633
      %v6428 = vmul.f32 %v6425, %v633
      %v6429 = vadd.f32 %v6426, 1e-05
      %v6430 = vadd.f32 %v6427, 1e-05
      %v6431 = vadd.f32 %v6428, 1e-05
      %v6432 = vrsqrt.pop %v6429
      %v6433 = vrsqrt.pop %v6430
      %v6434 = vrsqrt.pop %v6431
      %v6435 = vmul.f32 %v6411, %v6432
      %v6436 = vmul.f32 %v6412, %v6433
      %v6437 = vmul.f32 %v6413, %v6434
      %v6438 = vlaneseq
      %v6439 = vshrl.u32 %v6438, 7
      %v6440 = vsub.s32 1, %v6439
      %v6441 = vrot.slane %v6315, %v6440
      %v6442 = vmul.f32 %v6435, %v6441
      %v6443 = vmul.f32 %v6436, %v6441
      %v6444 = vmul.f32 %v6437, %v6441
      %v6445 = vlaneseq
      %v6446 = vshrl.u32 %v6445, 7
      %v6447 = vsub.s32 2, %v6446
      %v6448 = vrot.slane %v6315, %v6447
      %v6449 = vadd.f32 %v6442, %v6448
      %v6450 = vadd.f32 %v6443, %v6448
      %v6451 = vadd.f32 %v6444, %v6448
      %v6452 = vmul.f32 %v6449, %v6449
      %v6453 = vmul.f32 %v6450, %v6450
      %v6454 = vmul.f32 %v6451, %v6451
      %v6455 = vmul.f32 %v6449, %v6452
      %v6456 = vmul.f32 %v6450, %v6453
      %v6457 = vmul.f32 %v6451, %v6454
      %v6458 = vmul.f32 %v6455, 0.044715
      %v6459 = vmul.f32 %v6456, 0.044715
      %v6460 = vmul.f32 %v6457, 0.044715
      %v6461 = vadd.f32 %v6449, %v6458
      %v6462 = vadd.f32 %v6450, %v6459
      %v6463 = vadd.f32 %v6451, %v6460
      %v6464 = vmul.f32 %v6461, 0.7978846
      %v6465 = vmul.f32 %v6462, 0.7978846
      %v6466 = vmul.f32 %v6463, 0.7978846
      %v6467 = vtanh.pop %v6464
      %v6468 = vtanh.pop %v6465
      %v6469 = vtanh.pop %v6466
      %v6470 = vadd.f32 %v6467, 1.0
      %v6471 = vadd.f32 %v6468, 1.0
      %v6472 = vadd.f32 %v6469, 1.0
      %v6473 = vmul.f32 %v6470, 0.5
      %v6474 = vmul.f32 %v6471, 0.5
      %v6475 = vmul.f32 %v6472, 0.5
      %v6476 = vmul.f32 %v6449, %v6473
      %v6477 = vmul.f32 %v6450, %v6474
      %v6478 = vmul.f32 %v6451, %v6475
      %6479 = vst.msk [vmem:[#allocation3] sm:$0xff] %vm391, %v6476
      %6480 = vst.msk [vmem:[#allocation3 + $0x8] sm:$0xff] %vm391, %v6477
      %6481 = vst.msk [vmem:[#allocation3 + $0x10] sm:$0x7] %vm6404, %v6478
      %v6482 = vld [vmem:[#allocation3] ss:$2 sm:$0xff]
      %v6483 = vld [vmem:[%s4379] ss:$2 sm:$0x1]
      %v6484 = vld [vmem:[%s4417] ss:$2 sm:$0xff]
      %v6485 = vld [vmem:[%s4419] ss:$2 sm:$0x1]
      %6488 = vrot.lane.b32.xlu0 %v6484, 32
      %v6489 = vpop.permute.xlu0 %6488
      %6490 = vrot.lane.b32.xlu0 %v6485, 32
      %v6491 = vpop.permute.xlu0 %6490
      %v6494 = vsel %vm391, %v6482, %v6489
      %v6495 = vsel %vm391, %v6483, %v6491
      %v6496 = vpack.c.bf16 %v6495, %v6494
      %s6497 = scalar_lea.vmem %s1, 240
      %v6498 = vld [vmem:[%s6497] sm:$0xf]
      %v6499 = vld [vmem:[%s6497 + $0x4] sm:$0xf]
      %v6500 = vld [vmem:[%s6497 + $0x8] sm:$0xf]
      %v6501 = vld [vmem:[%s6497 + $0xc] sm:$0xf]
      %v6502 = vld [vmem:[%s6497 + $0x10] sm:$0xf]
      %v6503 = vld [vmem:[%s6497 + $0x14] sm:$0xf]
      %v6504 = vld [vmem:[%s6497 + $0x18] sm:$0xf]
      %v6505 = vld [vmem:[%s6497 + $0x1c] sm:$0xf]
      %s6506 = scalar_lea.vmem %s2, 48
      %v6507 = vld [vmem:[%s6506] sm:$0xff]
      %v6508 = vlaneseq
      %v6509 = vshrl.u32 %v6508, 7
      %v6510 = vsub.s32 0, %v6509
      %v6511 = vrot.slane %v6507, %v6510
      %v6520 = vunpack.c.l.b16 %v6498
      %v6521 = vunpack.c.l.b16 %v6499
      %v6522 = vunpack.c.l.b16 %v6500
      %v6523 = vunpack.c.l.b16 %v6501
      %v6524 = vunpack.c.l.b16 %v6502
      %v6525 = vunpack.c.l.b16 %v6503
      %v6526 = vunpack.c.l.b16 %v6504
      %v6527 = vunpack.c.l.b16 %v6505
      %v6528 = vpack.c.b16 %v6521, %v6520
      %v6529 = vpack.c.b16 %v6523, %v6522
      %v6530 = vpack.c.b16 %v6525, %v6524
      %v6531 = vpack.c.b16 %v6527, %v6526
      %v6537 = vsel %vm3001, %v6496, 0
      %6539 = vmatprep.subr.bf16.mxu0 0
      %6540 = vmatpush1.bf16.msra.mxu0 0
      %6541 = vmatprep.subr.bf16.mxu0 0
      %6542 = vmatpush1.bf16.msra.mxu0 0
      %6543 = vmatprep.subr.bf16.mxu0 0
      %6544 = vmatpush1.bf16.msra.mxu0 0
      %6545 = vmatprep.subr.bf16.mxu0 0
      %6546 = vmatpush1.bf16.msra.mxu0 0
      %6547 = vmatprep.subr.bf16.mxu0 0
      %6548 = vmatpush1.bf16.msra.mxu0 %v6531
      %6549 = vmatprep.subr.bf16.mxu0 0
      %6550 = vmatpush1.bf16.msra.mxu0 %v6530
      %6551 = vmatprep.subr.bf16.mxu0 0
      %6552 = vmatpush1.bf16.msra.mxu0 %v6529
      %6553 = vmatprep.subr.bf16.mxu0 0
      %6554 = vmatpush1.bf16.msra.mxu0 %v6528
      %6555 = vmatprep.subr.bf16.mxu0 0
      %6556 = vmatpush2.bf16.msra.mxu0 0
      %6557 = vmatprep.subr.bf16.mxu0 0
      %6558 = vmatpush2.bf16.msra.mxu0 0
      %6559 = vmatprep.subr.bf16.mxu0 0
      %6560 = vmatpush2.bf16.msra.mxu0 0
      %6561 = vmatprep.subr.bf16.mxu0 0
      %6562 = vmatpush2.bf16.msra.mxu0 0
      %6563 = vmatprep.subr.bf16.mxu0 0
      %6564 = vmatpush2.bf16.msra.mxu0 0
      %6565 = vmatprep.subr.bf16.mxu0 0
      %6566 = vmatpush2.bf16.msra.mxu0 0
      %6567 = vmatprep.subr.bf16.mxu0 0
      %6568 = vmatpush2.bf16.msra.mxu0 0
      %6569 = vmatprep.subr.bf16.mxu0 0
      %6570 = vmatpush2.bf16.msra.mxu0 0
      %6571 = vmatprep.mubr.bf16.mxu0 0
      %6572 = vmatmul.mubr.bf16.gmra.mxu0 %v6537
      %v6573 = vpop.f32.mrf.mxu0
      %v6574 = vadd.f32 %v6511, %v6573
      %v6575 = vpop.f32.mrf.mxu0
      %v6576 = vpop.f32.mrf.mxu0
      %v6577 = vadd.f32 %v6511, %v6576
      %v6578 = vpop.f32.mrf.mxu0
      %6579 = vdwg.mxu0
      %v6580 = vsel %vm391, %v6574, 0.0
      %6581 = vadd.xlane.f32.xlu0 %v6580
      %v6582 = vpop.xlane.xlu0 %6581
      %vm6583 = vcmask 253952
      %v6584 = vsel %vm6583, %v6577, 0.0
      %6585 = vadd.xlane.f32.xlu0 %v6584
      %v6586 = vpop.xlane.xlu0 %6585
      %v6587 = vmul.f32 %v6582, %v633
      %v6588 = vmul.f32 %v6586, %v633
      %v6589 = vsub.f32 %v6574, %v6587
      %v6590 = vsub.f32 %v6577, %v6588
      %v6591 = vmul.f32 %v6589, %v6589
      %v6592 = vmul.f32 %v6590, %v6590
      %v6593 = vsel %vm391, %v6591, 0.0
      %6594 = vadd.xlane.f32.xlu0 %v6593
      %v6595 = vpop.xlane.xlu0 %6594
      %v6596 = vsel %vm6583, %v6592, 0.0
      %6597 = vadd.xlane.f32.xlu0 %v6596
      %v6598 = vpop.xlane.xlu0 %6597
      %v6599 = vmul.f32 %v6595, %v633
      %v6600 = vmul.f32 %v6598, %v633
      %v6601 = vadd.f32 %v6599, 1e-05
      %v6602 = vadd.f32 %v6600, 1e-05
      %v6603 = vrsqrt.pop %v6601
      %v6604 = vrsqrt.pop %v6602
      %v6605 = vmul.f32 %v6589, %v6603
      %v6606 = vmul.f32 %v6590, %v6604
      %v6607 = vlaneseq
      %v6608 = vshrl.u32 %v6607, 7
      %v6609 = vsub.s32 1, %v6608
      %v6610 = vrot.slane %v6507, %v6609
      %v6611 = vmul.f32 %v6605, %v6610
      %v6612 = vmul.f32 %v6606, %v6610
      %v6613 = vlaneseq
      %v6614 = vshrl.u32 %v6613, 7
      %v6615 = vsub.s32 2, %v6614
      %v6616 = vrot.slane %v6507, %v6615
      %v6617 = vadd.f32 %v6611, %v6616
      %v6618 = vadd.f32 %v6612, %v6616
      %v6619 = vmul.f32 %v6617, %v6617
      %v6620 = vmul.f32 %v6618, %v6618
      %v6621 = vmul.f32 %v6617, %v6619
      %v6622 = vmul.f32 %v6618, %v6620
      %v6623 = vmul.f32 %v6621, 0.044715
      %v6624 = vmul.f32 %v6622, 0.044715
      %v6625 = vadd.f32 %v6617, %v6623
      %v6626 = vadd.f32 %v6618, %v6624
      %v6627 = vmul.f32 %v6625, 0.7978846
      %v6628 = vmul.f32 %v6626, 0.7978846
      %v6629 = vtanh.pop %v6627
      %v6630 = vtanh.pop %v6628
      %v6631 = vadd.f32 %v6629, 1.0
      %v6632 = vadd.f32 %v6630, 1.0
      %v6633 = vmul.f32 %v6631, 0.5
      %v6634 = vmul.f32 %v6632, 0.5
      %v6635 = vmul.f32 %v6617, %v6633
      %v6636 = vmul.f32 %v6618, %v6634
      %6637 = vst.msk [vmem:[#allocation2] sm:$0xff] %vm391, %v6635
      %6638 = vst.msk [vmem:[#allocation2 + $0x8] sm:$0x1] %vm6583, %v6636
      %v6639 = vld [vmem:[#allocation2] sm:$0xff]
      %v6640 = vld [vmem:[#allocation2 + $0x8] sm:$0x1]
      %v6641 = vld [vmem:[%s4] sm:$0xff]
      %v6642 = vsel %vm391, %v6639, 0.0
      %6643 = vadd.xlane.f32.xlu0 %v6642
      %v6644 = vpop.xlane.xlu0 %6643
      %v6645 = vsel %vm6583, %v6640, 0.0
      %6646 = vadd.xlane.f32.xlu0 %v6645
      %v6647 = vpop.xlane.xlu0 %6646
      %v6648 = vmul.f32 %v6644, %v633
      %v6649 = vmul.f32 %v6647, %v633
      %v6650 = vsub.f32 %v6639, %v6648
      %v6651 = vsub.f32 %v6640, %v6649
      %v6652 = vmul.f32 %v6650, %v6650
      %v6653 = vmul.f32 %v6651, %v6651
      %v6654 = vsel %vm391, %v6652, 0.0
      %6655 = vadd.xlane.f32.xlu0 %v6654
      %v6656 = vpop.xlane.xlu0 %6655
      %v6657 = vsel %vm6583, %v6653, 0.0
      %6658 = vadd.xlane.f32.xlu0 %v6657
      %v6659 = vpop.xlane.xlu0 %6658
      %v6660 = vmul.f32 %v6656, %v633
      %v6661 = vmul.f32 %v6659, %v633
      %v6662 = vadd.f32 %v6660, 1e-05
      %v6663 = vadd.f32 %v6661, 1e-05
      %v6664 = vrsqrt.pop %v6662
      %v6665 = vrsqrt.pop %v6663
      %v6666 = vmul.f32 %v6650, %v6664
      %v6667 = vmul.f32 %v6651, %v6665
      %v6668 = vlaneseq
      %v6669 = vshrl.u32 %v6668, 7
      %v6670 = vsub.s32 0, %v6669
      %v6671 = vrot.slane %v6641, %v6670
      %v6672 = vmul.f32 %v6666, %v6671
      %v6673 = vmul.f32 %v6667, %v6671
      %v6674 = vlaneseq
      %v6675 = vshrl.u32 %v6674, 7
      %v6676 = vsub.s32 1, %v6675
      %v6677 = vrot.slane %v6641, %v6676
      %v6678 = vadd.f32 %v6672, %v6677
      %v6679 = vadd.f32 %v6673, %v6677
      %v6680 = vpack.c.bf16 %v6679, %v6678
      %v6681 = vld [vmem:[%s3] sm:$0xf]
      %v6682 = vld [vmem:[%s3 + $0x4] sm:$0xf]
      %v6683 = vld [vmem:[%s3 + $0x8] sm:$0xf]
      %v6684 = vld [vmem:[%s3 + $0xc] sm:$0xf]
      %v6685 = vlaneseq
      %v6686 = vshrl.u32 %v6685, 7
      %v6687 = vsub.s32 2, %v6686
      %v6688 = vrot.slane %v6641, %v6687
      %v6693 = vunpack.c.l.b16 %v6681
      %v6694 = vunpack.c.l.b16 %v6682
      %v6695 = vunpack.c.l.b16 %v6683
      %v6696 = vunpack.c.l.b16 %v6684
      %v6697 = vpack.c.b16 %v6694, %v6693
      %v6698 = vpack.c.b16 %v6696, %v6695
      %v6702 = vsel %vm391, %v6680, 0
      %6704 = vmatprep.subr.bf16.mxu0 0
      %6705 = vmatpush1.bf16.msra.mxu0 0
      %6706 = vmatprep.subr.bf16.mxu0 0
      %6707 = vmatpush1.bf16.msra.mxu0 0
      %6708 = vmatprep.subr.bf16.mxu0 0
      %6709 = vmatpush1.bf16.msra.mxu0 0
      %6710 = vmatprep.subr.bf16.mxu0 0
      %6711 = vmatpush1.bf16.msra.mxu0 0
      %6712 = vmatprep.subr.bf16.mxu0 0
      %6713 = vmatpush1.bf16.msra.mxu0 0
      %6714 = vmatprep.subr.bf16.mxu0 0
      %6715 = vmatpush1.bf16.msra.mxu0 0
      %6716 = vmatprep.subr.bf16.mxu0 0
      %6717 = vmatpush1.bf16.msra.mxu0 %v6698
      %6718 = vmatprep.subr.bf16.mxu0 0
      %6719 = vmatpush1.bf16.msra.mxu0 %v6697
      %6720 = vmatprep.subr.bf16.mxu0 0
      %6721 = vmatpush2.bf16.msra.mxu0 0
      %6722 = vmatprep.subr.bf16.mxu0 0
      %6723 = vmatpush2.bf16.msra.mxu0 0
      %6724 = vmatprep.subr.bf16.mxu0 0
      %6725 = vmatpush2.bf16.msra.mxu0 0
      %6726 = vmatprep.subr.bf16.mxu0 0
      %6727 = vmatpush2.bf16.msra.mxu0 0
      %6728 = vmatprep.subr.bf16.mxu0 0
      %6729 = vmatpush2.bf16.msra.mxu0 0
      %6730 = vmatprep.subr.bf16.mxu0 0
      %6731 = vmatpush2.bf16.msra.mxu0 0
      %6732 = vmatprep.subr.bf16.mxu0 0
      %6733 = vmatpush2.bf16.msra.mxu0 0
      %6734 = vmatprep.subr.bf16.mxu0 0
      %6735 = vmatpush2.bf16.msra.mxu0 0
      %6736 = vmatprep.mubr.bf16.mxu0 0
      %6737 = vmatmul.mubr.bf16.gmra.mxu0 %v6702
      %v6738 = vpop.f32.mrf.mxu0
      %v6739 = vadd.f32 %v6688, %v6738
      %v6740 = vpop.f32.mrf.mxu0
      %v6741 = vpop.f32.mrf.mxu0
      %v6742 = vadd.f32 %v6688, %v6741
      %v6743 = vpop.f32.mrf.mxu0
      %6744 = vdwg.mxu0
      %vm6747 = vcmask 1041408
      %v6748 = vrot.slane %v6739, 6
      %v6749 = vrot.slane %v6742, 6
      %v6750 = vsel %vm6747, %v6748, %v6749
      %v6753 = vsel %vm6747, 0.0, %v6748
      %vm6754 = vcmask 1042432
      %v6755 = vsel %vm6754, %v6750, 0.0
      %v6758 = vrot.slane %v6753, 1
      %v6759 = vrot.slane %v6755, 1
      %v6760 = vsel %vm2761, %v6758, %v6759
      %6761 = vrot.lane.b32.xlu0 %v6760, 32
      %v6762 = vpop.permute.xlu0 %6761
      %6763 = vrot.lane.b32.xlu0 %v6759, 32
      %v6764 = vpop.permute.xlu0 %6763
      %vm6767 = vcmask 1045504
      %v6768 = vrot.slane %v6753, 2
      %v6769 = vrot.slane %v6755, 2
      %v6770 = vsel %vm6767, %v6768, %v6769
      %6771 = vrot.lane.b32.xlu0 %v6770, 64
      %v6772 = vpop.permute.xlu0 %6771
      %6773 = vrot.lane.b32.xlu0 %v6769, 64
      %v6774 = vpop.permute.xlu0 %6773
      %vm6777 = vcmask 1044480
      %v6778 = vrot.slane %v6753, 3
      %v6779 = vrot.slane %v6755, 3
      %v6780 = vsel %vm6777, %v6778, %v6779
      %6781 = vrot.lane.b32.xlu0 %v6780, 96
      %v6782 = vpop.permute.xlu0 %6781
      %6783 = vrot.lane.b32.xlu0 %v6779, 96
      %v6784 = vpop.permute.xlu0 %6783
      %v6787 = vsel %vm391, %v6753, %v6762
      %v6788 = vsel %vm391, %v6755, %v6764
      %v6789 = vsel %vm3001, %v6787, %v6772
      %v6790 = vsel %vm3001, %v6788, %v6774
      %v6791 = vsel %vm3116, %v6789, %v6782
      %v6792 = vsel %vm3116, %v6790, %v6784
      %v6793 = vpack.c.bf16 %v6792, %v6791
      %v6794 = vld [vmem:[%s3 + $0x10] sm:$0xf]
      %v6795 = vld [vmem:[%s3 + $0x14] sm:$0xf]
      %v6796 = vld [vmem:[%s3 + $0x18] sm:$0xf]
      %v6797 = vld [vmem:[%s3 + $0x1c] sm:$0xf]
      %v6798 = vld [vmem:[%s3 + $0x20] sm:$0xf]
      %v6799 = vld [vmem:[%s3 + $0x24] sm:$0xf]
      %v6800 = vld [vmem:[%s3 + $0x28] sm:$0xf]
      %v6801 = vld [vmem:[%s3 + $0x2c] sm:$0xf]
      %v6802 = vld [vmem:[%s3 + $0x30] sm:$0xf]
      %v6803 = vld [vmem:[%s3 + $0x34] sm:$0xf]
      %v6804 = vld [vmem:[%s3 + $0x38] sm:$0xf]
      %v6805 = vld [vmem:[%s3 + $0x3c] sm:$0xf]
      %v6806 = vld [vmem:[%s3 + $0x40] sm:$0xf]
      %v6807 = vld [vmem:[%s3 + $0x44] sm:$0xf]
      %v6808 = vld [vmem:[%s3 + $0x48] sm:$0xf]
      %v6809 = vld [vmem:[%s3 + $0x4c] sm:$0xf]
      %v6810 = vlaneseq
      %v6811 = vshrl.u32 %v6810, 7
      %v6812 = vsub.s32 3, %v6811
      %v6813 = vrot.slane %v6641, %v6812
      %v6830 = vunpack.c.l.b16 %v6794
      %v6831 = vunpack.c.l.b16 %v6795
      %v6832 = vunpack.c.l.b16 %v6796
      %v6833 = vunpack.c.l.b16 %v6797
      %v6834 = vunpack.c.l.b16 %v6798
      %v6835 = vunpack.c.l.b16 %v6799
      %v6836 = vunpack.c.l.b16 %v6800
      %v6837 = vunpack.c.l.b16 %v6801
      %v6838 = vunpack.c.l.b16 %v6802
      %v6839 = vunpack.c.l.b16 %v6803
      %v6840 = vunpack.c.l.b16 %v6804
      %v6841 = vunpack.c.l.b16 %v6805
      %v6842 = vunpack.c.l.b16 %v6806
      %v6843 = vunpack.c.l.b16 %v6807
      %v6844 = vunpack.c.l.b16 %v6808
      %v6845 = vunpack.c.l.b16 %v6809
      %v6846 = vpack.c.b16 %v6831, %v6830
      %v6847 = vpack.c.b16 %v6833, %v6832
      %v6848 = vpack.c.b16 %v6835, %v6834
      %v6849 = vpack.c.b16 %v6837, %v6836
      %v6850 = vpack.c.b16 %v6839, %v6838
      %v6851 = vpack.c.b16 %v6841, %v6840
      %v6852 = vpack.c.b16 %v6843, %v6842
      %v6853 = vpack.c.b16 %v6845, %v6844
      %6862 = vmatprep.subr.bf16.mxu0 0
      %6863 = vmatpush1.bf16.msra.mxu0 %v6853
      %6864 = vmatprep.subr.bf16.mxu0 0
      %6865 = vmatpush1.bf16.msra.mxu0 %v6852
      %6866 = vmatprep.subr.bf16.mxu0 0
      %6867 = vmatpush1.bf16.msra.mxu0 %v6851
      %6868 = vmatprep.subr.bf16.mxu0 0
      %6869 = vmatpush1.bf16.msra.mxu0 %v6850
      %6870 = vmatprep.subr.bf16.mxu0 0
      %6871 = vmatpush1.bf16.msra.mxu0 %v6849
      %6872 = vmatprep.subr.bf16.mxu0 0
      %6873 = vmatpush1.bf16.msra.mxu0 %v6848
      %6874 = vmatprep.subr.bf16.mxu0 0
      %6875 = vmatpush1.bf16.msra.mxu0 %v6847
      %6876 = vmatprep.subr.bf16.mxu0 0
      %6877 = vmatpush1.bf16.msra.mxu0 %v6846
      %6878 = vmatprep.subr.bf16.mxu0 0
      %6879 = vmatpush2.bf16.msra.mxu0 0
      %6880 = vmatprep.subr.bf16.mxu0 0
      %6881 = vmatpush2.bf16.msra.mxu0 0
      %6882 = vmatprep.subr.bf16.mxu0 0
      %6883 = vmatpush2.bf16.msra.mxu0 0
      %6884 = vmatprep.subr.bf16.mxu0 0
      %6885 = vmatpush2.bf16.msra.mxu0 0
      %6886 = vmatprep.subr.bf16.mxu0 0
      %6887 = vmatpush2.bf16.msra.mxu0 0
      %6888 = vmatprep.subr.bf16.mxu0 0
      %6889 = vmatpush2.bf16.msra.mxu0 0
      %6890 = vmatprep.subr.bf16.mxu0 0
      %6891 = vmatpush2.bf16.msra.mxu0 0
      %6892 = vmatprep.subr.bf16.mxu0 0
      %6893 = vmatpush2.bf16.msra.mxu0 0
      %6894 = vmatprep.mubr.bf16.mxu0 0
      %6895 = vmatmul.mubr.bf16.gmra.mxu0 %v6793
      %v6896 = vpop.f32.mrf.mxu0
      %v6897 = vadd.f32 %v6813, %v6896
      %v6898 = vpop.f32.mrf.mxu0
      %v6899 = vpop.f32.mrf.mxu0
      %v6900 = vadd.f32 %v6813, %v6899
      %v6901 = vpop.f32.mrf.mxu0
      %6902 = vdwg.mxu0
      %v6903 = vmul.f32 %v6897, %v6897
      %v6904 = vmul.f32 %v6900, %v6900
      %v6905 = vmul.f32 %v6897, %v6903
      %v6906 = vmul.f32 %v6900, %v6904
      %v6907 = vmul.f32 %v6905, 0.044715
      %v6908 = vmul.f32 %v6906, 0.044715
      %v6909 = vadd.f32 %v6897, %v6907
      %v6910 = vadd.f32 %v6900, %v6908
      %v6911 = vmul.f32 %v6909, 0.7978846
      %v6912 = vmul.f32 %v6910, 0.7978846
      %v6913 = vtanh.pop %v6911
      %v6914 = vtanh.pop %v6912
      %v6915 = vadd.f32 %v6913, 1.0
      %v6916 = vadd.f32 %v6914, 1.0
      %v6917 = vmul.f32 %v6915, 0.5
      %v6918 = vmul.f32 %v6916, 0.5
      %v6919 = vmul.f32 %v6897, %v6917
      %v6920 = vmul.f32 %v6900, %v6918
      %v6921 = vadd.f32 %v6739, %v6919
      %v6922 = vadd.f32 %v6742, %v6920
      %6923 = vst.msk [vmem:[%s224] sm:$0xff] %vm391, %v6921
      %6924 = vst.msk [vmem:[%s224 + $0x8] sm:$0x1] %vm6583, %v6922
      %p6925 = scmp.lt.s32.totalorder %s16, 1
      %s6926 = scalar_select %p6925, %s16, 1
      %s6927 = smul.addr %s6926, 2
      %s6928 = smul.addr %s6927, 8
      %s6929 = scalar_lea.vmem %s5, %s6928
      // Predicated region
      $region41: #{forward.2} parent=39 // pred_check
        %p6930 = pneg %p144
      $region42: #{forward.2} parent=39 // pred_check_branch
        %6932 = sbr.rel (%p6930) target = $region44
      $region43: #{forward.2} parent=39 // pred_region
        _
      $region44: #{forward.2} parent=39 // pred_fallthru
        _
    $region40: #{forward.2} parent=5 // pred_fallthru
      _
    %p6933 = scmp.le.s32.totalorder 2, %s11
    // Predicated region
    $region45: #{forward.2} parent=5 // pred_check
      %p6934 = pneg %p6933
    $region46: #{forward.2} parent=5 // pred_check_branch
      %6936 = sbr.rel (%p6934) target = $region48
    $region47: #{forward.2} parent=5 // pred_region
      %s6937 = ssub.s32 %s11, 2
      // Predicated region
      $region49: #{forward.2} parent=47 // pred_check
        %p6938 = pneg %p150
      $region50: #{forward.2} parent=47 // pred_check_branch
        %6940 = sbr.rel (%p6938) target = $region52
      $region51: #{forward.2} parent=47 // pred_region
        %p6941 = scmp.lt.s32.totalorder %s17, 1
        %s6942 = scalar_select %p6941, %s17, 1
        %s6943 = smul.addr %s6942, 2
        %s6944 = smul.addr %s6943, 8
        %s6945 = scalar_lea.vmem %s5, %s6944
      $region52: #{forward.2} parent=47 // pred_fallthru
        _
    $region48: #{forward.2} parent=5 // pred_fallthru
      _
  $region6: #{forward.2} parent=0 // loop_footer
    %s15 = sadd.s32 1, %s11
  $region7: #{forward.2} parent=0 // loop_footer_branch
    %10 = sbr.rel target = $region3
  $region8: #{forward.2} parent=0 // loop_exit
    _

</llo_original>
